<compile_context>
chip_gen: v7x
topology: tpu7x:2x2x1
jax: 0.10.0
libtpu: 0.0.40
codegen_flags: <defaults>
</compile_context>

<pallas_src>
import numpy as np
import jax
import jax.numpy as jnp
from jax import lax
from jax.experimental import pallas as pl
from jax.experimental.pallas import tpu as pltpu


MATMUL_DTYPE = jnp.bfloat16   # MXU operand dtype (f32 accumulate). jnp.float32 for exact f32.
MAX_BATCH_BLOCK = 128         # cap on batch rows per grid step (MXU rows / VMEM)
OUT_PAD = 128                 # lane-dense padded logits width


def _pick_batch_block(batch):
    """Round the batch up to a multiple of 16 (packed bf16 sublane tile), cap at 128."""
    bb = -(-batch // 16) * 16
    return int(min(MAX_BATCH_BLOCK, max(16, bb)))


# --------------------------------------------------------------------------------------
# Kernel 1: the two recurrent branches on a 2-wide "parallel" grid axis.
#   branch 0: GRU over audio -> audio fwd LSTM (fused per step) -> audio bwd single step
#   branch 1: text fwd LSTM -> text bwd single step
# Each program writes its (BB, 2H) half of the combined feature vector.
# --------------------------------------------------------------------------------------
def branch_kernel(
    audio_ref, text_ref,
    gru_wi_ref, gru_wh_ref, gru_bi_ref, gru_bh_ref,
    alf_wi_ref, alf_wh_ref, alf_b_ref,
    alb_wi_ref, alb_b_ref,
    tlf_wi_ref, tlf_wh_ref, tlf_b_ref,
    tlb_wi_ref, tlb_b_ref,
    comb_ref,
):
    f32 = jnp.float32
    T_a, BB, _ = audio_ref.shape
    T_t = text_ref.shape[0]
    H = gru_wh_ref.shape[0]
    mmd = gru_wh_ref.dtype          # matmul operand dtype (bf16 on MXU, f32 accumulation)
    branch = pl.program_id(1)

    def lstm_gates(g):
        # Gate columns were permuted in the wrapper to (i, f, o | g): one contiguous
        # sigmoid over 3H and one tanh over H (fewer EUP push sequences / slices).
        s = jax.nn.sigmoid(g[:, 0:3 * H])
        gg = jnp.tanh(g[:, 3 * H:4 * H])
        return s[:, 0:H], s[:, H:2 * H], s[:, 2 * H:3 * H], gg   # i, f, o, g

    zeros = jnp.zeros((BB, H), f32)

    @pl.when(branch == 0)
    def _audio_branch():
        # Hoist only the small bias broadcasts; weights are re-read from their
        # VMEM refs every step so no large values stay live across the unrolled body.
        gru_bi = jnp.broadcast_to(gru_bi_ref[...], (BB, 3 * H))
        gru_bh = jnp.broadcast_to(gru_bh_ref[...], (BB, 3 * H))
        alf_b = jnp.broadcast_to(alf_b_ref[...], (BB, 4 * H))

        def step(t, carry):
            h_g, h_a, c_a = carry
            x_a = audio_ref[t].astype(mmd)                         # (BB, D_a)

            # GRU cell (PyTorch gate order r, z, n).  x @ W_ih is off the recurrent
            # chain, issued per step so the MXU overlaps it with elementwise work.
            gi = jnp.dot(x_a, gru_wi_ref[...], preferred_element_type=f32) + gru_bi
            gh = (jnp.dot(h_g.astype(mmd), gru_wh_ref[...],
                          preferred_element_type=f32) + gru_bh)
            rz = jax.nn.sigmoid(gi[:, 0:2 * H] + gh[:, 0:2 * H])   # r,z in one EUP pass
            r, z = rz[:, 0:H], rz[:, H:2 * H]
            n = jnp.tanh(gi[:, 2 * H:3 * H] + r * gh[:, 2 * H:3 * H])
            h_g = (1.0 - z) * n + z * h_g

            # Audio fwd LSTM (input = this step's GRU output).  Un-packed matmuls:
            # the h_a @ W_hh half depends only on the previous step.
            g_a = (jnp.dot(h_a.astype(mmd), alf_wh_ref[...], preferred_element_type=f32)
                   + jnp.dot(h_g.astype(mmd), alf_wi_ref[...], preferred_element_type=f32)
                   + alf_b)
            i, f, o, gg = lstm_gates(g_a)
            c_a = f * c_a + i * gg
            h_a = o * jnp.tanh(c_a)
            return (h_g, h_a, c_a)

        # Short static trip count -> fully unroll for LLO scheduling visibility.
        h_g, h_alf, _ = lax.fori_loop(0, T_a, step, (zeros, zeros, zeros), unroll=True)

        # Backward direction: single step from zero state on the last input
        # (h0 = c0 = 0, so the h @ W_hh term vanishes and c_new = i * g).
        g_ab = (jnp.dot(h_g.astype(mmd), alb_wi_ref[...], preferred_element_type=f32)
                + jnp.broadcast_to(alb_b_ref[...], (BB, 4 * H)))
        i, f, o, gg = lstm_gates(g_ab)
        h_alb = o * jnp.tanh(i * gg)

        comb_ref[:, 0:H] = h_alf
        comb_ref[:, H:2 * H] = h_alb

    @pl.when(branch == 1)
    def _text_branch():
        tlf_b = jnp.broadcast_to(tlf_b_ref[...], (BB, 4 * H))

        def step(t, carry):
            h_t, c_t = carry
            x_t = text_ref[t].astype(mmd)
            g_t = (jnp.dot(x_t, tlf_wi_ref[...], preferred_element_type=f32)
                   + jnp.dot(h_t.astype(mmd), tlf_wh_ref[...], preferred_element_type=f32)
                   + tlf_b)
            i, f, o, gg = lstm_gates(g_t)
            c_t = f * c_t + i * gg
            return (o * jnp.tanh(c_t), c_t)

        h_tlf, _ = lax.fori_loop(0, T_t, step, (zeros, zeros), unroll=True)

        g_tb = (jnp.dot(text_ref[T_t - 1].astype(mmd), tlb_wi_ref[...],
                        preferred_element_type=f32)
                + jnp.broadcast_to(tlb_b_ref[...], (BB, 4 * H)))
        i, f, o, gg = lstm_gates(g_tb)
        h_tlb = o * jnp.tanh(i * gg)

        comb_ref[:, 0:H] = h_tlf
        comb_ref[:, H:2 * H] = h_tlb


# --------------------------------------------------------------------------------------
# Kernel 2: concat(combined) @ fc + softmax, lane-dense (padded) logits.
# --------------------------------------------------------------------------------------
def head_kernel(comb_ref, fc_w_ref, fc_b_ref, out_ref):
    f32 = jnp.float32
    logits = (jnp.dot(comb_ref[...].astype(fc_w_ref.dtype), fc_w_ref[...],
                      preferred_element_type=f32) + fc_b_ref[...])
    m = jnp.max(logits, axis=1, keepdims=True)
    e = jnp.exp(logits - m)                 # padded cols carry a -1e30 bias -> exp = 0
    denom = jnp.sum(e, axis=1, keepdims=True)
    # EUP reciprocal: rows sum to 1 only to ~1e-3 relative (intentional tradeoff).
    out_ref[...] = e * pl.reciprocal(denom, approx=True)


# --------------------------------------------------------------------------------------
# Parameters & wrapper
# --------------------------------------------------------------------------------------
def make_params(key, audio_dim, text_dim, hidden, out_dim):
    ks = jax.random.split(key, 18)
    s = 1.0 / np.sqrt(hidden)

    def init(k, shape):
        return jax.random.uniform(k, shape, jnp.float32, -1.0, 1.0) * s

    # LSTM biases are stored pre-summed (b_ih + b_hh); GRU keeps them split because
    # the n-gate needs b_hn inside the r-gated term.  Loading a real PyTorch
    # checkpoint requires doing that sum (and the gate-column permutation applied
    # in the wrapper) explicitly.
    return dict(
        gru_wi=init(ks[0], (audio_dim, 3 * hidden)),
        gru_wh=init(ks[1], (hidden, 3 * hidden)),
        gru_bi=init(ks[2], (1, 3 * hidden)),
        gru_bh=init(ks[3], (1, 3 * hidden)),
        alf_wi=init(ks[4], (hidden, 4 * hidden)),
        alf_wh=init(ks[5], (hidden, 4 * hidden)),
        alf_b=init(ks[6], (1, 4 * hidden)),
        alb_wi=init(ks[7], (hidden, 4 * hidden)),
        alb_wh=init(ks[8], (hidden, 4 * hidden)),      # unused (bwd starts from h0=0)
        alb_b=init(ks[9], (1, 4 * hidden)),
        tlf_wi=init(ks[10], (text_dim, 4 * hidden)),
        tlf_wh=init(ks[11], (hidden, 4 * hidden)),
        tlf_b=init(ks[12], (1, 4 * hidden)),
        tlb_wi=init(ks[13], (text_dim, 4 * hidden)),
        tlb_wh=init(ks[14], (hidden, 4 * hidden)),     # unused (bwd starts from h0=0)
        tlb_b=init(ks[15], (1, 4 * hidden)),
        fc_w=init(ks[16], (4 * hidden, out_dim)),
        fc_b=init(ks[17], (1, out_dim)),
    )


def _perm_lstm_gates(w):
    """Reorder PyTorch LSTM gate blocks (i, f, g, o) -> (i, f, o, g) along the last axis."""
    i, f, g, o = jnp.split(w, 4, axis=-1)
    return jnp.concatenate([i, f, o, g], axis=-1)


def audio_text_emotion_forward(audio_btd, text_btd, params):
    B, T_a, D_a = audio_btd.shape
    _, T_t, D_t = text_btd.shape
    H = params["gru_wh"].shape[0]
    out_dim = params["fc_w"].shape[1]
    mmd = MATMUL_DTYPE

    BB = _pick_batch_block(B)
    B_pad = -(-B // BB) * BB
    pad = B_pad - B
    num_blocks = B_pad // BB

    # Pad batch (padded rows are zeros, isolated by the row-wise softmax, sliced off).
    audio_p = jnp.pad(audio_btd.astype(jnp.float32), ((0, pad), (0, 0), (0, 0)))
    text_p = jnp.pad(text_btd.astype(jnp.float32), ((0, pad), (0, 0), (0, 0)))
    # Time-major (T, B_pad, D) for the recurrences.
    audio_tbd = jnp.transpose(audio_p, (1, 0, 2))
    text_tbd = jnp.transpose(text_p, (1, 0, 2))

    w = lambda k: params[k].astype(mmd)                       # plain bf16 weight
    wp = lambda k: _perm_lstm_gates(params[k]).astype(mmd)    # gate-permuted bf16 weight
    bp = lambda k: _perm_lstm_gates(params[k])                # gate-permuted f32 bias

    # FC padded to a lane-dense 128-wide output; padded logit columns get a large
    # negative bias so the softmax zeroes them; wrapper slices back to out_dim.
    fc_w_pad = jnp.pad(params["fc_w"], ((0, 0), (0, OUT_PAD - out_dim))).astype(mmd)
    fc_b_pad = jnp.pad(params["fc_b"], ((0, 0), (0, OUT_PAD - out_dim)),
                       constant_values=-1e30)

    branch_args = [
        audio_tbd, text_tbd,
        w("gru_wi"), w("gru_wh"), params["gru_bi"], params["gru_bh"],
        wp("alf_wi"), wp("alf_wh"), bp("alf_b"),
        wp("alb_wi"), bp("alb_b"),
        wp("tlf_wi"), wp("tlf_wh"), bp("tlf_b"),
        wp("tlb_wi"), bp("tlb_b"),
    ]

    def const_spec(a):
        nd = a.ndim
        # Full-array VMEM block, constant index map (same block for every program).
        # TODO(synk): at scale, single-buffer these via pipeline_mode=pl.Buffered(1).
        return pl.BlockSpec(tuple(a.shape), lambda i, br: (0,) * nd)

    in_specs = [
        pl.BlockSpec((T_a, BB, D_a), lambda i, br: (0, i, 0)),
        pl.BlockSpec((T_t, BB, D_t), lambda i, br: (0, i, 0)),
    ] + [const_spec(a) for a in branch_args[2:]]

    # TODO(synk): for long sequences, stream the time axis (memory_space=pl.ANY +
    # make_async_copy time chunks) instead of whole-sequence VMEM input blocks.
    combined = pl.pallas_call(
        branch_kernel,
        out_shape=jax.ShapeDtypeStruct((B_pad, 4 * H), jnp.float32),
        grid=(num_blocks, 2),                                  # (batch blocks, branch)
        in_specs=in_specs,
        out_specs=pl.BlockSpec((BB, 2 * H), lambda i, br: (i, br)),
        compiler_params=pltpu.CompilerParams(
            dimension_semantics=("parallel", "parallel")),     # both TCs on v7x
    )(*branch_args)

    out = pl.pallas_call(
        head_kernel,
        out_shape=jax.ShapeDtypeStruct((B_pad, OUT_PAD), jnp.float32),
        grid=(num_blocks,),
        in_specs=[
            pl.BlockSpec((BB, 4 * H), lambda i: (i, 0)),
            pl.BlockSpec((4 * H, OUT_PAD), lambda i: (0, 0)),
            pl.BlockSpec((1, OUT_PAD), lambda i: (0, 0)),
        ],
        out_specs=pl.BlockSpec((BB, OUT_PAD), lambda i: (i, 0)),
        compiler_params=pltpu.CompilerParams(
            dimension_semantics=("parallel",)),
    )(combined, fc_w_pad, fc_b_pad)

    return out[:B, :out_dim]


# --------------------------------------------------------------------------------------
# Pure-JAX reference with PyTorch GRU/BiLSTM semantics (matmul operands cast to
# `matmul_dtype` with f32 accumulation, mirroring the kernel's MXU dtype choice).
# --------------------------------------------------------------------------------------
def reference_forward(audio_btd, text_btd, p, matmul_dtype=jnp.float32):
    H = p["gru_wh"].shape[0]
    B = audio_btd.shape[0]

    def mm(a, wmat):
        return jnp.dot(a.astype(matmul_dtype), wmat.astype(matmul_dtype),
                       preferred_element_type=jnp.float32)

    def gru(x_seq):
        h = jnp.zeros((B, H), jnp.float32)
        outs = []
        for t in range(x_seq.shape[1]):
            x = x_seq[:, t, :]
            gi = mm(x, p["gru_wi"]) + p["gru_bi"]
            gh = mm(h, p["gru_wh"]) + p["gru_bh"]
            r = jax.nn.sigmoid(gi[:, :H] + gh[:, :H])
            z = jax.nn.sigmoid(gi[:, H:2 * H] + gh[:, H:2 * H])
            n = jnp.tanh(gi[:, 2 * H:] + r * gh[:, 2 * H:])
            h = (1.0 - z) * n + z * h
            outs.append(h)
        return jnp.stack(outs, axis=1)

    def lstm_cell(x, h, c, wi, wh, b):
        g = mm(x, wi) + mm(h, wh) + b
        i = jax.nn.sigmoid(g[:, :H])
        f = jax.nn.sigmoid(g[:, H:2 * H])
        gg = jnp.tanh(g[:, 2 * H:3 * H])
        o = jax.nn.sigmoid(g[:, 3 * H:])
        c = f * c + i * gg
        return o * jnp.tanh(c), c

    def bilstm_last(x_seq, pre):
        h = c = jnp.zeros((B, H), jnp.float32)
        for t in range(x_seq.shape[1]):
            h, c = lstm_cell(x_seq[:, t, :], h, c,
                             p[pre + "f_wi"], p[pre + "f_wh"], p[pre + "f_b"])
        hb, _ = lstm_cell(x_seq[:, -1, :],
                          jnp.zeros((B, H), jnp.float32), jnp.zeros((B, H), jnp.float32),
                          p[pre + "b_wi"], p[pre + "b_wh"], p[pre + "b_b"])
        return jnp.concatenate([h, hb], axis=1)

    g = gru(audio_btd.astype(jnp.float32))
    a_last = bilstm_last(g, "al")
    t_last = bilstm_last(text_btd.astype(jnp.float32), "tl")
    combined = jnp.concatenate([a_last, t_last], axis=1)
    logits = mm(combined, p["fc_w"]) + p["fc_b"]
    return jax.nn.softmax(logits, axis=1)


if __name__ == "__main__":
    B, T_a, T_t = 2, 8, 8
    audio_dim, text_dim, hidden, out_dim = 16, 24, 128, 3   # hidden_dim=128 as in the spec

    key = jax.random.PRNGKey(0)
    k_audio, k_text, k_params = jax.random.split(key, 3)
    audio = jax.random.normal(k_audio, (B, T_a, audio_dim), jnp.float32)
    text = jax.random.normal(k_text, (B, T_t, text_dim), jnp.float32)
    params = make_params(k_params, audio_dim, text_dim, hidden, out_dim)

    out = audio_text_emotion_forward(audio, text, params)
    out = jax.block_until_ready(out)

    # Reference uses the same MXU dtype for its matmul operands, so the check tightly
    # validates gate order / recurrence / softmax; bf16-vs-f32 quantization and the
    # approximate softmax reciprocal are the only intentional numeric differences.
    ref = reference_forward(audio, text, params, matmul_dtype=MATMUL_DTYPE)
    np.testing.assert_allclose(np.asarray(out), np.asarray(ref), rtol=2e-3, atol=2e-3)

    print("KERNEL_OK")
</pallas_src>

<mosaic_0001>
module attributes {stable_mosaic.version = 11 : i64} {
  func.func @branch_kernel(%arg0: i32, %arg1: i32, %arg2: memref<8x16x16xf32, #tpu.memory_space<vmem>>, %arg3: memref<8x16x24xf32, #tpu.memory_space<vmem>>, %arg4: memref<16x384xbf16, #tpu.memory_space<vmem>>, %arg5: memref<128x384xbf16, #tpu.memory_space<vmem>>, %arg6: memref<1x384xf32, #tpu.memory_space<vmem>>, %arg7: memref<1x384xf32, #tpu.memory_space<vmem>>, %arg8: memref<128x512xbf16, #tpu.memory_space<vmem>>, %arg9: memref<128x512xbf16, #tpu.memory_space<vmem>>, %arg10: memref<1x512xf32, #tpu.memory_space<vmem>>, %arg11: memref<128x512xbf16, #tpu.memory_space<vmem>>, %arg12: memref<1x512xf32, #tpu.memory_space<vmem>>, %arg13: memref<24x512xbf16, #tpu.memory_space<vmem>>, %arg14: memref<128x512xbf16, #tpu.memory_space<vmem>>, %arg15: memref<1x512xf32, #tpu.memory_space<vmem>>, %arg16: memref<24x512xbf16, #tpu.memory_space<vmem>>, %arg17: memref<1x512xf32, #tpu.memory_space<vmem>>, %arg18: memref<16x256xf32, #tpu.memory_space<vmem>>) attributes {dimension_semantics = [#tpu.dimension_semantics<parallel>, #tpu.dimension_semantics<parallel>], iteration_bounds = array<i64: 1, 2>, scalar_prefetch = 0 : i64, scratch_operands = 0 : i64, tpu.core_type = #tpu.core_type<tc>, window_params = [{transform_indices = @transform_0, window_bounds = array<i64: 8, 16, 16>}, {transform_indices = @transform_1, window_bounds = array<i64: 8, 16, 24>}, {pipeline_mode = #tpu.pipeline_mode<synchronous>, transform_indices = @transform_2, window_bounds = array<i64: 16, 384>}, {pipeline_mode = #tpu.pipeline_mode<synchronous>, transform_indices = @transform_3, window_bounds = array<i64: 128, 384>}, {pipeline_mode = #tpu.pipeline_mode<synchronous>, transform_indices = @transform_4, window_bounds = array<i64: 1, 384>}, {pipeline_mode = #tpu.pipeline_mode<synchronous>, transform_indices = @transform_5, window_bounds = array<i64: 1, 384>}, {pipeline_mode = #tpu.pipeline_mode<synchronous>, transform_indices = @transform_6, window_bounds = array<i64: 128, 512>}, {pipeline_mode = #tpu.pipeline_mode<synchronous>, transform_indices = @transform_7, window_bounds = array<i64: 128, 512>}, {pipeline_mode = #tpu.pipeline_mode<synchronous>, transform_indices = @transform_8, window_bounds = array<i64: 1, 512>}, {pipeline_mode = #tpu.pipeline_mode<synchronous>, transform_indices = @transform_9, window_bounds = array<i64: 128, 512>}, {pipeline_mode = #tpu.pipeline_mode<synchronous>, transform_indices = @transform_10, window_bounds = array<i64: 1, 512>}, {pipeline_mode = #tpu.pipeline_mode<synchronous>, transform_indices = @transform_11, window_bounds = array<i64: 24, 512>}, {pipeline_mode = #tpu.pipeline_mode<synchronous>, transform_indices = @transform_12, window_bounds = array<i64: 128, 512>}, {pipeline_mode = #tpu.pipeline_mode<synchronous>, transform_indices = @transform_13, window_bounds = array<i64: 1, 512>}, {pipeline_mode = #tpu.pipeline_mode<synchronous>, transform_indices = @transform_14, window_bounds = array<i64: 24, 512>}, {pipeline_mode = #tpu.pipeline_mode<synchronous>, transform_indices = @transform_15, window_bounds = array<i64: 1, 512>}, {transform_indices = @transform_16, window_bounds = array<i64: 16, 256>}]} {
    %cst = arith.constant 0.000000e+00 : f32
    %0 = vector.broadcast %cst : f32 to vector<16x128xf32>
    %c0_i32 = arith.constant 0 : i32
    %1 = arith.cmpi eq, %arg1, %c0_i32 : i32
    %2 = arith.extui %1 : i1 to i32
    %c0_i32_0 = arith.constant 0 : i32
    %3 = arith.cmpi ne, %2, %c0_i32_0 : i32
    scf.if %3 {
      %c0 = arith.constant 0 : index
      %c0_2 = arith.constant 0 : index
      %7 = vector.load %arg6[%c0, %c0_2] : memref<1x384xf32, #tpu.memory_space<vmem>>, vector<1x384xf32>
      %8 = vector.shape_cast %7 : vector<1x384xf32> to vector<1x384xf32>
      %9 = vector.broadcast %8 : vector<1x384xf32> to vector<16x384xf32>
      %c0_3 = arith.constant 0 : index
      %c0_4 = arith.constant 0 : index
      %10 = vector.load %arg7[%c0_3, %c0_4] : memref<1x384xf32, #tpu.memory_space<vmem>>, vector<1x384xf32>
      %11 = vector.shape_cast %10 : vector<1x384xf32> to vector<1x384xf32>
      %12 = vector.broadcast %11 : vector<1x384xf32> to vector<16x384xf32>
      %c0_5 = arith.constant 0 : index
      %c0_6 = arith.constant 0 : index
      %13 = vector.load %arg10[%c0_5, %c0_6] : memref<1x512xf32, #tpu.memory_space<vmem>>, vector<1x512xf32>
      %14 = vector.shape_cast %13 : vector<1x512xf32> to vector<1x512xf32>
      %15 = vector.broadcast %14 : vector<1x512xf32> to vector<16x512xf32>
      %c0_i32_7 = arith.constant 0 : i32
      %16 = arith.index_cast %c0_i32_7 : i32 to index
      %c0_8 = arith.constant 0 : index
      %c0_9 = arith.constant 0 : index
      %17 = vector.load %arg2[%16, %c0_8, %c0_9] : memref<8x16x16xf32, #tpu.memory_space<vmem>>, vector<1x16x16xf32>
      %18 = vector.shape_cast %17 : vector<1x16x16xf32> to vector<16x16xf32>
      %19 = arith.truncf %18 : vector<16x16xf32> to vector<16x16xbf16>
      %c0_10 = arith.constant 0 : index
      %c0_11 = arith.constant 0 : index
      %20 = vector.load %arg4[%c0_10, %c0_11] : memref<16x384xbf16, #tpu.memory_space<vmem>>, vector<16x384xbf16>
      %cst_12 = arith.constant dense<0.000000e+00> : vector<16x384xf32>
      %21 = tpu.matmul %19, %20, %cst_12 {dimension_numbers = #tpu.dot_dimension_numbers<[1], [0], [0], [1], [0, 0, 1, 1], [], []>} : vector<16x16xbf16>, vector<16x384xbf16>, vector<16x384xf32> -> vector<16x384xf32>
      %22 = arith.addf %21, %9 : vector<16x384xf32>
      %23 = arith.truncf %0 : vector<16x128xf32> to vector<16x128xbf16>
      %c0_13 = arith.constant 0 : index
      %c0_14 = arith.constant 0 : index
      %24 = vector.load %arg5[%c0_13, %c0_14] : memref<128x384xbf16, #tpu.memory_space<vmem>>, vector<128x384xbf16>
      %cst_15 = arith.constant dense<0.000000e+00> : vector<16x384xf32>
      %25 = tpu.matmul %23, %24, %cst_15 {dimension_numbers = #tpu.dot_dimension_numbers<[1], [0], [0], [1], [0, 0, 1, 1], [], []>} : vector<16x128xbf16>, vector<128x384xbf16>, vector<16x384xf32> -> vector<16x384xf32>
      %26 = arith.addf %25, %12 : vector<16x384xf32>
      %27 = vector.extract_strided_slice %22 {offsets = [0, 0], sizes = [16, 256], strides = [1, 1]} : vector<16x384xf32> to vector<16x256xf32>
      %28 = vector.extract_strided_slice %26 {offsets = [0, 0], sizes = [16, 256], strides = [1, 1]} : vector<16x384xf32> to vector<16x256xf32>
      %29 = arith.addf %27, %28 : vector<16x256xf32>
      %30 = arith.negf %29 : vector<16x256xf32>
      %31 = math.exp %30 : vector<16x256xf32>
      %cst_16 = arith.constant 1.000000e+00 : f32
      %32 = vector.broadcast %cst_16 : f32 to vector<16x256xf32>
      %33 = arith.addf %32, %31 : vector<16x256xf32>
      %34 = arith.divf %32, %33 : vector<16x256xf32>
      %35 = vector.extract_strided_slice %34 {offsets = [0, 0], sizes = [16, 128], strides = [1, 1]} : vector<16x256xf32> to vector<16x128xf32>
      %36 = vector.extract_strided_slice %34 {offsets = [0, 128], sizes = [16, 128], strides = [1, 1]} : vector<16x256xf32> to vector<16x128xf32>
      %37 = vector.extract_strided_slice %22 {offsets = [0, 256], sizes = [16, 128], strides = [1, 1]} : vector<16x384xf32> to vector<16x128xf32>
      %38 = vector.extract_strided_slice %26 {offsets = [0, 256], sizes = [16, 128], strides = [1, 1]} : vector<16x384xf32> to vector<16x128xf32>
      %39 = arith.mulf %35, %38 : vector<16x128xf32>
      %40 = arith.addf %37, %39 : vector<16x128xf32>
      %41 = math.tanh %40 : vector<16x128xf32>
      %cst_17 = arith.constant 1.000000e+00 : f32
      %42 = vector.broadcast %cst_17 : f32 to vector<16x128xf32>
      %43 = arith.subf %42, %36 : vector<16x128xf32>
      %44 = arith.mulf %43, %41 : vector<16x128xf32>
      %45 = arith.mulf %36, %0 : vector<16x128xf32>
      %46 = arith.addf %44, %45 : vector<16x128xf32>
      %47 = arith.truncf %0 : vector<16x128xf32> to vector<16x128xbf16>
      %c0_18 = arith.constant 0 : index
      %c0_19 = arith.constant 0 : index
      %48 = vector.load %arg9[%c0_18, %c0_19] : memref<128x512xbf16, #tpu.memory_space<vmem>>, vector<128x512xbf16>
      %cst_20 = arith.constant dense<0.000000e+00> : vector<16x512xf32>
      %49 = tpu.matmul %47, %48, %cst_20 {dimension_numbers = #tpu.dot_dimension_numbers<[1], [0], [0], [1], [0, 0, 1, 1], [], []>} : vector<16x128xbf16>, vector<128x512xbf16>, vector<16x512xf32> -> vector<16x512xf32>
      %50 = arith.truncf %46 : vector<16x128xf32> to vector<16x128xbf16>
      %c0_21 = arith.constant 0 : index
      %c0_22 = arith.constant 0 : index
      %51 = vector.load %arg8[%c0_21, %c0_22] : memref<128x512xbf16, #tpu.memory_space<vmem>>, vector<128x512xbf16>
      %cst_23 = arith.constant dense<0.000000e+00> : vector<16x512xf32>
      %52 = tpu.matmul %50, %51, %cst_23 {dimension_numbers = #tpu.dot_dimension_numbers<[1], [0], [0], [1], [0, 0, 1, 1], [], []>} : vector<16x128xbf16>, vector<128x512xbf16>, vector<16x512xf32> -> vector<16x512xf32>
      %53 = arith.addf %49, %52 : vector<16x512xf32>
      %54 = arith.addf %53, %15 : vector<16x512xf32>
      %55 = vector.extract_strided_slice %54 {offsets = [0, 0], sizes = [16, 384], strides = [1, 1]} : vector<16x512xf32> to vector<16x384xf32>
      %56 = arith.negf %55 : vector<16x384xf32>
      %57 = math.exp %56 : vector<16x384xf32>
      %cst_24 = arith.constant 1.000000e+00 : f32
      %58 = vector.broadcast %cst_24 : f32 to vector<16x384xf32>
      %59 = arith.addf %58, %57 : vector<16x384xf32>
      %60 = arith.divf %58, %59 : vector<16x384xf32>
      %61 = vector.extract_strided_slice %54 {offsets = [0, 384], sizes = [16, 128], strides = [1, 1]} : vector<16x512xf32> to vector<16x128xf32>
      %62 = math.tanh %61 : vector<16x128xf32>
      %63 = vector.extract_strided_slice %60 {offsets = [0, 0], sizes = [16, 128], strides = [1, 1]} : vector<16x384xf32> to vector<16x128xf32>
      %64 = vector.extract_strided_slice %60 {offsets = [0, 128], sizes = [16, 128], strides = [1, 1]} : vector<16x384xf32> to vector<16x128xf32>
      %65 = vector.extract_strided_slice %60 {offsets = [0, 256], sizes = [16, 128], strides = [1, 1]} : vector<16x384xf32> to vector<16x128xf32>
      %66 = arith.mulf %64, %0 : vector<16x128xf32>
      %67 = arith.mulf %63, %62 : vector<16x128xf32>
      %68 = arith.addf %66, %67 : vector<16x128xf32>
      %69 = math.tanh %68 : vector<16x128xf32>
      %70 = arith.mulf %65, %69 : vector<16x128xf32>
      %c1_i32_25 = arith.constant 1 : i32
      %71 = arith.index_cast %c1_i32_25 : i32 to index
      %c0_26 = arith.constant 0 : index
      %c0_27 = arith.constant 0 : index
      %72 = vector.load %arg2[%71, %c0_26, %c0_27] : memref<8x16x16xf32, #tpu.memory_space<vmem>>, vector<1x16x16xf32>
      %73 = vector.shape_cast %72 : vector<1x16x16xf32> to vector<16x16xf32>
      %74 = arith.truncf %73 : vector<16x16xf32> to vector<16x16xbf16>
      %c0_28 = arith.constant 0 : index
      %c0_29 = arith.constant 0 : index
      %75 = vector.load %arg4[%c0_28, %c0_29] : memref<16x384xbf16, #tpu.memory_space<vmem>>, vector<16x384xbf16>
      %cst_30 = arith.constant dense<0.000000e+00> : vector<16x384xf32>
      %76 = tpu.matmul %74, %75, %cst_30 {dimension_numbers = #tpu.dot_dimension_numbers<[1], [0], [0], [1], [0, 0, 1, 1], [], []>} : vector<16x16xbf16>, vector<16x384xbf16>, vector<16x384xf32> -> vector<16x384xf32>
      %77 = arith.addf %76, %9 : vector<16x384xf32>
      %78 = arith.truncf %46 : vector<16x128xf32> to vector<16x128xbf16>
      %c0_31 = arith.constant 0 : index
      %c0_32 = arith.constant 0 : index
      %79 = vector.load %arg5[%c0_31, %c0_32] : memref<128x384xbf16, #tpu.memory_space<vmem>>, vector<128x384xbf16>
      %cst_33 = arith.constant dense<0.000000e+00> : vector<16x384xf32>
      %80 = tpu.matmul %78, %79, %cst_33 {dimension_numbers = #tpu.dot_dimension_numbers<[1], [0], [0], [1], [0, 0, 1, 1], [], []>} : vector<16x128xbf16>, vector<128x384xbf16>, vector<16x384xf32> -> vector<16x384xf32>
      %81 = arith.addf %80, %12 : vector<16x384xf32>
      %82 = vector.extract_strided_slice %77 {offsets = [0, 0], sizes = [16, 256], strides = [1, 1]} : vector<16x384xf32> to vector<16x256xf32>
      %83 = vector.extract_strided_slice %81 {offsets = [0, 0], sizes = [16, 256], strides = [1, 1]} : vector<16x384xf32> to vector<16x256xf32>
      %84 = arith.addf %82, %83 : vector<16x256xf32>
      %85 = arith.negf %84 : vector<16x256xf32>
      %86 = math.exp %85 : vector<16x256xf32>
      %cst_34 = arith.constant 1.000000e+00 : f32
      %87 = vector.broadcast %cst_34 : f32 to vector<16x256xf32>
      %88 = arith.addf %87, %86 : vector<16x256xf32>
      %89 = arith.divf %87, %88 : vector<16x256xf32>
      %90 = vector.extract_strided_slice %89 {offsets = [0, 0], sizes = [16, 128], strides = [1, 1]} : vector<16x256xf32> to vector<16x128xf32>
      %91 = vector.extract_strided_slice %89 {offsets = [0, 128], sizes = [16, 128], strides = [1, 1]} : vector<16x256xf32> to vector<16x128xf32>
      %92 = vector.extract_strided_slice %77 {offsets = [0, 256], sizes = [16, 128], strides = [1, 1]} : vector<16x384xf32> to vector<16x128xf32>
      %93 = vector.extract_strided_slice %81 {offsets = [0, 256], sizes = [16, 128], strides = [1, 1]} : vector<16x384xf32> to vector<16x128xf32>
      %94 = arith.mulf %90, %93 : vector<16x128xf32>
      %95 = arith.addf %92, %94 : vector<16x128xf32>
      %96 = math.tanh %95 : vector<16x128xf32>
      %cst_35 = arith.constant 1.000000e+00 : f32
      %97 = vector.broadcast %cst_35 : f32 to vector<16x128xf32>
      %98 = arith.subf %97, %91 : vector<16x128xf32>
      %99 = arith.mulf %98, %96 : vector<16x128xf32>
      %100 = arith.mulf %91, %46 : vector<16x128xf32>
      %101 = arith.addf %99, %100 : vector<16x128xf32>
      %102 = arith.truncf %70 : vector<16x128xf32> to vector<16x128xbf16>
      %c0_36 = arith.constant 0 : index
      %c0_37 = arith.constant 0 : index
      %103 = vector.load %arg9[%c0_36, %c0_37] : memref<128x512xbf16, #tpu.memory_space<vmem>>, vector<128x512xbf16>
      %cst_38 = arith.constant dense<0.000000e+00> : vector<16x512xf32>
      %104 = tpu.matmul %102, %103, %cst_38 {dimension_numbers = #tpu.dot_dimension_numbers<[1], [0], [0], [1], [0, 0, 1, 1], [], []>} : vector<16x128xbf16>, vector<128x512xbf16>, vector<16x512xf32> -> vector<16x512xf32>
      %105 = arith.truncf %101 : vector<16x128xf32> to vector<16x128xbf16>
      %c0_39 = arith.constant 0 : index
      %c0_40 = arith.constant 0 : index
      %106 = vector.load %arg8[%c0_39, %c0_40] : memref<128x512xbf16, #tpu.memory_space<vmem>>, vector<128x512xbf16>
      %cst_41 = arith.constant dense<0.000000e+00> : vector<16x512xf32>
      %107 = tpu.matmul %105, %106, %cst_41 {dimension_numbers = #tpu.dot_dimension_numbers<[1], [0], [0], [1], [0, 0, 1, 1], [], []>} : vector<16x128xbf16>, vector<128x512xbf16>, vector<16x512xf32> -> vector<16x512xf32>
      %108 = arith.addf %104, %107 : vector<16x512xf32>
      %109 = arith.addf %108, %15 : vector<16x512xf32>
      %110 = vector.extract_strided_slice %109 {offsets = [0, 0], sizes = [16, 384], strides = [1, 1]} : vector<16x512xf32> to vector<16x384xf32>
      %111 = arith.negf %110 : vector<16x384xf32>
      %112 = math.exp %111 : vector<16x384xf32>
      %cst_42 = arith.constant 1.000000e+00 : f32
      %113 = vector.broadcast %cst_42 : f32 to vector<16x384xf32>
      %114 = arith.addf %113, %112 : vector<16x384xf32>
      %115 = arith.divf %113, %114 : vector<16x384xf32>
      %116 = vector.extract_strided_slice %109 {offsets = [0, 384], sizes = [16, 128], strides = [1, 1]} : vector<16x512xf32> to vector<16x128xf32>
      %117 = math.tanh %116 : vector<16x128xf32>
      %118 = vector.extract_strided_slice %115 {offsets = [0, 0], sizes = [16, 128], strides = [1, 1]} : vector<16x384xf32> to vector<16x128xf32>
      %119 = vector.extract_strided_slice %115 {offsets = [0, 128], sizes = [16, 128], strides = [1, 1]} : vector<16x384xf32> to vector<16x128xf32>
      %120 = vector.extract_strided_slice %115 {offsets = [0, 256], sizes = [16, 128], strides = [1, 1]} : vector<16x384xf32> to vector<16x128xf32>
      %121 = arith.mulf %119, %68 : vector<16x128xf32>
      %122 = arith.mulf %118, %117 : vector<16x128xf32>
      %123 = arith.addf %121, %122 : vector<16x128xf32>
      %124 = math.tanh %123 : vector<16x128xf32>
      %125 = arith.mulf %120, %124 : vector<16x128xf32>
      %c2_i32 = arith.constant 2 : i32
      %126 = arith.index_cast %c2_i32 : i32 to index
      %c0_43 = arith.constant 0 : index
      %c0_44 = arith.constant 0 : index
      %127 = vector.load %arg2[%126, %c0_43, %c0_44] : memref<8x16x16xf32, #tpu.memory_space<vmem>>, vector<1x16x16xf32>
      %128 = vector.shape_cast %127 : vector<1x16x16xf32> to vector<16x16xf32>
      %129 = arith.truncf %128 : vector<16x16xf32> to vector<16x16xbf16>
      %c0_45 = arith.constant 0 : index
      %c0_46 = arith.constant 0 : index
      %130 = vector.load %arg4[%c0_45, %c0_46] : memref<16x384xbf16, #tpu.memory_space<vmem>>, vector<16x384xbf16>
      %cst_47 = arith.constant dense<0.000000e+00> : vector<16x384xf32>
      %131 = tpu.matmul %129, %130, %cst_47 {dimension_numbers = #tpu.dot_dimension_numbers<[1], [0], [0], [1], [0, 0, 1, 1], [], []>} : vector<16x16xbf16>, vector<16x384xbf16>, vector<16x384xf32> -> vector<16x384xf32>
      %132 = arith.addf %131, %9 : vector<16x384xf32>
      %133 = arith.truncf %101 : vector<16x128xf32> to vector<16x128xbf16>
      %c0_48 = arith.constant 0 : index
      %c0_49 = arith.constant 0 : index
      %134 = vector.load %arg5[%c0_48, %c0_49] : memref<128x384xbf16, #tpu.memory_space<vmem>>, vector<128x384xbf16>
      %cst_50 = arith.constant dense<0.000000e+00> : vector<16x384xf32>
      %135 = tpu.matmul %133, %134, %cst_50 {dimension_numbers = #tpu.dot_dimension_numbers<[1], [0], [0], [1], [0, 0, 1, 1], [], []>} : vector<16x128xbf16>, vector<128x384xbf16>, vector<16x384xf32> -> vector<16x384xf32>
      %136 = arith.addf %135, %12 : vector<16x384xf32>
      %137 = vector.extract_strided_slice %132 {offsets = [0, 0], sizes = [16, 256], strides = [1, 1]} : vector<16x384xf32> to vector<16x256xf32>
      %138 = vector.extract_strided_slice %136 {offsets = [0, 0], sizes = [16, 256], strides = [1, 1]} : vector<16x384xf32> to vector<16x256xf32>
      %139 = arith.addf %137, %138 : vector<16x256xf32>
      %140 = arith.negf %139 : vector<16x256xf32>
      %141 = math.exp %140 : vector<16x256xf32>
      %cst_51 = arith.constant 1.000000e+00 : f32
      %142 = vector.broadcast %cst_51 : f32 to vector<16x256xf32>
      %143 = arith.addf %142, %141 : vector<16x256xf32>
      %144 = arith.divf %142, %143 : vector<16x256xf32>
      %145 = vector.extract_strided_slice %144 {offsets = [0, 0], sizes = [16, 128], strides = [1, 1]} : vector<16x256xf32> to vector<16x128xf32>
      %146 = vector.extract_strided_slice %144 {offsets = [0, 128], sizes = [16, 128], strides = [1, 1]} : vector<16x256xf32> to vector<16x128xf32>
      %147 = vector.extract_strided_slice %132 {offsets = [0, 256], sizes = [16, 128], strides = [1, 1]} : vector<16x384xf32> to vector<16x128xf32>
      %148 = vector.extract_strided_slice %136 {offsets = [0, 256], sizes = [16, 128], strides = [1, 1]} : vector<16x384xf32> to vector<16x128xf32>
      %149 = arith.mulf %145, %148 : vector<16x128xf32>
      %150 = arith.addf %147, %149 : vector<16x128xf32>
      %151 = math.tanh %150 : vector<16x128xf32>
      %cst_52 = arith.constant 1.000000e+00 : f32
      %152 = vector.broadcast %cst_52 : f32 to vector<16x128xf32>
      %153 = arith.subf %152, %146 : vector<16x128xf32>
      %154 = arith.mulf %153, %151 : vector<16x128xf32>
      %155 = arith.mulf %146, %101 : vector<16x128xf32>
      %156 = arith.addf %154, %155 : vector<16x128xf32>
      %157 = arith.truncf %125 : vector<16x128xf32> to vector<16x128xbf16>
      %c0_53 = arith.constant 0 : index
      %c0_54 = arith.constant 0 : index
      %158 = vector.load %arg9[%c0_53, %c0_54] : memref<128x512xbf16, #tpu.memory_space<vmem>>, vector<128x512xbf16>
      %cst_55 = arith.constant dense<0.000000e+00> : vector<16x512xf32>
      %159 = tpu.matmul %157, %158, %cst_55 {dimension_numbers = #tpu.dot_dimension_numbers<[1], [0], [0], [1], [0, 0, 1, 1], [], []>} : vector<16x128xbf16>, vector<128x512xbf16>, vector<16x512xf32> -> vector<16x512xf32>
      %160 = arith.truncf %156 : vector<16x128xf32> to vector<16x128xbf16>
      %c0_56 = arith.constant 0 : index
      %c0_57 = arith.constant 0 : index
      %161 = vector.load %arg8[%c0_56, %c0_57] : memref<128x512xbf16, #tpu.memory_space<vmem>>, vector<128x512xbf16>
      %cst_58 = arith.constant dense<0.000000e+00> : vector<16x512xf32>
      %162 = tpu.matmul %160, %161, %cst_58 {dimension_numbers = #tpu.dot_dimension_numbers<[1], [0], [0], [1], [0, 0, 1, 1], [], []>} : vector<16x128xbf16>, vector<128x512xbf16>, vector<16x512xf32> -> vector<16x512xf32>
      %163 = arith.addf %159, %162 : vector<16x512xf32>
      %164 = arith.addf %163, %15 : vector<16x512xf32>
      %165 = vector.extract_strided_slice %164 {offsets = [0, 0], sizes = [16, 384], strides = [1, 1]} : vector<16x512xf32> to vector<16x384xf32>
      %166 = arith.negf %165 : vector<16x384xf32>
      %167 = math.exp %166 : vector<16x384xf32>
      %cst_59 = arith.constant 1.000000e+00 : f32
      %168 = vector.broadcast %cst_59 : f32 to vector<16x384xf32>
      %169 = arith.addf %168, %167 : vector<16x384xf32>
      %170 = arith.divf %168, %169 : vector<16x384xf32>
      %171 = vector.extract_strided_slice %164 {offsets = [0, 384], sizes = [16, 128], strides = [1, 1]} : vector<16x512xf32> to vector<16x128xf32>
      %172 = math.tanh %171 : vector<16x128xf32>
      %173 = vector.extract_strided_slice %170 {offsets = [0, 0], sizes = [16, 128], strides = [1, 1]} : vector<16x384xf32> to vector<16x128xf32>
      %174 = vector.extract_strided_slice %170 {offsets = [0, 128], sizes = [16, 128], strides = [1, 1]} : vector<16x384xf32> to vector<16x128xf32>
      %175 = vector.extract_strided_slice %170 {offsets = [0, 256], sizes = [16, 128], strides = [1, 1]} : vector<16x384xf32> to vector<16x128xf32>
      %176 = arith.mulf %174, %123 : vector<16x128xf32>
      %177 = arith.mulf %173, %172 : vector<16x128xf32>
      %178 = arith.addf %176, %177 : vector<16x128xf32>
      %179 = math.tanh %178 : vector<16x128xf32>
      %180 = arith.mulf %175, %179 : vector<16x128xf32>
      %c3_i32 = arith.constant 3 : i32
      %181 = arith.index_cast %c3_i32 : i32 to index
      %c0_60 = arith.constant 0 : index
      %c0_61 = arith.constant 0 : index
      %182 = vector.load %arg2[%181, %c0_60, %c0_61] : memref<8x16x16xf32, #tpu.memory_space<vmem>>, vector<1x16x16xf32>
      %183 = vector.shape_cast %182 : vector<1x16x16xf32> to vector<16x16xf32>
      %184 = arith.truncf %183 : vector<16x16xf32> to vector<16x16xbf16>
      %c0_62 = arith.constant 0 : index
      %c0_63 = arith.constant 0 : index
      %185 = vector.load %arg4[%c0_62, %c0_63] : memref<16x384xbf16, #tpu.memory_space<vmem>>, vector<16x384xbf16>
      %cst_64 = arith.constant dense<0.000000e+00> : vector<16x384xf32>
      %186 = tpu.matmul %184, %185, %cst_64 {dimension_numbers = #tpu.dot_dimension_numbers<[1], [0], [0], [1], [0, 0, 1, 1], [], []>} : vector<16x16xbf16>, vector<16x384xbf16>, vector<16x384xf32> -> vector<16x384xf32>
      %187 = arith.addf %186, %9 : vector<16x384xf32>
      %188 = arith.truncf %156 : vector<16x128xf32> to vector<16x128xbf16>
      %c0_65 = arith.constant 0 : index
      %c0_66 = arith.constant 0 : index
      %189 = vector.load %arg5[%c0_65, %c0_66] : memref<128x384xbf16, #tpu.memory_space<vmem>>, vector<128x384xbf16>
      %cst_67 = arith.constant dense<0.000000e+00> : vector<16x384xf32>
      %190 = tpu.matmul %188, %189, %cst_67 {dimension_numbers = #tpu.dot_dimension_numbers<[1], [0], [0], [1], [0, 0, 1, 1], [], []>} : vector<16x128xbf16>, vector<128x384xbf16>, vector<16x384xf32> -> vector<16x384xf32>
      %191 = arith.addf %190, %12 : vector<16x384xf32>
      %192 = vector.extract_strided_slice %187 {offsets = [0, 0], sizes = [16, 256], strides = [1, 1]} : vector<16x384xf32> to vector<16x256xf32>
      %193 = vector.extract_strided_slice %191 {offsets = [0, 0], sizes = [16, 256], strides = [1, 1]} : vector<16x384xf32> to vector<16x256xf32>
      %194 = arith.addf %192, %193 : vector<16x256xf32>
      %195 = arith.negf %194 : vector<16x256xf32>
      %196 = math.exp %195 : vector<16x256xf32>
      %cst_68 = arith.constant 1.000000e+00 : f32
      %197 = vector.broadcast %cst_68 : f32 to vector<16x256xf32>
      %198 = arith.addf %197, %196 : vector<16x256xf32>
      %199 = arith.divf %197, %198 : vector<16x256xf32>
      %200 = vector.extract_strided_slice %199 {offsets = [0, 0], sizes = [16, 128], strides = [1, 1]} : vector<16x256xf32> to vector<16x128xf32>
      %201 = vector.extract_strided_slice %199 {offsets = [0, 128], sizes = [16, 128], strides = [1, 1]} : vector<16x256xf32> to vector<16x128xf32>
      %202 = vector.extract_strided_slice %187 {offsets = [0, 256], sizes = [16, 128], strides = [1, 1]} : vector<16x384xf32> to vector<16x128xf32>
      %203 = vector.extract_strided_slice %191 {offsets = [0, 256], sizes = [16, 128], strides = [1, 1]} : vector<16x384xf32> to vector<16x128xf32>
      %204 = arith.mulf %200, %203 : vector<16x128xf32>
      %205 = arith.addf %202, %204 : vector<16x128xf32>
      %206 = math.tanh %205 : vector<16x128xf32>
      %cst_69 = arith.constant 1.000000e+00 : f32
      %207 = vector.broadcast %cst_69 : f32 to vector<16x128xf32>
      %208 = arith.subf %207, %201 : vector<16x128xf32>
      %209 = arith.mulf %208, %206 : vector<16x128xf32>
      %210 = arith.mulf %201, %156 : vector<16x128xf32>
      %211 = arith.addf %209, %210 : vector<16x128xf32>
      %212 = arith.truncf %180 : vector<16x128xf32> to vector<16x128xbf16>
      %c0_70 = arith.constant 0 : index
      %c0_71 = arith.constant 0 : index
      %213 = vector.load %arg9[%c0_70, %c0_71] : memref<128x512xbf16, #tpu.memory_space<vmem>>, vector<128x512xbf16>
      %cst_72 = arith.constant dense<0.000000e+00> : vector<16x512xf32>
      %214 = tpu.matmul %212, %213, %cst_72 {dimension_numbers = #tpu.dot_dimension_numbers<[1], [0], [0], [1], [0, 0, 1, 1], [], []>} : vector<16x128xbf16>, vector<128x512xbf16>, vector<16x512xf32> -> vector<16x512xf32>
      %215 = arith.truncf %211 : vector<16x128xf32> to vector<16x128xbf16>
      %c0_73 = arith.constant 0 : index
      %c0_74 = arith.constant 0 : index
      %216 = vector.load %arg8[%c0_73, %c0_74] : memref<128x512xbf16, #tpu.memory_space<vmem>>, vector<128x512xbf16>
      %cst_75 = arith.constant dense<0.000000e+00> : vector<16x512xf32>
      %217 = tpu.matmul %215, %216, %cst_75 {dimension_numbers = #tpu.dot_dimension_numbers<[1], [0], [0], [1], [0, 0, 1, 1], [], []>} : vector<16x128xbf16>, vector<128x512xbf16>, vector<16x512xf32> -> vector<16x512xf32>
      %218 = arith.addf %214, %217 : vector<16x512xf32>
      %219 = arith.addf %218, %15 : vector<16x512xf32>
      %220 = vector.extract_strided_slice %219 {offsets = [0, 0], sizes = [16, 384], strides = [1, 1]} : vector<16x512xf32> to vector<16x384xf32>
      %221 = arith.negf %220 : vector<16x384xf32>
      %222 = math.exp %221 : vector<16x384xf32>
      %cst_76 = arith.constant 1.000000e+00 : f32
      %223 = vector.broadcast %cst_76 : f32 to vector<16x384xf32>
      %224 = arith.addf %223, %222 : vector<16x384xf32>
      %225 = arith.divf %223, %224 : vector<16x384xf32>
      %226 = vector.extract_strided_slice %219 {offsets = [0, 384], sizes = [16, 128], strides = [1, 1]} : vector<16x512xf32> to vector<16x128xf32>
      %227 = math.tanh %226 : vector<16x128xf32>
      %228 = vector.extract_strided_slice %225 {offsets = [0, 0], sizes = [16, 128], strides = [1, 1]} : vector<16x384xf32> to vector<16x128xf32>
      %229 = vector.extract_strided_slice %225 {offsets = [0, 128], sizes = [16, 128], strides = [1, 1]} : vector<16x384xf32> to vector<16x128xf32>
      %230 = vector.extract_strided_slice %225 {offsets = [0, 256], sizes = [16, 128], strides = [1, 1]} : vector<16x384xf32> to vector<16x128xf32>
      %231 = arith.mulf %229, %178 : vector<16x128xf32>
      %232 = arith.mulf %228, %227 : vector<16x128xf32>
      %233 = arith.addf %231, %232 : vector<16x128xf32>
      %234 = math.tanh %233 : vector<16x128xf32>
      %235 = arith.mulf %230, %234 : vector<16x128xf32>
      %c4_i32 = arith.constant 4 : i32
      %236 = arith.index_cast %c4_i32 : i32 to index
      %c0_77 = arith.constant 0 : index
      %c0_78 = arith.constant 0 : index
      %237 = vector.load %arg2[%236, %c0_77, %c0_78] : memref<8x16x16xf32, #tpu.memory_space<vmem>>, vector<1x16x16xf32>
      %238 = vector.shape_cast %237 : vector<1x16x16xf32> to vector<16x16xf32>
      %239 = arith.truncf %238 : vector<16x16xf32> to vector<16x16xbf16>
      %c0_79 = arith.constant 0 : index
      %c0_80 = arith.constant 0 : index
      %240 = vector.load %arg4[%c0_79, %c0_80] : memref<16x384xbf16, #tpu.memory_space<vmem>>, vector<16x384xbf16>
      %cst_81 = arith.constant dense<0.000000e+00> : vector<16x384xf32>
      %241 = tpu.matmul %239, %240, %cst_81 {dimension_numbers = #tpu.dot_dimension_numbers<[1], [0], [0], [1], [0, 0, 1, 1], [], []>} : vector<16x16xbf16>, vector<16x384xbf16>, vector<16x384xf32> -> vector<16x384xf32>
      %242 = arith.addf %241, %9 : vector<16x384xf32>
      %243 = arith.truncf %211 : vector<16x128xf32> to vector<16x128xbf16>
      %c0_82 = arith.constant 0 : index
      %c0_83 = arith.constant 0 : index
      %244 = vector.load %arg5[%c0_82, %c0_83] : memref<128x384xbf16, #tpu.memory_space<vmem>>, vector<128x384xbf16>
      %cst_84 = arith.constant dense<0.000000e+00> : vector<16x384xf32>
      %245 = tpu.matmul %243, %244, %cst_84 {dimension_numbers = #tpu.dot_dimension_numbers<[1], [0], [0], [1], [0, 0, 1, 1], [], []>} : vector<16x128xbf16>, vector<128x384xbf16>, vector<16x384xf32> -> vector<16x384xf32>
      %246 = arith.addf %245, %12 : vector<16x384xf32>
      %247 = vector.extract_strided_slice %242 {offsets = [0, 0], sizes = [16, 256], strides = [1, 1]} : vector<16x384xf32> to vector<16x256xf32>
      %248 = vector.extract_strided_slice %246 {offsets = [0, 0], sizes = [16, 256], strides = [1, 1]} : vector<16x384xf32> to vector<16x256xf32>
      %249 = arith.addf %247, %248 : vector<16x256xf32>
      %250 = arith.negf %249 : vector<16x256xf32>
      %251 = math.exp %250 : vector<16x256xf32>
      %cst_85 = arith.constant 1.000000e+00 : f32
      %252 = vector.broadcast %cst_85 : f32 to vector<16x256xf32>
      %253 = arith.addf %252, %251 : vector<16x256xf32>
      %254 = arith.divf %252, %253 : vector<16x256xf32>
      %255 = vector.extract_strided_slice %254 {offsets = [0, 0], sizes = [16, 128], strides = [1, 1]} : vector<16x256xf32> to vector<16x128xf32>
      %256 = vector.extract_strided_slice %254 {offsets = [0, 128], sizes = [16, 128], strides = [1, 1]} : vector<16x256xf32> to vector<16x128xf32>
      %257 = vector.extract_strided_slice %242 {offsets = [0, 256], sizes = [16, 128], strides = [1, 1]} : vector<16x384xf32> to vector<16x128xf32>
      %258 = vector.extract_strided_slice %246 {offsets = [0, 256], sizes = [16, 128], strides = [1, 1]} : vector<16x384xf32> to vector<16x128xf32>
      %259 = arith.mulf %255, %258 : vector<16x128xf32>
      %260 = arith.addf %257, %259 : vector<16x128xf32>
      %261 = math.tanh %260 : vector<16x128xf32>
      %cst_86 = arith.constant 1.000000e+00 : f32
      %262 = vector.broadcast %cst_86 : f32 to vector<16x128xf32>
      %263 = arith.subf %262, %256 : vector<16x128xf32>
      %264 = arith.mulf %263, %261 : vector<16x128xf32>
      %265 = arith.mulf %256, %211 : vector<16x128xf32>
      %266 = arith.addf %264, %265 : vector<16x128xf32>
      %267 = arith.truncf %235 : vector<16x128xf32> to vector<16x128xbf16>
      %c0_87 = arith.constant 0 : index
      %c0_88 = arith.constant 0 : index
      %268 = vector.load %arg9[%c0_87, %c0_88] : memref<128x512xbf16, #tpu.memory_space<vmem>>, vector<128x512xbf16>
      %cst_89 = arith.constant dense<0.000000e+00> : vector<16x512xf32>
      %269 = tpu.matmul %267, %268, %cst_89 {dimension_numbers = #tpu.dot_dimension_numbers<[1], [0], [0], [1], [0, 0, 1, 1], [], []>} : vector<16x128xbf16>, vector<128x512xbf16>, vector<16x512xf32> -> vector<16x512xf32>
      %270 = arith.truncf %266 : vector<16x128xf32> to vector<16x128xbf16>
      %c0_90 = arith.constant 0 : index
      %c0_91 = arith.constant 0 : index
      %271 = vector.load %arg8[%c0_90, %c0_91] : memref<128x512xbf16, #tpu.memory_space<vmem>>, vector<128x512xbf16>
      %cst_92 = arith.constant dense<0.000000e+00> : vector<16x512xf32>
      %272 = tpu.matmul %270, %271, %cst_92 {dimension_numbers = #tpu.dot_dimension_numbers<[1], [0], [0], [1], [0, 0, 1, 1], [], []>} : vector<16x128xbf16>, vector<128x512xbf16>, vector<16x512xf32> -> vector<16x512xf32>
      %273 = arith.addf %269, %272 : vector<16x512xf32>
      %274 = arith.addf %273, %15 : vector<16x512xf32>
      %275 = vector.extract_strided_slice %274 {offsets = [0, 0], sizes = [16, 384], strides = [1, 1]} : vector<16x512xf32> to vector<16x384xf32>
      %276 = arith.negf %275 : vector<16x384xf32>
      %277 = math.exp %276 : vector<16x384xf32>
      %cst_93 = arith.constant 1.000000e+00 : f32
      %278 = vector.broadcast %cst_93 : f32 to vector<16x384xf32>
      %279 = arith.addf %278, %277 : vector<16x384xf32>
      %280 = arith.divf %278, %279 : vector<16x384xf32>
      %281 = vector.extract_strided_slice %274 {offsets = [0, 384], sizes = [16, 128], strides = [1, 1]} : vector<16x512xf32> to vector<16x128xf32>
      %282 = math.tanh %281 : vector<16x128xf32>
      %283 = vector.extract_strided_slice %280 {offsets = [0, 0], sizes = [16, 128], strides = [1, 1]} : vector<16x384xf32> to vector<16x128xf32>
      %284 = vector.extract_strided_slice %280 {offsets = [0, 128], sizes = [16, 128], strides = [1, 1]} : vector<16x384xf32> to vector<16x128xf32>
      %285 = vector.extract_strided_slice %280 {offsets = [0, 256], sizes = [16, 128], strides = [1, 1]} : vector<16x384xf32> to vector<16x128xf32>
      %286 = arith.mulf %284, %233 : vector<16x128xf32>
      %287 = arith.mulf %283, %282 : vector<16x128xf32>
      %288 = arith.addf %286, %287 : vector<16x128xf32>
      %289 = math.tanh %288 : vector<16x128xf32>
      %290 = arith.mulf %285, %289 : vector<16x128xf32>
      %c5_i32 = arith.constant 5 : i32
      %291 = arith.index_cast %c5_i32 : i32 to index
      %c0_94 = arith.constant 0 : index
      %c0_95 = arith.constant 0 : index
      %292 = vector.load %arg2[%291, %c0_94, %c0_95] : memref<8x16x16xf32, #tpu.memory_space<vmem>>, vector<1x16x16xf32>
      %293 = vector.shape_cast %292 : vector<1x16x16xf32> to vector<16x16xf32>
      %294 = arith.truncf %293 : vector<16x16xf32> to vector<16x16xbf16>
      %c0_96 = arith.constant 0 : index
      %c0_97 = arith.constant 0 : index
      %295 = vector.load %arg4[%c0_96, %c0_97] : memref<16x384xbf16, #tpu.memory_space<vmem>>, vector<16x384xbf16>
      %cst_98 = arith.constant dense<0.000000e+00> : vector<16x384xf32>
      %296 = tpu.matmul %294, %295, %cst_98 {dimension_numbers = #tpu.dot_dimension_numbers<[1], [0], [0], [1], [0, 0, 1, 1], [], []>} : vector<16x16xbf16>, vector<16x384xbf16>, vector<16x384xf32> -> vector<16x384xf32>
      %297 = arith.addf %296, %9 : vector<16x384xf32>
      %298 = arith.truncf %266 : vector<16x128xf32> to vector<16x128xbf16>
      %c0_99 = arith.constant 0 : index
      %c0_100 = arith.constant 0 : index
      %299 = vector.load %arg5[%c0_99, %c0_100] : memref<128x384xbf16, #tpu.memory_space<vmem>>, vector<128x384xbf16>
      %cst_101 = arith.constant dense<0.000000e+00> : vector<16x384xf32>
      %300 = tpu.matmul %298, %299, %cst_101 {dimension_numbers = #tpu.dot_dimension_numbers<[1], [0], [0], [1], [0, 0, 1, 1], [], []>} : vector<16x128xbf16>, vector<128x384xbf16>, vector<16x384xf32> -> vector<16x384xf32>
      %301 = arith.addf %300, %12 : vector<16x384xf32>
      %302 = vector.extract_strided_slice %297 {offsets = [0, 0], sizes = [16, 256], strides = [1, 1]} : vector<16x384xf32> to vector<16x256xf32>
      %303 = vector.extract_strided_slice %301 {offsets = [0, 0], sizes = [16, 256], strides = [1, 1]} : vector<16x384xf32> to vector<16x256xf32>
      %304 = arith.addf %302, %303 : vector<16x256xf32>
      %305 = arith.negf %304 : vector<16x256xf32>
      %306 = math.exp %305 : vector<16x256xf32>
      %cst_102 = arith.constant 1.000000e+00 : f32
      %307 = vector.broadcast %cst_102 : f32 to vector<16x256xf32>
      %308 = arith.addf %307, %306 : vector<16x256xf32>
      %309 = arith.divf %307, %308 : vector<16x256xf32>
      %310 = vector.extract_strided_slice %309 {offsets = [0, 0], sizes = [16, 128], strides = [1, 1]} : vector<16x256xf32> to vector<16x128xf32>
      %311 = vector.extract_strided_slice %309 {offsets = [0, 128], sizes = [16, 128], strides = [1, 1]} : vector<16x256xf32> to vector<16x128xf32>
      %312 = vector.extract_strided_slice %297 {offsets = [0, 256], sizes = [16, 128], strides = [1, 1]} : vector<16x384xf32> to vector<16x128xf32>
      %313 = vector.extract_strided_slice %301 {offsets = [0, 256], sizes = [16, 128], strides = [1, 1]} : vector<16x384xf32> to vector<16x128xf32>
      %314 = arith.mulf %310, %313 : vector<16x128xf32>
      %315 = arith.addf %312, %314 : vector<16x128xf32>
      %316 = math.tanh %315 : vector<16x128xf32>
      %cst_103 = arith.constant 1.000000e+00 : f32
      %317 = vector.broadcast %cst_103 : f32 to vector<16x128xf32>
      %318 = arith.subf %317, %311 : vector<16x128xf32>
      %319 = arith.mulf %318, %316 : vector<16x128xf32>
      %320 = arith.mulf %311, %266 : vector<16x128xf32>
      %321 = arith.addf %319, %320 : vector<16x128xf32>
      %322 = arith.truncf %290 : vector<16x128xf32> to vector<16x128xbf16>
      %c0_104 = arith.constant 0 : index
      %c0_105 = arith.constant 0 : index
      %323 = vector.load %arg9[%c0_104, %c0_105] : memref<128x512xbf16, #tpu.memory_space<vmem>>, vector<128x512xbf16>
      %cst_106 = arith.constant dense<0.000000e+00> : vector<16x512xf32>
      %324 = tpu.matmul %322, %323, %cst_106 {dimension_numbers = #tpu.dot_dimension_numbers<[1], [0], [0], [1], [0, 0, 1, 1], [], []>} : vector<16x128xbf16>, vector<128x512xbf16>, vector<16x512xf32> -> vector<16x512xf32>
      %325 = arith.truncf %321 : vector<16x128xf32> to vector<16x128xbf16>
      %c0_107 = arith.constant 0 : index
      %c0_108 = arith.constant 0 : index
      %326 = vector.load %arg8[%c0_107, %c0_108] : memref<128x512xbf16, #tpu.memory_space<vmem>>, vector<128x512xbf16>
      %cst_109 = arith.constant dense<0.000000e+00> : vector<16x512xf32>
      %327 = tpu.matmul %325, %326, %cst_109 {dimension_numbers = #tpu.dot_dimension_numbers<[1], [0], [0], [1], [0, 0, 1, 1], [], []>} : vector<16x128xbf16>, vector<128x512xbf16>, vector<16x512xf32> -> vector<16x512xf32>
      %328 = arith.addf %324, %327 : vector<16x512xf32>
      %329 = arith.addf %328, %15 : vector<16x512xf32>
      %330 = vector.extract_strided_slice %329 {offsets = [0, 0], sizes = [16, 384], strides = [1, 1]} : vector<16x512xf32> to vector<16x384xf32>
      %331 = arith.negf %330 : vector<16x384xf32>
      %332 = math.exp %331 : vector<16x384xf32>
      %cst_110 = arith.constant 1.000000e+00 : f32
      %333 = vector.broadcast %cst_110 : f32 to vector<16x384xf32>
      %334 = arith.addf %333, %332 : vector<16x384xf32>
      %335 = arith.divf %333, %334 : vector<16x384xf32>
      %336 = vector.extract_strided_slice %329 {offsets = [0, 384], sizes = [16, 128], strides = [1, 1]} : vector<16x512xf32> to vector<16x128xf32>
      %337 = math.tanh %336 : vector<16x128xf32>
      %338 = vector.extract_strided_slice %335 {offsets = [0, 0], sizes = [16, 128], strides = [1, 1]} : vector<16x384xf32> to vector<16x128xf32>
      %339 = vector.extract_strided_slice %335 {offsets = [0, 128], sizes = [16, 128], strides = [1, 1]} : vector<16x384xf32> to vector<16x128xf32>
      %340 = vector.extract_strided_slice %335 {offsets = [0, 256], sizes = [16, 128], strides = [1, 1]} : vector<16x384xf32> to vector<16x128xf32>
      %341 = arith.mulf %339, %288 : vector<16x128xf32>
      %342 = arith.mulf %338, %337 : vector<16x128xf32>
      %343 = arith.addf %341, %342 : vector<16x128xf32>
      %344 = math.tanh %343 : vector<16x128xf32>
      %345 = arith.mulf %340, %344 : vector<16x128xf32>
      %c6_i32 = arith.constant 6 : i32
      %346 = arith.index_cast %c6_i32 : i32 to index
      %c0_111 = arith.constant 0 : index
      %c0_112 = arith.constant 0 : index
      %347 = vector.load %arg2[%346, %c0_111, %c0_112] : memref<8x16x16xf32, #tpu.memory_space<vmem>>, vector<1x16x16xf32>
      %348 = vector.shape_cast %347 : vector<1x16x16xf32> to vector<16x16xf32>
      %349 = arith.truncf %348 : vector<16x16xf32> to vector<16x16xbf16>
      %c0_113 = arith.constant 0 : index
      %c0_114 = arith.constant 0 : index
      %350 = vector.load %arg4[%c0_113, %c0_114] : memref<16x384xbf16, #tpu.memory_space<vmem>>, vector<16x384xbf16>
      %cst_115 = arith.constant dense<0.000000e+00> : vector<16x384xf32>
      %351 = tpu.matmul %349, %350, %cst_115 {dimension_numbers = #tpu.dot_dimension_numbers<[1], [0], [0], [1], [0, 0, 1, 1], [], []>} : vector<16x16xbf16>, vector<16x384xbf16>, vector<16x384xf32> -> vector<16x384xf32>
      %352 = arith.addf %351, %9 : vector<16x384xf32>
      %353 = arith.truncf %321 : vector<16x128xf32> to vector<16x128xbf16>
      %c0_116 = arith.constant 0 : index
      %c0_117 = arith.constant 0 : index
      %354 = vector.load %arg5[%c0_116, %c0_117] : memref<128x384xbf16, #tpu.memory_space<vmem>>, vector<128x384xbf16>
      %cst_118 = arith.constant dense<0.000000e+00> : vector<16x384xf32>
      %355 = tpu.matmul %353, %354, %cst_118 {dimension_numbers = #tpu.dot_dimension_numbers<[1], [0], [0], [1], [0, 0, 1, 1], [], []>} : vector<16x128xbf16>, vector<128x384xbf16>, vector<16x384xf32> -> vector<16x384xf32>
      %356 = arith.addf %355, %12 : vector<16x384xf32>
      %357 = vector.extract_strided_slice %352 {offsets = [0, 0], sizes = [16, 256], strides = [1, 1]} : vector<16x384xf32> to vector<16x256xf32>
      %358 = vector.extract_strided_slice %356 {offsets = [0, 0], sizes = [16, 256], strides = [1, 1]} : vector<16x384xf32> to vector<16x256xf32>
      %359 = arith.addf %357, %358 : vector<16x256xf32>
      %360 = arith.negf %359 : vector<16x256xf32>
      %361 = math.exp %360 : vector<16x256xf32>
      %cst_119 = arith.constant 1.000000e+00 : f32
      %362 = vector.broadcast %cst_119 : f32 to vector<16x256xf32>
      %363 = arith.addf %362, %361 : vector<16x256xf32>
      %364 = arith.divf %362, %363 : vector<16x256xf32>
      %365 = vector.extract_strided_slice %364 {offsets = [0, 0], sizes = [16, 128], strides = [1, 1]} : vector<16x256xf32> to vector<16x128xf32>
      %366 = vector.extract_strided_slice %364 {offsets = [0, 128], sizes = [16, 128], strides = [1, 1]} : vector<16x256xf32> to vector<16x128xf32>
      %367 = vector.extract_strided_slice %352 {offsets = [0, 256], sizes = [16, 128], strides = [1, 1]} : vector<16x384xf32> to vector<16x128xf32>
      %368 = vector.extract_strided_slice %356 {offsets = [0, 256], sizes = [16, 128], strides = [1, 1]} : vector<16x384xf32> to vector<16x128xf32>
      %369 = arith.mulf %365, %368 : vector<16x128xf32>
      %370 = arith.addf %367, %369 : vector<16x128xf32>
      %371 = math.tanh %370 : vector<16x128xf32>
      %cst_120 = arith.constant 1.000000e+00 : f32
      %372 = vector.broadcast %cst_120 : f32 to vector<16x128xf32>
      %373 = arith.subf %372, %366 : vector<16x128xf32>
      %374 = arith.mulf %373, %371 : vector<16x128xf32>
      %375 = arith.mulf %366, %321 : vector<16x128xf32>
      %376 = arith.addf %374, %375 : vector<16x128xf32>
      %377 = arith.truncf %345 : vector<16x128xf32> to vector<16x128xbf16>
      %c0_121 = arith.constant 0 : index
      %c0_122 = arith.constant 0 : index
      %378 = vector.load %arg9[%c0_121, %c0_122] : memref<128x512xbf16, #tpu.memory_space<vmem>>, vector<128x512xbf16>
      %cst_123 = arith.constant dense<0.000000e+00> : vector<16x512xf32>
      %379 = tpu.matmul %377, %378, %cst_123 {dimension_numbers = #tpu.dot_dimension_numbers<[1], [0], [0], [1], [0, 0, 1, 1], [], []>} : vector<16x128xbf16>, vector<128x512xbf16>, vector<16x512xf32> -> vector<16x512xf32>
      %380 = arith.truncf %376 : vector<16x128xf32> to vector<16x128xbf16>
      %c0_124 = arith.constant 0 : index
      %c0_125 = arith.constant 0 : index
      %381 = vector.load %arg8[%c0_124, %c0_125] : memref<128x512xbf16, #tpu.memory_space<vmem>>, vector<128x512xbf16>
      %cst_126 = arith.constant dense<0.000000e+00> : vector<16x512xf32>
      %382 = tpu.matmul %380, %381, %cst_126 {dimension_numbers = #tpu.dot_dimension_numbers<[1], [0], [0], [1], [0, 0, 1, 1], [], []>} : vector<16x128xbf16>, vector<128x512xbf16>, vector<16x512xf32> -> vector<16x512xf32>
      %383 = arith.addf %379, %382 : vector<16x512xf32>
      %384 = arith.addf %383, %15 : vector<16x512xf32>
      %385 = vector.extract_strided_slice %384 {offsets = [0, 0], sizes = [16, 384], strides = [1, 1]} : vector<16x512xf32> to vector<16x384xf32>
      %386 = arith.negf %385 : vector<16x384xf32>
      %387 = math.exp %386 : vector<16x384xf32>
      %cst_127 = arith.constant 1.000000e+00 : f32
      %388 = vector.broadcast %cst_127 : f32 to vector<16x384xf32>
      %389 = arith.addf %388, %387 : vector<16x384xf32>
      %390 = arith.divf %388, %389 : vector<16x384xf32>
      %391 = vector.extract_strided_slice %384 {offsets = [0, 384], sizes = [16, 128], strides = [1, 1]} : vector<16x512xf32> to vector<16x128xf32>
      %392 = math.tanh %391 : vector<16x128xf32>
      %393 = vector.extract_strided_slice %390 {offsets = [0, 0], sizes = [16, 128], strides = [1, 1]} : vector<16x384xf32> to vector<16x128xf32>
      %394 = vector.extract_strided_slice %390 {offsets = [0, 128], sizes = [16, 128], strides = [1, 1]} : vector<16x384xf32> to vector<16x128xf32>
      %395 = vector.extract_strided_slice %390 {offsets = [0, 256], sizes = [16, 128], strides = [1, 1]} : vector<16x384xf32> to vector<16x128xf32>
      %396 = arith.mulf %394, %343 : vector<16x128xf32>
      %397 = arith.mulf %393, %392 : vector<16x128xf32>
      %398 = arith.addf %396, %397 : vector<16x128xf32>
      %399 = math.tanh %398 : vector<16x128xf32>
      %400 = arith.mulf %395, %399 : vector<16x128xf32>
      %c7_i32 = arith.constant 7 : i32
      %401 = arith.index_cast %c7_i32 : i32 to index
      %c0_128 = arith.constant 0 : index
      %c0_129 = arith.constant 0 : index
      %402 = vector.load %arg2[%401, %c0_128, %c0_129] : memref<8x16x16xf32, #tpu.memory_space<vmem>>, vector<1x16x16xf32>
      %403 = vector.shape_cast %402 : vector<1x16x16xf32> to vector<16x16xf32>
      %404 = arith.truncf %403 : vector<16x16xf32> to vector<16x16xbf16>
      %c0_130 = arith.constant 0 : index
      %c0_131 = arith.constant 0 : index
      %405 = vector.load %arg4[%c0_130, %c0_131] : memref<16x384xbf16, #tpu.memory_space<vmem>>, vector<16x384xbf16>
      %cst_132 = arith.constant dense<0.000000e+00> : vector<16x384xf32>
      %406 = tpu.matmul %404, %405, %cst_132 {dimension_numbers = #tpu.dot_dimension_numbers<[1], [0], [0], [1], [0, 0, 1, 1], [], []>} : vector<16x16xbf16>, vector<16x384xbf16>, vector<16x384xf32> -> vector<16x384xf32>
      %407 = arith.addf %406, %9 : vector<16x384xf32>
      %408 = arith.truncf %376 : vector<16x128xf32> to vector<16x128xbf16>
      %c0_133 = arith.constant 0 : index
      %c0_134 = arith.constant 0 : index
      %409 = vector.load %arg5[%c0_133, %c0_134] : memref<128x384xbf16, #tpu.memory_space<vmem>>, vector<128x384xbf16>
      %cst_135 = arith.constant dense<0.000000e+00> : vector<16x384xf32>
      %410 = tpu.matmul %408, %409, %cst_135 {dimension_numbers = #tpu.dot_dimension_numbers<[1], [0], [0], [1], [0, 0, 1, 1], [], []>} : vector<16x128xbf16>, vector<128x384xbf16>, vector<16x384xf32> -> vector<16x384xf32>
      %411 = arith.addf %410, %12 : vector<16x384xf32>
      %412 = vector.extract_strided_slice %407 {offsets = [0, 0], sizes = [16, 256], strides = [1, 1]} : vector<16x384xf32> to vector<16x256xf32>
      %413 = vector.extract_strided_slice %411 {offsets = [0, 0], sizes = [16, 256], strides = [1, 1]} : vector<16x384xf32> to vector<16x256xf32>
      %414 = arith.addf %412, %413 : vector<16x256xf32>
      %415 = arith.negf %414 : vector<16x256xf32>
      %416 = math.exp %415 : vector<16x256xf32>
      %cst_136 = arith.constant 1.000000e+00 : f32
      %417 = vector.broadcast %cst_136 : f32 to vector<16x256xf32>
      %418 = arith.addf %417, %416 : vector<16x256xf32>
      %419 = arith.divf %417, %418 : vector<16x256xf32>
      %420 = vector.extract_strided_slice %419 {offsets = [0, 0], sizes = [16, 128], strides = [1, 1]} : vector<16x256xf32> to vector<16x128xf32>
      %421 = vector.extract_strided_slice %419 {offsets = [0, 128], sizes = [16, 128], strides = [1, 1]} : vector<16x256xf32> to vector<16x128xf32>
      %422 = vector.extract_strided_slice %407 {offsets = [0, 256], sizes = [16, 128], strides = [1, 1]} : vector<16x384xf32> to vector<16x128xf32>
      %423 = vector.extract_strided_slice %411 {offsets = [0, 256], sizes = [16, 128], strides = [1, 1]} : vector<16x384xf32> to vector<16x128xf32>
      %424 = arith.mulf %420, %423 : vector<16x128xf32>
      %425 = arith.addf %422, %424 : vector<16x128xf32>
      %426 = math.tanh %425 : vector<16x128xf32>
      %cst_137 = arith.constant 1.000000e+00 : f32
      %427 = vector.broadcast %cst_137 : f32 to vector<16x128xf32>
      %428 = arith.subf %427, %421 : vector<16x128xf32>
      %429 = arith.mulf %428, %426 : vector<16x128xf32>
      %430 = arith.mulf %421, %376 : vector<16x128xf32>
      %431 = arith.addf %429, %430 : vector<16x128xf32>
      %432 = arith.truncf %400 : vector<16x128xf32> to vector<16x128xbf16>
      %c0_138 = arith.constant 0 : index
      %c0_139 = arith.constant 0 : index
      %433 = vector.load %arg9[%c0_138, %c0_139] : memref<128x512xbf16, #tpu.memory_space<vmem>>, vector<128x512xbf16>
      %cst_140 = arith.constant dense<0.000000e+00> : vector<16x512xf32>
      %434 = tpu.matmul %432, %433, %cst_140 {dimension_numbers = #tpu.dot_dimension_numbers<[1], [0], [0], [1], [0, 0, 1, 1], [], []>} : vector<16x128xbf16>, vector<128x512xbf16>, vector<16x512xf32> -> vector<16x512xf32>
      %435 = arith.truncf %431 : vector<16x128xf32> to vector<16x128xbf16>
      %c0_141 = arith.constant 0 : index
      %c0_142 = arith.constant 0 : index
      %436 = vector.load %arg8[%c0_141, %c0_142] : memref<128x512xbf16, #tpu.memory_space<vmem>>, vector<128x512xbf16>
      %cst_143 = arith.constant dense<0.000000e+00> : vector<16x512xf32>
      %437 = tpu.matmul %435, %436, %cst_143 {dimension_numbers = #tpu.dot_dimension_numbers<[1], [0], [0], [1], [0, 0, 1, 1], [], []>} : vector<16x128xbf16>, vector<128x512xbf16>, vector<16x512xf32> -> vector<16x512xf32>
      %438 = arith.addf %434, %437 : vector<16x512xf32>
      %439 = arith.addf %438, %15 : vector<16x512xf32>
      %440 = vector.extract_strided_slice %439 {offsets = [0, 0], sizes = [16, 384], strides = [1, 1]} : vector<16x512xf32> to vector<16x384xf32>
      %441 = arith.negf %440 : vector<16x384xf32>
      %442 = math.exp %441 : vector<16x384xf32>
      %cst_144 = arith.constant 1.000000e+00 : f32
      %443 = vector.broadcast %cst_144 : f32 to vector<16x384xf32>
      %444 = arith.addf %443, %442 : vector<16x384xf32>
      %445 = arith.divf %443, %444 : vector<16x384xf32>
      %446 = vector.extract_strided_slice %439 {offsets = [0, 384], sizes = [16, 128], strides = [1, 1]} : vector<16x512xf32> to vector<16x128xf32>
      %447 = math.tanh %446 : vector<16x128xf32>
      %448 = vector.extract_strided_slice %445 {offsets = [0, 0], sizes = [16, 128], strides = [1, 1]} : vector<16x384xf32> to vector<16x128xf32>
      %449 = vector.extract_strided_slice %445 {offsets = [0, 128], sizes = [16, 128], strides = [1, 1]} : vector<16x384xf32> to vector<16x128xf32>
      %450 = vector.extract_strided_slice %445 {offsets = [0, 256], sizes = [16, 128], strides = [1, 1]} : vector<16x384xf32> to vector<16x128xf32>
      %451 = arith.mulf %449, %398 : vector<16x128xf32>
      %452 = arith.mulf %448, %447 : vector<16x128xf32>
      %453 = arith.addf %451, %452 : vector<16x128xf32>
      %454 = math.tanh %453 : vector<16x128xf32>
      %455 = arith.mulf %450, %454 : vector<16x128xf32>
      %c8_i32 = arith.constant 8 : i32
      %456 = arith.truncf %431 : vector<16x128xf32> to vector<16x128xbf16>
      %c0_145 = arith.constant 0 : index
      %c0_146 = arith.constant 0 : index
      %457 = vector.load %arg11[%c0_145, %c0_146] : memref<128x512xbf16, #tpu.memory_space<vmem>>, vector<128x512xbf16>
      %cst_147 = arith.constant dense<0.000000e+00> : vector<16x512xf32>
      %458 = tpu.matmul %456, %457, %cst_147 {dimension_numbers = #tpu.dot_dimension_numbers<[1], [0], [0], [1], [0, 0, 1, 1], [], []>} : vector<16x128xbf16>, vector<128x512xbf16>, vector<16x512xf32> -> vector<16x512xf32>
      %c0_148 = arith.constant 0 : index
      %c0_149 = arith.constant 0 : index
      %459 = vector.load %arg12[%c0_148, %c0_149] : memref<1x512xf32, #tpu.memory_space<vmem>>, vector<1x512xf32>
      %460 = vector.shape_cast %459 : vector<1x512xf32> to vector<1x512xf32>
      %461 = vector.broadcast %460 : vector<1x512xf32> to vector<16x512xf32>
      %462 = arith.addf %458, %461 : vector<16x512xf32>
      %463 = vector.extract_strided_slice %462 {offsets = [0, 0], sizes = [16, 384], strides = [1, 1]} : vector<16x512xf32> to vector<16x384xf32>
      %464 = arith.negf %463 : vector<16x384xf32>
      %465 = math.exp %464 : vector<16x384xf32>
      %cst_150 = arith.constant 1.000000e+00 : f32
      %466 = vector.broadcast %cst_150 : f32 to vector<16x384xf32>
      %467 = arith.addf %466, %465 : vector<16x384xf32>
      %468 = arith.divf %466, %467 : vector<16x384xf32>
      %469 = vector.extract_strided_slice %462 {offsets = [0, 384], sizes = [16, 128], strides = [1, 1]} : vector<16x512xf32> to vector<16x128xf32>
      %470 = math.tanh %469 : vector<16x128xf32>
      %471 = vector.extract_strided_slice %468 {offsets = [0, 0], sizes = [16, 128], strides = [1, 1]} : vector<16x384xf32> to vector<16x128xf32>
      %472 = vector.extract_strided_slice %468 {offsets = [0, 256], sizes = [16, 128], strides = [1, 1]} : vector<16x384xf32> to vector<16x128xf32>
      %473 = arith.mulf %471, %470 : vector<16x128xf32>
      %474 = math.tanh %473 : vector<16x128xf32>
      %475 = arith.mulf %472, %474 : vector<16x128xf32>
      %c0_151 = arith.constant 0 : index
      %c0_152 = arith.constant 0 : index
      %476 = vector.load %arg18[%c0_151, %c0_152] : memref<16x256xf32, #tpu.memory_space<vmem>>, vector<16x128xf32>
      tpu.vector_store %arg18[%c0_151, %c0_152], %455 {strides = array<i32>} : memref<16x256xf32, #tpu.memory_space<vmem>>, vector<16x128xf32>,
      %c0_153 = arith.constant 0 : index
      %c128 = arith.constant 128 : index
      %477 = vector.load %arg18[%c0_153, %c128] : memref<16x256xf32, #tpu.memory_space<vmem>>, vector<16x128xf32>
      tpu.vector_store %arg18[%c0_153, %c128], %475 {strides = array<i32>} : memref<16x256xf32, #tpu.memory_space<vmem>>, vector<16x128xf32>,
    } else {
    }
    %c1_i32 = arith.constant 1 : i32
    %4 = arith.cmpi eq, %arg1, %c1_i32 : i32
    %5 = arith.extui %4 : i1 to i32
    %c0_i32_1 = arith.constant 0 : i32
    %6 = arith.cmpi ne, %5, %c0_i32_1 : i32
    scf.if %6 {
      %c0 = arith.constant 0 : index
      %c0_2 = arith.constant 0 : index
      %7 = vector.load %arg15[%c0, %c0_2] : memref<1x512xf32, #tpu.memory_space<vmem>>, vector<1x512xf32>
      %8 = vector.shape_cast %7 : vector<1x512xf32> to vector<1x512xf32>
      %9 = vector.broadcast %8 : vector<1x512xf32> to vector<16x512xf32>
      %c0_i32_3 = arith.constant 0 : i32
      %10 = arith.index_cast %c0_i32_3 : i32 to index
      %c0_4 = arith.constant 0 : index
      %c0_5 = arith.constant 0 : index
      %11 = vector.load %arg3[%10, %c0_4, %c0_5] : memref<8x16x24xf32, #tpu.memory_space<vmem>>, vector<1x16x24xf32>
      %12 = vector.shape_cast %11 : vector<1x16x24xf32> to vector<16x24xf32>
      %13 = arith.truncf %12 : vector<16x24xf32> to vector<16x24xbf16>
      %c0_6 = arith.constant 0 : index
      %c0_7 = arith.constant 0 : index
      %14 = vector.load %arg13[%c0_6, %c0_7] : memref<24x512xbf16, #tpu.memory_space<vmem>>, vector<24x512xbf16>
      %cst_8 = arith.constant dense<0.000000e+00> : vector<16x512xf32>
      %15 = tpu.matmul %13, %14, %cst_8 {dimension_numbers = #tpu.dot_dimension_numbers<[1], [0], [0], [1], [0, 0, 1, 1], [], []>} : vector<16x24xbf16>, vector<24x512xbf16>, vector<16x512xf32> -> vector<16x512xf32>
      %16 = arith.truncf %0 : vector<16x128xf32> to vector<16x128xbf16>
      %c0_9 = arith.constant 0 : index
      %c0_10 = arith.constant 0 : index
      %17 = vector.load %arg14[%c0_9, %c0_10] : memref<128x512xbf16, #tpu.memory_space<vmem>>, vector<128x512xbf16>
      %cst_11 = arith.constant dense<0.000000e+00> : vector<16x512xf32>
      %18 = tpu.matmul %16, %17, %cst_11 {dimension_numbers = #tpu.dot_dimension_numbers<[1], [0], [0], [1], [0, 0, 1, 1], [], []>} : vector<16x128xbf16>, vector<128x512xbf16>, vector<16x512xf32> -> vector<16x512xf32>
      %19 = arith.addf %15, %18 : vector<16x512xf32>
      %20 = arith.addf %19, %9 : vector<16x512xf32>
      %21 = vector.extract_strided_slice %20 {offsets = [0, 0], sizes = [16, 384], strides = [1, 1]} : vector<16x512xf32> to vector<16x384xf32>
      %22 = arith.negf %21 : vector<16x384xf32>
      %23 = math.exp %22 : vector<16x384xf32>
      %cst_12 = arith.constant 1.000000e+00 : f32
      %24 = vector.broadcast %cst_12 : f32 to vector<16x384xf32>
      %25 = arith.addf %24, %23 : vector<16x384xf32>
      %26 = arith.divf %24, %25 : vector<16x384xf32>
      %27 = vector.extract_strided_slice %20 {offsets = [0, 384], sizes = [16, 128], strides = [1, 1]} : vector<16x512xf32> to vector<16x128xf32>
      %28 = math.tanh %27 : vector<16x128xf32>
      %29 = vector.extract_strided_slice %26 {offsets = [0, 0], sizes = [16, 128], strides = [1, 1]} : vector<16x384xf32> to vector<16x128xf32>
      %30 = vector.extract_strided_slice %26 {offsets = [0, 128], sizes = [16, 128], strides = [1, 1]} : vector<16x384xf32> to vector<16x128xf32>
      %31 = vector.extract_strided_slice %26 {offsets = [0, 256], sizes = [16, 128], strides = [1, 1]} : vector<16x384xf32> to vector<16x128xf32>
      %32 = arith.mulf %30, %0 : vector<16x128xf32>
      %33 = arith.mulf %29, %28 : vector<16x128xf32>
      %34 = arith.addf %32, %33 : vector<16x128xf32>
      %35 = math.tanh %34 : vector<16x128xf32>
      %36 = arith.mulf %31, %35 : vector<16x128xf32>
      %c1_i32_13 = arith.constant 1 : i32
      %37 = arith.index_cast %c1_i32_13 : i32 to index
      %c0_14 = arith.constant 0 : index
      %c0_15 = arith.constant 0 : index
      %38 = vector.load %arg3[%37, %c0_14, %c0_15] : memref<8x16x24xf32, #tpu.memory_space<vmem>>, vector<1x16x24xf32>
      %39 = vector.shape_cast %38 : vector<1x16x24xf32> to vector<16x24xf32>
      %40 = arith.truncf %39 : vector<16x24xf32> to vector<16x24xbf16>
      %c0_16 = arith.constant 0 : index
      %c0_17 = arith.constant 0 : index
      %41 = vector.load %arg13[%c0_16, %c0_17] : memref<24x512xbf16, #tpu.memory_space<vmem>>, vector<24x512xbf16>
      %cst_18 = arith.constant dense<0.000000e+00> : vector<16x512xf32>
      %42 = tpu.matmul %40, %41, %cst_18 {dimension_numbers = #tpu.dot_dimension_numbers<[1], [0], [0], [1], [0, 0, 1, 1], [], []>} : vector<16x24xbf16>, vector<24x512xbf16>, vector<16x512xf32> -> vector<16x512xf32>
      %43 = arith.truncf %36 : vector<16x128xf32> to vector<16x128xbf16>
      %c0_19 = arith.constant 0 : index
      %c0_20 = arith.constant 0 : index
      %44 = vector.load %arg14[%c0_19, %c0_20] : memref<128x512xbf16, #tpu.memory_space<vmem>>, vector<128x512xbf16>
      %cst_21 = arith.constant dense<0.000000e+00> : vector<16x512xf32>
      %45 = tpu.matmul %43, %44, %cst_21 {dimension_numbers = #tpu.dot_dimension_numbers<[1], [0], [0], [1], [0, 0, 1, 1], [], []>} : vector<16x128xbf16>, vector<128x512xbf16>, vector<16x512xf32> -> vector<16x512xf32>
      %46 = arith.addf %42, %45 : vector<16x512xf32>
      %47 = arith.addf %46, %9 : vector<16x512xf32>
      %48 = vector.extract_strided_slice %47 {offsets = [0, 0], sizes = [16, 384], strides = [1, 1]} : vector<16x512xf32> to vector<16x384xf32>
      %49 = arith.negf %48 : vector<16x384xf32>
      %50 = math.exp %49 : vector<16x384xf32>
      %cst_22 = arith.constant 1.000000e+00 : f32
      %51 = vector.broadcast %cst_22 : f32 to vector<16x384xf32>
      %52 = arith.addf %51, %50 : vector<16x384xf32>
      %53 = arith.divf %51, %52 : vector<16x384xf32>
      %54 = vector.extract_strided_slice %47 {offsets = [0, 384], sizes = [16, 128], strides = [1, 1]} : vector<16x512xf32> to vector<16x128xf32>
      %55 = math.tanh %54 : vector<16x128xf32>
      %56 = vector.extract_strided_slice %53 {offsets = [0, 0], sizes = [16, 128], strides = [1, 1]} : vector<16x384xf32> to vector<16x128xf32>
      %57 = vector.extract_strided_slice %53 {offsets = [0, 128], sizes = [16, 128], strides = [1, 1]} : vector<16x384xf32> to vector<16x128xf32>
      %58 = vector.extract_strided_slice %53 {offsets = [0, 256], sizes = [16, 128], strides = [1, 1]} : vector<16x384xf32> to vector<16x128xf32>
      %59 = arith.mulf %57, %34 : vector<16x128xf32>
      %60 = arith.mulf %56, %55 : vector<16x128xf32>
      %61 = arith.addf %59, %60 : vector<16x128xf32>
      %62 = math.tanh %61 : vector<16x128xf32>
      %63 = arith.mulf %58, %62 : vector<16x128xf32>
      %c2_i32 = arith.constant 2 : i32
      %64 = arith.index_cast %c2_i32 : i32 to index
      %c0_23 = arith.constant 0 : index
      %c0_24 = arith.constant 0 : index
      %65 = vector.load %arg3[%64, %c0_23, %c0_24] : memref<8x16x24xf32, #tpu.memory_space<vmem>>, vector<1x16x24xf32>
      %66 = vector.shape_cast %65 : vector<1x16x24xf32> to vector<16x24xf32>
      %67 = arith.truncf %66 : vector<16x24xf32> to vector<16x24xbf16>
      %c0_25 = arith.constant 0 : index
      %c0_26 = arith.constant 0 : index
      %68 = vector.load %arg13[%c0_25, %c0_26] : memref<24x512xbf16, #tpu.memory_space<vmem>>, vector<24x512xbf16>
      %cst_27 = arith.constant dense<0.000000e+00> : vector<16x512xf32>
      %69 = tpu.matmul %67, %68, %cst_27 {dimension_numbers = #tpu.dot_dimension_numbers<[1], [0], [0], [1], [0, 0, 1, 1], [], []>} : vector<16x24xbf16>, vector<24x512xbf16>, vector<16x512xf32> -> vector<16x512xf32>
      %70 = arith.truncf %63 : vector<16x128xf32> to vector<16x128xbf16>
      %c0_28 = arith.constant 0 : index
      %c0_29 = arith.constant 0 : index
      %71 = vector.load %arg14[%c0_28, %c0_29] : memref<128x512xbf16, #tpu.memory_space<vmem>>, vector<128x512xbf16>
      %cst_30 = arith.constant dense<0.000000e+00> : vector<16x512xf32>
      %72 = tpu.matmul %70, %71, %cst_30 {dimension_numbers = #tpu.dot_dimension_numbers<[1], [0], [0], [1], [0, 0, 1, 1], [], []>} : vector<16x128xbf16>, vector<128x512xbf16>, vector<16x512xf32> -> vector<16x512xf32>
      %73 = arith.addf %69, %72 : vector<16x512xf32>
      %74 = arith.addf %73, %9 : vector<16x512xf32>
      %75 = vector.extract_strided_slice %74 {offsets = [0, 0], sizes = [16, 384], strides = [1, 1]} : vector<16x512xf32> to vector<16x384xf32>
      %76 = arith.negf %75 : vector<16x384xf32>
      %77 = math.exp %76 : vector<16x384xf32>
      %cst_31 = arith.constant 1.000000e+00 : f32
      %78 = vector.broadcast %cst_31 : f32 to vector<16x384xf32>
      %79 = arith.addf %78, %77 : vector<16x384xf32>
      %80 = arith.divf %78, %79 : vector<16x384xf32>
      %81 = vector.extract_strided_slice %74 {offsets = [0, 384], sizes = [16, 128], strides = [1, 1]} : vector<16x512xf32> to vector<16x128xf32>
      %82 = math.tanh %81 : vector<16x128xf32>
      %83 = vector.extract_strided_slice %80 {offsets = [0, 0], sizes = [16, 128], strides = [1, 1]} : vector<16x384xf32> to vector<16x128xf32>
      %84 = vector.extract_strided_slice %80 {offsets = [0, 128], sizes = [16, 128], strides = [1, 1]} : vector<16x384xf32> to vector<16x128xf32>
      %85 = vector.extract_strided_slice %80 {offsets = [0, 256], sizes = [16, 128], strides = [1, 1]} : vector<16x384xf32> to vector<16x128xf32>
      %86 = arith.mulf %84, %61 : vector<16x128xf32>
      %87 = arith.mulf %83, %82 : vector<16x128xf32>
      %88 = arith.addf %86, %87 : vector<16x128xf32>
      %89 = math.tanh %88 : vector<16x128xf32>
      %90 = arith.mulf %85, %89 : vector<16x128xf32>
      %c3_i32 = arith.constant 3 : i32
      %91 = arith.index_cast %c3_i32 : i32 to index
      %c0_32 = arith.constant 0 : index
      %c0_33 = arith.constant 0 : index
      %92 = vector.load %arg3[%91, %c0_32, %c0_33] : memref<8x16x24xf32, #tpu.memory_space<vmem>>, vector<1x16x24xf32>
      %93 = vector.shape_cast %92 : vector<1x16x24xf32> to vector<16x24xf32>
      %94 = arith.truncf %93 : vector<16x24xf32> to vector<16x24xbf16>
      %c0_34 = arith.constant 0 : index
      %c0_35 = arith.constant 0 : index
      %95 = vector.load %arg13[%c0_34, %c0_35] : memref<24x512xbf16, #tpu.memory_space<vmem>>, vector<24x512xbf16>
      %cst_36 = arith.constant dense<0.000000e+00> : vector<16x512xf32>
      %96 = tpu.matmul %94, %95, %cst_36 {dimension_numbers = #tpu.dot_dimension_numbers<[1], [0], [0], [1], [0, 0, 1, 1], [], []>} : vector<16x24xbf16>, vector<24x512xbf16>, vector<16x512xf32> -> vector<16x512xf32>
      %97 = arith.truncf %90 : vector<16x128xf32> to vector<16x128xbf16>
      %c0_37 = arith.constant 0 : index
      %c0_38 = arith.constant 0 : index
      %98 = vector.load %arg14[%c0_37, %c0_38] : memref<128x512xbf16, #tpu.memory_space<vmem>>, vector<128x512xbf16>
      %cst_39 = arith.constant dense<0.000000e+00> : vector<16x512xf32>
      %99 = tpu.matmul %97, %98, %cst_39 {dimension_numbers = #tpu.dot_dimension_numbers<[1], [0], [0], [1], [0, 0, 1, 1], [], []>} : vector<16x128xbf16>, vector<128x512xbf16>, vector<16x512xf32> -> vector<16x512xf32>
      %100 = arith.addf %96, %99 : vector<16x512xf32>
      %101 = arith.addf %100, %9 : vector<16x512xf32>
      %102 = vector.extract_strided_slice %101 {offsets = [0, 0], sizes = [16, 384], strides = [1, 1]} : vector<16x512xf32> to vector<16x384xf32>
      %103 = arith.negf %102 : vector<16x384xf32>
      %104 = math.exp %103 : vector<16x384xf32>
      %cst_40 = arith.constant 1.000000e+00 : f32
      %105 = vector.broadcast %cst_40 : f32 to vector<16x384xf32>
      %106 = arith.addf %105, %104 : vector<16x384xf32>
      %107 = arith.divf %105, %106 : vector<16x384xf32>
      %108 = vector.extract_strided_slice %101 {offsets = [0, 384], sizes = [16, 128], strides = [1, 1]} : vector<16x512xf32> to vector<16x128xf32>
      %109 = math.tanh %108 : vector<16x128xf32>
      %110 = vector.extract_strided_slice %107 {offsets = [0, 0], sizes = [16, 128], strides = [1, 1]} : vector<16x384xf32> to vector<16x128xf32>
      %111 = vector.extract_strided_slice %107 {offsets = [0, 128], sizes = [16, 128], strides = [1, 1]} : vector<16x384xf32> to vector<16x128xf32>
      %112 = vector.extract_strided_slice %107 {offsets = [0, 256], sizes = [16, 128], strides = [1, 1]} : vector<16x384xf32> to vector<16x128xf32>
      %113 = arith.mulf %111, %88 : vector<16x128xf32>
      %114 = arith.mulf %110, %109 : vector<16x128xf32>
      %115 = arith.addf %113, %114 : vector<16x128xf32>
      %116 = math.tanh %115 : vector<16x128xf32>
      %117 = arith.mulf %112, %116 : vector<16x128xf32>
      %c4_i32 = arith.constant 4 : i32
      %118 = arith.index_cast %c4_i32 : i32 to index
      %c0_41 = arith.constant 0 : index
      %c0_42 = arith.constant 0 : index
      %119 = vector.load %arg3[%118, %c0_41, %c0_42] : memref<8x16x24xf32, #tpu.memory_space<vmem>>, vector<1x16x24xf32>
      %120 = vector.shape_cast %119 : vector<1x16x24xf32> to vector<16x24xf32>
      %121 = arith.truncf %120 : vector<16x24xf32> to vector<16x24xbf16>
      %c0_43 = arith.constant 0 : index
      %c0_44 = arith.constant 0 : index
      %122 = vector.load %arg13[%c0_43, %c0_44] : memref<24x512xbf16, #tpu.memory_space<vmem>>, vector<24x512xbf16>
      %cst_45 = arith.constant dense<0.000000e+00> : vector<16x512xf32>
      %123 = tpu.matmul %121, %122, %cst_45 {dimension_numbers = #tpu.dot_dimension_numbers<[1], [0], [0], [1], [0, 0, 1, 1], [], []>} : vector<16x24xbf16>, vector<24x512xbf16>, vector<16x512xf32> -> vector<16x512xf32>
      %124 = arith.truncf %117 : vector<16x128xf32> to vector<16x128xbf16>
      %c0_46 = arith.constant 0 : index
      %c0_47 = arith.constant 0 : index
      %125 = vector.load %arg14[%c0_46, %c0_47] : memref<128x512xbf16, #tpu.memory_space<vmem>>, vector<128x512xbf16>
      %cst_48 = arith.constant dense<0.000000e+00> : vector<16x512xf32>
      %126 = tpu.matmul %124, %125, %cst_48 {dimension_numbers = #tpu.dot_dimension_numbers<[1], [0], [0], [1], [0, 0, 1, 1], [], []>} : vector<16x128xbf16>, vector<128x512xbf16>, vector<16x512xf32> -> vector<16x512xf32>
      %127 = arith.addf %123, %126 : vector<16x512xf32>
      %128 = arith.addf %127, %9 : vector<16x512xf32>
      %129 = vector.extract_strided_slice %128 {offsets = [0, 0], sizes = [16, 384], strides = [1, 1]} : vector<16x512xf32> to vector<16x384xf32>
      %130 = arith.negf %129 : vector<16x384xf32>
      %131 = math.exp %130 : vector<16x384xf32>
      %cst_49 = arith.constant 1.000000e+00 : f32
      %132 = vector.broadcast %cst_49 : f32 to vector<16x384xf32>
      %133 = arith.addf %132, %131 : vector<16x384xf32>
      %134 = arith.divf %132, %133 : vector<16x384xf32>
      %135 = vector.extract_strided_slice %128 {offsets = [0, 384], sizes = [16, 128], strides = [1, 1]} : vector<16x512xf32> to vector<16x128xf32>
      %136 = math.tanh %135 : vector<16x128xf32>
      %137 = vector.extract_strided_slice %134 {offsets = [0, 0], sizes = [16, 128], strides = [1, 1]} : vector<16x384xf32> to vector<16x128xf32>
      %138 = vector.extract_strided_slice %134 {offsets = [0, 128], sizes = [16, 128], strides = [1, 1]} : vector<16x384xf32> to vector<16x128xf32>
      %139 = vector.extract_strided_slice %134 {offsets = [0, 256], sizes = [16, 128], strides = [1, 1]} : vector<16x384xf32> to vector<16x128xf32>
      %140 = arith.mulf %138, %115 : vector<16x128xf32>
      %141 = arith.mulf %137, %136 : vector<16x128xf32>
      %142 = arith.addf %140, %141 : vector<16x128xf32>
      %143 = math.tanh %142 : vector<16x128xf32>
      %144 = arith.mulf %139, %143 : vector<16x128xf32>
      %c5_i32 = arith.constant 5 : i32
      %145 = arith.index_cast %c5_i32 : i32 to index
      %c0_50 = arith.constant 0 : index
      %c0_51 = arith.constant 0 : index
      %146 = vector.load %arg3[%145, %c0_50, %c0_51] : memref<8x16x24xf32, #tpu.memory_space<vmem>>, vector<1x16x24xf32>
      %147 = vector.shape_cast %146 : vector<1x16x24xf32> to vector<16x24xf32>
      %148 = arith.truncf %147 : vector<16x24xf32> to vector<16x24xbf16>
      %c0_52 = arith.constant 0 : index
      %c0_53 = arith.constant 0 : index
      %149 = vector.load %arg13[%c0_52, %c0_53] : memref<24x512xbf16, #tpu.memory_space<vmem>>, vector<24x512xbf16>
      %cst_54 = arith.constant dense<0.000000e+00> : vector<16x512xf32>
      %150 = tpu.matmul %148, %149, %cst_54 {dimension_numbers = #tpu.dot_dimension_numbers<[1], [0], [0], [1], [0, 0, 1, 1], [], []>} : vector<16x24xbf16>, vector<24x512xbf16>, vector<16x512xf32> -> vector<16x512xf32>
      %151 = arith.truncf %144 : vector<16x128xf32> to vector<16x128xbf16>
      %c0_55 = arith.constant 0 : index
      %c0_56 = arith.constant 0 : index
      %152 = vector.load %arg14[%c0_55, %c0_56] : memref<128x512xbf16, #tpu.memory_space<vmem>>, vector<128x512xbf16>
      %cst_57 = arith.constant dense<0.000000e+00> : vector<16x512xf32>
      %153 = tpu.matmul %151, %152, %cst_57 {dimension_numbers = #tpu.dot_dimension_numbers<[1], [0], [0], [1], [0, 0, 1, 1], [], []>} : vector<16x128xbf16>, vector<128x512xbf16>, vector<16x512xf32> -> vector<16x512xf32>
      %154 = arith.addf %150, %153 : vector<16x512xf32>
      %155 = arith.addf %154, %9 : vector<16x512xf32>
      %156 = vector.extract_strided_slice %155 {offsets = [0, 0], sizes = [16, 384], strides = [1, 1]} : vector<16x512xf32> to vector<16x384xf32>
      %157 = arith.negf %156 : vector<16x384xf32>
      %158 = math.exp %157 : vector<16x384xf32>
      %cst_58 = arith.constant 1.000000e+00 : f32
      %159 = vector.broadcast %cst_58 : f32 to vector<16x384xf32>
      %160 = arith.addf %159, %158 : vector<16x384xf32>
      %161 = arith.divf %159, %160 : vector<16x384xf32>
      %162 = vector.extract_strided_slice %155 {offsets = [0, 384], sizes = [16, 128], strides = [1, 1]} : vector<16x512xf32> to vector<16x128xf32>
      %163 = math.tanh %162 : vector<16x128xf32>
      %164 = vector.extract_strided_slice %161 {offsets = [0, 0], sizes = [16, 128], strides = [1, 1]} : vector<16x384xf32> to vector<16x128xf32>
      %165 = vector.extract_strided_slice %161 {offsets = [0, 128], sizes = [16, 128], strides = [1, 1]} : vector<16x384xf32> to vector<16x128xf32>
      %166 = vector.extract_strided_slice %161 {offsets = [0, 256], sizes = [16, 128], strides = [1, 1]} : vector<16x384xf32> to vector<16x128xf32>
      %167 = arith.mulf %165, %142 : vector<16x128xf32>
      %168 = arith.mulf %164, %163 : vector<16x128xf32>
      %169 = arith.addf %167, %168 : vector<16x128xf32>
      %170 = math.tanh %169 : vector<16x128xf32>
      %171 = arith.mulf %166, %170 : vector<16x128xf32>
      %c6_i32 = arith.constant 6 : i32
      %172 = arith.index_cast %c6_i32 : i32 to index
      %c0_59 = arith.constant 0 : index
      %c0_60 = arith.constant 0 : index
      %173 = vector.load %arg3[%172, %c0_59, %c0_60] : memref<8x16x24xf32, #tpu.memory_space<vmem>>, vector<1x16x24xf32>
      %174 = vector.shape_cast %173 : vector<1x16x24xf32> to vector<16x24xf32>
      %175 = arith.truncf %174 : vector<16x24xf32> to vector<16x24xbf16>
      %c0_61 = arith.constant 0 : index
      %c0_62 = arith.constant 0 : index
      %176 = vector.load %arg13[%c0_61, %c0_62] : memref<24x512xbf16, #tpu.memory_space<vmem>>, vector<24x512xbf16>
      %cst_63 = arith.constant dense<0.000000e+00> : vector<16x512xf32>
      %177 = tpu.matmul %175, %176, %cst_63 {dimension_numbers = #tpu.dot_dimension_numbers<[1], [0], [0], [1], [0, 0, 1, 1], [], []>} : vector<16x24xbf16>, vector<24x512xbf16>, vector<16x512xf32> -> vector<16x512xf32>
      %178 = arith.truncf %171 : vector<16x128xf32> to vector<16x128xbf16>
      %c0_64 = arith.constant 0 : index
      %c0_65 = arith.constant 0 : index
      %179 = vector.load %arg14[%c0_64, %c0_65] : memref<128x512xbf16, #tpu.memory_space<vmem>>, vector<128x512xbf16>
      %cst_66 = arith.constant dense<0.000000e+00> : vector<16x512xf32>
      %180 = tpu.matmul %178, %179, %cst_66 {dimension_numbers = #tpu.dot_dimension_numbers<[1], [0], [0], [1], [0, 0, 1, 1], [], []>} : vector<16x128xbf16>, vector<128x512xbf16>, vector<16x512xf32> -> vector<16x512xf32>
      %181 = arith.addf %177, %180 : vector<16x512xf32>
      %182 = arith.addf %181, %9 : vector<16x512xf32>
      %183 = vector.extract_strided_slice %182 {offsets = [0, 0], sizes = [16, 384], strides = [1, 1]} : vector<16x512xf32> to vector<16x384xf32>
      %184 = arith.negf %183 : vector<16x384xf32>
      %185 = math.exp %184 : vector<16x384xf32>
      %cst_67 = arith.constant 1.000000e+00 : f32
      %186 = vector.broadcast %cst_67 : f32 to vector<16x384xf32>
      %187 = arith.addf %186, %185 : vector<16x384xf32>
      %188 = arith.divf %186, %187 : vector<16x384xf32>
      %189 = vector.extract_strided_slice %182 {offsets = [0, 384], sizes = [16, 128], strides = [1, 1]} : vector<16x512xf32> to vector<16x128xf32>
      %190 = math.tanh %189 : vector<16x128xf32>
      %191 = vector.extract_strided_slice %188 {offsets = [0, 0], sizes = [16, 128], strides = [1, 1]} : vector<16x384xf32> to vector<16x128xf32>
      %192 = vector.extract_strided_slice %188 {offsets = [0, 128], sizes = [16, 128], strides = [1, 1]} : vector<16x384xf32> to vector<16x128xf32>
      %193 = vector.extract_strided_slice %188 {offsets = [0, 256], sizes = [16, 128], strides = [1, 1]} : vector<16x384xf32> to vector<16x128xf32>
      %194 = arith.mulf %192, %169 : vector<16x128xf32>
      %195 = arith.mulf %191, %190 : vector<16x128xf32>
      %196 = arith.addf %194, %195 : vector<16x128xf32>
      %197 = math.tanh %196 : vector<16x128xf32>
      %198 = arith.mulf %193, %197 : vector<16x128xf32>
      %c7_i32 = arith.constant 7 : i32
      %199 = arith.index_cast %c7_i32 : i32 to index
      %c0_68 = arith.constant 0 : index
      %c0_69 = arith.constant 0 : index
      %200 = vector.load %arg3[%199, %c0_68, %c0_69] : memref<8x16x24xf32, #tpu.memory_space<vmem>>, vector<1x16x24xf32>
      %201 = vector.shape_cast %200 : vector<1x16x24xf32> to vector<16x24xf32>
      %202 = arith.truncf %201 : vector<16x24xf32> to vector<16x24xbf16>
      %c0_70 = arith.constant 0 : index
      %c0_71 = arith.constant 0 : index
      %203 = vector.load %arg13[%c0_70, %c0_71] : memref<24x512xbf16, #tpu.memory_space<vmem>>, vector<24x512xbf16>
      %cst_72 = arith.constant dense<0.000000e+00> : vector<16x512xf32>
      %204 = tpu.matmul %202, %203, %cst_72 {dimension_numbers = #tpu.dot_dimension_numbers<[1], [0], [0], [1], [0, 0, 1, 1], [], []>} : vector<16x24xbf16>, vector<24x512xbf16>, vector<16x512xf32> -> vector<16x512xf32>
      %205 = arith.truncf %198 : vector<16x128xf32> to vector<16x128xbf16>
      %c0_73 = arith.constant 0 : index
      %c0_74 = arith.constant 0 : index
      %206 = vector.load %arg14[%c0_73, %c0_74] : memref<128x512xbf16, #tpu.memory_space<vmem>>, vector<128x512xbf16>
      %cst_75 = arith.constant dense<0.000000e+00> : vector<16x512xf32>
      %207 = tpu.matmul %205, %206, %cst_75 {dimension_numbers = #tpu.dot_dimension_numbers<[1], [0], [0], [1], [0, 0, 1, 1], [], []>} : vector<16x128xbf16>, vector<128x512xbf16>, vector<16x512xf32> -> vector<16x512xf32>
      %208 = arith.addf %204, %207 : vector<16x512xf32>
      %209 = arith.addf %208, %9 : vector<16x512xf32>
      %210 = vector.extract_strided_slice %209 {offsets = [0, 0], sizes = [16, 384], strides = [1, 1]} : vector<16x512xf32> to vector<16x384xf32>
      %211 = arith.negf %210 : vector<16x384xf32>
      %212 = math.exp %211 : vector<16x384xf32>
      %cst_76 = arith.constant 1.000000e+00 : f32
      %213 = vector.broadcast %cst_76 : f32 to vector<16x384xf32>
      %214 = arith.addf %213, %212 : vector<16x384xf32>
      %215 = arith.divf %213, %214 : vector<16x384xf32>
      %216 = vector.extract_strided_slice %209 {offsets = [0, 384], sizes = [16, 128], strides = [1, 1]} : vector<16x512xf32> to vector<16x128xf32>
      %217 = math.tanh %216 : vector<16x128xf32>
      %218 = vector.extract_strided_slice %215 {offsets = [0, 0], sizes = [16, 128], strides = [1, 1]} : vector<16x384xf32> to vector<16x128xf32>
      %219 = vector.extract_strided_slice %215 {offsets = [0, 128], sizes = [16, 128], strides = [1, 1]} : vector<16x384xf32> to vector<16x128xf32>
      %220 = vector.extract_strided_slice %215 {offsets = [0, 256], sizes = [16, 128], strides = [1, 1]} : vector<16x384xf32> to vector<16x128xf32>
      %221 = arith.mulf %219, %196 : vector<16x128xf32>
      %222 = arith.mulf %218, %217 : vector<16x128xf32>
      %223 = arith.addf %221, %222 : vector<16x128xf32>
      %224 = math.tanh %223 : vector<16x128xf32>
      %225 = arith.mulf %220, %224 : vector<16x128xf32>
      %c8_i32 = arith.constant 8 : i32
      %c7 = arith.constant 7 : index
      %c0_77 = arith.constant 0 : index
      %c0_78 = arith.constant 0 : index
      %226 = vector.load %arg3[%c7, %c0_77, %c0_78] : memref<8x16x24xf32, #tpu.memory_space<vmem>>, vector<1x16x24xf32>
      %227 = vector.shape_cast %226 : vector<1x16x24xf32> to vector<16x24xf32>
      %228 = arith.truncf %227 : vector<16x24xf32> to vector<16x24xbf16>
      %c0_79 = arith.constant 0 : index
      %c0_80 = arith.constant 0 : index
      %229 = vector.load %arg16[%c0_79, %c0_80] : memref<24x512xbf16, #tpu.memory_space<vmem>>, vector<24x512xbf16>
      %cst_81 = arith.constant dense<0.000000e+00> : vector<16x512xf32>
      %230 = tpu.matmul %228, %229, %cst_81 {dimension_numbers = #tpu.dot_dimension_numbers<[1], [0], [0], [1], [0, 0, 1, 1], [], []>} : vector<16x24xbf16>, vector<24x512xbf16>, vector<16x512xf32> -> vector<16x512xf32>
      %c0_82 = arith.constant 0 : index
      %c0_83 = arith.constant 0 : index
      %231 = vector.load %arg17[%c0_82, %c0_83] : memref<1x512xf32, #tpu.memory_space<vmem>>, vector<1x512xf32>
      %232 = vector.shape_cast %231 : vector<1x512xf32> to vector<1x512xf32>
      %233 = vector.broadcast %232 : vector<1x512xf32> to vector<16x512xf32>
      %234 = arith.addf %230, %233 : vector<16x512xf32>
      %235 = vector.extract_strided_slice %234 {offsets = [0, 0], sizes = [16, 384], strides = [1, 1]} : vector<16x512xf32> to vector<16x384xf32>
      %236 = arith.negf %235 : vector<16x384xf32>
      %237 = math.exp %236 : vector<16x384xf32>
      %cst_84 = arith.constant 1.000000e+00 : f32
      %238 = vector.broadcast %cst_84 : f32 to vector<16x384xf32>
      %239 = arith.addf %238, %237 : vector<16x384xf32>
      %240 = arith.divf %238, %239 : vector<16x384xf32>
      %241 = vector.extract_strided_slice %234 {offsets = [0, 384], sizes = [16, 128], strides = [1, 1]} : vector<16x512xf32> to vector<16x128xf32>
      %242 = math.tanh %241 : vector<16x128xf32>
      %243 = vector.extract_strided_slice %240 {offsets = [0, 0], sizes = [16, 128], strides = [1, 1]} : vector<16x384xf32> to vector<16x128xf32>
      %244 = vector.extract_strided_slice %240 {offsets = [0, 256], sizes = [16, 128], strides = [1, 1]} : vector<16x384xf32> to vector<16x128xf32>
      %245 = arith.mulf %243, %242 : vector<16x128xf32>
      %246 = math.tanh %245 : vector<16x128xf32>
      %247 = arith.mulf %244, %246 : vector<16x128xf32>
      %c0_85 = arith.constant 0 : index
      %c0_86 = arith.constant 0 : index
      %248 = vector.load %arg18[%c0_85, %c0_86] : memref<16x256xf32, #tpu.memory_space<vmem>>, vector<16x128xf32>
      tpu.vector_store %arg18[%c0_85, %c0_86], %225 {strides = array<i32>} : memref<16x256xf32, #tpu.memory_space<vmem>>, vector<16x128xf32>,
      %c0_87 = arith.constant 0 : index
      %c128 = arith.constant 128 : index
      %249 = vector.load %arg18[%c0_87, %c128] : memref<16x256xf32, #tpu.memory_space<vmem>>, vector<16x128xf32>
      tpu.vector_store %arg18[%c0_87, %c128], %247 {strides = array<i32>} : memref<16x256xf32, #tpu.memory_space<vmem>>, vector<16x128xf32>,
    } else {
    }
    return
  }
  func.func @transform_0(%arg0: i32, %arg1: i32) -> (i32, i32, i32) {
    %c0_i32 = arith.constant 0 : i32
    %c0_i32_0 = arith.constant 0 : i32
    %c0_i32_1 = arith.constant 0 : i32
    return %c0_i32, %arg0, %c0_i32_0 : i32, i32, i32
  }
  func.func @transform_1(%arg0: i32, %arg1: i32) -> (i32, i32, i32) {
    %c0_i32 = arith.constant 0 : i32
    %c0_i32_0 = arith.constant 0 : i32
    %c0_i32_1 = arith.constant 0 : i32
    return %c0_i32, %arg0, %c0_i32_0 : i32, i32, i32
  }
  func.func @transform_2(%arg0: i32, %arg1: i32) -> (i32, i32) {
    %c0_i32 = arith.constant 0 : i32
    %c0_i32_0 = arith.constant 0 : i32
    %c0_i32_1 = arith.constant 0 : i32
    return %c0_i32, %c0_i32_0 : i32, i32
  }
  func.func @transform_3(%arg0: i32, %arg1: i32) -> (i32, i32) {
    %c0_i32 = arith.constant 0 : i32
    %c0_i32_0 = arith.constant 0 : i32
    %c0_i32_1 = arith.constant 0 : i32
    return %c0_i32, %c0_i32_0 : i32, i32
  }
  func.func @transform_4(%arg0: i32, %arg1: i32) -> (i32, i32) {
    %c0_i32 = arith.constant 0 : i32
    %c0_i32_0 = arith.constant 0 : i32
    %c0_i32_1 = arith.constant 0 : i32
    return %c0_i32, %c0_i32_0 : i32, i32
  }
  func.func @transform_5(%arg0: i32, %arg1: i32) -> (i32, i32) {
    %c0_i32 = arith.constant 0 : i32
    %c0_i32_0 = arith.constant 0 : i32
    %c0_i32_1 = arith.constant 0 : i32
    return %c0_i32, %c0_i32_0 : i32, i32
  }
  func.func @transform_6(%arg0: i32, %arg1: i32) -> (i32, i32) {
    %c0_i32 = arith.constant 0 : i32
    %c0_i32_0 = arith.constant 0 : i32
    %c0_i32_1 = arith.constant 0 : i32
    return %c0_i32, %c0_i32_0 : i32, i32
  }
  func.func @transform_7(%arg0: i32, %arg1: i32) -> (i32, i32) {
    %c0_i32 = arith.constant 0 : i32
    %c0_i32_0 = arith.constant 0 : i32
    %c0_i32_1 = arith.constant 0 : i32
    return %c0_i32, %c0_i32_0 : i32, i32
  }
  func.func @transform_8(%arg0: i32, %arg1: i32) -> (i32, i32) {
    %c0_i32 = arith.constant 0 : i32
    %c0_i32_0 = arith.constant 0 : i32
    %c0_i32_1 = arith.constant 0 : i32
    return %c0_i32, %c0_i32_0 : i32, i32
  }
  func.func @transform_9(%arg0: i32, %arg1: i32) -> (i32, i32) {
    %c0_i32 = arith.constant 0 : i32
    %c0_i32_0 = arith.constant 0 : i32
    %c0_i32_1 = arith.constant 0 : i32
    return %c0_i32, %c0_i32_0 : i32, i32
  }
  func.func @transform_10(%arg0: i32, %arg1: i32) -> (i32, i32) {
    %c0_i32 = arith.constant 0 : i32
    %c0_i32_0 = arith.constant 0 : i32
    %c0_i32_1 = arith.constant 0 : i32
    return %c0_i32, %c0_i32_0 : i32, i32
  }
  func.func @transform_11(%arg0: i32, %arg1: i32) -> (i32, i32) {
    %c0_i32 = arith.constant 0 : i32
    %c0_i32_0 = arith.constant 0 : i32
    %c0_i32_1 = arith.constant 0 : i32
    return %c0_i32, %c0_i32_0 : i32, i32
  }
  func.func @transform_12(%arg0: i32, %arg1: i32) -> (i32, i32) {
    %c0_i32 = arith.constant 0 : i32
    %c0_i32_0 = arith.constant 0 : i32
    %c0_i32_1 = arith.constant 0 : i32
    return %c0_i32, %c0_i32_0 : i32, i32
  }
  func.func @transform_13(%arg0: i32, %arg1: i32) -> (i32, i32) {
    %c0_i32 = arith.constant 0 : i32
    %c0_i32_0 = arith.constant 0 : i32
    %c0_i32_1 = arith.constant 0 : i32
    return %c0_i32, %c0_i32_0 : i32, i32
  }
  func.func @transform_14(%arg0: i32, %arg1: i32) -> (i32, i32) {
    %c0_i32 = arith.constant 0 : i32
    %c0_i32_0 = arith.constant 0 : i32
    %c0_i32_1 = arith.constant 0 : i32
    return %c0_i32, %c0_i32_0 : i32, i32
  }
  func.func @transform_15(%arg0: i32, %arg1: i32) -> (i32, i32) {
    %c0_i32 = arith.constant 0 : i32
    %c0_i32_0 = arith.constant 0 : i32
    %c0_i32_1 = arith.constant 0 : i32
    return %c0_i32, %c0_i32_0 : i32, i32
  }
  func.func @transform_16(%arg0: i32, %arg1: i32) -> (i32, i32) {
    %c0_i32 = arith.constant 0 : i32
    return %arg0, %arg1 : i32, i32
  }
}

</mosaic_0001>

<llo_original>
// kernel: tpu_custom_call.1
$region0: #{tpu_custom_call.1}
  #allocation0 [shape = 'u32[]', space=smem, size = 0x4, offset = 0x4, fixed_abs, tag = 'smem constant byte address 0x4 - core index']
  #allocation1 [shape = 'u32[144,128]{1,0:T(1,128)}', space=vmem, size = 0x12000, scoped, tag = 'internal scratch']
  %s0 = inlined_call_operand.hbm [shape: f32[8,16,16], index: 0, kind: input, shape index: {}]
  %s1 = inlined_call_operand.hbm [shape: f32[8,16,24], index: 1, kind: input, shape index: {}]
  %s2 = inlined_call_operand.hbm [shape: bf16[16,384], index: 2, kind: input, shape index: {}]
  %s3 = inlined_call_operand.hbm [shape: bf16[128,384], index: 3, kind: input, shape index: {}]
  %s4 = inlined_call_operand.hbm [shape: f32[1,384], index: 4, kind: input, shape index: {}]
  %s5 = inlined_call_operand.hbm [shape: f32[1,384], index: 5, kind: input, shape index: {}]
  %s6 = inlined_call_operand.hbm [shape: bf16[128,512], index: 6, kind: input, shape index: {}]
  %s7 = inlined_call_operand.hbm [shape: bf16[128,512], index: 7, kind: input, shape index: {}]
  %s8 = inlined_call_operand.vmem [shape: f32[1,512], index: 8, kind: input, shape index: {}]
  %s9 = inlined_call_operand.hbm [shape: bf16[128,512], index: 9, kind: input, shape index: {}]
  %s10 = inlined_call_operand.hbm [shape: f32[1,512], index: 10, kind: input, shape index: {}]
  %s11 = inlined_call_operand.hbm [shape: bf16[24,512], index: 11, kind: input, shape index: {}]
  %s12 = inlined_call_operand.hbm [shape: bf16[128,512], index: 12, kind: input, shape index: {}]
  %s13 = inlined_call_operand.hbm [shape: f32[1,512], index: 13, kind: input, shape index: {}]
  %s14 = inlined_call_operand.vmem [shape: bf16[24,512], index: 14, kind: input, shape index: {}]
  %s15 = inlined_call_operand.vmem [shape: f32[1,512], index: 15, kind: input, shape index: {}]
  %s16 = inlined_call_operand.hbm [shape: f32[16,512], index: 16, kind: output, shape index: {}]
  %s17 = sld [smem:[#allocation0]]
  $region157: #{tpu_custom_call.1} parent=0
    _
  %s19 = ssub.s32 1, %s17
  %s20 = scalar_select 0, %s19, %s17
  $region1: #{tpu_custom_call.1} parent=0
    #allocation2 [shape = 'u8[65536]{0}', space=vmem, size = 0x10000, scoped, tag = 'input window, operand 0, single buffered']
    #allocation3 [shape = 's32[2]{0}', space=sflag, size = 0x8, scoped, tag = 'scoped memory for tpu_custom_call.1']
    #allocation4 [shape = 's32[2]{0}', space=sflag, size = 0x8, scoped, tag = 'scoped memory for tpu_custom_call.1']
    #allocation5 [shape = 'u8[65536]{0}', space=vmem, size = 0x10000, scoped, tag = 'input window, operand 1, single buffered']
    #allocation6 [shape = 's32[1]{0}', space=sflag, size = 0x4, scoped, tag = 'scoped memory for tpu_custom_call.1']
    #allocation7 [shape = 'u8[12288]{0}', space=vmem, size = 0x3000, scoped, tag = 'input window, operand 2, single buffered']
    #allocation8 [shape = 'u8[98304]{0}', space=vmem, size = 0x18000, scoped, tag = 'input window, operand 3, single buffered']
    #allocation9 [shape = 's32[1]{0}', space=sflag, size = 0x4, scoped, tag = 'scoped memory for tpu_custom_call.1']
    #allocation10 [shape = 'u8[1536]{0}', space=vmem, size = 0x800, scoped, tag = 'input window, operand 4, single buffered']
    #allocation11 [shape = 'u8[1536]{0}', space=vmem, size = 0x800, scoped, tag = 'input window, operand 5, single buffered']
    #allocation12 [shape = 's32[1]{0}', space=sflag, size = 0x4, scoped, tag = 'scoped memory for tpu_custom_call.1']
    #allocation13 [shape = 'u8[131072]{0}', space=vmem, size = 0x20000, scoped, tag = 'input window, operand 6, single buffered']
    #allocation14 [shape = 'u8[131072]{0}', space=vmem, size = 0x20000, scoped, tag = 'input window, operand 7, single buffered']
    #allocation15 [shape = 's32[1]{0}', space=sflag, size = 0x4, scoped, tag = 'scoped memory for tpu_custom_call.1']
    #allocation16 [shape = 'u8[131072]{0}', space=vmem, size = 0x20000, scoped, tag = 'input window, operand 9, single buffered']
    #allocation17 [shape = 'u8[2048]{0}', space=vmem, size = 0x800, scoped, tag = 'input window, operand 10, single buffered']
    #allocation18 [shape = 's32[1]{0}', space=sflag, size = 0x4, scoped, tag = 'scoped memory for tpu_custom_call.1']
    #allocation19 [shape = 'u8[24576]{0}', space=vmem, size = 0x6000, scoped, tag = 'input window, operand 11, single buffered']
    #allocation20 [shape = 'u8[131072]{0}', space=vmem, size = 0x20000, scoped, tag = 'input window, operand 12, single buffered']
    #allocation21 [shape = 's32[1]{0}', space=sflag, size = 0x4, scoped, tag = 'scoped memory for tpu_custom_call.1']
    #allocation22 [shape = 'u8[2048]{0}', space=vmem, size = 0x800, scoped, tag = 'input window, operand 13, single buffered']
    #allocation23 [shape = 'u8[32768]{0}', space=vmem, size = 0x8000, scoped, tag = 'output window, operand 0']
    %21 = vsyncpa [#allocation3], 0
    %22 = vsyncpa [#allocation6], 0
    %23 = vsyncpa [#allocation9], 0
    %24 = vsyncpa [#allocation12], 0
    %25 = vsyncpa [#allocation15], 0
    %26 = vsyncpa [#allocation18], 0
    %27 = vsyncpa [#allocation21], 0
    %28 = vsyncpa [#allocation4], 0
    %s29 = scalar_lea.sflag [#allocation4], 1
    %30 = vsyncpa %s29, 0
    loop: start=0, step=1, limit=4
    $region2: #{tpu_custom_call.1} parent=1 // loop_pre_header
      _
    $region3: #{tpu_custom_call.1} parent=1 // loop_header
      %s32 = sphi 0, %s36
      %p33 = scmp.ge.s32.totalorder %s32, 4
      %s39 = sphi 0, %s51
      %s40 = sphi 0, %s47
      %s41 = sphi 0, %s39
      %s42 = sphi 0, %s40
      %s43 = sphi 0, %s41
      %s44 = sphi 0, %s42
      %s54 = sphi 0, %s56
      %s57 = sphi 0, %s54
      %s58 = sphi 0, %s57
      %s74 = sphi 0, %s58
      %s80 = sphi 0, %s82
      %s83 = sphi 0, %s80
      %s84 = sphi 0, %s83
      %s100 = sphi 0, %s84
      %s104 = sphi 0, %s104
      %s106 = sphi 0, %s104
      %s107 = sphi 0, %s106
      %s121 = sphi 0, %s107
      %s125 = sphi 0, %s125
      %s127 = sphi 0, %s125
      %s128 = sphi 0, %s127
      %s142 = sphi 0, %s128
      %s146 = sphi 0, %s146
      %s148 = sphi 0, %s146
      %s149 = sphi 0, %s148
      %s163 = sphi 0, %s149
      %s167 = sphi 0, %s167
      %s169 = sphi 0, %s167
      %s170 = sphi 0, %s169
      %s184 = sphi 0, %s170
      %s188 = sphi 0, %s188
      %s190 = sphi 0, %s188
      %s191 = sphi 0, %s190
      %s205 = sphi 0, %s191
      %s209 = sphi 0, %s209
      %s211 = sphi 0, %s209
      %s212 = sphi 0, %s211
      %s226 = sphi 0, %s212
      %s230 = sphi 0, %s230
      %s232 = sphi 0, %s230
      %s233 = sphi 0, %s232
      %s247 = sphi 0, %s233
      %s251 = sphi 0, %s251
      %s253 = sphi 0, %s251
      %s254 = sphi 0, %s253
      %s268 = sphi 0, %s254
      %s272 = sphi 0, %s272
      %s274 = sphi 0, %s272
      %s275 = sphi 0, %s274
      %s289 = sphi 0, %s275
      %s293 = sphi 0, %s293
      %s295 = sphi 0, %s293
      %s296 = sphi 0, %s295
      %s310 = sphi 0, %s296
      %s314 = sphi 0, %s314
      %s316 = sphi 0, %s314
      %s317 = sphi 0, %s316
      %s331 = sphi 0, %s317
      %s335 = sphi 0, %s335
      %s337 = sphi 0, %s335
      %s338 = sphi 0, %s337
      %s352 = sphi 0, %s338
      %s356 = sphi 0, %s356
      %s358 = sphi 0, %s356
      %s359 = sphi 0, %s358
      %s373 = sphi 0, %s359
      %s377 = sphi 0, %s377
      %s379 = sphi 0, %s377
      %s380 = sphi 0, %s379
      %s394 = sphi 0, %s380
      %s402 = sphi 0, %s404
      %s405 = sphi 0, %s402
      %s406 = sphi 0, %s405
      %s422 = sphi 0, %s406
    $region4: #{tpu_custom_call.1} parent=1 // loop_header_branch
      %35 = sbr.rel (%p33) target = $region8
    $region5: #{tpu_custom_call.1} parent=1 // loop_body
      %s37 = ssub.s32 %s32, 1
      %s38 = ssub.s32 %s32, 2
      %s45 = sadd.s32 1, %s40
      %p46 = scmp.ge.s32.totalorder %s45, 2
      %s47 = scalar_select %p46, 0, %s45
      %s48 = sadd.s32 1, %s39
      %s49 = scalar_select %p46, %s48, %s39
      %p50 = scmp.ge.s32.totalorder %s49, 1
      %s51 = scalar_select %p50, 0, %s49
      %s52 = ssub.s32 %s39, %s51
      %p53 = scmp.eq.s32.totalorder %s52, 0
      %s55 = sadd.s32 %s54, 1
      %s56 = scalar_select %p53, %s54, %s55
      %p59 = pneg %p53
      %p60 = scmp.eq.s32.totalorder %s32, 1
      %p61 = por %p59, %p60
      %p62 = scmp.ne.s32.totalorder %s54, %s57
      %p63 = scmp.eq.s32.totalorder %s32, 0
      %p64 = por %p62, %p63
      %p65 = scmp.ne.s32.totalorder %s54, %s57
      %p66 = scmp.eq.s32.totalorder %s37, 1
      %p67 = por %p65, %p66
      %p68 = scmp.ne.s32.totalorder %s57, %s58
      %p69 = scmp.eq.s32.totalorder %s37, 0
      %p70 = por %p68, %p69
      %p71 = scmp.ne.s32.totalorder %s57, %s58
      %p72 = scmp.eq.s32.totalorder %s38, 1
      %p73 = por %p71, %p72
      %p75 = scmp.ne.s32.totalorder %s58, %s74
      %p76 = scmp.eq.s32.totalorder %s38, 0
      %p77 = por %p75, %p76
      %s78 = ssub.s32 %s39, %s51
      %p79 = scmp.eq.s32.totalorder %s78, 0
      %s81 = sadd.s32 %s80, 1
      %s82 = scalar_select %p79, %s80, %s81
      %p85 = pneg %p79
      %p86 = scmp.eq.s32.totalorder %s32, 1
      %p87 = por %p85, %p86
      %p88 = scmp.ne.s32.totalorder %s80, %s83
      %p89 = scmp.eq.s32.totalorder %s32, 0
      %p90 = por %p88, %p89
      %p91 = scmp.ne.s32.totalorder %s80, %s83
      %p92 = scmp.eq.s32.totalorder %s37, 1
      %p93 = por %p91, %p92
      %p94 = scmp.ne.s32.totalorder %s83, %s84
      %p95 = scmp.eq.s32.totalorder %s37, 0
      %p96 = por %p94, %p95
      %p97 = scmp.ne.s32.totalorder %s83, %s84
      %p98 = scmp.eq.s32.totalorder %s38, 1
      %p99 = por %p97, %p98
      %p101 = scmp.ne.s32.totalorder %s84, %s100
      %p102 = scmp.eq.s32.totalorder %s38, 0
      %p103 = por %p101, %p102
      %s105 = sadd.s32 %s104, 1
      %p108 = scmp.eq.s32.totalorder %s32, 1
      %p109 = scmp.ne.s32.totalorder %s104, %s106
      %p110 = scmp.eq.s32.totalorder %s32, 0
      %p111 = por %p109, %p110
      %p112 = scmp.ne.s32.totalorder %s104, %s106
      %p113 = scmp.eq.s32.totalorder %s37, 1
      %p114 = por %p112, %p113
      %p115 = scmp.ne.s32.totalorder %s106, %s107
      %p116 = scmp.eq.s32.totalorder %s37, 0
      %p117 = por %p115, %p116
      %p118 = scmp.ne.s32.totalorder %s106, %s107
      %p119 = scmp.eq.s32.totalorder %s38, 1
      %p120 = por %p118, %p119
      %p122 = scmp.ne.s32.totalorder %s107, %s121
      %p123 = scmp.eq.s32.totalorder %s38, 0
      %p124 = por %p122, %p123
      %s126 = sadd.s32 %s125, 1
      %p129 = scmp.eq.s32.totalorder %s32, 1
      %p130 = scmp.ne.s32.totalorder %s125, %s127
      %p131 = scmp.eq.s32.totalorder %s32, 0
      %p132 = por %p130, %p131
      %p133 = scmp.ne.s32.totalorder %s125, %s127
      %p134 = scmp.eq.s32.totalorder %s37, 1
      %p135 = por %p133, %p134
      %p136 = scmp.ne.s32.totalorder %s127, %s128
      %p137 = scmp.eq.s32.totalorder %s37, 0
      %p138 = por %p136, %p137
      %p139 = scmp.ne.s32.totalorder %s127, %s128
      %p140 = scmp.eq.s32.totalorder %s38, 1
      %p141 = por %p139, %p140
      %p143 = scmp.ne.s32.totalorder %s128, %s142
      %p144 = scmp.eq.s32.totalorder %s38, 0
      %p145 = por %p143, %p144
      %s147 = sadd.s32 %s146, 1
      %p150 = scmp.eq.s32.totalorder %s32, 1
      %p151 = scmp.ne.s32.totalorder %s146, %s148
      %p152 = scmp.eq.s32.totalorder %s32, 0
      %p153 = por %p151, %p152
      %p154 = scmp.ne.s32.totalorder %s146, %s148
      %p155 = scmp.eq.s32.totalorder %s37, 1
      %p156 = por %p154, %p155
      %p157 = scmp.ne.s32.totalorder %s148, %s149
      %p158 = scmp.eq.s32.totalorder %s37, 0
      %p159 = por %p157, %p158
      %p160 = scmp.ne.s32.totalorder %s148, %s149
      %p161 = scmp.eq.s32.totalorder %s38, 1
      %p162 = por %p160, %p161
      %p164 = scmp.ne.s32.totalorder %s149, %s163
      %p165 = scmp.eq.s32.totalorder %s38, 0
      %p166 = por %p164, %p165
      %s168 = sadd.s32 %s167, 1
      %p171 = scmp.eq.s32.totalorder %s32, 1
      %p172 = scmp.ne.s32.totalorder %s167, %s169
      %p173 = scmp.eq.s32.totalorder %s32, 0
      %p174 = por %p172, %p173
      %p175 = scmp.ne.s32.totalorder %s167, %s169
      %p176 = scmp.eq.s32.totalorder %s37, 1
      %p177 = por %p175, %p176
      %p178 = scmp.ne.s32.totalorder %s169, %s170
      %p179 = scmp.eq.s32.totalorder %s37, 0
      %p180 = por %p178, %p179
      %p181 = scmp.ne.s32.totalorder %s169, %s170
      %p182 = scmp.eq.s32.totalorder %s38, 1
      %p183 = por %p181, %p182
      %p185 = scmp.ne.s32.totalorder %s170, %s184
      %p186 = scmp.eq.s32.totalorder %s38, 0
      %p187 = por %p185, %p186
      %s189 = sadd.s32 %s188, 1
      %p192 = scmp.eq.s32.totalorder %s32, 1
      %p193 = scmp.ne.s32.totalorder %s188, %s190
      %p194 = scmp.eq.s32.totalorder %s32, 0
      %p195 = por %p193, %p194
      %p196 = scmp.ne.s32.totalorder %s188, %s190
      %p197 = scmp.eq.s32.totalorder %s37, 1
      %p198 = por %p196, %p197
      %p199 = scmp.ne.s32.totalorder %s190, %s191
      %p200 = scmp.eq.s32.totalorder %s37, 0
      %p201 = por %p199, %p200
      %p202 = scmp.ne.s32.totalorder %s190, %s191
      %p203 = scmp.eq.s32.totalorder %s38, 1
      %p204 = por %p202, %p203
      %p206 = scmp.ne.s32.totalorder %s191, %s205
      %p207 = scmp.eq.s32.totalorder %s38, 0
      %p208 = por %p206, %p207
      %s210 = sadd.s32 %s209, 1
      %p213 = scmp.eq.s32.totalorder %s32, 1
      %p214 = scmp.ne.s32.totalorder %s209, %s211
      %p215 = scmp.eq.s32.totalorder %s32, 0
      %p216 = por %p214, %p215
      %p217 = scmp.ne.s32.totalorder %s209, %s211
      %p218 = scmp.eq.s32.totalorder %s37, 1
      %p219 = por %p217, %p218
      %p220 = scmp.ne.s32.totalorder %s211, %s212
      %p221 = scmp.eq.s32.totalorder %s37, 0
      %p222 = por %p220, %p221
      %p223 = scmp.ne.s32.totalorder %s211, %s212
      %p224 = scmp.eq.s32.totalorder %s38, 1
      %p225 = por %p223, %p224
      %p227 = scmp.ne.s32.totalorder %s212, %s226
      %p228 = scmp.eq.s32.totalorder %s38, 0
      %p229 = por %p227, %p228
      %s231 = sadd.s32 %s230, 1
      %p234 = scmp.eq.s32.totalorder %s32, 1
      %p235 = scmp.ne.s32.totalorder %s230, %s232
      %p236 = scmp.eq.s32.totalorder %s32, 0
      %p237 = por %p235, %p236
      %p238 = scmp.ne.s32.totalorder %s230, %s232
      %p239 = scmp.eq.s32.totalorder %s37, 1
      %p240 = por %p238, %p239
      %p241 = scmp.ne.s32.totalorder %s232, %s233
      %p242 = scmp.eq.s32.totalorder %s37, 0
      %p243 = por %p241, %p242
      %p244 = scmp.ne.s32.totalorder %s232, %s233
      %p245 = scmp.eq.s32.totalorder %s38, 1
      %p246 = por %p244, %p245
      %p248 = scmp.ne.s32.totalorder %s233, %s247
      %p249 = scmp.eq.s32.totalorder %s38, 0
      %p250 = por %p248, %p249
      %s252 = sadd.s32 %s251, 1
      %p255 = scmp.eq.s32.totalorder %s32, 1
      %p256 = scmp.ne.s32.totalorder %s251, %s253
      %p257 = scmp.eq.s32.totalorder %s32, 0
      %p258 = por %p256, %p257
      %p259 = scmp.ne.s32.totalorder %s251, %s253
      %p260 = scmp.eq.s32.totalorder %s37, 1
      %p261 = por %p259, %p260
      %p262 = scmp.ne.s32.totalorder %s253, %s254
      %p263 = scmp.eq.s32.totalorder %s37, 0
      %p264 = por %p262, %p263
      %p265 = scmp.ne.s32.totalorder %s253, %s254
      %p266 = scmp.eq.s32.totalorder %s38, 1
      %p267 = por %p265, %p266
      %p269 = scmp.ne.s32.totalorder %s254, %s268
      %p270 = scmp.eq.s32.totalorder %s38, 0
      %p271 = por %p269, %p270
      %s273 = sadd.s32 %s272, 1
      %p276 = scmp.eq.s32.totalorder %s32, 1
      %p277 = scmp.ne.s32.totalorder %s272, %s274
      %p278 = scmp.eq.s32.totalorder %s32, 0
      %p279 = por %p277, %p278
      %p280 = scmp.ne.s32.totalorder %s272, %s274
      %p281 = scmp.eq.s32.totalorder %s37, 1
      %p282 = por %p280, %p281
      %p283 = scmp.ne.s32.totalorder %s274, %s275
      %p284 = scmp.eq.s32.totalorder %s37, 0
      %p285 = por %p283, %p284
      %p286 = scmp.ne.s32.totalorder %s274, %s275
      %p287 = scmp.eq.s32.totalorder %s38, 1
      %p288 = por %p286, %p287
      %p290 = scmp.ne.s32.totalorder %s275, %s289
      %p291 = scmp.eq.s32.totalorder %s38, 0
      %p292 = por %p290, %p291
      %s294 = sadd.s32 %s293, 1
      %p297 = scmp.eq.s32.totalorder %s32, 1
      %p298 = scmp.ne.s32.totalorder %s293, %s295
      %p299 = scmp.eq.s32.totalorder %s32, 0
      %p300 = por %p298, %p299
      %p301 = scmp.ne.s32.totalorder %s293, %s295
      %p302 = scmp.eq.s32.totalorder %s37, 1
      %p303 = por %p301, %p302
      %p304 = scmp.ne.s32.totalorder %s295, %s296
      %p305 = scmp.eq.s32.totalorder %s37, 0
      %p306 = por %p304, %p305
      %p307 = scmp.ne.s32.totalorder %s295, %s296
      %p308 = scmp.eq.s32.totalorder %s38, 1
      %p309 = por %p307, %p308
      %p311 = scmp.ne.s32.totalorder %s296, %s310
      %p312 = scmp.eq.s32.totalorder %s38, 0
      %p313 = por %p311, %p312
      %s315 = sadd.s32 %s314, 1
      %p318 = scmp.eq.s32.totalorder %s32, 1
      %p319 = scmp.ne.s32.totalorder %s314, %s316
      %p320 = scmp.eq.s32.totalorder %s32, 0
      %p321 = por %p319, %p320
      %p322 = scmp.ne.s32.totalorder %s314, %s316
      %p323 = scmp.eq.s32.totalorder %s37, 1
      %p324 = por %p322, %p323
      %p325 = scmp.ne.s32.totalorder %s316, %s317
      %p326 = scmp.eq.s32.totalorder %s37, 0
      %p327 = por %p325, %p326
      %p328 = scmp.ne.s32.totalorder %s316, %s317
      %p329 = scmp.eq.s32.totalorder %s38, 1
      %p330 = por %p328, %p329
      %p332 = scmp.ne.s32.totalorder %s317, %s331
      %p333 = scmp.eq.s32.totalorder %s38, 0
      %p334 = por %p332, %p333
      %s336 = sadd.s32 %s335, 1
      %p339 = scmp.eq.s32.totalorder %s32, 1
      %p340 = scmp.ne.s32.totalorder %s335, %s337
      %p341 = scmp.eq.s32.totalorder %s32, 0
      %p342 = por %p340, %p341
      %p343 = scmp.ne.s32.totalorder %s335, %s337
      %p344 = scmp.eq.s32.totalorder %s37, 1
      %p345 = por %p343, %p344
      %p346 = scmp.ne.s32.totalorder %s337, %s338
      %p347 = scmp.eq.s32.totalorder %s37, 0
      %p348 = por %p346, %p347
      %p349 = scmp.ne.s32.totalorder %s337, %s338
      %p350 = scmp.eq.s32.totalorder %s38, 1
      %p351 = por %p349, %p350
      %p353 = scmp.ne.s32.totalorder %s338, %s352
      %p354 = scmp.eq.s32.totalorder %s38, 0
      %p355 = por %p353, %p354
      %s357 = sadd.s32 %s356, 1
      %p360 = scmp.eq.s32.totalorder %s32, 1
      %p361 = scmp.ne.s32.totalorder %s356, %s358
      %p362 = scmp.eq.s32.totalorder %s32, 0
      %p363 = por %p361, %p362
      %p364 = scmp.ne.s32.totalorder %s356, %s358
      %p365 = scmp.eq.s32.totalorder %s37, 1
      %p366 = por %p364, %p365
      %p367 = scmp.ne.s32.totalorder %s358, %s359
      %p368 = scmp.eq.s32.totalorder %s37, 0
      %p369 = por %p367, %p368
      %p370 = scmp.ne.s32.totalorder %s358, %s359
      %p371 = scmp.eq.s32.totalorder %s38, 1
      %p372 = por %p370, %p371
      %p374 = scmp.ne.s32.totalorder %s359, %s373
      %p375 = scmp.eq.s32.totalorder %s38, 0
      %p376 = por %p374, %p375
      %s378 = sadd.s32 %s377, 1
      %p381 = scmp.eq.s32.totalorder %s32, 1
      %p382 = scmp.ne.s32.totalorder %s377, %s379
      %p383 = scmp.eq.s32.totalorder %s32, 0
      %p384 = por %p382, %p383
      %p385 = scmp.ne.s32.totalorder %s377, %s379
      %p386 = scmp.eq.s32.totalorder %s37, 1
      %p387 = por %p385, %p386
      %p388 = scmp.ne.s32.totalorder %s379, %s380
      %p389 = scmp.eq.s32.totalorder %s37, 0
      %p390 = por %p388, %p389
      %p391 = scmp.ne.s32.totalorder %s379, %s380
      %p392 = scmp.eq.s32.totalorder %s38, 1
      %p393 = por %p391, %p392
      %p395 = scmp.ne.s32.totalorder %s380, %s394
      %p396 = scmp.eq.s32.totalorder %s38, 0
      %p397 = por %p395, %p396
      %s398 = ssub.s32 %s39, %s51
      %s399 = ssub.s32 %s40, %s47
      %s400 = sor.u32 %s398, %s399
      %p401 = scmp.eq.s32.totalorder %s400, 0
      %s403 = sadd.s32 %s402, 1
      %s404 = scalar_select %p401, %s402, %s403
      %p407 = pneg %p401
      %p408 = scmp.eq.s32.totalorder %s32, 1
      %p409 = por %p407, %p408
      %p410 = scmp.ne.s32.totalorder %s402, %s405
      %p411 = scmp.eq.s32.totalorder %s32, 0
      %p412 = por %p410, %p411
      %p413 = scmp.ne.s32.totalorder %s402, %s405
      %p414 = scmp.eq.s32.totalorder %s37, 1
      %p415 = por %p413, %p414
      %p416 = scmp.ne.s32.totalorder %s405, %s406
      %p417 = scmp.eq.s32.totalorder %s37, 0
      %p418 = por %p416, %p417
      %p419 = scmp.ne.s32.totalorder %s405, %s406
      %p420 = scmp.eq.s32.totalorder %s38, 1
      %p421 = por %p419, %p420
      %p423 = scmp.ne.s32.totalorder %s406, %s422
      %p424 = scmp.eq.s32.totalorder %s38, 0
      %p425 = por %p423, %p424
      %p426 = scmp.le.s32.totalorder 1, %s32
      %p427 = scmp.lt.s32.totalorder %s32, 3
      %p428 = pnand %p426, %p427
      %p429 = pneg %p428
      // Predicated region
      $region9: #{tpu_custom_call.1} parent=5 // pred_check
        _
      $region10: #{tpu_custom_call.1} parent=5 // pred_check_branch
        %431 = sbr.rel (%p428) target = $region12
      $region11: #{tpu_custom_call.1} parent=5 // pred_region
        %s432 = ssub.s32 %s32, 1
        // Predicated region
        $region13: #{tpu_custom_call.1} parent=11 // pred_check
          %p433 = pneg %p70
        $region14: #{tpu_custom_call.1} parent=11 // pred_check_branch
          %435 = sbr.rel (%p433) target = $region16
        $region15: #{tpu_custom_call.1} parent=11 // pred_region
          %s436 = smul.u32 2, %s41
          %s438 = ssub.s32 2048, 2048
          %439 = vsyncadd [#allocation3], %s438
          %s440 = smul.addr %s436, 128
          %s441 = scalar_lea.hbm %s0, %s440
          %s442 = sshll.u32 [#allocation2], 4
          %s443 = int_to_ptr.vmem [resolvable:$true] %s442
          %448 = dma.hbm_to_vmem [thread:$0]  %s441, 2048, %s443, [#allocation3], 128, 128, 8
        $region16: #{tpu_custom_call.1} parent=11 // pred_fallthru
          _
        // Predicated region
        $region17: #{tpu_custom_call.1} parent=11 // pred_check
          %p449 = pneg %p96
        $region18: #{tpu_custom_call.1} parent=11 // pred_check_branch
          %451 = sbr.rel (%p449) target = $region20
        $region19: #{tpu_custom_call.1} parent=11 // pred_region
          %s452 = smul.u32 2, %s41
          %s454 = ssub.s32 2048, 2048
          %455 = vsyncadd [#allocation6], %s454
          %s456 = smul.addr %s452, 128
          %s457 = scalar_lea.hbm %s1, %s456
          %s458 = sshll.u32 [#allocation5], 4
          %s459 = int_to_ptr.vmem [resolvable:$true] %s458
          %464 = dma.hbm_to_vmem [thread:$0]  %s457, 2048, %s459, [#allocation6], 128, 128, 8
        $region20: #{tpu_custom_call.1} parent=11 // pred_fallthru
          _
        // Predicated region
        $region21: #{tpu_custom_call.1} parent=11 // pred_check
          %p465 = pneg %p117
        $region22: #{tpu_custom_call.1} parent=11 // pred_check_branch
          %467 = sbr.rel (%p465) target = $region24
        $region23: #{tpu_custom_call.1} parent=11 // pred_region
          %s469 = ssub.s32 384, 384
          %470 = vsyncadd [#allocation6], %s469
          %s471 = sshll.u32 [#allocation7], 4
          %s472 = int_to_ptr.vmem [resolvable:$true] %s471
          %477 = dma.hbm_to_vmem [thread:$0]  %s2, 384, %s472, [#allocation6], 192, 192, 12
        $region24: #{tpu_custom_call.1} parent=11 // pred_fallthru
          _
        // Predicated region
        $region25: #{tpu_custom_call.1} parent=11 // pred_check
          %p478 = pneg %p138
        $region26: #{tpu_custom_call.1} parent=11 // pred_check_branch
          %480 = sbr.rel (%p478) target = $region28
        $region27: #{tpu_custom_call.1} parent=11 // pred_region
          %s482 = ssub.s32 3072, 3072
          %483 = vsyncadd [#allocation9], %s482
          %s484 = sshll.u32 [#allocation8], 4
          %s485 = int_to_ptr.vmem [resolvable:$true] %s484
          %490 = dma.hbm_to_vmem [thread:$0]  %s3, 3072, %s485, [#allocation9], 192, 192, 12
        $region28: #{tpu_custom_call.1} parent=11 // pred_fallthru
          _
        // Predicated region
        $region29: #{tpu_custom_call.1} parent=11 // pred_check
          %p491 = pneg %p159
        $region30: #{tpu_custom_call.1} parent=11 // pred_check_branch
          %493 = sbr.rel (%p491) target = $region32
        $region31: #{tpu_custom_call.1} parent=11 // pred_region
          %s495 = ssub.s32 48, 48
          %496 = vsyncadd [#allocation9], %s495
          %s498 = sshll.u32 [#allocation10], 4
          %s499 = int_to_ptr.vmem [resolvable:$true] %s498
          %501 = dma.hbm_to_vmem [thread:$0]  %s4, 48, %s499, [#allocation9]
        $region32: #{tpu_custom_call.1} parent=11 // pred_fallthru
          _
        // Predicated region
        $region33: #{tpu_custom_call.1} parent=11 // pred_check
          %p502 = pneg %p180
        $region34: #{tpu_custom_call.1} parent=11 // pred_check_branch
          %504 = sbr.rel (%p502) target = $region36
        $region35: #{tpu_custom_call.1} parent=11 // pred_region
          %s506 = ssub.s32 48, 48
          %507 = vsyncadd [#allocation12], %s506
          %s509 = sshll.u32 [#allocation11], 4
          %s510 = int_to_ptr.vmem [resolvable:$true] %s509
          %512 = dma.hbm_to_vmem [thread:$0]  %s5, 48, %s510, [#allocation12]
        $region36: #{tpu_custom_call.1} parent=11 // pred_fallthru
          _
        // Predicated region
        $region37: #{tpu_custom_call.1} parent=11 // pred_check
          %p513 = pneg %p201
        $region38: #{tpu_custom_call.1} parent=11 // pred_check_branch
          %515 = sbr.rel (%p513) target = $region40
        $region39: #{tpu_custom_call.1} parent=11 // pred_region
          %s517 = ssub.s32 4096, 4096
          %518 = vsyncadd [#allocation12], %s517
          %s519 = sshll.u32 [#allocation13], 4
          %s520 = int_to_ptr.vmem [resolvable:$true] %s519
          %525 = dma.hbm_to_vmem [thread:$0]  %s6, 4096, %s520, [#allocation12], 256, 256, 16
        $region40: #{tpu_custom_call.1} parent=11 // pred_fallthru
          _
        // Predicated region
        $region41: #{tpu_custom_call.1} parent=11 // pred_check
          %p526 = pneg %p222
        $region42: #{tpu_custom_call.1} parent=11 // pred_check_branch
          %528 = sbr.rel (%p526) target = $region44
        $region43: #{tpu_custom_call.1} parent=11 // pred_region
          %s530 = ssub.s32 4096, 4096
          %531 = vsyncadd [#allocation15], %s530
          %s532 = sshll.u32 [#allocation14], 4
          %s533 = int_to_ptr.vmem [resolvable:$true] %s532
          %538 = dma.hbm_to_vmem [thread:$0]  %s7, 4096, %s533, [#allocation15], 256, 256, 16
        $region44: #{tpu_custom_call.1} parent=11 // pred_fallthru
          _
        // Predicated region
        $region45: #{tpu_custom_call.1} parent=11 // pred_check
          %p539 = pneg %p243
        $region46: #{tpu_custom_call.1} parent=11 // pred_check_branch
          %541 = sbr.rel (%p539) target = $region48
        $region47: #{tpu_custom_call.1} parent=11 // pred_region
          _
        $region48: #{tpu_custom_call.1} parent=11 // pred_fallthru
          _
        // Predicated region
        $region49: #{tpu_custom_call.1} parent=11 // pred_check
          %p542 = pneg %p264
        $region50: #{tpu_custom_call.1} parent=11 // pred_check_branch
          %544 = sbr.rel (%p542) target = $region52
        $region51: #{tpu_custom_call.1} parent=11 // pred_region
          %s546 = ssub.s32 4096, 4096
          %547 = vsyncadd [#allocation15], %s546
          %s548 = sshll.u32 [#allocation16], 4
          %s549 = int_to_ptr.vmem [resolvable:$true] %s548
          %554 = dma.hbm_to_vmem [thread:$0]  %s9, 4096, %s549, [#allocation15], 256, 256, 16
        $region52: #{tpu_custom_call.1} parent=11 // pred_fallthru
          _
        // Predicated region
        $region53: #{tpu_custom_call.1} parent=11 // pred_check
          %p555 = pneg %p285
        $region54: #{tpu_custom_call.1} parent=11 // pred_check_branch
          %557 = sbr.rel (%p555) target = $region56
        $region55: #{tpu_custom_call.1} parent=11 // pred_region
          %s559 = ssub.s32 64, 64
          %560 = vsyncadd [#allocation18], %s559
          %s562 = sshll.u32 [#allocation17], 4
          %s563 = int_to_ptr.vmem [resolvable:$true] %s562
          %565 = dma.hbm_to_vmem [thread:$0]  %s10, 64, %s563, [#allocation18]
        $region56: #{tpu_custom_call.1} parent=11 // pred_fallthru
          _
        // Predicated region
        $region57: #{tpu_custom_call.1} parent=11 // pred_check
          %p566 = pneg %p306
        $region58: #{tpu_custom_call.1} parent=11 // pred_check_branch
          %568 = sbr.rel (%p566) target = $region60
        $region59: #{tpu_custom_call.1} parent=11 // pred_region
          %s570 = ssub.s32 768, 768
          %571 = vsyncadd [#allocation18], %s570
          %s572 = sshll.u32 [#allocation19], 4
          %s573 = int_to_ptr.vmem [resolvable:$true] %s572
          %578 = dma.hbm_to_vmem [thread:$0]  %s11, 768, %s573, [#allocation18], 256, 256, 16
        $region60: #{tpu_custom_call.1} parent=11 // pred_fallthru
          _
        // Predicated region
        $region61: #{tpu_custom_call.1} parent=11 // pred_check
          %p579 = pneg %p327
        $region62: #{tpu_custom_call.1} parent=11 // pred_check_branch
          %581 = sbr.rel (%p579) target = $region64
        $region63: #{tpu_custom_call.1} parent=11 // pred_region
          %s583 = ssub.s32 4096, 4096
          %584 = vsyncadd [#allocation21], %s583
          %s585 = sshll.u32 [#allocation20], 4
          %s586 = int_to_ptr.vmem [resolvable:$true] %s585
          %591 = dma.hbm_to_vmem [thread:$0]  %s12, 4096, %s586, [#allocation21], 256, 256, 16
        $region64: #{tpu_custom_call.1} parent=11 // pred_fallthru
          _
        // Predicated region
        $region65: #{tpu_custom_call.1} parent=11 // pred_check
          %p592 = pneg %p348
        $region66: #{tpu_custom_call.1} parent=11 // pred_check_branch
          %594 = sbr.rel (%p592) target = $region68
        $region67: #{tpu_custom_call.1} parent=11 // pred_region
          %s596 = ssub.s32 64, 64
          %597 = vsyncadd [#allocation21], %s596
          %s599 = sshll.u32 [#allocation22], 4
          %s600 = int_to_ptr.vmem [resolvable:$true] %s599
          %602 = dma.hbm_to_vmem [thread:$0]  %s13, 64, %s600, [#allocation21]
        $region68: #{tpu_custom_call.1} parent=11 // pred_fallthru
          _
        // Predicated region
        $region69: #{tpu_custom_call.1} parent=11 // pred_check
          %p603 = pneg %p369
        $region70: #{tpu_custom_call.1} parent=11 // pred_check_branch
          %605 = sbr.rel (%p603) target = $region72
        $region71: #{tpu_custom_call.1} parent=11 // pred_region
          _
        $region72: #{tpu_custom_call.1} parent=11 // pred_fallthru
          _
        // Predicated region
        $region73: #{tpu_custom_call.1} parent=11 // pred_check
          %p606 = pneg %p390
        $region74: #{tpu_custom_call.1} parent=11 // pred_check_branch
          %608 = sbr.rel (%p606) target = $region76
        $region75: #{tpu_custom_call.1} parent=11 // pred_region
          _
        $region76: #{tpu_custom_call.1} parent=11 // pred_fallthru
          _
      $region12: #{tpu_custom_call.1} parent=5 // pred_fallthru
        _
      %p609 = scmp.lt.s32.totalorder %s32, 2
      // Predicated region
      $region77: #{tpu_custom_call.1} parent=5 // pred_check
        %p610 = pneg %p609
      $region78: #{tpu_custom_call.1} parent=5 // pred_check_branch
        %612 = sbr.rel (%p610) target = $region80
      $region79: #{tpu_custom_call.1} parent=5 // pred_region
        _
      $region80: #{tpu_custom_call.1} parent=5 // pred_fallthru
        _
      %p613 = scmp.le.s32.totalorder 1, %s32
      %p614 = scmp.lt.s32.totalorder %s32, 3
      %p615 = pnand %p613, %p614
      %p616 = pneg %p615
      // Predicated region
      $region81: #{tpu_custom_call.1} parent=5 // pred_check
        _
      $region82: #{tpu_custom_call.1} parent=5 // pred_check_branch
        %618 = sbr.rel (%p615) target = $region84
      $region83: #{tpu_custom_call.1} parent=5 // pred_region
        %s619 = ssub.s32 %s32, 1
        // Predicated region
        $region85: #{tpu_custom_call.1} parent=83 // pred_check
          %p620 = pneg %p70
        $region86: #{tpu_custom_call.1} parent=83 // pred_check_branch
          %622 = sbr.rel (%p620) target = $region88
        $region87: #{tpu_custom_call.1} parent=83 // pred_region
          %623 = dma.done [#allocation3], 2048
        $region88: #{tpu_custom_call.1} parent=83 // pred_fallthru
          _
        // Predicated region
        $region89: #{tpu_custom_call.1} parent=83 // pred_check
          %p624 = pneg %p96
        $region90: #{tpu_custom_call.1} parent=83 // pred_check_branch
          %626 = sbr.rel (%p624) target = $region92
        $region91: #{tpu_custom_call.1} parent=83 // pred_region
          %627 = dma.done [#allocation6], 2048
        $region92: #{tpu_custom_call.1} parent=83 // pred_fallthru
          _
        // Predicated region
        $region93: #{tpu_custom_call.1} parent=83 // pred_check
          %p628 = pneg %p117
        $region94: #{tpu_custom_call.1} parent=83 // pred_check_branch
          %630 = sbr.rel (%p628) target = $region96
        $region95: #{tpu_custom_call.1} parent=83 // pred_region
          %631 = dma.done [#allocation6], 384
        $region96: #{tpu_custom_call.1} parent=83 // pred_fallthru
          _
        // Predicated region
        $region97: #{tpu_custom_call.1} parent=83 // pred_check
          %p632 = pneg %p138
        $region98: #{tpu_custom_call.1} parent=83 // pred_check_branch
          %634 = sbr.rel (%p632) target = $region100
        $region99: #{tpu_custom_call.1} parent=83 // pred_region
          %635 = dma.done [#allocation9], 3072
        $region100: #{tpu_custom_call.1} parent=83 // pred_fallthru
          _
        // Predicated region
        $region101: #{tpu_custom_call.1} parent=83 // pred_check
          %p636 = pneg %p159
        $region102: #{tpu_custom_call.1} parent=83 // pred_check_branch
          %638 = sbr.rel (%p636) target = $region104
        $region103: #{tpu_custom_call.1} parent=83 // pred_region
          %639 = dma.done [#allocation9], 48
        $region104: #{tpu_custom_call.1} parent=83 // pred_fallthru
          _
        // Predicated region
        $region105: #{tpu_custom_call.1} parent=83 // pred_check
          %p640 = pneg %p180
        $region106: #{tpu_custom_call.1} parent=83 // pred_check_branch
          %642 = sbr.rel (%p640) target = $region108
        $region107: #{tpu_custom_call.1} parent=83 // pred_region
          %643 = dma.done [#allocation12], 48
        $region108: #{tpu_custom_call.1} parent=83 // pred_fallthru
          _
        // Predicated region
        $region109: #{tpu_custom_call.1} parent=83 // pred_check
          %p644 = pneg %p201
        $region110: #{tpu_custom_call.1} parent=83 // pred_check_branch
          %646 = sbr.rel (%p644) target = $region112
        $region111: #{tpu_custom_call.1} parent=83 // pred_region
          %647 = dma.done [#allocation12], 4096
        $region112: #{tpu_custom_call.1} parent=83 // pred_fallthru
          _
        // Predicated region
        $region113: #{tpu_custom_call.1} parent=83 // pred_check
          %p648 = pneg %p222
        $region114: #{tpu_custom_call.1} parent=83 // pred_check_branch
          %650 = sbr.rel (%p648) target = $region116
        $region115: #{tpu_custom_call.1} parent=83 // pred_region
          %651 = dma.done [#allocation15], 4096
        $region116: #{tpu_custom_call.1} parent=83 // pred_fallthru
          _
        // Predicated region
        $region117: #{tpu_custom_call.1} parent=83 // pred_check
          %p652 = pneg %p264
        $region118: #{tpu_custom_call.1} parent=83 // pred_check_branch
          %654 = sbr.rel (%p652) target = $region120
        $region119: #{tpu_custom_call.1} parent=83 // pred_region
          %655 = dma.done [#allocation15], 4096
        $region120: #{tpu_custom_call.1} parent=83 // pred_fallthru
          _
        // Predicated region
        $region121: #{tpu_custom_call.1} parent=83 // pred_check
          %p656 = pneg %p285
        $region122: #{tpu_custom_call.1} parent=83 // pred_check_branch
          %658 = sbr.rel (%p656) target = $region124
        $region123: #{tpu_custom_call.1} parent=83 // pred_region
          %659 = dma.done [#allocation18], 64
        $region124: #{tpu_custom_call.1} parent=83 // pred_fallthru
          _
        // Predicated region
        $region125: #{tpu_custom_call.1} parent=83 // pred_check
          %p660 = pneg %p306
        $region126: #{tpu_custom_call.1} parent=83 // pred_check_branch
          %662 = sbr.rel (%p660) target = $region128
        $region127: #{tpu_custom_call.1} parent=83 // pred_region
          %663 = dma.done [#allocation18], 768
        $region128: #{tpu_custom_call.1} parent=83 // pred_fallthru
          _
        // Predicated region
        $region129: #{tpu_custom_call.1} parent=83 // pred_check
          %p664 = pneg %p327
        $region130: #{tpu_custom_call.1} parent=83 // pred_check_branch
          %666 = sbr.rel (%p664) target = $region132
        $region131: #{tpu_custom_call.1} parent=83 // pred_region
          %667 = dma.done [#allocation21], 4096
        $region132: #{tpu_custom_call.1} parent=83 // pred_fallthru
          _
        // Predicated region
        $region133: #{tpu_custom_call.1} parent=83 // pred_check
          %p668 = pneg %p348
        $region134: #{tpu_custom_call.1} parent=83 // pred_check_branch
          %670 = sbr.rel (%p668) target = $region136
        $region135: #{tpu_custom_call.1} parent=83 // pred_region
          %671 = dma.done [#allocation21], 64
        $region136: #{tpu_custom_call.1} parent=83 // pred_fallthru
          _
        %p672 = pneg %p70
        %p673 = pneg %p67
        %p674 = pneg %p96
        %p675 = pneg %p93
        %p676 = pneg %p117
        %p677 = pneg %p114
        %p678 = pneg %p138
        %p679 = pneg %p135
        %p680 = pneg %p159
        %p681 = pneg %p156
        %p682 = pneg %p180
        %p683 = pneg %p177
        %p684 = pneg %p201
        %p685 = pneg %p198
        %p686 = pneg %p222
        %p687 = pneg %p219
        %p688 = pneg %p243
        %p689 = pneg %p240
        %p690 = pneg %p264
        %p691 = pneg %p261
        %p692 = pneg %p285
        %p693 = pneg %p282
        %p694 = pneg %p306
        %p695 = pneg %p303
        %p696 = pneg %p327
        %p697 = pneg %p324
        %p698 = pneg %p348
        %p699 = pneg %p345
        %p700 = pneg %p369
        %p701 = pneg %p366
        %p702 = pneg %p390
        %p703 = pneg %p387
        %p704 = pneg %p418
        %p705 = pneg %p415
        %s706 = sand.u32 %s405, 1
        %s707 = scalar_lea.sflag [#allocation4], %s706
        %s708 = sand.u32 %s405, 1
        %s709 = smul.addr %s708, 32
        %s710 = scalar_lea.vmem [#allocation23], %s709
        %s711 = smul.u32 2, %s41
        %s712 = smul.u32 2, %s41
        %s713 = smul.u32 2, %s41
        %s714 = smul.u32 2, %s42
        %p716 = scmp.eq.s32.totalorder %s42, 0
        // Predicated region
        $region137: #{tpu_custom_call.1} parent=83 // pred_check
          %p717 = pneg %p716
        $region138: #{tpu_custom_call.1} parent=83 // pred_check_branch
          %719 = sbr.rel (%p717) target = $region140
        $region139: #{tpu_custom_call.1} parent=83 // pred_region
          %v720 = vld [vmem:[#allocation10] sm:$0x7]
          %v722 = vlaneseq
          %v723 = vshrl.u32 %v722, 7
          %v724 = vsub.s32 0, %v723
          %v725 = vrot.slane %v720, %v724
          %v726 = vlaneseq
          %v727 = vshrl.u32 %v726, 7
          %v728 = vsub.s32 1, %v727
          %v729 = vrot.slane %v720, %v728
          %v730 = vlaneseq
          %v731 = vshrl.u32 %v730, 7
          %v732 = vsub.s32 2, %v731
          %v733 = vrot.slane %v720, %v732
          %v737 = vld [vmem:[#allocation11] sm:$0x7]
          %v739 = vlaneseq
          %v740 = vshrl.u32 %v739, 7
          %v741 = vsub.s32 0, %v740
          %v742 = vrot.slane %v737, %v741
          %v743 = vlaneseq
          %v744 = vshrl.u32 %v743, 7
          %v745 = vsub.s32 1, %v744
          %v746 = vrot.slane %v737, %v745
          %v747 = vlaneseq
          %v748 = vshrl.u32 %v747, 7
          %v749 = vsub.s32 2, %v748
          %v750 = vrot.slane %v737, %v749
          %v754 = vld [vmem:[%s8] sm:$0xf]
          %v756 = vlaneseq
          %v757 = vshrl.u32 %v756, 7
          %v758 = vsub.s32 0, %v757
          %v759 = vrot.slane %v754, %v758
          %v760 = vlaneseq
          %v761 = vshrl.u32 %v760, 7
          %v762 = vsub.s32 1, %v761
          %v763 = vrot.slane %v754, %v762
          %v764 = vlaneseq
          %v765 = vshrl.u32 %v764, 7
          %v766 = vsub.s32 2, %v765
          %v767 = vrot.slane %v754, %v766
          %v768 = vlaneseq
          %v769 = vshrl.u32 %v768, 7
          %v770 = vsub.s32 3, %v769
          %v771 = vrot.slane %v754, %v770
          %v776 = vld [vmem:[#allocation2] sm:$0xff]
          %v777 = vld [vmem:[#allocation2 + $0x8] sm:$0xff]
          %v778 = vpack.c.bf16 %v777, %v776
          %v779 = vld [vmem:[#allocation7] sm:$0xff]
          %v780 = vld [vmem:[#allocation7 + $0x8] sm:$0xf]
          %v781 = vld [vmem:[#allocation7 + $0xc] sm:$0xff]
          %v782 = vld [vmem:[#allocation7 + $0x14] sm:$0xf]
          %v787 = vunpack.c.l.b16 %v779
          %v788 = vunpack.c.h.b16 %v779
          %v789 = vunpack.c.l.b16 %v780
          %v790 = vunpack.c.l.b16 %v781
          %v791 = vunpack.c.h.b16 %v781
          %v792 = vunpack.c.l.b16 %v782
          %v793 = vpack.c.b16 %v790, %v787
          %v794 = vpack.c.b16 %v791, %v788
          %v795 = vpack.c.b16 %v792, %v789
          %vm799 = vcmask 130048
          %v801 = vsel %vm799, %v778, 0
          %803 = vmatprep.subr.bf16.mxu0 %v794
          %804 = vmatpush1.bf16.msra.mxu0 %v793
          %805 = vmatprep.subr.bf16.mxu0 0
          %806 = vmatpush1.bf16.msra.mxu0 0
          %807 = vmatprep.subr.bf16.mxu0 0
          %808 = vmatpush1.bf16.msra.mxu0 0
          %809 = vmatprep.subr.bf16.mxu0 0
          %810 = vmatpush1.bf16.msra.mxu0 0
          %811 = vmatprep.subr.bf16.mxu0 0
          %812 = vmatpush1.bf16.msra.mxu0 0
          %813 = vmatprep.subr.bf16.mxu0 0
          %814 = vmatpush1.bf16.msra.mxu0 0
          %815 = vmatprep.subr.bf16.mxu0 0
          %816 = vmatpush1.bf16.msra.mxu0 0
          %817 = vmatprep.subr.bf16.mxu0 0
          %818 = vmatpush1.bf16.msra.mxu0 0
          %819 = vmatprep.subr.bf16.mxu0 0
          %820 = vmatpush1.bf16.msra.mxu0 0
          %821 = vmatprep.subr.bf16.mxu0 0
          %822 = vmatpush1.bf16.msra.mxu0 0
          %823 = vmatprep.subr.bf16.mxu0 0
          %824 = vmatpush1.bf16.msra.mxu0 0
          %825 = vmatprep.subr.bf16.mxu0 0
          %826 = vmatpush1.bf16.msra.mxu0 0
          %827 = vmatprep.subr.bf16.mxu0 0
          %828 = vmatpush1.bf16.msra.mxu0 0
          %829 = vmatprep.subr.bf16.mxu0 0
          %830 = vmatpush1.bf16.msra.mxu0 0
          %831 = vmatprep.subr.bf16.mxu0 0
          %832 = vmatpush1.bf16.msra.mxu0 0
          %833 = vmatprep.subr.bf16.mxu0 0
          %834 = vmatpush1.bf16.msra.mxu0 0
          %835 = vmatprep.mubr.bf16.mxu0 0
          %836 = vmatmul.mubr.bf16.gmra.mrb[0].mxu0 %v801
          %v837 = vpop.f32.mrb[0].mxu0
          %v838 = vadd.f32 %v725, %v837
          %v839 = vpop.f32.mrb[0].mxu0
          %v840 = vadd.f32 %v729, %v839
          %v841 = vpop.f32.mrb[0].mxu0
          %v842 = vadd.f32 %v725, %v841
          %v843 = vpop.f32.mrb[0].mxu0
          %v844 = vadd.f32 %v729, %v843
          %845 = vdwg.mxu0
          %846 = vmatprep.subr.bf16.mxu0 0
          %847 = vmatpush1.bf16.msra.mxu0 %v795
          %848 = vmatprep.subr.bf16.mxu0 0
          %849 = vmatpush1.bf16.msra.mxu0 0
          %850 = vmatprep.subr.bf16.mxu0 0
          %851 = vmatpush1.bf16.msra.mxu0 0
          %852 = vmatprep.subr.bf16.mxu0 0
          %853 = vmatpush1.bf16.msra.mxu0 0
          %854 = vmatprep.subr.bf16.mxu0 0
          %855 = vmatpush1.bf16.msra.mxu0 0
          %856 = vmatprep.subr.bf16.mxu0 0
          %857 = vmatpush1.bf16.msra.mxu0 0
          %858 = vmatprep.subr.bf16.mxu0 0
          %859 = vmatpush1.bf16.msra.mxu0 0
          %860 = vmatprep.subr.bf16.mxu0 0
          %861 = vmatpush1.bf16.msra.mxu0 0
          %862 = vmatprep.subr.bf16.mxu0 0
          %863 = vmatpush1.bf16.msra.mxu0 0
          %864 = vmatprep.subr.bf16.mxu0 0
          %865 = vmatpush1.bf16.msra.mxu0 0
          %866 = vmatprep.subr.bf16.mxu0 0
          %867 = vmatpush1.bf16.msra.mxu0 0
          %868 = vmatprep.subr.bf16.mxu0 0
          %869 = vmatpush1.bf16.msra.mxu0 0
          %870 = vmatprep.subr.bf16.mxu0 0
          %871 = vmatpush1.bf16.msra.mxu0 0
          %872 = vmatprep.subr.bf16.mxu0 0
          %873 = vmatpush1.bf16.msra.mxu0 0
          %874 = vmatprep.subr.bf16.mxu0 0
          %875 = vmatpush1.bf16.msra.mxu0 0
          %876 = vmatprep.subr.bf16.mxu0 0
          %877 = vmatpush1.bf16.msra.mxu0 0
          %878 = vmatprep.mubr.bf16.mxu0 0
          %879 = vmatmul.mubr.bf16.gmra.mrb[0].mxu0 %v801
          %v880 = vpop.f32.mrb[0].mxu0
          %v881 = vadd.f32 %v733, %v880
          %v882 = vpop.f32.mrb[0].mxu0
          %v883 = vpop.f32.mrb[0].mxu0
          %v884 = vadd.f32 %v733, %v883
          %v885 = vpop.f32.mrb[0].mxu0
          %886 = vdwg.mxu0
          %v887 = vld [vmem:[#allocation8] sm:$0xff]
          %v888 = vld [vmem:[#allocation8 + $0x8] sm:$0xf]
          %v889 = vld [vmem:[#allocation8 + $0xc] sm:$0xff]
          %v890 = vld [vmem:[#allocation8 + $0x14] sm:$0xf]
          %v891 = vld [vmem:[#allocation8 + $0x18] sm:$0xff]
          %v892 = vld [vmem:[#allocation8 + $0x20] sm:$0xf]
          %v893 = vld [vmem:[#allocation8 + $0x24] sm:$0xff]
          %v894 = vld [vmem:[#allocation8 + $0x2c] sm:$0xf]
          %v895 = vld [vmem:[#allocation8 + $0x30] sm:$0xff]
          %v896 = vld [vmem:[#allocation8 + $0x38] sm:$0xf]
          %v897 = vld [vmem:[#allocation8 + $0x3c] sm:$0xff]
          %v898 = vld [vmem:[#allocation8 + $0x44] sm:$0xf]
          %v899 = vld [vmem:[#allocation8 + $0x48] sm:$0xff]
          %v900 = vld [vmem:[#allocation8 + $0x50] sm:$0xf]
          %v901 = vld [vmem:[#allocation8 + $0x54] sm:$0xff]
          %v902 = vld [vmem:[#allocation8 + $0x5c] sm:$0xf]
          %v903 = vld [vmem:[#allocation8 + $0x60] sm:$0xff]
          %v904 = vld [vmem:[#allocation8 + $0x68] sm:$0xf]
          %v905 = vld [vmem:[#allocation8 + $0x6c] sm:$0xff]
          %v906 = vld [vmem:[#allocation8 + $0x74] sm:$0xf]
          %v907 = vld [vmem:[#allocation8 + $0x78] sm:$0xff]
          %v908 = vld [vmem:[#allocation8 + $0x80] sm:$0xf]
          %v909 = vld [vmem:[#allocation8 + $0x84] sm:$0xff]
          %v910 = vld [vmem:[#allocation8 + $0x8c] sm:$0xf]
          %v911 = vld [vmem:[#allocation8 + $0x90] sm:$0xff]
          %v912 = vld [vmem:[#allocation8 + $0x98] sm:$0xf]
          %v913 = vld [vmem:[#allocation8 + $0x9c] sm:$0xff]
          %v914 = vld [vmem:[#allocation8 + $0xa4] sm:$0xf]
          %v915 = vld [vmem:[#allocation8 + $0xa8] sm:$0xff]
          %v916 = vld [vmem:[#allocation8 + $0xb0] sm:$0xf]
          %v917 = vld [vmem:[#allocation8 + $0xb4] sm:$0xff]
          %v918 = vld [vmem:[#allocation8 + $0xbc] sm:$0xf]
          %v951 = vunpack.c.l.b16 %v887
          %v952 = vunpack.c.h.b16 %v887
          %v953 = vunpack.c.l.b16 %v888
          %v954 = vunpack.c.l.b16 %v889
          %v955 = vunpack.c.h.b16 %v889
          %v956 = vunpack.c.l.b16 %v890
          %v957 = vunpack.c.l.b16 %v891
          %v958 = vunpack.c.h.b16 %v891
          %v959 = vunpack.c.l.b16 %v892
          %v960 = vunpack.c.l.b16 %v893
          %v961 = vunpack.c.h.b16 %v893
          %v962 = vunpack.c.l.b16 %v894
          %v963 = vunpack.c.l.b16 %v895
          %v964 = vunpack.c.h.b16 %v895
          %v965 = vunpack.c.l.b16 %v896
          %v966 = vunpack.c.l.b16 %v897
          %v967 = vunpack.c.h.b16 %v897
          %v968 = vunpack.c.l.b16 %v898
          %v969 = vunpack.c.l.b16 %v899
          %v970 = vunpack.c.h.b16 %v899
          %v971 = vunpack.c.l.b16 %v900
          %v972 = vunpack.c.l.b16 %v901
          %v973 = vunpack.c.h.b16 %v901
          %v974 = vunpack.c.l.b16 %v902
          %v975 = vunpack.c.l.b16 %v903
          %v976 = vunpack.c.h.b16 %v903
          %v977 = vunpack.c.l.b16 %v904
          %v978 = vunpack.c.l.b16 %v905
          %v979 = vunpack.c.h.b16 %v905
          %v980 = vunpack.c.l.b16 %v906
          %v981 = vunpack.c.l.b16 %v907
          %v982 = vunpack.c.h.b16 %v907
          %v983 = vunpack.c.l.b16 %v908
          %v984 = vunpack.c.l.b16 %v909
          %v985 = vunpack.c.h.b16 %v909
          %v986 = vunpack.c.l.b16 %v910
          %v987 = vunpack.c.l.b16 %v911
          %v988 = vunpack.c.h.b16 %v911
          %v989 = vunpack.c.l.b16 %v912
          %v990 = vunpack.c.l.b16 %v913
          %v991 = vunpack.c.h.b16 %v913
          %v992 = vunpack.c.l.b16 %v914
          %v993 = vunpack.c.l.b16 %v915
          %v994 = vunpack.c.h.b16 %v915
          %v995 = vunpack.c.l.b16 %v916
          %v996 = vunpack.c.l.b16 %v917
          %v997 = vunpack.c.h.b16 %v917
          %v998 = vunpack.c.l.b16 %v918
          %v999 = vpack.c.b16 %v954, %v951
          %v1000 = vpack.c.b16 %v955, %v952
          %v1001 = vpack.c.b16 %v956, %v953
          %v1002 = vpack.c.b16 %v960, %v957
          %v1003 = vpack.c.b16 %v961, %v958
          %v1004 = vpack.c.b16 %v962, %v959
          %v1005 = vpack.c.b16 %v966, %v963
          %v1006 = vpack.c.b16 %v967, %v964
          %v1007 = vpack.c.b16 %v968, %v965
          %v1008 = vpack.c.b16 %v972, %v969
          %v1009 = vpack.c.b16 %v973, %v970
          %v1010 = vpack.c.b16 %v974, %v971
          %v1011 = vpack.c.b16 %v978, %v975
          %v1012 = vpack.c.b16 %v979, %v976
          %v1013 = vpack.c.b16 %v980, %v977
          %v1014 = vpack.c.b16 %v984, %v981
          %v1015 = vpack.c.b16 %v985, %v982
          %v1016 = vpack.c.b16 %v986, %v983
          %v1017 = vpack.c.b16 %v990, %v987
          %v1018 = vpack.c.b16 %v991, %v988
          %v1019 = vpack.c.b16 %v992, %v989
          %v1020 = vpack.c.b16 %v996, %v993
          %v1021 = vpack.c.b16 %v997, %v994
          %v1022 = vpack.c.b16 %v998, %v995
          %1047 = vmatprep.subr.bf16.mxu0 %v1000
          %1048 = vmatpush1.bf16.msra.mxu0 %v999
          %1049 = vmatprep.subr.bf16.mxu0 %v1003
          %1050 = vmatpush1.bf16.msra.mxu0 %v1002
          %1051 = vmatprep.subr.bf16.mxu0 %v1006
          %1052 = vmatpush1.bf16.msra.mxu0 %v1005
          %1053 = vmatprep.subr.bf16.mxu0 %v1009
          %1054 = vmatpush1.bf16.msra.mxu0 %v1008
          %1055 = vmatprep.subr.bf16.mxu0 %v1012
          %1056 = vmatpush1.bf16.msra.mxu0 %v1011
          %1057 = vmatprep.subr.bf16.mxu0 %v1015
          %1058 = vmatpush1.bf16.msra.mxu0 %v1014
          %1059 = vmatprep.subr.bf16.mxu0 %v1018
          %1060 = vmatpush1.bf16.msra.mxu0 %v1017
          %1061 = vmatprep.subr.bf16.mxu0 %v1021
          %1062 = vmatpush1.bf16.msra.mxu0 %v1020
          %1063 = vmatprep.subr.bf16.mxu0 0
          %1064 = vmatpush1.bf16.msra.mxu0 0
          %1065 = vmatprep.subr.bf16.mxu0 0
          %1066 = vmatpush1.bf16.msra.mxu0 0
          %1067 = vmatprep.subr.bf16.mxu0 0
          %1068 = vmatpush1.bf16.msra.mxu0 0
          %1069 = vmatprep.subr.bf16.mxu0 0
          %1070 = vmatpush1.bf16.msra.mxu0 0
          %1071 = vmatprep.subr.bf16.mxu0 0
          %1072 = vmatpush1.bf16.msra.mxu0 0
          %1073 = vmatprep.subr.bf16.mxu0 0
          %1074 = vmatpush1.bf16.msra.mxu0 0
          %1075 = vmatprep.subr.bf16.mxu0 0
          %1076 = vmatpush1.bf16.msra.mxu0 0
          %1077 = vmatprep.subr.bf16.mxu0 0
          %1078 = vmatpush1.bf16.msra.mxu0 0
          %1079 = vmatprep.mubr.bf16.mxu0 0
          %1080 = vmatmul.mubr.bf16.gmra.mrb[0].mxu0 0
          %v1081 = vpop.f32.mrb[0].mxu0
          %v1082 = vadd.f32 %v742, %v1081
          %v1083 = vpop.f32.mrb[0].mxu0
          %v1084 = vadd.f32 %v746, %v1083
          %v1085 = vpop.f32.mrb[0].mxu0
          %v1086 = vadd.f32 %v742, %v1085
          %v1087 = vpop.f32.mrb[0].mxu0
          %v1088 = vadd.f32 %v746, %v1087
          %1089 = vdwg.mxu0
          %1090 = vmatprep.subr.bf16.mxu0 0
          %1091 = vmatpush1.bf16.msra.mxu0 %v1001
          %1092 = vmatprep.subr.bf16.mxu0 0
          %1093 = vmatpush1.bf16.msra.mxu0 %v1004
          %1094 = vmatprep.subr.bf16.mxu0 0
          %1095 = vmatpush1.bf16.msra.mxu0 %v1007
          %1096 = vmatprep.subr.bf16.mxu0 0
          %1097 = vmatpush1.bf16.msra.mxu0 %v1010
          %1098 = vmatprep.subr.bf16.mxu0 0
          %1099 = vmatpush1.bf16.msra.mxu0 %v1013
          %1100 = vmatprep.subr.bf16.mxu0 0
          %1101 = vmatpush1.bf16.msra.mxu0 %v1016
          %1102 = vmatprep.subr.bf16.mxu0 0
          %1103 = vmatpush1.bf16.msra.mxu0 %v1019
          %1104 = vmatprep.subr.bf16.mxu0 0
          %1105 = vmatpush1.bf16.msra.mxu0 %v1022
          %1106 = vmatprep.subr.bf16.mxu0 0
          %1107 = vmatpush1.bf16.msra.mxu0 0
          %1108 = vmatprep.subr.bf16.mxu0 0
          %1109 = vmatpush1.bf16.msra.mxu0 0
          %1110 = vmatprep.subr.bf16.mxu0 0
          %1111 = vmatpush1.bf16.msra.mxu0 0
          %1112 = vmatprep.subr.bf16.mxu0 0
          %1113 = vmatpush1.bf16.msra.mxu0 0
          %1114 = vmatprep.subr.bf16.mxu0 0
          %1115 = vmatpush1.bf16.msra.mxu0 0
          %1116 = vmatprep.subr.bf16.mxu0 0
          %1117 = vmatpush1.bf16.msra.mxu0 0
          %1118 = vmatprep.subr.bf16.mxu0 0
          %1119 = vmatpush1.bf16.msra.mxu0 0
          %1120 = vmatprep.subr.bf16.mxu0 0
          %1121 = vmatpush1.bf16.msra.mxu0 0
          %1122 = vmatprep.mubr.bf16.mxu0 0
          %1123 = vmatmul.mubr.bf16.gmra.mrb[0].mxu0 0
          %v1124 = vpop.f32.mrb[0].mxu0
          %v1125 = vadd.f32 %v750, %v1124
          %v1126 = vpop.f32.mrb[0].mxu0
          %v1127 = vpop.f32.mrb[0].mxu0
          %v1128 = vadd.f32 %v750, %v1127
          %v1129 = vpop.f32.mrb[0].mxu0
          %1130 = vdwg.mxu0
          %v1131 = vadd.f32 %v838, %v1082
          %v1132 = vadd.f32 %v840, %v1084
          %v1133 = vadd.f32 %v842, %v1086
          %v1134 = vadd.f32 %v844, %v1088
          %v1135 = vxor.u32 %v1131, 2147483648
          %v1136 = vxor.u32 %v1132, 2147483648
          %v1137 = vxor.u32 %v1133, 2147483648
          %v1138 = vxor.u32 %v1134, 2147483648
          %v1139 = vmul.f32 %v1135, 1.442695
          %v1140 = vpow.pop %v1139
          %v1141 = vmul.f32 %v1136, 1.442695
          %v1142 = vpow.pop %v1141
          %v1143 = vmul.f32 %v1137, 1.442695
          %v1144 = vpow.pop %v1143
          %v1145 = vmul.f32 %v1138, 1.442695
          %v1146 = vpow.pop %v1145
          %v1147 = vadd.f32 %v1140, 1.0
          %v1148 = vadd.f32 %v1142, 1.0
          %v1149 = vadd.f32 %v1144, 1.0
          %v1150 = vadd.f32 %v1146, 1.0
          %v1151 = vrcp.pop %v1147
          %v1152 = vmul.f32 1.0, %v1151
          %v1153 = vrcp.pop %v1148
          %v1154 = vmul.f32 1.0, %v1153
          %v1155 = vrcp.pop %v1149
          %v1156 = vmul.f32 1.0, %v1155
          %v1157 = vrcp.pop %v1150
          %v1158 = vmul.f32 1.0, %v1157
          %v1159 = vmul.f32 %v1152, %v1125
          %v1160 = vmul.f32 %v1156, %v1128
          %v1161 = vadd.f32 %v881, %v1159
          %v1162 = vadd.f32 %v884, %v1160
          %v1163 = vtanh.pop %v1161
          %v1164 = vtanh.pop %v1162
          %v1165 = vsub.f32 1.0, %v1154
          %v1166 = vsub.f32 1.0, %v1158
          %v1167 = vmul.f32 %v1165, %v1163
          %v1168 = vmul.f32 %v1166, %v1164
          %v1169 = vmul.f32 %v1154, 0.0
          %v1170 = vmul.f32 %v1158, 0.0
          %v1171 = vadd.f32 %v1167, %v1169
          %v1172 = vadd.f32 %v1168, %v1170
          %v1173 = vld [vmem:[#allocation14] sm:$0xff]
          %v1174 = vld [vmem:[#allocation14 + $0x8] sm:$0xff]
          %v1175 = vld [vmem:[#allocation14 + $0x10] sm:$0xff]
          %v1176 = vld [vmem:[#allocation14 + $0x18] sm:$0xff]
          %v1177 = vld [vmem:[#allocation14 + $0x20] sm:$0xff]
          %v1178 = vld [vmem:[#allocation14 + $0x28] sm:$0xff]
          %v1179 = vld [vmem:[#allocation14 + $0x30] sm:$0xff]
          %v1180 = vld [vmem:[#allocation14 + $0x38] sm:$0xff]
          %v1181 = vld [vmem:[#allocation14 + $0x40] sm:$0xff]
          %v1182 = vld [vmem:[#allocation14 + $0x48] sm:$0xff]
          %v1183 = vld [vmem:[#allocation14 + $0x50] sm:$0xff]
          %v1184 = vld [vmem:[#allocation14 + $0x58] sm:$0xff]
          %v1185 = vld [vmem:[#allocation14 + $0x60] sm:$0xff]
          %v1186 = vld [vmem:[#allocation14 + $0x68] sm:$0xff]
          %v1187 = vld [vmem:[#allocation14 + $0x70] sm:$0xff]
          %v1188 = vld [vmem:[#allocation14 + $0x78] sm:$0xff]
          %v1189 = vld [vmem:[#allocation14 + $0x80] sm:$0xff]
          %v1190 = vld [vmem:[#allocation14 + $0x88] sm:$0xff]
          %v1191 = vld [vmem:[#allocation14 + $0x90] sm:$0xff]
          %v1192 = vld [vmem:[#allocation14 + $0x98] sm:$0xff]
          %v1193 = vld [vmem:[#allocation14 + $0xa0] sm:$0xff]
          %v1194 = vld [vmem:[#allocation14 + $0xa8] sm:$0xff]
          %v1195 = vld [vmem:[#allocation14 + $0xb0] sm:$0xff]
          %v1196 = vld [vmem:[#allocation14 + $0xb8] sm:$0xff]
          %v1197 = vld [vmem:[#allocation14 + $0xc0] sm:$0xff]
          %v1198 = vld [vmem:[#allocation14 + $0xc8] sm:$0xff]
          %v1199 = vld [vmem:[#allocation14 + $0xd0] sm:$0xff]
          %v1200 = vld [vmem:[#allocation14 + $0xd8] sm:$0xff]
          %v1201 = vld [vmem:[#allocation14 + $0xe0] sm:$0xff]
          %v1202 = vld [vmem:[#allocation14 + $0xe8] sm:$0xff]
          %v1203 = vld [vmem:[#allocation14 + $0xf0] sm:$0xff]
          %v1204 = vld [vmem:[#allocation14 + $0xf8] sm:$0xff]
          %v1205 = vpack.c.bf16 %v1172, %v1171
          %v1206 = vld [vmem:[#allocation13] sm:$0xff]
          %v1207 = vld [vmem:[#allocation13 + $0x8] sm:$0xff]
          %v1208 = vld [vmem:[#allocation13 + $0x10] sm:$0xff]
          %v1209 = vld [vmem:[#allocation13 + $0x18] sm:$0xff]
          %v1210 = vld [vmem:[#allocation13 + $0x20] sm:$0xff]
          %v1211 = vld [vmem:[#allocation13 + $0x28] sm:$0xff]
          %v1212 = vld [vmem:[#allocation13 + $0x30] sm:$0xff]
          %v1213 = vld [vmem:[#allocation13 + $0x38] sm:$0xff]
          %v1214 = vld [vmem:[#allocation13 + $0x40] sm:$0xff]
          %v1215 = vld [vmem:[#allocation13 + $0x48] sm:$0xff]
          %v1216 = vld [vmem:[#allocation13 + $0x50] sm:$0xff]
          %v1217 = vld [vmem:[#allocation13 + $0x58] sm:$0xff]
          %v1218 = vld [vmem:[#allocation13 + $0x60] sm:$0xff]
          %v1219 = vld [vmem:[#allocation13 + $0x68] sm:$0xff]
          %v1220 = vld [vmem:[#allocation13 + $0x70] sm:$0xff]
          %v1221 = vld [vmem:[#allocation13 + $0x78] sm:$0xff]
          %v1222 = vld [vmem:[#allocation13 + $0x80] sm:$0xff]
          %v1223 = vld [vmem:[#allocation13 + $0x88] sm:$0xff]
          %v1224 = vld [vmem:[#allocation13 + $0x90] sm:$0xff]
          %v1225 = vld [vmem:[#allocation13 + $0x98] sm:$0xff]
          %v1226 = vld [vmem:[#allocation13 + $0xa0] sm:$0xff]
          %v1227 = vld [vmem:[#allocation13 + $0xa8] sm:$0xff]
          %v1228 = vld [vmem:[#allocation13 + $0xb0] sm:$0xff]
          %v1229 = vld [vmem:[#allocation13 + $0xb8] sm:$0xff]
          %v1230 = vld [vmem:[#allocation13 + $0xc0] sm:$0xff]
          %v1231 = vld [vmem:[#allocation13 + $0xc8] sm:$0xff]
          %v1232 = vld [vmem:[#allocation13 + $0xd0] sm:$0xff]
          %v1233 = vld [vmem:[#allocation13 + $0xd8] sm:$0xff]
          %v1234 = vld [vmem:[#allocation13 + $0xe0] sm:$0xff]
          %v1235 = vld [vmem:[#allocation13 + $0xe8] sm:$0xff]
          %v1236 = vld [vmem:[#allocation13 + $0xf0] sm:$0xff]
          %v1237 = vld [vmem:[#allocation13 + $0xf8] sm:$0xff]
          %v1270 = vunpack.c.l.b16 %v1206
          %v1271 = vunpack.c.h.b16 %v1206
          %v1272 = vunpack.c.l.b16 %v1207
          %v1273 = vunpack.c.h.b16 %v1207
          %v1274 = vunpack.c.l.b16 %v1208
          %v1275 = vunpack.c.h.b16 %v1208
          %v1276 = vunpack.c.l.b16 %v1209
          %v1277 = vunpack.c.h.b16 %v1209
          %v1278 = vunpack.c.l.b16 %v1210
          %v1279 = vunpack.c.h.b16 %v1210
          %v1280 = vunpack.c.l.b16 %v1211
          %v1281 = vunpack.c.h.b16 %v1211
          %v1282 = vunpack.c.l.b16 %v1212
          %v1283 = vunpack.c.h.b16 %v1212
          %v1284 = vunpack.c.l.b16 %v1213
          %v1285 = vunpack.c.h.b16 %v1213
          %v1286 = vunpack.c.l.b16 %v1214
          %v1287 = vunpack.c.h.b16 %v1214
          %v1288 = vunpack.c.l.b16 %v1215
          %v1289 = vunpack.c.h.b16 %v1215
          %v1290 = vunpack.c.l.b16 %v1216
          %v1291 = vunpack.c.h.b16 %v1216
          %v1292 = vunpack.c.l.b16 %v1217
          %v1293 = vunpack.c.h.b16 %v1217
          %v1294 = vunpack.c.l.b16 %v1218
          %v1295 = vunpack.c.h.b16 %v1218
          %v1296 = vunpack.c.l.b16 %v1219
          %v1297 = vunpack.c.h.b16 %v1219
          %v1298 = vunpack.c.l.b16 %v1220
          %v1299 = vunpack.c.h.b16 %v1220
          %v1300 = vunpack.c.l.b16 %v1221
          %v1301 = vunpack.c.h.b16 %v1221
          %v1302 = vunpack.c.l.b16 %v1222
          %v1303 = vunpack.c.h.b16 %v1222
          %v1304 = vunpack.c.l.b16 %v1223
          %v1305 = vunpack.c.h.b16 %v1223
          %v1306 = vunpack.c.l.b16 %v1224
          %v1307 = vunpack.c.h.b16 %v1224
          %v1308 = vunpack.c.l.b16 %v1225
          %v1309 = vunpack.c.h.b16 %v1225
          %v1310 = vunpack.c.l.b16 %v1226
          %v1311 = vunpack.c.h.b16 %v1226
          %v1312 = vunpack.c.l.b16 %v1227
          %v1313 = vunpack.c.h.b16 %v1227
          %v1314 = vunpack.c.l.b16 %v1228
          %v1315 = vunpack.c.h.b16 %v1228
          %v1316 = vunpack.c.l.b16 %v1229
          %v1317 = vunpack.c.h.b16 %v1229
          %v1318 = vunpack.c.l.b16 %v1230
          %v1319 = vunpack.c.h.b16 %v1230
          %v1320 = vunpack.c.l.b16 %v1231
          %v1321 = vunpack.c.h.b16 %v1231
          %v1322 = vunpack.c.l.b16 %v1232
          %v1323 = vunpack.c.h.b16 %v1232
          %v1324 = vunpack.c.l.b16 %v1233
          %v1325 = vunpack.c.h.b16 %v1233
          %v1326 = vunpack.c.l.b16 %v1234
          %v1327 = vunpack.c.h.b16 %v1234
          %v1328 = vunpack.c.l.b16 %v1235
          %v1329 = vunpack.c.h.b16 %v1235
          %v1330 = vunpack.c.l.b16 %v1236
          %v1331 = vunpack.c.h.b16 %v1236
          %v1332 = vunpack.c.l.b16 %v1237
          %v1333 = vunpack.c.h.b16 %v1237
          %v1334 = vpack.c.b16 %v1274, %v1270
          %v1335 = vpack.c.b16 %v1275, %v1271
          %v1336 = vpack.c.b16 %v1276, %v1272
          %v1337 = vpack.c.b16 %v1277, %v1273
          %v1338 = vpack.c.b16 %v1282, %v1278
          %v1339 = vpack.c.b16 %v1283, %v1279
          %v1340 = vpack.c.b16 %v1284, %v1280
          %v1341 = vpack.c.b16 %v1285, %v1281
          %v1342 = vpack.c.b16 %v1290, %v1286
          %v1343 = vpack.c.b16 %v1291, %v1287
          %v1344 = vpack.c.b16 %v1292, %v1288
          %v1345 = vpack.c.b16 %v1293, %v1289
          %v1346 = vpack.c.b16 %v1298, %v1294
          %v1347 = vpack.c.b16 %v1299, %v1295
          %v1348 = vpack.c.b16 %v1300, %v1296
          %v1349 = vpack.c.b16 %v1301, %v1297
          %v1350 = vpack.c.b16 %v1306, %v1302
          %v1351 = vpack.c.b16 %v1307, %v1303
          %v1352 = vpack.c.b16 %v1308, %v1304
          %v1353 = vpack.c.b16 %v1309, %v1305
          %v1354 = vpack.c.b16 %v1314, %v1310
          %v1355 = vpack.c.b16 %v1315, %v1311
          %v1356 = vpack.c.b16 %v1316, %v1312
          %v1357 = vpack.c.b16 %v1317, %v1313
          %v1358 = vpack.c.b16 %v1322, %v1318
          %v1359 = vpack.c.b16 %v1323, %v1319
          %v1360 = vpack.c.b16 %v1324, %v1320
          %v1361 = vpack.c.b16 %v1325, %v1321
          %v1362 = vpack.c.b16 %v1330, %v1326
          %v1363 = vpack.c.b16 %v1331, %v1327
          %v1364 = vpack.c.b16 %v1332, %v1328
          %v1365 = vpack.c.b16 %v1333, %v1329
          %1398 = vmatprep.subr.bf16.mxu0 %v1335
          %1399 = vmatpush1.bf16.msra.mxu0 %v1334
          %1400 = vmatprep.subr.bf16.mxu0 %v1339
          %1401 = vmatpush1.bf16.msra.mxu0 %v1338
          %1402 = vmatprep.subr.bf16.mxu0 %v1343
          %1403 = vmatpush1.bf16.msra.mxu0 %v1342
          %1404 = vmatprep.subr.bf16.mxu0 %v1347
          %1405 = vmatpush1.bf16.msra.mxu0 %v1346
          %1406 = vmatprep.subr.bf16.mxu0 %v1351
          %1407 = vmatpush1.bf16.msra.mxu0 %v1350
          %1408 = vmatprep.subr.bf16.mxu0 %v1355
          %1409 = vmatpush1.bf16.msra.mxu0 %v1354
          %1410 = vmatprep.subr.bf16.mxu0 %v1359
          %1411 = vmatpush1.bf16.msra.mxu0 %v1358
          %1412 = vmatprep.subr.bf16.mxu0 %v1363
          %1413 = vmatpush1.bf16.msra.mxu0 %v1362
          %1414 = vmatprep.subr.bf16.mxu0 0
          %1415 = vmatpush1.bf16.msra.mxu0 0
          %1416 = vmatprep.subr.bf16.mxu0 0
          %1417 = vmatpush1.bf16.msra.mxu0 0
          %1418 = vmatprep.subr.bf16.mxu0 0
          %1419 = vmatpush1.bf16.msra.mxu0 0
          %1420 = vmatprep.subr.bf16.mxu0 0
          %1421 = vmatpush1.bf16.msra.mxu0 0
          %1422 = vmatprep.subr.bf16.mxu0 0
          %1423 = vmatpush1.bf16.msra.mxu0 0
          %1424 = vmatprep.subr.bf16.mxu0 0
          %1425 = vmatpush1.bf16.msra.mxu0 0
          %1426 = vmatprep.subr.bf16.mxu0 0
          %1427 = vmatpush1.bf16.msra.mxu0 0
          %1428 = vmatprep.subr.bf16.mxu0 0
          %1429 = vmatpush1.bf16.msra.mxu0 0
          %1430 = vmatprep.mubr.bf16.mxu0 0
          %1431 = vmatmul.mubr.bf16.gmra.mrb[0].mxu0 %v1205
          %v1432 = vpop.f32.mrb[0].mxu0
          %v1433 = vadd.f32 0.0, %v1432
          %v1434 = vpop.f32.mrb[0].mxu0
          %v1435 = vadd.f32 0.0, %v1434
          %v1436 = vpop.f32.mrb[0].mxu0
          %v1437 = vadd.f32 0.0, %v1436
          %v1438 = vpop.f32.mrb[0].mxu0
          %v1439 = vadd.f32 0.0, %v1438
          %1440 = vdwg.mxu0
          %1441 = vmatprep.subr.bf16.mxu0 %v1337
          %1442 = vmatpush1.bf16.msra.mxu0 %v1336
          %1443 = vmatprep.subr.bf16.mxu0 %v1341
          %1444 = vmatpush1.bf16.msra.mxu0 %v1340
          %1445 = vmatprep.subr.bf16.mxu0 %v1345
          %1446 = vmatpush1.bf16.msra.mxu0 %v1344
          %1447 = vmatprep.subr.bf16.mxu0 %v1349
          %1448 = vmatpush1.bf16.msra.mxu0 %v1348
          %1449 = vmatprep.subr.bf16.mxu0 %v1353
          %1450 = vmatpush1.bf16.msra.mxu0 %v1352
          %1451 = vmatprep.subr.bf16.mxu0 %v1357
          %1452 = vmatpush1.bf16.msra.mxu0 %v1356
          %1453 = vmatprep.subr.bf16.mxu0 %v1361
          %1454 = vmatpush1.bf16.msra.mxu0 %v1360
          %1455 = vmatprep.subr.bf16.mxu0 %v1365
          %1456 = vmatpush1.bf16.msra.mxu0 %v1364
          %1457 = vmatprep.subr.bf16.mxu0 0
          %1458 = vmatpush1.bf16.msra.mxu0 0
          %1459 = vmatprep.subr.bf16.mxu0 0
          %1460 = vmatpush1.bf16.msra.mxu0 0
          %1461 = vmatprep.subr.bf16.mxu0 0
          %1462 = vmatpush1.bf16.msra.mxu0 0
          %1463 = vmatprep.subr.bf16.mxu0 0
          %1464 = vmatpush1.bf16.msra.mxu0 0
          %1465 = vmatprep.subr.bf16.mxu0 0
          %1466 = vmatpush1.bf16.msra.mxu0 0
          %1467 = vmatprep.subr.bf16.mxu0 0
          %1468 = vmatpush1.bf16.msra.mxu0 0
          %1469 = vmatprep.subr.bf16.mxu0 0
          %1470 = vmatpush1.bf16.msra.mxu0 0
          %1471 = vmatprep.subr.bf16.mxu0 0
          %1472 = vmatpush1.bf16.msra.mxu0 0
          %1473 = vmatprep.mubr.bf16.mxu0 0
          %1474 = vmatmul.mubr.bf16.gmra.mrb[0].mxu0 %v1205
          %v1475 = vpop.f32.mrb[0].mxu0
          %v1476 = vadd.f32 0.0, %v1475
          %v1477 = vpop.f32.mrb[0].mxu0
          %v1478 = vadd.f32 0.0, %v1477
          %v1479 = vpop.f32.mrb[0].mxu0
          %v1480 = vadd.f32 0.0, %v1479
          %v1481 = vpop.f32.mrb[0].mxu0
          %v1482 = vadd.f32 0.0, %v1481
          %1483 = vdwg.mxu0
          %v1516 = vunpack.c.l.b16 %v1173
          %v1517 = vunpack.c.h.b16 %v1173
          %v1518 = vunpack.c.l.b16 %v1174
          %v1519 = vunpack.c.h.b16 %v1174
          %v1520 = vunpack.c.l.b16 %v1175
          %v1521 = vunpack.c.h.b16 %v1175
          %v1522 = vunpack.c.l.b16 %v1176
          %v1523 = vunpack.c.h.b16 %v1176
          %v1524 = vunpack.c.l.b16 %v1177
          %v1525 = vunpack.c.h.b16 %v1177
          %v1526 = vunpack.c.l.b16 %v1178
          %v1527 = vunpack.c.h.b16 %v1178
          %v1528 = vunpack.c.l.b16 %v1179
          %v1529 = vunpack.c.h.b16 %v1179
          %v1530 = vunpack.c.l.b16 %v1180
          %v1531 = vunpack.c.h.b16 %v1180
          %v1532 = vunpack.c.l.b16 %v1181
          %v1533 = vunpack.c.h.b16 %v1181
          %v1534 = vunpack.c.l.b16 %v1182
          %v1535 = vunpack.c.h.b16 %v1182
          %v1536 = vunpack.c.l.b16 %v1183
          %v1537 = vunpack.c.h.b16 %v1183
          %v1538 = vunpack.c.l.b16 %v1184
          %v1539 = vunpack.c.h.b16 %v1184
          %v1540 = vunpack.c.l.b16 %v1185
          %v1541 = vunpack.c.h.b16 %v1185
          %v1542 = vunpack.c.l.b16 %v1186
          %v1543 = vunpack.c.h.b16 %v1186
          %v1544 = vunpack.c.l.b16 %v1187
          %v1545 = vunpack.c.h.b16 %v1187
          %v1546 = vunpack.c.l.b16 %v1188
          %v1547 = vunpack.c.h.b16 %v1188
          %v1548 = vunpack.c.l.b16 %v1189
          %v1549 = vunpack.c.h.b16 %v1189
          %v1550 = vunpack.c.l.b16 %v1190
          %v1551 = vunpack.c.h.b16 %v1190
          %v1552 = vunpack.c.l.b16 %v1191
          %v1553 = vunpack.c.h.b16 %v1191
          %v1554 = vunpack.c.l.b16 %v1192
          %v1555 = vunpack.c.h.b16 %v1192
          %v1556 = vunpack.c.l.b16 %v1193
          %v1557 = vunpack.c.h.b16 %v1193
          %v1558 = vunpack.c.l.b16 %v1194
          %v1559 = vunpack.c.h.b16 %v1194
          %v1560 = vunpack.c.l.b16 %v1195
          %v1561 = vunpack.c.h.b16 %v1195
          %v1562 = vunpack.c.l.b16 %v1196
          %v1563 = vunpack.c.h.b16 %v1196
          %v1564 = vunpack.c.l.b16 %v1197
          %v1565 = vunpack.c.h.b16 %v1197
          %v1566 = vunpack.c.l.b16 %v1198
          %v1567 = vunpack.c.h.b16 %v1198
          %v1568 = vunpack.c.l.b16 %v1199
          %v1569 = vunpack.c.h.b16 %v1199
          %v1570 = vunpack.c.l.b16 %v1200
          %v1571 = vunpack.c.h.b16 %v1200
          %v1572 = vunpack.c.l.b16 %v1201
          %v1573 = vunpack.c.h.b16 %v1201
          %v1574 = vunpack.c.l.b16 %v1202
          %v1575 = vunpack.c.h.b16 %v1202
          %v1576 = vunpack.c.l.b16 %v1203
          %v1577 = vunpack.c.h.b16 %v1203
          %v1578 = vunpack.c.l.b16 %v1204
          %v1579 = vunpack.c.h.b16 %v1204
          %v1580 = vpack.c.b16 %v1520, %v1516
          %v1581 = vpack.c.b16 %v1521, %v1517
          %v1582 = vpack.c.b16 %v1522, %v1518
          %v1583 = vpack.c.b16 %v1523, %v1519
          %v1584 = vpack.c.b16 %v1528, %v1524
          %v1585 = vpack.c.b16 %v1529, %v1525
          %v1586 = vpack.c.b16 %v1530, %v1526
          %v1587 = vpack.c.b16 %v1531, %v1527
          %v1588 = vpack.c.b16 %v1536, %v1532
          %v1589 = vpack.c.b16 %v1537, %v1533
          %v1590 = vpack.c.b16 %v1538, %v1534
          %v1591 = vpack.c.b16 %v1539, %v1535
          %v1592 = vpack.c.b16 %v1544, %v1540
          %v1593 = vpack.c.b16 %v1545, %v1541
          %v1594 = vpack.c.b16 %v1546, %v1542
          %v1595 = vpack.c.b16 %v1547, %v1543
          %v1596 = vpack.c.b16 %v1552, %v1548
          %v1597 = vpack.c.b16 %v1553, %v1549
          %v1598 = vpack.c.b16 %v1554, %v1550
          %v1599 = vpack.c.b16 %v1555, %v1551
          %v1600 = vpack.c.b16 %v1560, %v1556
          %v1601 = vpack.c.b16 %v1561, %v1557
          %v1602 = vpack.c.b16 %v1562, %v1558
          %v1603 = vpack.c.b16 %v1563, %v1559
          %v1604 = vpack.c.b16 %v1568, %v1564
          %v1605 = vpack.c.b16 %v1569, %v1565
          %v1606 = vpack.c.b16 %v1570, %v1566
          %v1607 = vpack.c.b16 %v1571, %v1567
          %v1608 = vpack.c.b16 %v1576, %v1572
          %v1609 = vpack.c.b16 %v1577, %v1573
          %v1610 = vpack.c.b16 %v1578, %v1574
          %v1611 = vpack.c.b16 %v1579, %v1575
          %1644 = vmatprep.subr.bf16.mxu0 %v1581
          %1645 = vmatpush1.bf16.msra.mxu0 %v1580
          %1646 = vmatprep.subr.bf16.mxu0 %v1585
          %1647 = vmatpush1.bf16.msra.mxu0 %v1584
          %1648 = vmatprep.subr.bf16.mxu0 %v1589
          %1649 = vmatpush1.bf16.msra.mxu0 %v1588
          %1650 = vmatprep.subr.bf16.mxu0 %v1593
          %1651 = vmatpush1.bf16.msra.mxu0 %v1592
          %1652 = vmatprep.subr.bf16.mxu0 %v1597
          %1653 = vmatpush1.bf16.msra.mxu0 %v1596
          %1654 = vmatprep.subr.bf16.mxu0 %v1601
          %1655 = vmatpush1.bf16.msra.mxu0 %v1600
          %1656 = vmatprep.subr.bf16.mxu0 %v1605
          %1657 = vmatpush1.bf16.msra.mxu0 %v1604
          %1658 = vmatprep.subr.bf16.mxu0 %v1609
          %1659 = vmatpush1.bf16.msra.mxu0 %v1608
          %1660 = vmatprep.subr.bf16.mxu0 0
          %1661 = vmatpush1.bf16.msra.mxu0 0
          %1662 = vmatprep.subr.bf16.mxu0 0
          %1663 = vmatpush1.bf16.msra.mxu0 0
          %1664 = vmatprep.subr.bf16.mxu0 0
          %1665 = vmatpush1.bf16.msra.mxu0 0
          %1666 = vmatprep.subr.bf16.mxu0 0
          %1667 = vmatpush1.bf16.msra.mxu0 0
          %1668 = vmatprep.subr.bf16.mxu0 0
          %1669 = vmatpush1.bf16.msra.mxu0 0
          %1670 = vmatprep.subr.bf16.mxu0 0
          %1671 = vmatpush1.bf16.msra.mxu0 0
          %1672 = vmatprep.subr.bf16.mxu0 0
          %1673 = vmatpush1.bf16.msra.mxu0 0
          %1674 = vmatprep.subr.bf16.mxu0 0
          %1675 = vmatpush1.bf16.msra.mxu0 0
          %1676 = vmatprep.mubr.bf16.mxu0 0
          %1677 = vmatmul.mubr.bf16.gmra.mrb[0].mxu0 0
          %v1678 = vpop.f32.mrb[0].mxu0
          %v1679 = vadd.f32 %v1433, %v1678
          %v1680 = vpop.f32.mrb[0].mxu0
          %v1681 = vadd.f32 %v1435, %v1680
          %v1682 = vpop.f32.mrb[0].mxu0
          %v1683 = vadd.f32 %v1437, %v1682
          %v1684 = vpop.f32.mrb[0].mxu0
          %v1685 = vadd.f32 %v1439, %v1684
          %1686 = vdwg.mxu0
          %1687 = vmatprep.subr.bf16.mxu0 %v1583
          %1688 = vmatpush1.bf16.msra.mxu0 %v1582
          %1689 = vmatprep.subr.bf16.mxu0 %v1587
          %1690 = vmatpush1.bf16.msra.mxu0 %v1586
          %1691 = vmatprep.subr.bf16.mxu0 %v1591
          %1692 = vmatpush1.bf16.msra.mxu0 %v1590
          %1693 = vmatprep.subr.bf16.mxu0 %v1595
          %1694 = vmatpush1.bf16.msra.mxu0 %v1594
          %1695 = vmatprep.subr.bf16.mxu0 %v1599
          %1696 = vmatpush1.bf16.msra.mxu0 %v1598
          %1697 = vmatprep.subr.bf16.mxu0 %v1603
          %1698 = vmatpush1.bf16.msra.mxu0 %v1602
          %1699 = vmatprep.subr.bf16.mxu0 %v1607
          %1700 = vmatpush1.bf16.msra.mxu0 %v1606
          %1701 = vmatprep.subr.bf16.mxu0 %v1611
          %1702 = vmatpush1.bf16.msra.mxu0 %v1610
          %1703 = vmatprep.subr.bf16.mxu0 0
          %1704 = vmatpush1.bf16.msra.mxu0 0
          %1705 = vmatprep.subr.bf16.mxu0 0
          %1706 = vmatpush1.bf16.msra.mxu0 0
          %1707 = vmatprep.subr.bf16.mxu0 0
          %1708 = vmatpush1.bf16.msra.mxu0 0
          %1709 = vmatprep.subr.bf16.mxu0 0
          %1710 = vmatpush1.bf16.msra.mxu0 0
          %1711 = vmatprep.subr.bf16.mxu0 0
          %1712 = vmatpush1.bf16.msra.mxu0 0
          %1713 = vmatprep.subr.bf16.mxu0 0
          %1714 = vmatpush1.bf16.msra.mxu0 0
          %1715 = vmatprep.subr.bf16.mxu0 0
          %1716 = vmatpush1.bf16.msra.mxu0 0
          %1717 = vmatprep.subr.bf16.mxu0 0
          %1718 = vmatpush1.bf16.msra.mxu0 0
          %1719 = vmatprep.mubr.bf16.mxu0 0
          %1720 = vmatmul.mubr.bf16.gmra.mrb[0].mxu0 0
          %v1721 = vpop.f32.mrb[0].mxu0
          %v1722 = vadd.f32 %v1476, %v1721
          %v1723 = vpop.f32.mrb[0].mxu0
          %v1724 = vadd.f32 %v1478, %v1723
          %v1725 = vpop.f32.mrb[0].mxu0
          %v1726 = vadd.f32 %v1480, %v1725
          %v1727 = vpop.f32.mrb[0].mxu0
          %v1728 = vadd.f32 %v1482, %v1727
          %1729 = vdwg.mxu0
          %v1730 = vadd.f32 %v1679, %v759
          %v1731 = vadd.f32 %v1681, %v763
          %v1732 = vadd.f32 %v1722, %v767
          %v1733 = vadd.f32 %v1724, %v771
          %v1734 = vadd.f32 %v1683, %v759
          %v1735 = vadd.f32 %v1685, %v763
          %v1736 = vadd.f32 %v1726, %v767
          %v1737 = vadd.f32 %v1728, %v771
          %v1738 = vxor.u32 %v1730, 2147483648
          %v1739 = vxor.u32 %v1731, 2147483648
          %v1740 = vxor.u32 %v1732, 2147483648
          %v1741 = vxor.u32 %v1734, 2147483648
          %v1742 = vxor.u32 %v1735, 2147483648
          %v1743 = vxor.u32 %v1736, 2147483648
          %v1744 = vmul.f32 %v1738, 1.442695
          %v1745 = vpow.pop %v1744
          %v1746 = vmul.f32 %v1739, 1.442695
          %v1747 = vpow.pop %v1746
          %v1748 = vmul.f32 %v1740, 1.442695
          %v1749 = vpow.pop %v1748
          %v1750 = vmul.f32 %v1741, 1.442695
          %v1751 = vpow.pop %v1750
          %v1752 = vmul.f32 %v1742, 1.442695
          %v1753 = vpow.pop %v1752
          %v1754 = vmul.f32 %v1743, 1.442695
          %v1755 = vpow.pop %v1754
          %v1756 = vadd.f32 %v1745, 1.0
          %v1757 = vadd.f32 %v1747, 1.0
          %v1758 = vadd.f32 %v1749, 1.0
          %v1759 = vadd.f32 %v1751, 1.0
          %v1760 = vadd.f32 %v1753, 1.0
          %v1761 = vadd.f32 %v1755, 1.0
          %v1762 = vrcp.pop %v1756
          %v1763 = vmul.f32 1.0, %v1762
          %v1764 = vrcp.pop %v1757
          %v1765 = vmul.f32 1.0, %v1764
          %v1766 = vrcp.pop %v1758
          %v1767 = vmul.f32 1.0, %v1766
          %v1768 = vrcp.pop %v1759
          %v1769 = vmul.f32 1.0, %v1768
          %v1770 = vrcp.pop %v1760
          %v1771 = vmul.f32 1.0, %v1770
          %v1772 = vrcp.pop %v1761
          %v1773 = vmul.f32 1.0, %v1772
          %v1774 = vtanh.pop %v1733
          %v1775 = vtanh.pop %v1737
          %v1776 = vmul.f32 %v1765, 0.0
          %v1777 = vmul.f32 %v1771, 0.0
          %v1778 = vmul.f32 %v1763, %v1774
          %v1779 = vmul.f32 %v1769, %v1775
          %v1780 = vadd.f32 %v1776, %v1778
          %v1781 = vadd.f32 %v1777, %v1779
          %v1782 = vtanh.pop %v1780
          %v1783 = vtanh.pop %v1781
          %v1784 = vmul.f32 %v1767, %v1782
          %v1785 = vmul.f32 %v1773, %v1783
          %s1786 = scalar_lea.vmem [#allocation2], 16
          %v1787 = vld [vmem:[%s1786] sm:$0xff]
          %v1788 = vld [vmem:[%s1786 + $0x8] sm:$0xff]
          %v1789 = vpack.c.bf16 %v1788, %v1787
          %v1791 = vsel %vm799, %v1789, 0
          %1793 = vmatprep.subr.bf16.mxu0 %v794
          %1794 = vmatpush1.bf16.msra.mxu0 %v793
          %1795 = vmatprep.subr.bf16.mxu0 0
          %1796 = vmatpush1.bf16.msra.mxu0 0
          %1797 = vmatprep.subr.bf16.mxu0 0
          %1798 = vmatpush1.bf16.msra.mxu0 0
          %1799 = vmatprep.subr.bf16.mxu0 0
          %1800 = vmatpush1.bf16.msra.mxu0 0
          %1801 = vmatprep.subr.bf16.mxu0 0
          %1802 = vmatpush1.bf16.msra.mxu0 0
          %1803 = vmatprep.subr.bf16.mxu0 0
          %1804 = vmatpush1.bf16.msra.mxu0 0
          %1805 = vmatprep.subr.bf16.mxu0 0
          %1806 = vmatpush1.bf16.msra.mxu0 0
          %1807 = vmatprep.subr.bf16.mxu0 0
          %1808 = vmatpush1.bf16.msra.mxu0 0
          %1809 = vmatprep.subr.bf16.mxu0 0
          %1810 = vmatpush1.bf16.msra.mxu0 0
          %1811 = vmatprep.subr.bf16.mxu0 0
          %1812 = vmatpush1.bf16.msra.mxu0 0
          %1813 = vmatprep.subr.bf16.mxu0 0
          %1814 = vmatpush1.bf16.msra.mxu0 0
          %1815 = vmatprep.subr.bf16.mxu0 0
          %1816 = vmatpush1.bf16.msra.mxu0 0
          %1817 = vmatprep.subr.bf16.mxu0 0
          %1818 = vmatpush1.bf16.msra.mxu0 0
          %1819 = vmatprep.subr.bf16.mxu0 0
          %1820 = vmatpush1.bf16.msra.mxu0 0
          %1821 = vmatprep.subr.bf16.mxu0 0
          %1822 = vmatpush1.bf16.msra.mxu0 0
          %1823 = vmatprep.subr.bf16.mxu0 0
          %1824 = vmatpush1.bf16.msra.mxu0 0
          %1825 = vmatprep.mubr.bf16.mxu0 0
          %1826 = vmatmul.mubr.bf16.gmra.mrb[0].mxu0 %v1791
          %v1827 = vpop.f32.mrb[0].mxu0
          %v1828 = vadd.f32 %v725, %v1827
          %v1829 = vpop.f32.mrb[0].mxu0
          %v1830 = vadd.f32 %v729, %v1829
          %v1831 = vpop.f32.mrb[0].mxu0
          %v1832 = vadd.f32 %v725, %v1831
          %v1833 = vpop.f32.mrb[0].mxu0
          %v1834 = vadd.f32 %v729, %v1833
          %1835 = vdwg.mxu0
          %1836 = vmatprep.subr.bf16.mxu0 0
          %1837 = vmatpush1.bf16.msra.mxu0 %v795
          %1838 = vmatprep.subr.bf16.mxu0 0
          %1839 = vmatpush1.bf16.msra.mxu0 0
          %1840 = vmatprep.subr.bf16.mxu0 0
          %1841 = vmatpush1.bf16.msra.mxu0 0
          %1842 = vmatprep.subr.bf16.mxu0 0
          %1843 = vmatpush1.bf16.msra.mxu0 0
          %1844 = vmatprep.subr.bf16.mxu0 0
          %1845 = vmatpush1.bf16.msra.mxu0 0
          %1846 = vmatprep.subr.bf16.mxu0 0
          %1847 = vmatpush1.bf16.msra.mxu0 0
          %1848 = vmatprep.subr.bf16.mxu0 0
          %1849 = vmatpush1.bf16.msra.mxu0 0
          %1850 = vmatprep.subr.bf16.mxu0 0
          %1851 = vmatpush1.bf16.msra.mxu0 0
          %1852 = vmatprep.subr.bf16.mxu0 0
          %1853 = vmatpush1.bf16.msra.mxu0 0
          %1854 = vmatprep.subr.bf16.mxu0 0
          %1855 = vmatpush1.bf16.msra.mxu0 0
          %1856 = vmatprep.subr.bf16.mxu0 0
          %1857 = vmatpush1.bf16.msra.mxu0 0
          %1858 = vmatprep.subr.bf16.mxu0 0
          %1859 = vmatpush1.bf16.msra.mxu0 0
          %1860 = vmatprep.subr.bf16.mxu0 0
          %1861 = vmatpush1.bf16.msra.mxu0 0
          %1862 = vmatprep.subr.bf16.mxu0 0
          %1863 = vmatpush1.bf16.msra.mxu0 0
          %1864 = vmatprep.subr.bf16.mxu0 0
          %1865 = vmatpush1.bf16.msra.mxu0 0
          %1866 = vmatprep.subr.bf16.mxu0 0
          %1867 = vmatpush1.bf16.msra.mxu0 0
          %1868 = vmatprep.mubr.bf16.mxu0 0
          %1869 = vmatmul.mubr.bf16.gmra.mrb[0].mxu0 %v1791
          %v1870 = vpop.f32.mrb[0].mxu0
          %v1871 = vadd.f32 %v733, %v1870
          %v1872 = vpop.f32.mrb[0].mxu0
          %v1873 = vpop.f32.mrb[0].mxu0
          %v1874 = vadd.f32 %v733, %v1873
          %v1875 = vpop.f32.mrb[0].mxu0
          %1876 = vdwg.mxu0
          %1877 = vmatprep.subr.bf16.mxu0 %v1000
          %1878 = vmatpush1.bf16.msra.mxu0 %v999
          %1879 = vmatprep.subr.bf16.mxu0 %v1003
          %1880 = vmatpush1.bf16.msra.mxu0 %v1002
          %1881 = vmatprep.subr.bf16.mxu0 %v1006
          %1882 = vmatpush1.bf16.msra.mxu0 %v1005
          %1883 = vmatprep.subr.bf16.mxu0 %v1009
          %1884 = vmatpush1.bf16.msra.mxu0 %v1008
          %1885 = vmatprep.subr.bf16.mxu0 %v1012
          %1886 = vmatpush1.bf16.msra.mxu0 %v1011
          %1887 = vmatprep.subr.bf16.mxu0 %v1015
          %1888 = vmatpush1.bf16.msra.mxu0 %v1014
          %1889 = vmatprep.subr.bf16.mxu0 %v1018
          %1890 = vmatpush1.bf16.msra.mxu0 %v1017
          %1891 = vmatprep.subr.bf16.mxu0 %v1021
          %1892 = vmatpush1.bf16.msra.mxu0 %v1020
          %1893 = vmatprep.subr.bf16.mxu0 0
          %1894 = vmatpush1.bf16.msra.mxu0 0
          %1895 = vmatprep.subr.bf16.mxu0 0
          %1896 = vmatpush1.bf16.msra.mxu0 0
          %1897 = vmatprep.subr.bf16.mxu0 0
          %1898 = vmatpush1.bf16.msra.mxu0 0
          %1899 = vmatprep.subr.bf16.mxu0 0
          %1900 = vmatpush1.bf16.msra.mxu0 0
          %1901 = vmatprep.subr.bf16.mxu0 0
          %1902 = vmatpush1.bf16.msra.mxu0 0
          %1903 = vmatprep.subr.bf16.mxu0 0
          %1904 = vmatpush1.bf16.msra.mxu0 0
          %1905 = vmatprep.subr.bf16.mxu0 0
          %1906 = vmatpush1.bf16.msra.mxu0 0
          %1907 = vmatprep.subr.bf16.mxu0 0
          %1908 = vmatpush1.bf16.msra.mxu0 0
          %1909 = vmatprep.mubr.bf16.mxu0 0
          %1910 = vmatmul.mubr.bf16.gmra.mrb[0].mxu0 %v1205
          %v1911 = vpop.f32.mrb[0].mxu0
          %v1912 = vadd.f32 %v742, %v1911
          %v1913 = vpop.f32.mrb[0].mxu0
          %v1914 = vadd.f32 %v746, %v1913
          %v1915 = vpop.f32.mrb[0].mxu0
          %v1916 = vadd.f32 %v742, %v1915
          %v1917 = vpop.f32.mrb[0].mxu0
          %v1918 = vadd.f32 %v746, %v1917
          %1919 = vdwg.mxu0
          %1920 = vmatprep.subr.bf16.mxu0 0
          %1921 = vmatpush1.bf16.msra.mxu0 %v1001
          %1922 = vmatprep.subr.bf16.mxu0 0
          %1923 = vmatpush1.bf16.msra.mxu0 %v1004
          %1924 = vmatprep.subr.bf16.mxu0 0
          %1925 = vmatpush1.bf16.msra.mxu0 %v1007
          %1926 = vmatprep.subr.bf16.mxu0 0
          %1927 = vmatpush1.bf16.msra.mxu0 %v1010
          %1928 = vmatprep.subr.bf16.mxu0 0
          %1929 = vmatpush1.bf16.msra.mxu0 %v1013
          %1930 = vmatprep.subr.bf16.mxu0 0
          %1931 = vmatpush1.bf16.msra.mxu0 %v1016
          %1932 = vmatprep.subr.bf16.mxu0 0
          %1933 = vmatpush1.bf16.msra.mxu0 %v1019
          %1934 = vmatprep.subr.bf16.mxu0 0
          %1935 = vmatpush1.bf16.msra.mxu0 %v1022
          %1936 = vmatprep.subr.bf16.mxu0 0
          %1937 = vmatpush1.bf16.msra.mxu0 0
          %1938 = vmatprep.subr.bf16.mxu0 0
          %1939 = vmatpush1.bf16.msra.mxu0 0
          %1940 = vmatprep.subr.bf16.mxu0 0
          %1941 = vmatpush1.bf16.msra.mxu0 0
          %1942 = vmatprep.subr.bf16.mxu0 0
          %1943 = vmatpush1.bf16.msra.mxu0 0
          %1944 = vmatprep.subr.bf16.mxu0 0
          %1945 = vmatpush1.bf16.msra.mxu0 0
          %1946 = vmatprep.subr.bf16.mxu0 0
          %1947 = vmatpush1.bf16.msra.mxu0 0
          %1948 = vmatprep.subr.bf16.mxu0 0
          %1949 = vmatpush1.bf16.msra.mxu0 0
          %1950 = vmatprep.subr.bf16.mxu0 0
          %1951 = vmatpush1.bf16.msra.mxu0 0
          %1952 = vmatprep.mubr.bf16.mxu0 0
          %1953 = vmatmul.mubr.bf16.gmra.mrb[0].mxu0 %v1205
          %v1954 = vpop.f32.mrb[0].mxu0
          %v1955 = vadd.f32 %v750, %v1954
          %v1956 = vpop.f32.mrb[0].mxu0
          %v1957 = vpop.f32.mrb[0].mxu0
          %v1958 = vadd.f32 %v750, %v1957
          %v1959 = vpop.f32.mrb[0].mxu0
          %1960 = vdwg.mxu0
          %v1961 = vadd.f32 %v1828, %v1912
          %v1962 = vadd.f32 %v1830, %v1914
          %v1963 = vadd.f32 %v1832, %v1916
          %v1964 = vadd.f32 %v1834, %v1918
          %v1965 = vxor.u32 %v1961, 2147483648
          %v1966 = vxor.u32 %v1962, 2147483648
          %v1967 = vxor.u32 %v1963, 2147483648
          %v1968 = vxor.u32 %v1964, 2147483648
          %v1969 = vmul.f32 %v1965, 1.442695
          %v1970 = vpow.pop %v1969
          %v1971 = vmul.f32 %v1966, 1.442695
          %v1972 = vpow.pop %v1971
          %v1973 = vmul.f32 %v1967, 1.442695
          %v1974 = vpow.pop %v1973
          %v1975 = vmul.f32 %v1968, 1.442695
          %v1976 = vpow.pop %v1975
          %v1977 = vadd.f32 %v1970, 1.0
          %v1978 = vadd.f32 %v1972, 1.0
          %v1979 = vadd.f32 %v1974, 1.0
          %v1980 = vadd.f32 %v1976, 1.0
          %v1981 = vrcp.pop %v1977
          %v1982 = vmul.f32 1.0, %v1981
          %v1983 = vrcp.pop %v1978
          %v1984 = vmul.f32 1.0, %v1983
          %v1985 = vrcp.pop %v1979
          %v1986 = vmul.f32 1.0, %v1985
          %v1987 = vrcp.pop %v1980
          %v1988 = vmul.f32 1.0, %v1987
          %v1989 = vmul.f32 %v1982, %v1955
          %v1990 = vmul.f32 %v1986, %v1958
          %v1991 = vadd.f32 %v1871, %v1989
          %v1992 = vadd.f32 %v1874, %v1990
          %v1993 = vtanh.pop %v1991
          %v1994 = vtanh.pop %v1992
          %v1995 = vsub.f32 1.0, %v1984
          %v1996 = vsub.f32 1.0, %v1988
          %v1997 = vmul.f32 %v1995, %v1993
          %v1998 = vmul.f32 %v1996, %v1994
          %v1999 = vmul.f32 %v1984, %v1171
          %v2000 = vmul.f32 %v1988, %v1172
          %v2001 = vadd.f32 %v1997, %v1999
          %v2002 = vadd.f32 %v1998, %v2000
          %v2003 = vpack.c.bf16 %v1785, %v1784
          %v2004 = vpack.c.bf16 %v2002, %v2001
          %2005 = vmatprep.subr.bf16.mxu0 %v1335
          %2006 = vmatpush1.bf16.msra.mxu0 %v1334
          %2007 = vmatprep.subr.bf16.mxu0 %v1339
          %2008 = vmatpush1.bf16.msra.mxu0 %v1338
          %2009 = vmatprep.subr.bf16.mxu0 %v1343
          %2010 = vmatpush1.bf16.msra.mxu0 %v1342
          %2011 = vmatprep.subr.bf16.mxu0 %v1347
          %2012 = vmatpush1.bf16.msra.mxu0 %v1346
          %2013 = vmatprep.subr.bf16.mxu0 %v1351
          %2014 = vmatpush1.bf16.msra.mxu0 %v1350
          %2015 = vmatprep.subr.bf16.mxu0 %v1355
          %2016 = vmatpush1.bf16.msra.mxu0 %v1354
          %2017 = vmatprep.subr.bf16.mxu0 %v1359
          %2018 = vmatpush1.bf16.msra.mxu0 %v1358
          %2019 = vmatprep.subr.bf16.mxu0 %v1363
          %2020 = vmatpush1.bf16.msra.mxu0 %v1362
          %2021 = vmatprep.subr.bf16.mxu0 0
          %2022 = vmatpush1.bf16.msra.mxu0 0
          %2023 = vmatprep.subr.bf16.mxu0 0
          %2024 = vmatpush1.bf16.msra.mxu0 0
          %2025 = vmatprep.subr.bf16.mxu0 0
          %2026 = vmatpush1.bf16.msra.mxu0 0
          %2027 = vmatprep.subr.bf16.mxu0 0
          %2028 = vmatpush1.bf16.msra.mxu0 0
          %2029 = vmatprep.subr.bf16.mxu0 0
          %2030 = vmatpush1.bf16.msra.mxu0 0
          %2031 = vmatprep.subr.bf16.mxu0 0
          %2032 = vmatpush1.bf16.msra.mxu0 0
          %2033 = vmatprep.subr.bf16.mxu0 0
          %2034 = vmatpush1.bf16.msra.mxu0 0
          %2035 = vmatprep.subr.bf16.mxu0 0
          %2036 = vmatpush1.bf16.msra.mxu0 0
          %2037 = vmatprep.mubr.bf16.mxu0 0
          %2038 = vmatmul.mubr.bf16.gmra.mrb[0].mxu0 %v2004
          %v2039 = vpop.f32.mrb[0].mxu0
          %v2040 = vadd.f32 0.0, %v2039
          %v2041 = vpop.f32.mrb[0].mxu0
          %v2042 = vadd.f32 0.0, %v2041
          %v2043 = vpop.f32.mrb[0].mxu0
          %v2044 = vadd.f32 0.0, %v2043
          %v2045 = vpop.f32.mrb[0].mxu0
          %v2046 = vadd.f32 0.0, %v2045
          %2047 = vdwg.mxu0
          %2048 = vmatprep.subr.bf16.mxu0 %v1337
          %2049 = vmatpush1.bf16.msra.mxu0 %v1336
          %2050 = vmatprep.subr.bf16.mxu0 %v1341
          %2051 = vmatpush1.bf16.msra.mxu0 %v1340
          %2052 = vmatprep.subr.bf16.mxu0 %v1345
          %2053 = vmatpush1.bf16.msra.mxu0 %v1344
          %2054 = vmatprep.subr.bf16.mxu0 %v1349
          %2055 = vmatpush1.bf16.msra.mxu0 %v1348
          %2056 = vmatprep.subr.bf16.mxu0 %v1353
          %2057 = vmatpush1.bf16.msra.mxu0 %v1352
          %2058 = vmatprep.subr.bf16.mxu0 %v1357
          %2059 = vmatpush1.bf16.msra.mxu0 %v1356
          %2060 = vmatprep.subr.bf16.mxu0 %v1361
          %2061 = vmatpush1.bf16.msra.mxu0 %v1360
          %2062 = vmatprep.subr.bf16.mxu0 %v1365
          %2063 = vmatpush1.bf16.msra.mxu0 %v1364
          %2064 = vmatprep.subr.bf16.mxu0 0
          %2065 = vmatpush1.bf16.msra.mxu0 0
          %2066 = vmatprep.subr.bf16.mxu0 0
          %2067 = vmatpush1.bf16.msra.mxu0 0
          %2068 = vmatprep.subr.bf16.mxu0 0
          %2069 = vmatpush1.bf16.msra.mxu0 0
          %2070 = vmatprep.subr.bf16.mxu0 0
          %2071 = vmatpush1.bf16.msra.mxu0 0
          %2072 = vmatprep.subr.bf16.mxu0 0
          %2073 = vmatpush1.bf16.msra.mxu0 0
          %2074 = vmatprep.subr.bf16.mxu0 0
          %2075 = vmatpush1.bf16.msra.mxu0 0
          %2076 = vmatprep.subr.bf16.mxu0 0
          %2077 = vmatpush1.bf16.msra.mxu0 0
          %2078 = vmatprep.subr.bf16.mxu0 0
          %2079 = vmatpush1.bf16.msra.mxu0 0
          %2080 = vmatprep.mubr.bf16.mxu0 0
          %2081 = vmatmul.mubr.bf16.gmra.mrb[0].mxu0 %v2004
          %v2082 = vpop.f32.mrb[0].mxu0
          %v2083 = vadd.f32 0.0, %v2082
          %v2084 = vpop.f32.mrb[0].mxu0
          %v2085 = vadd.f32 0.0, %v2084
          %v2086 = vpop.f32.mrb[0].mxu0
          %v2087 = vadd.f32 0.0, %v2086
          %v2088 = vpop.f32.mrb[0].mxu0
          %v2089 = vadd.f32 0.0, %v2088
          %2090 = vdwg.mxu0
          %2091 = vmatprep.subr.bf16.mxu0 %v1581
          %2092 = vmatpush1.bf16.msra.mxu0 %v1580
          %2093 = vmatprep.subr.bf16.mxu0 %v1585
          %2094 = vmatpush1.bf16.msra.mxu0 %v1584
          %2095 = vmatprep.subr.bf16.mxu0 %v1589
          %2096 = vmatpush1.bf16.msra.mxu0 %v1588
          %2097 = vmatprep.subr.bf16.mxu0 %v1593
          %2098 = vmatpush1.bf16.msra.mxu0 %v1592
          %2099 = vmatprep.subr.bf16.mxu0 %v1597
          %2100 = vmatpush1.bf16.msra.mxu0 %v1596
          %2101 = vmatprep.subr.bf16.mxu0 %v1601
          %2102 = vmatpush1.bf16.msra.mxu0 %v1600
          %2103 = vmatprep.subr.bf16.mxu0 %v1605
          %2104 = vmatpush1.bf16.msra.mxu0 %v1604
          %2105 = vmatprep.subr.bf16.mxu0 %v1609
          %2106 = vmatpush1.bf16.msra.mxu0 %v1608
          %2107 = vmatprep.subr.bf16.mxu0 0
          %2108 = vmatpush1.bf16.msra.mxu0 0
          %2109 = vmatprep.subr.bf16.mxu0 0
          %2110 = vmatpush1.bf16.msra.mxu0 0
          %2111 = vmatprep.subr.bf16.mxu0 0
          %2112 = vmatpush1.bf16.msra.mxu0 0
          %2113 = vmatprep.subr.bf16.mxu0 0
          %2114 = vmatpush1.bf16.msra.mxu0 0
          %2115 = vmatprep.subr.bf16.mxu0 0
          %2116 = vmatpush1.bf16.msra.mxu0 0
          %2117 = vmatprep.subr.bf16.mxu0 0
          %2118 = vmatpush1.bf16.msra.mxu0 0
          %2119 = vmatprep.subr.bf16.mxu0 0
          %2120 = vmatpush1.bf16.msra.mxu0 0
          %2121 = vmatprep.subr.bf16.mxu0 0
          %2122 = vmatpush1.bf16.msra.mxu0 0
          %2123 = vmatprep.mubr.bf16.mxu0 0
          %2124 = vmatmul.mubr.bf16.gmra.mrb[0].mxu0 %v2003
          %v2125 = vpop.f32.mrb[0].mxu0
          %v2126 = vadd.f32 %v2040, %v2125
          %v2127 = vpop.f32.mrb[0].mxu0
          %v2128 = vadd.f32 %v2042, %v2127
          %v2129 = vpop.f32.mrb[0].mxu0
          %v2130 = vadd.f32 %v2044, %v2129
          %v2131 = vpop.f32.mrb[0].mxu0
          %v2132 = vadd.f32 %v2046, %v2131
          %2133 = vdwg.mxu0
          %2134 = vmatprep.subr.bf16.mxu0 %v1583
          %2135 = vmatpush1.bf16.msra.mxu0 %v1582
          %2136 = vmatprep.subr.bf16.mxu0 %v1587
          %2137 = vmatpush1.bf16.msra.mxu0 %v1586
          %2138 = vmatprep.subr.bf16.mxu0 %v1591
          %2139 = vmatpush1.bf16.msra.mxu0 %v1590
          %2140 = vmatprep.subr.bf16.mxu0 %v1595
          %2141 = vmatpush1.bf16.msra.mxu0 %v1594
          %2142 = vmatprep.subr.bf16.mxu0 %v1599
          %2143 = vmatpush1.bf16.msra.mxu0 %v1598
          %2144 = vmatprep.subr.bf16.mxu0 %v1603
          %2145 = vmatpush1.bf16.msra.mxu0 %v1602
          %2146 = vmatprep.subr.bf16.mxu0 %v1607
          %2147 = vmatpush1.bf16.msra.mxu0 %v1606
          %2148 = vmatprep.subr.bf16.mxu0 %v1611
          %2149 = vmatpush1.bf16.msra.mxu0 %v1610
          %2150 = vmatprep.subr.bf16.mxu0 0
          %2151 = vmatpush1.bf16.msra.mxu0 0
          %2152 = vmatprep.subr.bf16.mxu0 0
          %2153 = vmatpush1.bf16.msra.mxu0 0
          %2154 = vmatprep.subr.bf16.mxu0 0
          %2155 = vmatpush1.bf16.msra.mxu0 0
          %2156 = vmatprep.subr.bf16.mxu0 0
          %2157 = vmatpush1.bf16.msra.mxu0 0
          %2158 = vmatprep.subr.bf16.mxu0 0
          %2159 = vmatpush1.bf16.msra.mxu0 0
          %2160 = vmatprep.subr.bf16.mxu0 0
          %2161 = vmatpush1.bf16.msra.mxu0 0
          %2162 = vmatprep.subr.bf16.mxu0 0
          %2163 = vmatpush1.bf16.msra.mxu0 0
          %2164 = vmatprep.subr.bf16.mxu0 0
          %2165 = vmatpush1.bf16.msra.mxu0 0
          %2166 = vmatprep.mubr.bf16.mxu0 0
          %2167 = vmatmul.mubr.bf16.gmra.mrb[0].mxu0 %v2003
          %v2168 = vpop.f32.mrb[0].mxu0
          %v2169 = vadd.f32 %v2083, %v2168
          %v2170 = vpop.f32.mrb[0].mxu0
          %v2171 = vadd.f32 %v2085, %v2170
          %v2172 = vpop.f32.mrb[0].mxu0
          %v2173 = vadd.f32 %v2087, %v2172
          %v2174 = vpop.f32.mrb[0].mxu0
          %v2175 = vadd.f32 %v2089, %v2174
          %2176 = vdwg.mxu0
          %v2177 = vadd.f32 %v2126, %v759
          %v2178 = vadd.f32 %v2128, %v763
          %v2179 = vadd.f32 %v2169, %v767
          %v2180 = vadd.f32 %v2171, %v771
          %v2181 = vadd.f32 %v2130, %v759
          %v2182 = vadd.f32 %v2132, %v763
          %v2183 = vadd.f32 %v2173, %v767
          %v2184 = vadd.f32 %v2175, %v771
          %v2185 = vxor.u32 %v2177, 2147483648
          %v2186 = vxor.u32 %v2178, 2147483648
          %v2187 = vxor.u32 %v2179, 2147483648
          %v2188 = vxor.u32 %v2181, 2147483648
          %v2189 = vxor.u32 %v2182, 2147483648
          %v2190 = vxor.u32 %v2183, 2147483648
          %v2191 = vmul.f32 %v2185, 1.442695
          %v2192 = vpow.pop %v2191
          %v2193 = vmul.f32 %v2186, 1.442695
          %v2194 = vpow.pop %v2193
          %v2195 = vmul.f32 %v2187, 1.442695
          %v2196 = vpow.pop %v2195
          %v2197 = vmul.f32 %v2188, 1.442695
          %v2198 = vpow.pop %v2197
          %v2199 = vmul.f32 %v2189, 1.442695
          %v2200 = vpow.pop %v2199
          %v2201 = vmul.f32 %v2190, 1.442695
          %v2202 = vpow.pop %v2201
          %v2203 = vadd.f32 %v2192, 1.0
          %v2204 = vadd.f32 %v2194, 1.0
          %v2205 = vadd.f32 %v2196, 1.0
          %v2206 = vadd.f32 %v2198, 1.0
          %v2207 = vadd.f32 %v2200, 1.0
          %v2208 = vadd.f32 %v2202, 1.0
          %v2209 = vrcp.pop %v2203
          %v2210 = vmul.f32 1.0, %v2209
          %v2211 = vrcp.pop %v2204
          %v2212 = vmul.f32 1.0, %v2211
          %v2213 = vrcp.pop %v2205
          %v2214 = vmul.f32 1.0, %v2213
          %v2215 = vrcp.pop %v2206
          %v2216 = vmul.f32 1.0, %v2215
          %v2217 = vrcp.pop %v2207
          %v2218 = vmul.f32 1.0, %v2217
          %v2219 = vrcp.pop %v2208
          %v2220 = vmul.f32 1.0, %v2219
          %v2221 = vtanh.pop %v2180
          %v2222 = vtanh.pop %v2184
          %v2223 = vmul.f32 %v2212, %v1780
          %v2224 = vmul.f32 %v2218, %v1781
          %v2225 = vmul.f32 %v2210, %v2221
          %v2226 = vmul.f32 %v2216, %v2222
          %v2227 = vadd.f32 %v2223, %v2225
          %v2228 = vadd.f32 %v2224, %v2226
          %v2229 = vtanh.pop %v2227
          %v2230 = vtanh.pop %v2228
          %v2231 = vmul.f32 %v2214, %v2229
          %v2232 = vmul.f32 %v2220, %v2230
          %s2233 = scalar_lea.vmem [#allocation2], 32
          %v2234 = vld [vmem:[%s2233] sm:$0xff]
          %v2235 = vld [vmem:[%s2233 + $0x8] sm:$0xff]
          %v2236 = vpack.c.bf16 %v2235, %v2234
          %v2238 = vsel %vm799, %v2236, 0
          %2240 = vmatprep.subr.bf16.mxu0 %v794
          %2241 = vmatpush1.bf16.msra.mxu0 %v793
          %2242 = vmatprep.subr.bf16.mxu0 0
          %2243 = vmatpush1.bf16.msra.mxu0 0
          %2244 = vmatprep.subr.bf16.mxu0 0
          %2245 = vmatpush1.bf16.msra.mxu0 0
          %2246 = vmatprep.subr.bf16.mxu0 0
          %2247 = vmatpush1.bf16.msra.mxu0 0
          %2248 = vmatprep.subr.bf16.mxu0 0
          %2249 = vmatpush1.bf16.msra.mxu0 0
          %2250 = vmatprep.subr.bf16.mxu0 0
          %2251 = vmatpush1.bf16.msra.mxu0 0
          %2252 = vmatprep.subr.bf16.mxu0 0
          %2253 = vmatpush1.bf16.msra.mxu0 0
          %2254 = vmatprep.subr.bf16.mxu0 0
          %2255 = vmatpush1.bf16.msra.mxu0 0
          %2256 = vmatprep.subr.bf16.mxu0 0
          %2257 = vmatpush1.bf16.msra.mxu0 0
          %2258 = vmatprep.subr.bf16.mxu0 0
          %2259 = vmatpush1.bf16.msra.mxu0 0
          %2260 = vmatprep.subr.bf16.mxu0 0
          %2261 = vmatpush1.bf16.msra.mxu0 0
          %2262 = vmatprep.subr.bf16.mxu0 0
          %2263 = vmatpush1.bf16.msra.mxu0 0
          %2264 = vmatprep.subr.bf16.mxu0 0
          %2265 = vmatpush1.bf16.msra.mxu0 0
          %2266 = vmatprep.subr.bf16.mxu0 0
          %2267 = vmatpush1.bf16.msra.mxu0 0
          %2268 = vmatprep.subr.bf16.mxu0 0
          %2269 = vmatpush1.bf16.msra.mxu0 0
          %2270 = vmatprep.subr.bf16.mxu0 0
          %2271 = vmatpush1.bf16.msra.mxu0 0
          %2272 = vmatprep.mubr.bf16.mxu0 0
          %2273 = vmatmul.mubr.bf16.gmra.mrb[0].mxu0 %v2238
          %v2274 = vpop.f32.mrb[0].mxu0
          %v2275 = vadd.f32 %v725, %v2274
          %v2276 = vpop.f32.mrb[0].mxu0
          %v2277 = vadd.f32 %v729, %v2276
          %v2278 = vpop.f32.mrb[0].mxu0
          %v2279 = vadd.f32 %v725, %v2278
          %v2280 = vpop.f32.mrb[0].mxu0
          %v2281 = vadd.f32 %v729, %v2280
          %2282 = vdwg.mxu0
          %2283 = vmatprep.subr.bf16.mxu0 0
          %2284 = vmatpush1.bf16.msra.mxu0 %v795
          %2285 = vmatprep.subr.bf16.mxu0 0
          %2286 = vmatpush1.bf16.msra.mxu0 0
          %2287 = vmatprep.subr.bf16.mxu0 0
          %2288 = vmatpush1.bf16.msra.mxu0 0
          %2289 = vmatprep.subr.bf16.mxu0 0
          %2290 = vmatpush1.bf16.msra.mxu0 0
          %2291 = vmatprep.subr.bf16.mxu0 0
          %2292 = vmatpush1.bf16.msra.mxu0 0
          %2293 = vmatprep.subr.bf16.mxu0 0
          %2294 = vmatpush1.bf16.msra.mxu0 0
          %2295 = vmatprep.subr.bf16.mxu0 0
          %2296 = vmatpush1.bf16.msra.mxu0 0
          %2297 = vmatprep.subr.bf16.mxu0 0
          %2298 = vmatpush1.bf16.msra.mxu0 0
          %2299 = vmatprep.subr.bf16.mxu0 0
          %2300 = vmatpush1.bf16.msra.mxu0 0
          %2301 = vmatprep.subr.bf16.mxu0 0
          %2302 = vmatpush1.bf16.msra.mxu0 0
          %2303 = vmatprep.subr.bf16.mxu0 0
          %2304 = vmatpush1.bf16.msra.mxu0 0
          %2305 = vmatprep.subr.bf16.mxu0 0
          %2306 = vmatpush1.bf16.msra.mxu0 0
          %2307 = vmatprep.subr.bf16.mxu0 0
          %2308 = vmatpush1.bf16.msra.mxu0 0
          %2309 = vmatprep.subr.bf16.mxu0 0
          %2310 = vmatpush1.bf16.msra.mxu0 0
          %2311 = vmatprep.subr.bf16.mxu0 0
          %2312 = vmatpush1.bf16.msra.mxu0 0
          %2313 = vmatprep.subr.bf16.mxu0 0
          %2314 = vmatpush1.bf16.msra.mxu0 0
          %2315 = vmatprep.mubr.bf16.mxu0 0
          %2316 = vmatmul.mubr.bf16.gmra.mrb[0].mxu0 %v2238
          %v2317 = vpop.f32.mrb[0].mxu0
          %v2318 = vadd.f32 %v733, %v2317
          %v2319 = vpop.f32.mrb[0].mxu0
          %v2320 = vpop.f32.mrb[0].mxu0
          %v2321 = vadd.f32 %v733, %v2320
          %v2322 = vpop.f32.mrb[0].mxu0
          %2323 = vdwg.mxu0
          %2324 = vmatprep.subr.bf16.mxu0 %v1000
          %2325 = vmatpush1.bf16.msra.mxu0 %v999
          %2326 = vmatprep.subr.bf16.mxu0 %v1003
          %2327 = vmatpush1.bf16.msra.mxu0 %v1002
          %2328 = vmatprep.subr.bf16.mxu0 %v1006
          %2329 = vmatpush1.bf16.msra.mxu0 %v1005
          %2330 = vmatprep.subr.bf16.mxu0 %v1009
          %2331 = vmatpush1.bf16.msra.mxu0 %v1008
          %2332 = vmatprep.subr.bf16.mxu0 %v1012
          %2333 = vmatpush1.bf16.msra.mxu0 %v1011
          %2334 = vmatprep.subr.bf16.mxu0 %v1015
          %2335 = vmatpush1.bf16.msra.mxu0 %v1014
          %2336 = vmatprep.subr.bf16.mxu0 %v1018
          %2337 = vmatpush1.bf16.msra.mxu0 %v1017
          %2338 = vmatprep.subr.bf16.mxu0 %v1021
          %2339 = vmatpush1.bf16.msra.mxu0 %v1020
          %2340 = vmatprep.subr.bf16.mxu0 0
          %2341 = vmatpush1.bf16.msra.mxu0 0
          %2342 = vmatprep.subr.bf16.mxu0 0
          %2343 = vmatpush1.bf16.msra.mxu0 0
          %2344 = vmatprep.subr.bf16.mxu0 0
          %2345 = vmatpush1.bf16.msra.mxu0 0
          %2346 = vmatprep.subr.bf16.mxu0 0
          %2347 = vmatpush1.bf16.msra.mxu0 0
          %2348 = vmatprep.subr.bf16.mxu0 0
          %2349 = vmatpush1.bf16.msra.mxu0 0
          %2350 = vmatprep.subr.bf16.mxu0 0
          %2351 = vmatpush1.bf16.msra.mxu0 0
          %2352 = vmatprep.subr.bf16.mxu0 0
          %2353 = vmatpush1.bf16.msra.mxu0 0
          %2354 = vmatprep.subr.bf16.mxu0 0
          %2355 = vmatpush1.bf16.msra.mxu0 0
          %2356 = vmatprep.mubr.bf16.mxu0 0
          %2357 = vmatmul.mubr.bf16.gmra.mrb[0].mxu0 %v2004
          %v2358 = vpop.f32.mrb[0].mxu0
          %v2359 = vadd.f32 %v742, %v2358
          %v2360 = vpop.f32.mrb[0].mxu0
          %v2361 = vadd.f32 %v746, %v2360
          %v2362 = vpop.f32.mrb[0].mxu0
          %v2363 = vadd.f32 %v742, %v2362
          %v2364 = vpop.f32.mrb[0].mxu0
          %v2365 = vadd.f32 %v746, %v2364
          %2366 = vdwg.mxu0
          %2367 = vmatprep.subr.bf16.mxu0 0
          %2368 = vmatpush1.bf16.msra.mxu0 %v1001
          %2369 = vmatprep.subr.bf16.mxu0 0
          %2370 = vmatpush1.bf16.msra.mxu0 %v1004
          %2371 = vmatprep.subr.bf16.mxu0 0
          %2372 = vmatpush1.bf16.msra.mxu0 %v1007
          %2373 = vmatprep.subr.bf16.mxu0 0
          %2374 = vmatpush1.bf16.msra.mxu0 %v1010
          %2375 = vmatprep.subr.bf16.mxu0 0
          %2376 = vmatpush1.bf16.msra.mxu0 %v1013
          %2377 = vmatprep.subr.bf16.mxu0 0
          %2378 = vmatpush1.bf16.msra.mxu0 %v1016
          %2379 = vmatprep.subr.bf16.mxu0 0
          %2380 = vmatpush1.bf16.msra.mxu0 %v1019
          %2381 = vmatprep.subr.bf16.mxu0 0
          %2382 = vmatpush1.bf16.msra.mxu0 %v1022
          %2383 = vmatprep.subr.bf16.mxu0 0
          %2384 = vmatpush1.bf16.msra.mxu0 0
          %2385 = vmatprep.subr.bf16.mxu0 0
          %2386 = vmatpush1.bf16.msra.mxu0 0
          %2387 = vmatprep.subr.bf16.mxu0 0
          %2388 = vmatpush1.bf16.msra.mxu0 0
          %2389 = vmatprep.subr.bf16.mxu0 0
          %2390 = vmatpush1.bf16.msra.mxu0 0
          %2391 = vmatprep.subr.bf16.mxu0 0
          %2392 = vmatpush1.bf16.msra.mxu0 0
          %2393 = vmatprep.subr.bf16.mxu0 0
          %2394 = vmatpush1.bf16.msra.mxu0 0
          %2395 = vmatprep.subr.bf16.mxu0 0
          %2396 = vmatpush1.bf16.msra.mxu0 0
          %2397 = vmatprep.subr.bf16.mxu0 0
          %2398 = vmatpush1.bf16.msra.mxu0 0
          %2399 = vmatprep.mubr.bf16.mxu0 0
          %2400 = vmatmul.mubr.bf16.gmra.mrb[0].mxu0 %v2004
          %v2401 = vpop.f32.mrb[0].mxu0
          %v2402 = vadd.f32 %v750, %v2401
          %v2403 = vpop.f32.mrb[0].mxu0
          %v2404 = vpop.f32.mrb[0].mxu0
          %v2405 = vadd.f32 %v750, %v2404
          %v2406 = vpop.f32.mrb[0].mxu0
          %2407 = vdwg.mxu0
          %v2408 = vadd.f32 %v2275, %v2359
          %v2409 = vadd.f32 %v2277, %v2361
          %v2410 = vadd.f32 %v2279, %v2363
          %v2411 = vadd.f32 %v2281, %v2365
          %v2412 = vxor.u32 %v2408, 2147483648
          %v2413 = vxor.u32 %v2409, 2147483648
          %v2414 = vxor.u32 %v2410, 2147483648
          %v2415 = vxor.u32 %v2411, 2147483648
          %v2416 = vmul.f32 %v2412, 1.442695
          %v2417 = vpow.pop %v2416
          %v2418 = vmul.f32 %v2413, 1.442695
          %v2419 = vpow.pop %v2418
          %v2420 = vmul.f32 %v2414, 1.442695
          %v2421 = vpow.pop %v2420
          %v2422 = vmul.f32 %v2415, 1.442695
          %v2423 = vpow.pop %v2422
          %v2424 = vadd.f32 %v2417, 1.0
          %v2425 = vadd.f32 %v2419, 1.0
          %v2426 = vadd.f32 %v2421, 1.0
          %v2427 = vadd.f32 %v2423, 1.0
          %v2428 = vrcp.pop %v2424
          %v2429 = vmul.f32 1.0, %v2428
          %v2430 = vrcp.pop %v2425
          %v2431 = vmul.f32 1.0, %v2430
          %v2432 = vrcp.pop %v2426
          %v2433 = vmul.f32 1.0, %v2432
          %v2434 = vrcp.pop %v2427
          %v2435 = vmul.f32 1.0, %v2434
          %v2436 = vmul.f32 %v2429, %v2402
          %v2437 = vmul.f32 %v2433, %v2405
          %v2438 = vadd.f32 %v2318, %v2436
          %v2439 = vadd.f32 %v2321, %v2437
          %v2440 = vtanh.pop %v2438
          %v2441 = vtanh.pop %v2439
          %v2442 = vsub.f32 1.0, %v2431
          %v2443 = vsub.f32 1.0, %v2435
          %v2444 = vmul.f32 %v2442, %v2440
          %v2445 = vmul.f32 %v2443, %v2441
          %v2446 = vmul.f32 %v2431, %v2001
          %v2447 = vmul.f32 %v2435, %v2002
          %v2448 = vadd.f32 %v2444, %v2446
          %v2449 = vadd.f32 %v2445, %v2447
          %v2450 = vpack.c.bf16 %v2232, %v2231
          %v2451 = vpack.c.bf16 %v2449, %v2448
          %2452 = vmatprep.subr.bf16.mxu0 %v1335
          %2453 = vmatpush1.bf16.msra.mxu0 %v1334
          %2454 = vmatprep.subr.bf16.mxu0 %v1339
          %2455 = vmatpush1.bf16.msra.mxu0 %v1338
          %2456 = vmatprep.subr.bf16.mxu0 %v1343
          %2457 = vmatpush1.bf16.msra.mxu0 %v1342
          %2458 = vmatprep.subr.bf16.mxu0 %v1347
          %2459 = vmatpush1.bf16.msra.mxu0 %v1346
          %2460 = vmatprep.subr.bf16.mxu0 %v1351
          %2461 = vmatpush1.bf16.msra.mxu0 %v1350
          %2462 = vmatprep.subr.bf16.mxu0 %v1355
          %2463 = vmatpush1.bf16.msra.mxu0 %v1354
          %2464 = vmatprep.subr.bf16.mxu0 %v1359
          %2465 = vmatpush1.bf16.msra.mxu0 %v1358
          %2466 = vmatprep.subr.bf16.mxu0 %v1363
          %2467 = vmatpush1.bf16.msra.mxu0 %v1362
          %2468 = vmatprep.subr.bf16.mxu0 0
          %2469 = vmatpush1.bf16.msra.mxu0 0
          %2470 = vmatprep.subr.bf16.mxu0 0
          %2471 = vmatpush1.bf16.msra.mxu0 0
          %2472 = vmatprep.subr.bf16.mxu0 0
          %2473 = vmatpush1.bf16.msra.mxu0 0
          %2474 = vmatprep.subr.bf16.mxu0 0
          %2475 = vmatpush1.bf16.msra.mxu0 0
          %2476 = vmatprep.subr.bf16.mxu0 0
          %2477 = vmatpush1.bf16.msra.mxu0 0
          %2478 = vmatprep.subr.bf16.mxu0 0
          %2479 = vmatpush1.bf16.msra.mxu0 0
          %2480 = vmatprep.subr.bf16.mxu0 0
          %2481 = vmatpush1.bf16.msra.mxu0 0
          %2482 = vmatprep.subr.bf16.mxu0 0
          %2483 = vmatpush1.bf16.msra.mxu0 0
          %2484 = vmatprep.mubr.bf16.mxu0 0
          %2485 = vmatmul.mubr.bf16.gmra.mrb[0].mxu0 %v2451
          %v2486 = vpop.f32.mrb[0].mxu0
          %v2487 = vadd.f32 0.0, %v2486
          %v2488 = vpop.f32.mrb[0].mxu0
          %v2489 = vadd.f32 0.0, %v2488
          %v2490 = vpop.f32.mrb[0].mxu0
          %v2491 = vadd.f32 0.0, %v2490
          %v2492 = vpop.f32.mrb[0].mxu0
          %v2493 = vadd.f32 0.0, %v2492
          %2494 = vdwg.mxu0
          %2495 = vmatprep.subr.bf16.mxu0 %v1337
          %2496 = vmatpush1.bf16.msra.mxu0 %v1336
          %2497 = vmatprep.subr.bf16.mxu0 %v1341
          %2498 = vmatpush1.bf16.msra.mxu0 %v1340
          %2499 = vmatprep.subr.bf16.mxu0 %v1345
          %2500 = vmatpush1.bf16.msra.mxu0 %v1344
          %2501 = vmatprep.subr.bf16.mxu0 %v1349
          %2502 = vmatpush1.bf16.msra.mxu0 %v1348
          %2503 = vmatprep.subr.bf16.mxu0 %v1353
          %2504 = vmatpush1.bf16.msra.mxu0 %v1352
          %2505 = vmatprep.subr.bf16.mxu0 %v1357
          %2506 = vmatpush1.bf16.msra.mxu0 %v1356
          %2507 = vmatprep.subr.bf16.mxu0 %v1361
          %2508 = vmatpush1.bf16.msra.mxu0 %v1360
          %2509 = vmatprep.subr.bf16.mxu0 %v1365
          %2510 = vmatpush1.bf16.msra.mxu0 %v1364
          %2511 = vmatprep.subr.bf16.mxu0 0
          %2512 = vmatpush1.bf16.msra.mxu0 0
          %2513 = vmatprep.subr.bf16.mxu0 0
          %2514 = vmatpush1.bf16.msra.mxu0 0
          %2515 = vmatprep.subr.bf16.mxu0 0
          %2516 = vmatpush1.bf16.msra.mxu0 0
          %2517 = vmatprep.subr.bf16.mxu0 0
          %2518 = vmatpush1.bf16.msra.mxu0 0
          %2519 = vmatprep.subr.bf16.mxu0 0
          %2520 = vmatpush1.bf16.msra.mxu0 0
          %2521 = vmatprep.subr.bf16.mxu0 0
          %2522 = vmatpush1.bf16.msra.mxu0 0
          %2523 = vmatprep.subr.bf16.mxu0 0
          %2524 = vmatpush1.bf16.msra.mxu0 0
          %2525 = vmatprep.subr.bf16.mxu0 0
          %2526 = vmatpush1.bf16.msra.mxu0 0
          %2527 = vmatprep.mubr.bf16.mxu0 0
          %2528 = vmatmul.mubr.bf16.gmra.mrb[0].mxu0 %v2451
          %v2529 = vpop.f32.mrb[0].mxu0
          %v2530 = vadd.f32 0.0, %v2529
          %v2531 = vpop.f32.mrb[0].mxu0
          %v2532 = vadd.f32 0.0, %v2531
          %v2533 = vpop.f32.mrb[0].mxu0
          %v2534 = vadd.f32 0.0, %v2533
          %v2535 = vpop.f32.mrb[0].mxu0
          %v2536 = vadd.f32 0.0, %v2535
          %2537 = vdwg.mxu0
          %2538 = vmatprep.subr.bf16.mxu0 %v1581
          %2539 = vmatpush1.bf16.msra.mxu0 %v1580
          %2540 = vmatprep.subr.bf16.mxu0 %v1585
          %2541 = vmatpush1.bf16.msra.mxu0 %v1584
          %2542 = vmatprep.subr.bf16.mxu0 %v1589
          %2543 = vmatpush1.bf16.msra.mxu0 %v1588
          %2544 = vmatprep.subr.bf16.mxu0 %v1593
          %2545 = vmatpush1.bf16.msra.mxu0 %v1592
          %2546 = vmatprep.subr.bf16.mxu0 %v1597
          %2547 = vmatpush1.bf16.msra.mxu0 %v1596
          %2548 = vmatprep.subr.bf16.mxu0 %v1601
          %2549 = vmatpush1.bf16.msra.mxu0 %v1600
          %2550 = vmatprep.subr.bf16.mxu0 %v1605
          %2551 = vmatpush1.bf16.msra.mxu0 %v1604
          %2552 = vmatprep.subr.bf16.mxu0 %v1609
          %2553 = vmatpush1.bf16.msra.mxu0 %v1608
          %2554 = vmatprep.subr.bf16.mxu0 0
          %2555 = vmatpush1.bf16.msra.mxu0 0
          %2556 = vmatprep.subr.bf16.mxu0 0
          %2557 = vmatpush1.bf16.msra.mxu0 0
          %2558 = vmatprep.subr.bf16.mxu0 0
          %2559 = vmatpush1.bf16.msra.mxu0 0
          %2560 = vmatprep.subr.bf16.mxu0 0
          %2561 = vmatpush1.bf16.msra.mxu0 0
          %2562 = vmatprep.subr.bf16.mxu0 0
          %2563 = vmatpush1.bf16.msra.mxu0 0
          %2564 = vmatprep.subr.bf16.mxu0 0
          %2565 = vmatpush1.bf16.msra.mxu0 0
          %2566 = vmatprep.subr.bf16.mxu0 0
          %2567 = vmatpush1.bf16.msra.mxu0 0
          %2568 = vmatprep.subr.bf16.mxu0 0
          %2569 = vmatpush1.bf16.msra.mxu0 0
          %2570 = vmatprep.mubr.bf16.mxu0 0
          %2571 = vmatmul.mubr.bf16.gmra.mrb[0].mxu0 %v2450
          %v2572 = vpop.f32.mrb[0].mxu0
          %v2573 = vadd.f32 %v2487, %v2572
          %v2574 = vpop.f32.mrb[0].mxu0
          %v2575 = vadd.f32 %v2489, %v2574
          %v2576 = vpop.f32.mrb[0].mxu0
          %v2577 = vadd.f32 %v2491, %v2576
          %v2578 = vpop.f32.mrb[0].mxu0
          %v2579 = vadd.f32 %v2493, %v2578
          %2580 = vdwg.mxu0
          %2581 = vmatprep.subr.bf16.mxu0 %v1583
          %2582 = vmatpush1.bf16.msra.mxu0 %v1582
          %2583 = vmatprep.subr.bf16.mxu0 %v1587
          %2584 = vmatpush1.bf16.msra.mxu0 %v1586
          %2585 = vmatprep.subr.bf16.mxu0 %v1591
          %2586 = vmatpush1.bf16.msra.mxu0 %v1590
          %2587 = vmatprep.subr.bf16.mxu0 %v1595
          %2588 = vmatpush1.bf16.msra.mxu0 %v1594
          %2589 = vmatprep.subr.bf16.mxu0 %v1599
          %2590 = vmatpush1.bf16.msra.mxu0 %v1598
          %2591 = vmatprep.subr.bf16.mxu0 %v1603
          %2592 = vmatpush1.bf16.msra.mxu0 %v1602
          %2593 = vmatprep.subr.bf16.mxu0 %v1607
          %2594 = vmatpush1.bf16.msra.mxu0 %v1606
          %2595 = vmatprep.subr.bf16.mxu0 %v1611
          %2596 = vmatpush1.bf16.msra.mxu0 %v1610
          %2597 = vmatprep.subr.bf16.mxu0 0
          %2598 = vmatpush1.bf16.msra.mxu0 0
          %2599 = vmatprep.subr.bf16.mxu0 0
          %2600 = vmatpush1.bf16.msra.mxu0 0
          %2601 = vmatprep.subr.bf16.mxu0 0
          %2602 = vmatpush1.bf16.msra.mxu0 0
          %2603 = vmatprep.subr.bf16.mxu0 0
          %2604 = vmatpush1.bf16.msra.mxu0 0
          %2605 = vmatprep.subr.bf16.mxu0 0
          %2606 = vmatpush1.bf16.msra.mxu0 0
          %2607 = vmatprep.subr.bf16.mxu0 0
          %2608 = vmatpush1.bf16.msra.mxu0 0
          %2609 = vmatprep.subr.bf16.mxu0 0
          %2610 = vmatpush1.bf16.msra.mxu0 0
          %2611 = vmatprep.subr.bf16.mxu0 0
          %2612 = vmatpush1.bf16.msra.mxu0 0
          %2613 = vmatprep.mubr.bf16.mxu0 0
          %2614 = vmatmul.mubr.bf16.gmra.mrb[0].mxu0 %v2450
          %v2615 = vpop.f32.mrb[0].mxu0
          %v2616 = vadd.f32 %v2530, %v2615
          %v2617 = vpop.f32.mrb[0].mxu0
          %v2618 = vadd.f32 %v2532, %v2617
          %v2619 = vpop.f32.mrb[0].mxu0
          %v2620 = vadd.f32 %v2534, %v2619
          %v2621 = vpop.f32.mrb[0].mxu0
          %v2622 = vadd.f32 %v2536, %v2621
          %2623 = vdwg.mxu0
          %v2624 = vadd.f32 %v2573, %v759
          %v2625 = vadd.f32 %v2575, %v763
          %v2626 = vadd.f32 %v2616, %v767
          %v2627 = vadd.f32 %v2618, %v771
          %v2628 = vadd.f32 %v2577, %v759
          %v2629 = vadd.f32 %v2579, %v763
          %v2630 = vadd.f32 %v2620, %v767
          %v2631 = vadd.f32 %v2622, %v771
          %v2632 = vxor.u32 %v2624, 2147483648
          %v2633 = vxor.u32 %v2625, 2147483648
          %v2634 = vxor.u32 %v2626, 2147483648
          %v2635 = vxor.u32 %v2628, 2147483648
          %v2636 = vxor.u32 %v2629, 2147483648
          %v2637 = vxor.u32 %v2630, 2147483648
          %v2638 = vmul.f32 %v2632, 1.442695
          %v2639 = vpow.pop %v2638
          %v2640 = vmul.f32 %v2633, 1.442695
          %v2641 = vpow.pop %v2640
          %v2642 = vmul.f32 %v2634, 1.442695
          %v2643 = vpow.pop %v2642
          %v2644 = vmul.f32 %v2635, 1.442695
          %v2645 = vpow.pop %v2644
          %v2646 = vmul.f32 %v2636, 1.442695
          %v2647 = vpow.pop %v2646
          %v2648 = vmul.f32 %v2637, 1.442695
          %v2649 = vpow.pop %v2648
          %v2650 = vadd.f32 %v2639, 1.0
          %v2651 = vadd.f32 %v2641, 1.0
          %v2652 = vadd.f32 %v2643, 1.0
          %v2653 = vadd.f32 %v2645, 1.0
          %v2654 = vadd.f32 %v2647, 1.0
          %v2655 = vadd.f32 %v2649, 1.0
          %v2656 = vrcp.pop %v2650
          %v2657 = vmul.f32 1.0, %v2656
          %v2658 = vrcp.pop %v2651
          %v2659 = vmul.f32 1.0, %v2658
          %v2660 = vrcp.pop %v2652
          %v2661 = vmul.f32 1.0, %v2660
          %v2662 = vrcp.pop %v2653
          %v2663 = vmul.f32 1.0, %v2662
          %v2664 = vrcp.pop %v2654
          %v2665 = vmul.f32 1.0, %v2664
          %v2666 = vrcp.pop %v2655
          %v2667 = vmul.f32 1.0, %v2666
          %v2668 = vtanh.pop %v2627
          %v2669 = vtanh.pop %v2631
          %v2670 = vmul.f32 %v2659, %v2227
          %v2671 = vmul.f32 %v2665, %v2228
          %v2672 = vmul.f32 %v2657, %v2668
          %v2673 = vmul.f32 %v2663, %v2669
          %v2674 = vadd.f32 %v2670, %v2672
          %v2675 = vadd.f32 %v2671, %v2673
          %v2676 = vtanh.pop %v2674
          %v2677 = vtanh.pop %v2675
          %v2678 = vmul.f32 %v2661, %v2676
          %v2679 = vmul.f32 %v2667, %v2677
          %s2680 = scalar_lea.vmem [#allocation2], 48
          %v2681 = vld [vmem:[%s2680] sm:$0xff]
          %v2682 = vld [vmem:[%s2680 + $0x8] sm:$0xff]
          %v2683 = vpack.c.bf16 %v2682, %v2681
          %v2685 = vsel %vm799, %v2683, 0
          %2687 = vmatprep.subr.bf16.mxu0 %v794
          %2688 = vmatpush1.bf16.msra.mxu0 %v793
          %2689 = vmatprep.subr.bf16.mxu0 0
          %2690 = vmatpush1.bf16.msra.mxu0 0
          %2691 = vmatprep.subr.bf16.mxu0 0
          %2692 = vmatpush1.bf16.msra.mxu0 0
          %2693 = vmatprep.subr.bf16.mxu0 0
          %2694 = vmatpush1.bf16.msra.mxu0 0
          %2695 = vmatprep.subr.bf16.mxu0 0
          %2696 = vmatpush1.bf16.msra.mxu0 0
          %2697 = vmatprep.subr.bf16.mxu0 0
          %2698 = vmatpush1.bf16.msra.mxu0 0
          %2699 = vmatprep.subr.bf16.mxu0 0
          %2700 = vmatpush1.bf16.msra.mxu0 0
          %2701 = vmatprep.subr.bf16.mxu0 0
          %2702 = vmatpush1.bf16.msra.mxu0 0
          %2703 = vmatprep.subr.bf16.mxu0 0
          %2704 = vmatpush1.bf16.msra.mxu0 0
          %2705 = vmatprep.subr.bf16.mxu0 0
          %2706 = vmatpush1.bf16.msra.mxu0 0
          %2707 = vmatprep.subr.bf16.mxu0 0
          %2708 = vmatpush1.bf16.msra.mxu0 0
          %2709 = vmatprep.subr.bf16.mxu0 0
          %2710 = vmatpush1.bf16.msra.mxu0 0
          %2711 = vmatprep.subr.bf16.mxu0 0
          %2712 = vmatpush1.bf16.msra.mxu0 0
          %2713 = vmatprep.subr.bf16.mxu0 0
          %2714 = vmatpush1.bf16.msra.mxu0 0
          %2715 = vmatprep.subr.bf16.mxu0 0
          %2716 = vmatpush1.bf16.msra.mxu0 0
          %2717 = vmatprep.subr.bf16.mxu0 0
          %2718 = vmatpush1.bf16.msra.mxu0 0
          %2719 = vmatprep.mubr.bf16.mxu0 0
          %2720 = vmatmul.mubr.bf16.gmra.mrb[0].mxu0 %v2685
          %v2721 = vpop.f32.mrb[0].mxu0
          %v2722 = vadd.f32 %v725, %v2721
          %v2723 = vpop.f32.mrb[0].mxu0
          %v2724 = vadd.f32 %v729, %v2723
          %v2725 = vpop.f32.mrb[0].mxu0
          %v2726 = vadd.f32 %v725, %v2725
          %v2727 = vpop.f32.mrb[0].mxu0
          %v2728 = vadd.f32 %v729, %v2727
          %2729 = vdwg.mxu0
          %2730 = vmatprep.subr.bf16.mxu0 0
          %2731 = vmatpush1.bf16.msra.mxu0 %v795
          %2732 = vmatprep.subr.bf16.mxu0 0
          %2733 = vmatpush1.bf16.msra.mxu0 0
          %2734 = vmatprep.subr.bf16.mxu0 0
          %2735 = vmatpush1.bf16.msra.mxu0 0
          %2736 = vmatprep.subr.bf16.mxu0 0
          %2737 = vmatpush1.bf16.msra.mxu0 0
          %2738 = vmatprep.subr.bf16.mxu0 0
          %2739 = vmatpush1.bf16.msra.mxu0 0
          %2740 = vmatprep.subr.bf16.mxu0 0
          %2741 = vmatpush1.bf16.msra.mxu0 0
          %2742 = vmatprep.subr.bf16.mxu0 0
          %2743 = vmatpush1.bf16.msra.mxu0 0
          %2744 = vmatprep.subr.bf16.mxu0 0
          %2745 = vmatpush1.bf16.msra.mxu0 0
          %2746 = vmatprep.subr.bf16.mxu0 0
          %2747 = vmatpush1.bf16.msra.mxu0 0
          %2748 = vmatprep.subr.bf16.mxu0 0
          %2749 = vmatpush1.bf16.msra.mxu0 0
          %2750 = vmatprep.subr.bf16.mxu0 0
          %2751 = vmatpush1.bf16.msra.mxu0 0
          %2752 = vmatprep.subr.bf16.mxu0 0
          %2753 = vmatpush1.bf16.msra.mxu0 0
          %2754 = vmatprep.subr.bf16.mxu0 0
          %2755 = vmatpush1.bf16.msra.mxu0 0
          %2756 = vmatprep.subr.bf16.mxu0 0
          %2757 = vmatpush1.bf16.msra.mxu0 0
          %2758 = vmatprep.subr.bf16.mxu0 0
          %2759 = vmatpush1.bf16.msra.mxu0 0
          %2760 = vmatprep.subr.bf16.mxu0 0
          %2761 = vmatpush1.bf16.msra.mxu0 0
          %2762 = vmatprep.mubr.bf16.mxu0 0
          %2763 = vmatmul.mubr.bf16.gmra.mrb[0].mxu0 %v2685
          %v2764 = vpop.f32.mrb[0].mxu0
          %v2765 = vadd.f32 %v733, %v2764
          %v2766 = vpop.f32.mrb[0].mxu0
          %v2767 = vpop.f32.mrb[0].mxu0
          %v2768 = vadd.f32 %v733, %v2767
          %v2769 = vpop.f32.mrb[0].mxu0
          %2770 = vdwg.mxu0
          %2771 = vmatprep.subr.bf16.mxu0 %v1000
          %2772 = vmatpush1.bf16.msra.mxu0 %v999
          %2773 = vmatprep.subr.bf16.mxu0 %v1003
          %2774 = vmatpush1.bf16.msra.mxu0 %v1002
          %2775 = vmatprep.subr.bf16.mxu0 %v1006
          %2776 = vmatpush1.bf16.msra.mxu0 %v1005
          %2777 = vmatprep.subr.bf16.mxu0 %v1009
          %2778 = vmatpush1.bf16.msra.mxu0 %v1008
          %2779 = vmatprep.subr.bf16.mxu0 %v1012
          %2780 = vmatpush1.bf16.msra.mxu0 %v1011
          %2781 = vmatprep.subr.bf16.mxu0 %v1015
          %2782 = vmatpush1.bf16.msra.mxu0 %v1014
          %2783 = vmatprep.subr.bf16.mxu0 %v1018
          %2784 = vmatpush1.bf16.msra.mxu0 %v1017
          %2785 = vmatprep.subr.bf16.mxu0 %v1021
          %2786 = vmatpush1.bf16.msra.mxu0 %v1020
          %2787 = vmatprep.subr.bf16.mxu0 0
          %2788 = vmatpush1.bf16.msra.mxu0 0
          %2789 = vmatprep.subr.bf16.mxu0 0
          %2790 = vmatpush1.bf16.msra.mxu0 0
          %2791 = vmatprep.subr.bf16.mxu0 0
          %2792 = vmatpush1.bf16.msra.mxu0 0
          %2793 = vmatprep.subr.bf16.mxu0 0
          %2794 = vmatpush1.bf16.msra.mxu0 0
          %2795 = vmatprep.subr.bf16.mxu0 0
          %2796 = vmatpush1.bf16.msra.mxu0 0
          %2797 = vmatprep.subr.bf16.mxu0 0
          %2798 = vmatpush1.bf16.msra.mxu0 0
          %2799 = vmatprep.subr.bf16.mxu0 0
          %2800 = vmatpush1.bf16.msra.mxu0 0
          %2801 = vmatprep.subr.bf16.mxu0 0
          %2802 = vmatpush1.bf16.msra.mxu0 0
          %2803 = vmatprep.mubr.bf16.mxu0 0
          %2804 = vmatmul.mubr.bf16.gmra.mrb[0].mxu0 %v2451
          %v2805 = vpop.f32.mrb[0].mxu0
          %v2806 = vadd.f32 %v742, %v2805
          %v2807 = vpop.f32.mrb[0].mxu0
          %v2808 = vadd.f32 %v746, %v2807
          %v2809 = vpop.f32.mrb[0].mxu0
          %v2810 = vadd.f32 %v742, %v2809
          %v2811 = vpop.f32.mrb[0].mxu0
          %v2812 = vadd.f32 %v746, %v2811
          %2813 = vdwg.mxu0
          %2814 = vmatprep.subr.bf16.mxu0 0
          %2815 = vmatpush1.bf16.msra.mxu0 %v1001
          %2816 = vmatprep.subr.bf16.mxu0 0
          %2817 = vmatpush1.bf16.msra.mxu0 %v1004
          %2818 = vmatprep.subr.bf16.mxu0 0
          %2819 = vmatpush1.bf16.msra.mxu0 %v1007
          %2820 = vmatprep.subr.bf16.mxu0 0
          %2821 = vmatpush1.bf16.msra.mxu0 %v1010
          %2822 = vmatprep.subr.bf16.mxu0 0
          %2823 = vmatpush1.bf16.msra.mxu0 %v1013
          %2824 = vmatprep.subr.bf16.mxu0 0
          %2825 = vmatpush1.bf16.msra.mxu0 %v1016
          %2826 = vmatprep.subr.bf16.mxu0 0
          %2827 = vmatpush1.bf16.msra.mxu0 %v1019
          %2828 = vmatprep.subr.bf16.mxu0 0
          %2829 = vmatpush1.bf16.msra.mxu0 %v1022
          %2830 = vmatprep.subr.bf16.mxu0 0
          %2831 = vmatpush1.bf16.msra.mxu0 0
          %2832 = vmatprep.subr.bf16.mxu0 0
          %2833 = vmatpush1.bf16.msra.mxu0 0
          %2834 = vmatprep.subr.bf16.mxu0 0
          %2835 = vmatpush1.bf16.msra.mxu0 0
          %2836 = vmatprep.subr.bf16.mxu0 0
          %2837 = vmatpush1.bf16.msra.mxu0 0
          %2838 = vmatprep.subr.bf16.mxu0 0
          %2839 = vmatpush1.bf16.msra.mxu0 0
          %2840 = vmatprep.subr.bf16.mxu0 0
          %2841 = vmatpush1.bf16.msra.mxu0 0
          %2842 = vmatprep.subr.bf16.mxu0 0
          %2843 = vmatpush1.bf16.msra.mxu0 0
          %2844 = vmatprep.subr.bf16.mxu0 0
          %2845 = vmatpush1.bf16.msra.mxu0 0
          %2846 = vmatprep.mubr.bf16.mxu0 0
          %2847 = vmatmul.mubr.bf16.gmra.mrb[0].mxu0 %v2451
          %v2848 = vpop.f32.mrb[0].mxu0
          %v2849 = vadd.f32 %v750, %v2848
          %v2850 = vpop.f32.mrb[0].mxu0
          %v2851 = vpop.f32.mrb[0].mxu0
          %v2852 = vadd.f32 %v750, %v2851
          %v2853 = vpop.f32.mrb[0].mxu0
          %2854 = vdwg.mxu0
          %v2855 = vadd.f32 %v2722, %v2806
          %v2856 = vadd.f32 %v2724, %v2808
          %v2857 = vadd.f32 %v2726, %v2810
          %v2858 = vadd.f32 %v2728, %v2812
          %v2859 = vxor.u32 %v2855, 2147483648
          %v2860 = vxor.u32 %v2856, 2147483648
          %v2861 = vxor.u32 %v2857, 2147483648
          %v2862 = vxor.u32 %v2858, 2147483648
          %v2863 = vmul.f32 %v2859, 1.442695
          %v2864 = vpow.pop %v2863
          %v2865 = vmul.f32 %v2860, 1.442695
          %v2866 = vpow.pop %v2865
          %v2867 = vmul.f32 %v2861, 1.442695
          %v2868 = vpow.pop %v2867
          %v2869 = vmul.f32 %v2862, 1.442695
          %v2870 = vpow.pop %v2869
          %v2871 = vadd.f32 %v2864, 1.0
          %v2872 = vadd.f32 %v2866, 1.0
          %v2873 = vadd.f32 %v2868, 1.0
          %v2874 = vadd.f32 %v2870, 1.0
          %v2875 = vrcp.pop %v2871
          %v2876 = vmul.f32 1.0, %v2875
          %v2877 = vrcp.pop %v2872
          %v2878 = vmul.f32 1.0, %v2877
          %v2879 = vrcp.pop %v2873
          %v2880 = vmul.f32 1.0, %v2879
          %v2881 = vrcp.pop %v2874
          %v2882 = vmul.f32 1.0, %v2881
          %v2883 = vmul.f32 %v2876, %v2849
          %v2884 = vmul.f32 %v2880, %v2852
          %v2885 = vadd.f32 %v2765, %v2883
          %v2886 = vadd.f32 %v2768, %v2884
          %v2887 = vtanh.pop %v2885
          %v2888 = vtanh.pop %v2886
          %v2889 = vsub.f32 1.0, %v2878
          %v2890 = vsub.f32 1.0, %v2882
          %v2891 = vmul.f32 %v2889, %v2887
          %v2892 = vmul.f32 %v2890, %v2888
          %v2893 = vmul.f32 %v2878, %v2448
          %v2894 = vmul.f32 %v2882, %v2449
          %v2895 = vadd.f32 %v2891, %v2893
          %v2896 = vadd.f32 %v2892, %v2894
          %v2897 = vpack.c.bf16 %v2679, %v2678
          %v2898 = vpack.c.bf16 %v2896, %v2895
          %2899 = vmatprep.subr.bf16.mxu0 %v1335
          %2900 = vmatpush1.bf16.msra.mxu0 %v1334
          %2901 = vmatprep.subr.bf16.mxu0 %v1339
          %2902 = vmatpush1.bf16.msra.mxu0 %v1338
          %2903 = vmatprep.subr.bf16.mxu0 %v1343
          %2904 = vmatpush1.bf16.msra.mxu0 %v1342
          %2905 = vmatprep.subr.bf16.mxu0 %v1347
          %2906 = vmatpush1.bf16.msra.mxu0 %v1346
          %2907 = vmatprep.subr.bf16.mxu0 %v1351
          %2908 = vmatpush1.bf16.msra.mxu0 %v1350
          %2909 = vmatprep.subr.bf16.mxu0 %v1355
          %2910 = vmatpush1.bf16.msra.mxu0 %v1354
          %2911 = vmatprep.subr.bf16.mxu0 %v1359
          %2912 = vmatpush1.bf16.msra.mxu0 %v1358
          %2913 = vmatprep.subr.bf16.mxu0 %v1363
          %2914 = vmatpush1.bf16.msra.mxu0 %v1362
          %2915 = vmatprep.subr.bf16.mxu0 0
          %2916 = vmatpush1.bf16.msra.mxu0 0
          %2917 = vmatprep.subr.bf16.mxu0 0
          %2918 = vmatpush1.bf16.msra.mxu0 0
          %2919 = vmatprep.subr.bf16.mxu0 0
          %2920 = vmatpush1.bf16.msra.mxu0 0
          %2921 = vmatprep.subr.bf16.mxu0 0
          %2922 = vmatpush1.bf16.msra.mxu0 0
          %2923 = vmatprep.subr.bf16.mxu0 0
          %2924 = vmatpush1.bf16.msra.mxu0 0
          %2925 = vmatprep.subr.bf16.mxu0 0
          %2926 = vmatpush1.bf16.msra.mxu0 0
          %2927 = vmatprep.subr.bf16.mxu0 0
          %2928 = vmatpush1.bf16.msra.mxu0 0
          %2929 = vmatprep.subr.bf16.mxu0 0
          %2930 = vmatpush1.bf16.msra.mxu0 0
          %2931 = vmatprep.mubr.bf16.mxu0 0
          %2932 = vmatmul.mubr.bf16.gmra.mrb[0].mxu0 %v2898
          %v2933 = vpop.f32.mrb[0].mxu0
          %v2934 = vadd.f32 0.0, %v2933
          %v2935 = vpop.f32.mrb[0].mxu0
          %v2936 = vadd.f32 0.0, %v2935
          %v2937 = vpop.f32.mrb[0].mxu0
          %v2938 = vadd.f32 0.0, %v2937
          %v2939 = vpop.f32.mrb[0].mxu0
          %v2940 = vadd.f32 0.0, %v2939
          %2941 = vdwg.mxu0
          %2942 = vmatprep.subr.bf16.mxu0 %v1337
          %2943 = vmatpush1.bf16.msra.mxu0 %v1336
          %2944 = vmatprep.subr.bf16.mxu0 %v1341
          %2945 = vmatpush1.bf16.msra.mxu0 %v1340
          %2946 = vmatprep.subr.bf16.mxu0 %v1345
          %2947 = vmatpush1.bf16.msra.mxu0 %v1344
          %2948 = vmatprep.subr.bf16.mxu0 %v1349
          %2949 = vmatpush1.bf16.msra.mxu0 %v1348
          %2950 = vmatprep.subr.bf16.mxu0 %v1353
          %2951 = vmatpush1.bf16.msra.mxu0 %v1352
          %2952 = vmatprep.subr.bf16.mxu0 %v1357
          %2953 = vmatpush1.bf16.msra.mxu0 %v1356
          %2954 = vmatprep.subr.bf16.mxu0 %v1361
          %2955 = vmatpush1.bf16.msra.mxu0 %v1360
          %2956 = vmatprep.subr.bf16.mxu0 %v1365
          %2957 = vmatpush1.bf16.msra.mxu0 %v1364
          %2958 = vmatprep.subr.bf16.mxu0 0
          %2959 = vmatpush1.bf16.msra.mxu0 0
          %2960 = vmatprep.subr.bf16.mxu0 0
          %2961 = vmatpush1.bf16.msra.mxu0 0
          %2962 = vmatprep.subr.bf16.mxu0 0
          %2963 = vmatpush1.bf16.msra.mxu0 0
          %2964 = vmatprep.subr.bf16.mxu0 0
          %2965 = vmatpush1.bf16.msra.mxu0 0
          %2966 = vmatprep.subr.bf16.mxu0 0
          %2967 = vmatpush1.bf16.msra.mxu0 0
          %2968 = vmatprep.subr.bf16.mxu0 0
          %2969 = vmatpush1.bf16.msra.mxu0 0
          %2970 = vmatprep.subr.bf16.mxu0 0
          %2971 = vmatpush1.bf16.msra.mxu0 0
          %2972 = vmatprep.subr.bf16.mxu0 0
          %2973 = vmatpush1.bf16.msra.mxu0 0
          %2974 = vmatprep.mubr.bf16.mxu0 0
          %2975 = vmatmul.mubr.bf16.gmra.mrb[0].mxu0 %v2898
          %v2976 = vpop.f32.mrb[0].mxu0
          %v2977 = vadd.f32 0.0, %v2976
          %v2978 = vpop.f32.mrb[0].mxu0
          %v2979 = vadd.f32 0.0, %v2978
          %v2980 = vpop.f32.mrb[0].mxu0
          %v2981 = vadd.f32 0.0, %v2980
          %v2982 = vpop.f32.mrb[0].mxu0
          %v2983 = vadd.f32 0.0, %v2982
          %2984 = vdwg.mxu0
          %2985 = vmatprep.subr.bf16.mxu0 %v1581
          %2986 = vmatpush1.bf16.msra.mxu0 %v1580
          %2987 = vmatprep.subr.bf16.mxu0 %v1585
          %2988 = vmatpush1.bf16.msra.mxu0 %v1584
          %2989 = vmatprep.subr.bf16.mxu0 %v1589
          %2990 = vmatpush1.bf16.msra.mxu0 %v1588
          %2991 = vmatprep.subr.bf16.mxu0 %v1593
          %2992 = vmatpush1.bf16.msra.mxu0 %v1592
          %2993 = vmatprep.subr.bf16.mxu0 %v1597
          %2994 = vmatpush1.bf16.msra.mxu0 %v1596
          %2995 = vmatprep.subr.bf16.mxu0 %v1601
          %2996 = vmatpush1.bf16.msra.mxu0 %v1600
          %2997 = vmatprep.subr.bf16.mxu0 %v1605
          %2998 = vmatpush1.bf16.msra.mxu0 %v1604
          %2999 = vmatprep.subr.bf16.mxu0 %v1609
          %3000 = vmatpush1.bf16.msra.mxu0 %v1608
          %3001 = vmatprep.subr.bf16.mxu0 0
          %3002 = vmatpush1.bf16.msra.mxu0 0
          %3003 = vmatprep.subr.bf16.mxu0 0
          %3004 = vmatpush1.bf16.msra.mxu0 0
          %3005 = vmatprep.subr.bf16.mxu0 0
          %3006 = vmatpush1.bf16.msra.mxu0 0
          %3007 = vmatprep.subr.bf16.mxu0 0
          %3008 = vmatpush1.bf16.msra.mxu0 0
          %3009 = vmatprep.subr.bf16.mxu0 0
          %3010 = vmatpush1.bf16.msra.mxu0 0
          %3011 = vmatprep.subr.bf16.mxu0 0
          %3012 = vmatpush1.bf16.msra.mxu0 0
          %3013 = vmatprep.subr.bf16.mxu0 0
          %3014 = vmatpush1.bf16.msra.mxu0 0
          %3015 = vmatprep.subr.bf16.mxu0 0
          %3016 = vmatpush1.bf16.msra.mxu0 0
          %3017 = vmatprep.mubr.bf16.mxu0 0
          %3018 = vmatmul.mubr.bf16.gmra.mrb[0].mxu0 %v2897
          %v3019 = vpop.f32.mrb[0].mxu0
          %v3020 = vadd.f32 %v2934, %v3019
          %v3021 = vpop.f32.mrb[0].mxu0
          %v3022 = vadd.f32 %v2936, %v3021
          %v3023 = vpop.f32.mrb[0].mxu0
          %v3024 = vadd.f32 %v2938, %v3023
          %v3025 = vpop.f32.mrb[0].mxu0
          %v3026 = vadd.f32 %v2940, %v3025
          %3027 = vdwg.mxu0
          %3028 = vmatprep.subr.bf16.mxu0 %v1583
          %3029 = vmatpush1.bf16.msra.mxu0 %v1582
          %3030 = vmatprep.subr.bf16.mxu0 %v1587
          %3031 = vmatpush1.bf16.msra.mxu0 %v1586
          %3032 = vmatprep.subr.bf16.mxu0 %v1591
          %3033 = vmatpush1.bf16.msra.mxu0 %v1590
          %3034 = vmatprep.subr.bf16.mxu0 %v1595
          %3035 = vmatpush1.bf16.msra.mxu0 %v1594
          %3036 = vmatprep.subr.bf16.mxu0 %v1599
          %3037 = vmatpush1.bf16.msra.mxu0 %v1598
          %3038 = vmatprep.subr.bf16.mxu0 %v1603
          %3039 = vmatpush1.bf16.msra.mxu0 %v1602
          %3040 = vmatprep.subr.bf16.mxu0 %v1607
          %3041 = vmatpush1.bf16.msra.mxu0 %v1606
          %3042 = vmatprep.subr.bf16.mxu0 %v1611
          %3043 = vmatpush1.bf16.msra.mxu0 %v1610
          %3044 = vmatprep.subr.bf16.mxu0 0
          %3045 = vmatpush1.bf16.msra.mxu0 0
          %3046 = vmatprep.subr.bf16.mxu0 0
          %3047 = vmatpush1.bf16.msra.mxu0 0
          %3048 = vmatprep.subr.bf16.mxu0 0
          %3049 = vmatpush1.bf16.msra.mxu0 0
          %3050 = vmatprep.subr.bf16.mxu0 0
          %3051 = vmatpush1.bf16.msra.mxu0 0
          %3052 = vmatprep.subr.bf16.mxu0 0
          %3053 = vmatpush1.bf16.msra.mxu0 0
          %3054 = vmatprep.subr.bf16.mxu0 0
          %3055 = vmatpush1.bf16.msra.mxu0 0
          %3056 = vmatprep.subr.bf16.mxu0 0
          %3057 = vmatpush1.bf16.msra.mxu0 0
          %3058 = vmatprep.subr.bf16.mxu0 0
          %3059 = vmatpush1.bf16.msra.mxu0 0
          %3060 = vmatprep.mubr.bf16.mxu0 0
          %3061 = vmatmul.mubr.bf16.gmra.mrb[0].mxu0 %v2897
          %v3062 = vpop.f32.mrb[0].mxu0
          %v3063 = vadd.f32 %v2977, %v3062
          %v3064 = vpop.f32.mrb[0].mxu0
          %v3065 = vadd.f32 %v2979, %v3064
          %v3066 = vpop.f32.mrb[0].mxu0
          %v3067 = vadd.f32 %v2981, %v3066
          %v3068 = vpop.f32.mrb[0].mxu0
          %v3069 = vadd.f32 %v2983, %v3068
          %3070 = vdwg.mxu0
          %v3071 = vadd.f32 %v3020, %v759
          %v3072 = vadd.f32 %v3022, %v763
          %v3073 = vadd.f32 %v3063, %v767
          %v3074 = vadd.f32 %v3065, %v771
          %v3075 = vadd.f32 %v3024, %v759
          %v3076 = vadd.f32 %v3026, %v763
          %v3077 = vadd.f32 %v3067, %v767
          %v3078 = vadd.f32 %v3069, %v771
          %v3079 = vxor.u32 %v3071, 2147483648
          %v3080 = vxor.u32 %v3072, 2147483648
          %v3081 = vxor.u32 %v3073, 2147483648
          %v3082 = vxor.u32 %v3075, 2147483648
          %v3083 = vxor.u32 %v3076, 2147483648
          %v3084 = vxor.u32 %v3077, 2147483648
          %v3085 = vmul.f32 %v3079, 1.442695
          %v3086 = vpow.pop %v3085
          %v3087 = vmul.f32 %v3080, 1.442695
          %v3088 = vpow.pop %v3087
          %v3089 = vmul.f32 %v3081, 1.442695
          %v3090 = vpow.pop %v3089
          %v3091 = vmul.f32 %v3082, 1.442695
          %v3092 = vpow.pop %v3091
          %v3093 = vmul.f32 %v3083, 1.442695
          %v3094 = vpow.pop %v3093
          %v3095 = vmul.f32 %v3084, 1.442695
          %v3096 = vpow.pop %v3095
          %v3097 = vadd.f32 %v3086, 1.0
          %v3098 = vadd.f32 %v3088, 1.0
          %v3099 = vadd.f32 %v3090, 1.0
          %v3100 = vadd.f32 %v3092, 1.0
          %v3101 = vadd.f32 %v3094, 1.0
          %v3102 = vadd.f32 %v3096, 1.0
          %v3103 = vrcp.pop %v3097
          %v3104 = vmul.f32 1.0, %v3103
          %v3105 = vrcp.pop %v3098
          %v3106 = vmul.f32 1.0, %v3105
          %v3107 = vrcp.pop %v3099
          %v3108 = vmul.f32 1.0, %v3107
          %v3109 = vrcp.pop %v3100
          %v3110 = vmul.f32 1.0, %v3109
          %v3111 = vrcp.pop %v3101
          %v3112 = vmul.f32 1.0, %v3111
          %v3113 = vrcp.pop %v3102
          %v3114 = vmul.f32 1.0, %v3113
          %v3115 = vtanh.pop %v3074
          %v3116 = vtanh.pop %v3078
          %v3117 = vmul.f32 %v3106, %v2674
          %v3118 = vmul.f32 %v3112, %v2675
          %v3119 = vmul.f32 %v3104, %v3115
          %v3120 = vmul.f32 %v3110, %v3116
          %v3121 = vadd.f32 %v3117, %v3119
          %v3122 = vadd.f32 %v3118, %v3120
          %v3123 = vtanh.pop %v3121
          %v3124 = vtanh.pop %v3122
          %v3125 = vmul.f32 %v3108, %v3123
          %v3126 = vmul.f32 %v3114, %v3124
          %s3127 = scalar_lea.vmem [#allocation2], 64
          %v3128 = vld [vmem:[%s3127] sm:$0xff]
          %v3129 = vld [vmem:[%s3127 + $0x8] sm:$0xff]
          %v3130 = vpack.c.bf16 %v3129, %v3128
          %v3132 = vsel %vm799, %v3130, 0
          %3134 = vmatprep.subr.bf16.mxu0 %v794
          %3135 = vmatpush1.bf16.msra.mxu0 %v793
          %3136 = vmatprep.subr.bf16.mxu0 0
          %3137 = vmatpush1.bf16.msra.mxu0 0
          %3138 = vmatprep.subr.bf16.mxu0 0
          %3139 = vmatpush1.bf16.msra.mxu0 0
          %3140 = vmatprep.subr.bf16.mxu0 0
          %3141 = vmatpush1.bf16.msra.mxu0 0
          %3142 = vmatprep.subr.bf16.mxu0 0
          %3143 = vmatpush1.bf16.msra.mxu0 0
          %3144 = vmatprep.subr.bf16.mxu0 0
          %3145 = vmatpush1.bf16.msra.mxu0 0
          %3146 = vmatprep.subr.bf16.mxu0 0
          %3147 = vmatpush1.bf16.msra.mxu0 0
          %3148 = vmatprep.subr.bf16.mxu0 0
          %3149 = vmatpush1.bf16.msra.mxu0 0
          %3150 = vmatprep.subr.bf16.mxu0 0
          %3151 = vmatpush1.bf16.msra.mxu0 0
          %3152 = vmatprep.subr.bf16.mxu0 0
          %3153 = vmatpush1.bf16.msra.mxu0 0
          %3154 = vmatprep.subr.bf16.mxu0 0
          %3155 = vmatpush1.bf16.msra.mxu0 0
          %3156 = vmatprep.subr.bf16.mxu0 0
          %3157 = vmatpush1.bf16.msra.mxu0 0
          %3158 = vmatprep.subr.bf16.mxu0 0
          %3159 = vmatpush1.bf16.msra.mxu0 0
          %3160 = vmatprep.subr.bf16.mxu0 0
          %3161 = vmatpush1.bf16.msra.mxu0 0
          %3162 = vmatprep.subr.bf16.mxu0 0
          %3163 = vmatpush1.bf16.msra.mxu0 0
          %3164 = vmatprep.subr.bf16.mxu0 0
          %3165 = vmatpush1.bf16.msra.mxu0 0
          %3166 = vmatprep.mubr.bf16.mxu0 0
          %3167 = vmatmul.mubr.bf16.gmra.mrb[0].mxu0 %v3132
          %v3168 = vpop.f32.mrb[0].mxu0
          %v3169 = vadd.f32 %v725, %v3168
          %v3170 = vpop.f32.mrb[0].mxu0
          %v3171 = vadd.f32 %v729, %v3170
          %v3172 = vpop.f32.mrb[0].mxu0
          %v3173 = vadd.f32 %v725, %v3172
          %v3174 = vpop.f32.mrb[0].mxu0
          %v3175 = vadd.f32 %v729, %v3174
          %3176 = vdwg.mxu0
          %3177 = vmatprep.subr.bf16.mxu0 0
          %3178 = vmatpush1.bf16.msra.mxu0 %v795
          %3179 = vmatprep.subr.bf16.mxu0 0
          %3180 = vmatpush1.bf16.msra.mxu0 0
          %3181 = vmatprep.subr.bf16.mxu0 0
          %3182 = vmatpush1.bf16.msra.mxu0 0
          %3183 = vmatprep.subr.bf16.mxu0 0
          %3184 = vmatpush1.bf16.msra.mxu0 0
          %3185 = vmatprep.subr.bf16.mxu0 0
          %3186 = vmatpush1.bf16.msra.mxu0 0
          %3187 = vmatprep.subr.bf16.mxu0 0
          %3188 = vmatpush1.bf16.msra.mxu0 0
          %3189 = vmatprep.subr.bf16.mxu0 0
          %3190 = vmatpush1.bf16.msra.mxu0 0
          %3191 = vmatprep.subr.bf16.mxu0 0
          %3192 = vmatpush1.bf16.msra.mxu0 0
          %3193 = vmatprep.subr.bf16.mxu0 0
          %3194 = vmatpush1.bf16.msra.mxu0 0
          %3195 = vmatprep.subr.bf16.mxu0 0
          %3196 = vmatpush1.bf16.msra.mxu0 0
          %3197 = vmatprep.subr.bf16.mxu0 0
          %3198 = vmatpush1.bf16.msra.mxu0 0
          %3199 = vmatprep.subr.bf16.mxu0 0
          %3200 = vmatpush1.bf16.msra.mxu0 0
          %3201 = vmatprep.subr.bf16.mxu0 0
          %3202 = vmatpush1.bf16.msra.mxu0 0
          %3203 = vmatprep.subr.bf16.mxu0 0
          %3204 = vmatpush1.bf16.msra.mxu0 0
          %3205 = vmatprep.subr.bf16.mxu0 0
          %3206 = vmatpush1.bf16.msra.mxu0 0
          %3207 = vmatprep.subr.bf16.mxu0 0
          %3208 = vmatpush1.bf16.msra.mxu0 0
          %3209 = vmatprep.mubr.bf16.mxu0 0
          %3210 = vmatmul.mubr.bf16.gmra.mrb[0].mxu0 %v3132
          %v3211 = vpop.f32.mrb[0].mxu0
          %v3212 = vadd.f32 %v733, %v3211
          %v3213 = vpop.f32.mrb[0].mxu0
          %v3214 = vpop.f32.mrb[0].mxu0
          %v3215 = vadd.f32 %v733, %v3214
          %v3216 = vpop.f32.mrb[0].mxu0
          %3217 = vdwg.mxu0
          %3218 = vmatprep.subr.bf16.mxu0 %v1000
          %3219 = vmatpush1.bf16.msra.mxu0 %v999
          %3220 = vmatprep.subr.bf16.mxu0 %v1003
          %3221 = vmatpush1.bf16.msra.mxu0 %v1002
          %3222 = vmatprep.subr.bf16.mxu0 %v1006
          %3223 = vmatpush1.bf16.msra.mxu0 %v1005
          %3224 = vmatprep.subr.bf16.mxu0 %v1009
          %3225 = vmatpush1.bf16.msra.mxu0 %v1008
          %3226 = vmatprep.subr.bf16.mxu0 %v1012
          %3227 = vmatpush1.bf16.msra.mxu0 %v1011
          %3228 = vmatprep.subr.bf16.mxu0 %v1015
          %3229 = vmatpush1.bf16.msra.mxu0 %v1014
          %3230 = vmatprep.subr.bf16.mxu0 %v1018
          %3231 = vmatpush1.bf16.msra.mxu0 %v1017
          %3232 = vmatprep.subr.bf16.mxu0 %v1021
          %3233 = vmatpush1.bf16.msra.mxu0 %v1020
          %3234 = vmatprep.subr.bf16.mxu0 0
          %3235 = vmatpush1.bf16.msra.mxu0 0
          %3236 = vmatprep.subr.bf16.mxu0 0
          %3237 = vmatpush1.bf16.msra.mxu0 0
          %3238 = vmatprep.subr.bf16.mxu0 0
          %3239 = vmatpush1.bf16.msra.mxu0 0
          %3240 = vmatprep.subr.bf16.mxu0 0
          %3241 = vmatpush1.bf16.msra.mxu0 0
          %3242 = vmatprep.subr.bf16.mxu0 0
          %3243 = vmatpush1.bf16.msra.mxu0 0
          %3244 = vmatprep.subr.bf16.mxu0 0
          %3245 = vmatpush1.bf16.msra.mxu0 0
          %3246 = vmatprep.subr.bf16.mxu0 0
          %3247 = vmatpush1.bf16.msra.mxu0 0
          %3248 = vmatprep.subr.bf16.mxu0 0
          %3249 = vmatpush1.bf16.msra.mxu0 0
          %3250 = vmatprep.mubr.bf16.mxu0 0
          %3251 = vmatmul.mubr.bf16.gmra.mrb[0].mxu0 %v2898
          %v3252 = vpop.f32.mrb[0].mxu0
          %v3253 = vadd.f32 %v742, %v3252
          %v3254 = vpop.f32.mrb[0].mxu0
          %v3255 = vadd.f32 %v746, %v3254
          %v3256 = vpop.f32.mrb[0].mxu0
          %v3257 = vadd.f32 %v742, %v3256
          %v3258 = vpop.f32.mrb[0].mxu0
          %v3259 = vadd.f32 %v746, %v3258
          %3260 = vdwg.mxu0
          %3261 = vmatprep.subr.bf16.mxu0 0
          %3262 = vmatpush1.bf16.msra.mxu0 %v1001
          %3263 = vmatprep.subr.bf16.mxu0 0
          %3264 = vmatpush1.bf16.msra.mxu0 %v1004
          %3265 = vmatprep.subr.bf16.mxu0 0
          %3266 = vmatpush1.bf16.msra.mxu0 %v1007
          %3267 = vmatprep.subr.bf16.mxu0 0
          %3268 = vmatpush1.bf16.msra.mxu0 %v1010
          %3269 = vmatprep.subr.bf16.mxu0 0
          %3270 = vmatpush1.bf16.msra.mxu0 %v1013
          %3271 = vmatprep.subr.bf16.mxu0 0
          %3272 = vmatpush1.bf16.msra.mxu0 %v1016
          %3273 = vmatprep.subr.bf16.mxu0 0
          %3274 = vmatpush1.bf16.msra.mxu0 %v1019
          %3275 = vmatprep.subr.bf16.mxu0 0
          %3276 = vmatpush1.bf16.msra.mxu0 %v1022
          %3277 = vmatprep.subr.bf16.mxu0 0
          %3278 = vmatpush1.bf16.msra.mxu0 0
          %3279 = vmatprep.subr.bf16.mxu0 0
          %3280 = vmatpush1.bf16.msra.mxu0 0
          %3281 = vmatprep.subr.bf16.mxu0 0
          %3282 = vmatpush1.bf16.msra.mxu0 0
          %3283 = vmatprep.subr.bf16.mxu0 0
          %3284 = vmatpush1.bf16.msra.mxu0 0
          %3285 = vmatprep.subr.bf16.mxu0 0
          %3286 = vmatpush1.bf16.msra.mxu0 0
          %3287 = vmatprep.subr.bf16.mxu0 0
          %3288 = vmatpush1.bf16.msra.mxu0 0
          %3289 = vmatprep.subr.bf16.mxu0 0
          %3290 = vmatpush1.bf16.msra.mxu0 0
          %3291 = vmatprep.subr.bf16.mxu0 0
          %3292 = vmatpush1.bf16.msra.mxu0 0
          %3293 = vmatprep.mubr.bf16.mxu0 0
          %3294 = vmatmul.mubr.bf16.gmra.mrb[0].mxu0 %v2898
          %v3295 = vpop.f32.mrb[0].mxu0
          %v3296 = vadd.f32 %v750, %v3295
          %v3297 = vpop.f32.mrb[0].mxu0
          %v3298 = vpop.f32.mrb[0].mxu0
          %v3299 = vadd.f32 %v750, %v3298
          %v3300 = vpop.f32.mrb[0].mxu0
          %3301 = vdwg.mxu0
          %v3302 = vadd.f32 %v3169, %v3253
          %v3303 = vadd.f32 %v3171, %v3255
          %v3304 = vadd.f32 %v3173, %v3257
          %v3305 = vadd.f32 %v3175, %v3259
          %v3306 = vxor.u32 %v3302, 2147483648
          %v3307 = vxor.u32 %v3303, 2147483648
          %v3308 = vxor.u32 %v3304, 2147483648
          %v3309 = vxor.u32 %v3305, 2147483648
          %v3310 = vmul.f32 %v3306, 1.442695
          %v3311 = vpow.pop %v3310
          %v3312 = vmul.f32 %v3307, 1.442695
          %v3313 = vpow.pop %v3312
          %v3314 = vmul.f32 %v3308, 1.442695
          %v3315 = vpow.pop %v3314
          %v3316 = vmul.f32 %v3309, 1.442695
          %v3317 = vpow.pop %v3316
          %v3318 = vadd.f32 %v3311, 1.0
          %v3319 = vadd.f32 %v3313, 1.0
          %v3320 = vadd.f32 %v3315, 1.0
          %v3321 = vadd.f32 %v3317, 1.0
          %v3322 = vrcp.pop %v3318
          %v3323 = vmul.f32 1.0, %v3322
          %v3324 = vrcp.pop %v3319
          %v3325 = vmul.f32 1.0, %v3324
          %v3326 = vrcp.pop %v3320
          %v3327 = vmul.f32 1.0, %v3326
          %v3328 = vrcp.pop %v3321
          %v3329 = vmul.f32 1.0, %v3328
          %v3330 = vmul.f32 %v3323, %v3296
          %v3331 = vmul.f32 %v3327, %v3299
          %v3332 = vadd.f32 %v3212, %v3330
          %v3333 = vadd.f32 %v3215, %v3331
          %v3334 = vtanh.pop %v3332
          %v3335 = vtanh.pop %v3333
          %v3336 = vsub.f32 1.0, %v3325
          %v3337 = vsub.f32 1.0, %v3329
          %v3338 = vmul.f32 %v3336, %v3334
          %v3339 = vmul.f32 %v3337, %v3335
          %v3340 = vmul.f32 %v3325, %v2895
          %v3341 = vmul.f32 %v3329, %v2896
          %v3342 = vadd.f32 %v3338, %v3340
          %v3343 = vadd.f32 %v3339, %v3341
          %v3344 = vpack.c.bf16 %v3126, %v3125
          %v3345 = vpack.c.bf16 %v3343, %v3342
          %3346 = vmatprep.subr.bf16.mxu0 %v1335
          %3347 = vmatpush1.bf16.msra.mxu0 %v1334
          %3348 = vmatprep.subr.bf16.mxu0 %v1339
          %3349 = vmatpush1.bf16.msra.mxu0 %v1338
          %3350 = vmatprep.subr.bf16.mxu0 %v1343
          %3351 = vmatpush1.bf16.msra.mxu0 %v1342
          %3352 = vmatprep.subr.bf16.mxu0 %v1347
          %3353 = vmatpush1.bf16.msra.mxu0 %v1346
          %3354 = vmatprep.subr.bf16.mxu0 %v1351
          %3355 = vmatpush1.bf16.msra.mxu0 %v1350
          %3356 = vmatprep.subr.bf16.mxu0 %v1355
          %3357 = vmatpush1.bf16.msra.mxu0 %v1354
          %3358 = vmatprep.subr.bf16.mxu0 %v1359
          %3359 = vmatpush1.bf16.msra.mxu0 %v1358
          %3360 = vmatprep.subr.bf16.mxu0 %v1363
          %3361 = vmatpush1.bf16.msra.mxu0 %v1362
          %3362 = vmatprep.subr.bf16.mxu0 0
          %3363 = vmatpush1.bf16.msra.mxu0 0
          %3364 = vmatprep.subr.bf16.mxu0 0
          %3365 = vmatpush1.bf16.msra.mxu0 0
          %3366 = vmatprep.subr.bf16.mxu0 0
          %3367 = vmatpush1.bf16.msra.mxu0 0
          %3368 = vmatprep.subr.bf16.mxu0 0
          %3369 = vmatpush1.bf16.msra.mxu0 0
          %3370 = vmatprep.subr.bf16.mxu0 0
          %3371 = vmatpush1.bf16.msra.mxu0 0
          %3372 = vmatprep.subr.bf16.mxu0 0
          %3373 = vmatpush1.bf16.msra.mxu0 0
          %3374 = vmatprep.subr.bf16.mxu0 0
          %3375 = vmatpush1.bf16.msra.mxu0 0
          %3376 = vmatprep.subr.bf16.mxu0 0
          %3377 = vmatpush1.bf16.msra.mxu0 0
          %3378 = vmatprep.mubr.bf16.mxu0 0
          %3379 = vmatmul.mubr.bf16.gmra.mrb[0].mxu0 %v3345
          %v3380 = vpop.f32.mrb[0].mxu0
          %v3381 = vadd.f32 0.0, %v3380
          %v3382 = vpop.f32.mrb[0].mxu0
          %v3383 = vadd.f32 0.0, %v3382
          %v3384 = vpop.f32.mrb[0].mxu0
          %v3385 = vadd.f32 0.0, %v3384
          %v3386 = vpop.f32.mrb[0].mxu0
          %v3387 = vadd.f32 0.0, %v3386
          %3388 = vdwg.mxu0
          %3389 = vmatprep.subr.bf16.mxu0 %v1337
          %3390 = vmatpush1.bf16.msra.mxu0 %v1336
          %3391 = vmatprep.subr.bf16.mxu0 %v1341
          %3392 = vmatpush1.bf16.msra.mxu0 %v1340
          %3393 = vmatprep.subr.bf16.mxu0 %v1345
          %3394 = vmatpush1.bf16.msra.mxu0 %v1344
          %3395 = vmatprep.subr.bf16.mxu0 %v1349
          %3396 = vmatpush1.bf16.msra.mxu0 %v1348
          %3397 = vmatprep.subr.bf16.mxu0 %v1353
          %3398 = vmatpush1.bf16.msra.mxu0 %v1352
          %3399 = vmatprep.subr.bf16.mxu0 %v1357
          %3400 = vmatpush1.bf16.msra.mxu0 %v1356
          %3401 = vmatprep.subr.bf16.mxu0 %v1361
          %3402 = vmatpush1.bf16.msra.mxu0 %v1360
          %3403 = vmatprep.subr.bf16.mxu0 %v1365
          %3404 = vmatpush1.bf16.msra.mxu0 %v1364
          %3405 = vmatprep.subr.bf16.mxu0 0
          %3406 = vmatpush1.bf16.msra.mxu0 0
          %3407 = vmatprep.subr.bf16.mxu0 0
          %3408 = vmatpush1.bf16.msra.mxu0 0
          %3409 = vmatprep.subr.bf16.mxu0 0
          %3410 = vmatpush1.bf16.msra.mxu0 0
          %3411 = vmatprep.subr.bf16.mxu0 0
          %3412 = vmatpush1.bf16.msra.mxu0 0
          %3413 = vmatprep.subr.bf16.mxu0 0
          %3414 = vmatpush1.bf16.msra.mxu0 0
          %3415 = vmatprep.subr.bf16.mxu0 0
          %3416 = vmatpush1.bf16.msra.mxu0 0
          %3417 = vmatprep.subr.bf16.mxu0 0
          %3418 = vmatpush1.bf16.msra.mxu0 0
          %3419 = vmatprep.subr.bf16.mxu0 0
          %3420 = vmatpush1.bf16.msra.mxu0 0
          %3421 = vmatprep.mubr.bf16.mxu0 0
          %3422 = vmatmul.mubr.bf16.gmra.mrb[0].mxu0 %v3345
          %v3423 = vpop.f32.mrb[0].mxu0
          %v3424 = vadd.f32 0.0, %v3423
          %v3425 = vpop.f32.mrb[0].mxu0
          %v3426 = vadd.f32 0.0, %v3425
          %v3427 = vpop.f32.mrb[0].mxu0
          %v3428 = vadd.f32 0.0, %v3427
          %v3429 = vpop.f32.mrb[0].mxu0
          %v3430 = vadd.f32 0.0, %v3429
          %3431 = vdwg.mxu0
          %3432 = vmatprep.subr.bf16.mxu0 %v1581
          %3433 = vmatpush1.bf16.msra.mxu0 %v1580
          %3434 = vmatprep.subr.bf16.mxu0 %v1585
          %3435 = vmatpush1.bf16.msra.mxu0 %v1584
          %3436 = vmatprep.subr.bf16.mxu0 %v1589
          %3437 = vmatpush1.bf16.msra.mxu0 %v1588
          %3438 = vmatprep.subr.bf16.mxu0 %v1593
          %3439 = vmatpush1.bf16.msra.mxu0 %v1592
          %3440 = vmatprep.subr.bf16.mxu0 %v1597
          %3441 = vmatpush1.bf16.msra.mxu0 %v1596
          %3442 = vmatprep.subr.bf16.mxu0 %v1601
          %3443 = vmatpush1.bf16.msra.mxu0 %v1600
          %3444 = vmatprep.subr.bf16.mxu0 %v1605
          %3445 = vmatpush1.bf16.msra.mxu0 %v1604
          %3446 = vmatprep.subr.bf16.mxu0 %v1609
          %3447 = vmatpush1.bf16.msra.mxu0 %v1608
          %3448 = vmatprep.subr.bf16.mxu0 0
          %3449 = vmatpush1.bf16.msra.mxu0 0
          %3450 = vmatprep.subr.bf16.mxu0 0
          %3451 = vmatpush1.bf16.msra.mxu0 0
          %3452 = vmatprep.subr.bf16.mxu0 0
          %3453 = vmatpush1.bf16.msra.mxu0 0
          %3454 = vmatprep.subr.bf16.mxu0 0
          %3455 = vmatpush1.bf16.msra.mxu0 0
          %3456 = vmatprep.subr.bf16.mxu0 0
          %3457 = vmatpush1.bf16.msra.mxu0 0
          %3458 = vmatprep.subr.bf16.mxu0 0
          %3459 = vmatpush1.bf16.msra.mxu0 0
          %3460 = vmatprep.subr.bf16.mxu0 0
          %3461 = vmatpush1.bf16.msra.mxu0 0
          %3462 = vmatprep.subr.bf16.mxu0 0
          %3463 = vmatpush1.bf16.msra.mxu0 0
          %3464 = vmatprep.mubr.bf16.mxu0 0
          %3465 = vmatmul.mubr.bf16.gmra.mrb[0].mxu0 %v3344
          %v3466 = vpop.f32.mrb[0].mxu0
          %v3467 = vadd.f32 %v3381, %v3466
          %v3468 = vpop.f32.mrb[0].mxu0
          %v3469 = vadd.f32 %v3383, %v3468
          %v3470 = vpop.f32.mrb[0].mxu0
          %v3471 = vadd.f32 %v3385, %v3470
          %v3472 = vpop.f32.mrb[0].mxu0
          %v3473 = vadd.f32 %v3387, %v3472
          %3474 = vdwg.mxu0
          %3475 = vmatprep.subr.bf16.mxu0 %v1583
          %3476 = vmatpush1.bf16.msra.mxu0 %v1582
          %3477 = vmatprep.subr.bf16.mxu0 %v1587
          %3478 = vmatpush1.bf16.msra.mxu0 %v1586
          %3479 = vmatprep.subr.bf16.mxu0 %v1591
          %3480 = vmatpush1.bf16.msra.mxu0 %v1590
          %3481 = vmatprep.subr.bf16.mxu0 %v1595
          %3482 = vmatpush1.bf16.msra.mxu0 %v1594
          %3483 = vmatprep.subr.bf16.mxu0 %v1599
          %3484 = vmatpush1.bf16.msra.mxu0 %v1598
          %3485 = vmatprep.subr.bf16.mxu0 %v1603
          %3486 = vmatpush1.bf16.msra.mxu0 %v1602
          %3487 = vmatprep.subr.bf16.mxu0 %v1607
          %3488 = vmatpush1.bf16.msra.mxu0 %v1606
          %3489 = vmatprep.subr.bf16.mxu0 %v1611
          %3490 = vmatpush1.bf16.msra.mxu0 %v1610
          %3491 = vmatprep.subr.bf16.mxu0 0
          %3492 = vmatpush1.bf16.msra.mxu0 0
          %3493 = vmatprep.subr.bf16.mxu0 0
          %3494 = vmatpush1.bf16.msra.mxu0 0
          %3495 = vmatprep.subr.bf16.mxu0 0
          %3496 = vmatpush1.bf16.msra.mxu0 0
          %3497 = vmatprep.subr.bf16.mxu0 0
          %3498 = vmatpush1.bf16.msra.mxu0 0
          %3499 = vmatprep.subr.bf16.mxu0 0
          %3500 = vmatpush1.bf16.msra.mxu0 0
          %3501 = vmatprep.subr.bf16.mxu0 0
          %3502 = vmatpush1.bf16.msra.mxu0 0
          %3503 = vmatprep.subr.bf16.mxu0 0
          %3504 = vmatpush1.bf16.msra.mxu0 0
          %3505 = vmatprep.subr.bf16.mxu0 0
          %3506 = vmatpush1.bf16.msra.mxu0 0
          %3507 = vmatprep.mubr.bf16.mxu0 0
          %3508 = vmatmul.mubr.bf16.gmra.mrb[0].mxu0 %v3344
          %v3509 = vpop.f32.mrb[0].mxu0
          %v3510 = vadd.f32 %v3424, %v3509
          %v3511 = vpop.f32.mrb[0].mxu0
          %v3512 = vadd.f32 %v3426, %v3511
          %v3513 = vpop.f32.mrb[0].mxu0
          %v3514 = vadd.f32 %v3428, %v3513
          %v3515 = vpop.f32.mrb[0].mxu0
          %v3516 = vadd.f32 %v3430, %v3515
          %3517 = vdwg.mxu0
          %v3518 = vadd.f32 %v3467, %v759
          %v3519 = vadd.f32 %v3469, %v763
          %v3520 = vadd.f32 %v3510, %v767
          %v3521 = vadd.f32 %v3512, %v771
          %v3522 = vadd.f32 %v3471, %v759
          %v3523 = vadd.f32 %v3473, %v763
          %v3524 = vadd.f32 %v3514, %v767
          %v3525 = vadd.f32 %v3516, %v771
          %v3526 = vxor.u32 %v3518, 2147483648
          %v3527 = vxor.u32 %v3519, 2147483648
          %v3528 = vxor.u32 %v3520, 2147483648
          %v3529 = vxor.u32 %v3522, 2147483648
          %v3530 = vxor.u32 %v3523, 2147483648
          %v3531 = vxor.u32 %v3524, 2147483648
          %v3532 = vmul.f32 %v3526, 1.442695
          %v3533 = vpow.pop %v3532
          %v3534 = vmul.f32 %v3527, 1.442695
          %v3535 = vpow.pop %v3534
          %v3536 = vmul.f32 %v3528, 1.442695
          %v3537 = vpow.pop %v3536
          %v3538 = vmul.f32 %v3529, 1.442695
          %v3539 = vpow.pop %v3538
          %v3540 = vmul.f32 %v3530, 1.442695
          %v3541 = vpow.pop %v3540
          %v3542 = vmul.f32 %v3531, 1.442695
          %v3543 = vpow.pop %v3542
          %v3544 = vadd.f32 %v3533, 1.0
          %v3545 = vadd.f32 %v3535, 1.0
          %v3546 = vadd.f32 %v3537, 1.0
          %v3547 = vadd.f32 %v3539, 1.0
          %v3548 = vadd.f32 %v3541, 1.0
          %v3549 = vadd.f32 %v3543, 1.0
          %v3550 = vrcp.pop %v3544
          %v3551 = vmul.f32 1.0, %v3550
          %v3552 = vrcp.pop %v3545
          %v3553 = vmul.f32 1.0, %v3552
          %v3554 = vrcp.pop %v3546
          %v3555 = vmul.f32 1.0, %v3554
          %v3556 = vrcp.pop %v3547
          %v3557 = vmul.f32 1.0, %v3556
          %v3558 = vrcp.pop %v3548
          %v3559 = vmul.f32 1.0, %v3558
          %v3560 = vrcp.pop %v3549
          %v3561 = vmul.f32 1.0, %v3560
          %v3562 = vtanh.pop %v3521
          %v3563 = vtanh.pop %v3525
          %v3564 = vmul.f32 %v3553, %v3121
          %v3565 = vmul.f32 %v3559, %v3122
          %v3566 = vmul.f32 %v3551, %v3562
          %v3567 = vmul.f32 %v3557, %v3563
          %v3568 = vadd.f32 %v3564, %v3566
          %v3569 = vadd.f32 %v3565, %v3567
          %v3570 = vtanh.pop %v3568
          %v3571 = vtanh.pop %v3569
          %v3572 = vmul.f32 %v3555, %v3570
          %v3573 = vmul.f32 %v3561, %v3571
          %s3574 = scalar_lea.vmem [#allocation2], 80
          %v3575 = vld [vmem:[%s3574] sm:$0xff]
          %v3576 = vld [vmem:[%s3574 + $0x8] sm:$0xff]
          %v3577 = vpack.c.bf16 %v3576, %v3575
          %v3579 = vsel %vm799, %v3577, 0
          %3581 = vmatprep.subr.bf16.mxu0 %v794
          %3582 = vmatpush1.bf16.msra.mxu0 %v793
          %3583 = vmatprep.subr.bf16.mxu0 0
          %3584 = vmatpush1.bf16.msra.mxu0 0
          %3585 = vmatprep.subr.bf16.mxu0 0
          %3586 = vmatpush1.bf16.msra.mxu0 0
          %3587 = vmatprep.subr.bf16.mxu0 0
          %3588 = vmatpush1.bf16.msra.mxu0 0
          %3589 = vmatprep.subr.bf16.mxu0 0
          %3590 = vmatpush1.bf16.msra.mxu0 0
          %3591 = vmatprep.subr.bf16.mxu0 0
          %3592 = vmatpush1.bf16.msra.mxu0 0
          %3593 = vmatprep.subr.bf16.mxu0 0
          %3594 = vmatpush1.bf16.msra.mxu0 0
          %3595 = vmatprep.subr.bf16.mxu0 0
          %3596 = vmatpush1.bf16.msra.mxu0 0
          %3597 = vmatprep.subr.bf16.mxu0 0
          %3598 = vmatpush1.bf16.msra.mxu0 0
          %3599 = vmatprep.subr.bf16.mxu0 0
          %3600 = vmatpush1.bf16.msra.mxu0 0
          %3601 = vmatprep.subr.bf16.mxu0 0
          %3602 = vmatpush1.bf16.msra.mxu0 0
          %3603 = vmatprep.subr.bf16.mxu0 0
          %3604 = vmatpush1.bf16.msra.mxu0 0
          %3605 = vmatprep.subr.bf16.mxu0 0
          %3606 = vmatpush1.bf16.msra.mxu0 0
          %3607 = vmatprep.subr.bf16.mxu0 0
          %3608 = vmatpush1.bf16.msra.mxu0 0
          %3609 = vmatprep.subr.bf16.mxu0 0
          %3610 = vmatpush1.bf16.msra.mxu0 0
          %3611 = vmatprep.subr.bf16.mxu0 0
          %3612 = vmatpush1.bf16.msra.mxu0 0
          %3613 = vmatprep.mubr.bf16.mxu0 0
          %3614 = vmatmul.mubr.bf16.gmra.mrb[0].mxu0 %v3579
          %v3615 = vpop.f32.mrb[0].mxu0
          %v3616 = vadd.f32 %v725, %v3615
          %v3617 = vpop.f32.mrb[0].mxu0
          %v3618 = vadd.f32 %v729, %v3617
          %v3619 = vpop.f32.mrb[0].mxu0
          %v3620 = vadd.f32 %v725, %v3619
          %v3621 = vpop.f32.mrb[0].mxu0
          %v3622 = vadd.f32 %v729, %v3621
          %3623 = vdwg.mxu0
          %3624 = vmatprep.subr.bf16.mxu0 0
          %3625 = vmatpush1.bf16.msra.mxu0 %v795
          %3626 = vmatprep.subr.bf16.mxu0 0
          %3627 = vmatpush1.bf16.msra.mxu0 0
          %3628 = vmatprep.subr.bf16.mxu0 0
          %3629 = vmatpush1.bf16.msra.mxu0 0
          %3630 = vmatprep.subr.bf16.mxu0 0
          %3631 = vmatpush1.bf16.msra.mxu0 0
          %3632 = vmatprep.subr.bf16.mxu0 0
          %3633 = vmatpush1.bf16.msra.mxu0 0
          %3634 = vmatprep.subr.bf16.mxu0 0
          %3635 = vmatpush1.bf16.msra.mxu0 0
          %3636 = vmatprep.subr.bf16.mxu0 0
          %3637 = vmatpush1.bf16.msra.mxu0 0
          %3638 = vmatprep.subr.bf16.mxu0 0
          %3639 = vmatpush1.bf16.msra.mxu0 0
          %3640 = vmatprep.subr.bf16.mxu0 0
          %3641 = vmatpush1.bf16.msra.mxu0 0
          %3642 = vmatprep.subr.bf16.mxu0 0
          %3643 = vmatpush1.bf16.msra.mxu0 0
          %3644 = vmatprep.subr.bf16.mxu0 0
          %3645 = vmatpush1.bf16.msra.mxu0 0
          %3646 = vmatprep.subr.bf16.mxu0 0
          %3647 = vmatpush1.bf16.msra.mxu0 0
          %3648 = vmatprep.subr.bf16.mxu0 0
          %3649 = vmatpush1.bf16.msra.mxu0 0
          %3650 = vmatprep.subr.bf16.mxu0 0
          %3651 = vmatpush1.bf16.msra.mxu0 0
          %3652 = vmatprep.subr.bf16.mxu0 0
          %3653 = vmatpush1.bf16.msra.mxu0 0
          %3654 = vmatprep.subr.bf16.mxu0 0
          %3655 = vmatpush1.bf16.msra.mxu0 0
          %3656 = vmatprep.mubr.bf16.mxu0 0
          %3657 = vmatmul.mubr.bf16.gmra.mrb[0].mxu0 %v3579
          %v3658 = vpop.f32.mrb[0].mxu0
          %v3659 = vadd.f32 %v733, %v3658
          %v3660 = vpop.f32.mrb[0].mxu0
          %v3661 = vpop.f32.mrb[0].mxu0
          %v3662 = vadd.f32 %v733, %v3661
          %v3663 = vpop.f32.mrb[0].mxu0
          %3664 = vdwg.mxu0
          %3665 = vmatprep.subr.bf16.mxu0 %v1000
          %3666 = vmatpush1.bf16.msra.mxu0 %v999
          %3667 = vmatprep.subr.bf16.mxu0 %v1003
          %3668 = vmatpush1.bf16.msra.mxu0 %v1002
          %3669 = vmatprep.subr.bf16.mxu0 %v1006
          %3670 = vmatpush1.bf16.msra.mxu0 %v1005
          %3671 = vmatprep.subr.bf16.mxu0 %v1009
          %3672 = vmatpush1.bf16.msra.mxu0 %v1008
          %3673 = vmatprep.subr.bf16.mxu0 %v1012
          %3674 = vmatpush1.bf16.msra.mxu0 %v1011
          %3675 = vmatprep.subr.bf16.mxu0 %v1015
          %3676 = vmatpush1.bf16.msra.mxu0 %v1014
          %3677 = vmatprep.subr.bf16.mxu0 %v1018
          %3678 = vmatpush1.bf16.msra.mxu0 %v1017
          %3679 = vmatprep.subr.bf16.mxu0 %v1021
          %3680 = vmatpush1.bf16.msra.mxu0 %v1020
          %3681 = vmatprep.subr.bf16.mxu0 0
          %3682 = vmatpush1.bf16.msra.mxu0 0
          %3683 = vmatprep.subr.bf16.mxu0 0
          %3684 = vmatpush1.bf16.msra.mxu0 0
          %3685 = vmatprep.subr.bf16.mxu0 0
          %3686 = vmatpush1.bf16.msra.mxu0 0
          %3687 = vmatprep.subr.bf16.mxu0 0
          %3688 = vmatpush1.bf16.msra.mxu0 0
          %3689 = vmatprep.subr.bf16.mxu0 0
          %3690 = vmatpush1.bf16.msra.mxu0 0
          %3691 = vmatprep.subr.bf16.mxu0 0
          %3692 = vmatpush1.bf16.msra.mxu0 0
          %3693 = vmatprep.subr.bf16.mxu0 0
          %3694 = vmatpush1.bf16.msra.mxu0 0
          %3695 = vmatprep.subr.bf16.mxu0 0
          %3696 = vmatpush1.bf16.msra.mxu0 0
          %3697 = vmatprep.mubr.bf16.mxu0 0
          %3698 = vmatmul.mubr.bf16.gmra.mrb[0].mxu0 %v3345
          %v3699 = vpop.f32.mrb[0].mxu0
          %v3700 = vadd.f32 %v742, %v3699
          %v3701 = vpop.f32.mrb[0].mxu0
          %v3702 = vadd.f32 %v746, %v3701
          %v3703 = vpop.f32.mrb[0].mxu0
          %v3704 = vadd.f32 %v742, %v3703
          %v3705 = vpop.f32.mrb[0].mxu0
          %v3706 = vadd.f32 %v746, %v3705
          %3707 = vdwg.mxu0
          %3708 = vmatprep.subr.bf16.mxu0 0
          %3709 = vmatpush1.bf16.msra.mxu0 %v1001
          %3710 = vmatprep.subr.bf16.mxu0 0
          %3711 = vmatpush1.bf16.msra.mxu0 %v1004
          %3712 = vmatprep.subr.bf16.mxu0 0
          %3713 = vmatpush1.bf16.msra.mxu0 %v1007
          %3714 = vmatprep.subr.bf16.mxu0 0
          %3715 = vmatpush1.bf16.msra.mxu0 %v1010
          %3716 = vmatprep.subr.bf16.mxu0 0
          %3717 = vmatpush1.bf16.msra.mxu0 %v1013
          %3718 = vmatprep.subr.bf16.mxu0 0
          %3719 = vmatpush1.bf16.msra.mxu0 %v1016
          %3720 = vmatprep.subr.bf16.mxu0 0
          %3721 = vmatpush1.bf16.msra.mxu0 %v1019
          %3722 = vmatprep.subr.bf16.mxu0 0
          %3723 = vmatpush1.bf16.msra.mxu0 %v1022
          %3724 = vmatprep.subr.bf16.mxu0 0
          %3725 = vmatpush1.bf16.msra.mxu0 0
          %3726 = vmatprep.subr.bf16.mxu0 0
          %3727 = vmatpush1.bf16.msra.mxu0 0
          %3728 = vmatprep.subr.bf16.mxu0 0
          %3729 = vmatpush1.bf16.msra.mxu0 0
          %3730 = vmatprep.subr.bf16.mxu0 0
          %3731 = vmatpush1.bf16.msra.mxu0 0
          %3732 = vmatprep.subr.bf16.mxu0 0
          %3733 = vmatpush1.bf16.msra.mxu0 0
          %3734 = vmatprep.subr.bf16.mxu0 0
          %3735 = vmatpush1.bf16.msra.mxu0 0
          %3736 = vmatprep.subr.bf16.mxu0 0
          %3737 = vmatpush1.bf16.msra.mxu0 0
          %3738 = vmatprep.subr.bf16.mxu0 0
          %3739 = vmatpush1.bf16.msra.mxu0 0
          %3740 = vmatprep.mubr.bf16.mxu0 0
          %3741 = vmatmul.mubr.bf16.gmra.mrb[0].mxu0 %v3345
          %v3742 = vpop.f32.mrb[0].mxu0
          %v3743 = vadd.f32 %v750, %v3742
          %v3744 = vpop.f32.mrb[0].mxu0
          %v3745 = vpop.f32.mrb[0].mxu0
          %v3746 = vadd.f32 %v750, %v3745
          %v3747 = vpop.f32.mrb[0].mxu0
          %3748 = vdwg.mxu0
          %v3749 = vadd.f32 %v3616, %v3700
          %v3750 = vadd.f32 %v3618, %v3702
          %v3751 = vadd.f32 %v3620, %v3704
          %v3752 = vadd.f32 %v3622, %v3706
          %v3753 = vxor.u32 %v3749, 2147483648
          %v3754 = vxor.u32 %v3750, 2147483648
          %v3755 = vxor.u32 %v3751, 2147483648
          %v3756 = vxor.u32 %v3752, 2147483648
          %v3757 = vmul.f32 %v3753, 1.442695
          %v3758 = vpow.pop %v3757
          %v3759 = vmul.f32 %v3754, 1.442695
          %v3760 = vpow.pop %v3759
          %v3761 = vmul.f32 %v3755, 1.442695
          %v3762 = vpow.pop %v3761
          %v3763 = vmul.f32 %v3756, 1.442695
          %v3764 = vpow.pop %v3763
          %v3765 = vadd.f32 %v3758, 1.0
          %v3766 = vadd.f32 %v3760, 1.0
          %v3767 = vadd.f32 %v3762, 1.0
          %v3768 = vadd.f32 %v3764, 1.0
          %v3769 = vrcp.pop %v3765
          %v3770 = vmul.f32 1.0, %v3769
          %v3771 = vrcp.pop %v3766
          %v3772 = vmul.f32 1.0, %v3771
          %v3773 = vrcp.pop %v3767
          %v3774 = vmul.f32 1.0, %v3773
          %v3775 = vrcp.pop %v3768
          %v3776 = vmul.f32 1.0, %v3775
          %v3777 = vmul.f32 %v3770, %v3743
          %v3778 = vmul.f32 %v3774, %v3746
          %v3779 = vadd.f32 %v3659, %v3777
          %v3780 = vadd.f32 %v3662, %v3778
          %v3781 = vtanh.pop %v3779
          %v3782 = vtanh.pop %v3780
          %v3783 = vsub.f32 1.0, %v3772
          %v3784 = vsub.f32 1.0, %v3776
          %v3785 = vmul.f32 %v3783, %v3781
          %v3786 = vmul.f32 %v3784, %v3782
          %v3787 = vmul.f32 %v3772, %v3342
          %v3788 = vmul.f32 %v3776, %v3343
          %v3789 = vadd.f32 %v3785, %v3787
          %v3790 = vadd.f32 %v3786, %v3788
          %v3791 = vpack.c.bf16 %v3573, %v3572
          %v3792 = vpack.c.bf16 %v3790, %v3789
          %3793 = vmatprep.subr.bf16.mxu0 %v1335
          %3794 = vmatpush1.bf16.msra.mxu0 %v1334
          %3795 = vmatprep.subr.bf16.mxu0 %v1339
          %3796 = vmatpush1.bf16.msra.mxu0 %v1338
          %3797 = vmatprep.subr.bf16.mxu0 %v1343
          %3798 = vmatpush1.bf16.msra.mxu0 %v1342
          %3799 = vmatprep.subr.bf16.mxu0 %v1347
          %3800 = vmatpush1.bf16.msra.mxu0 %v1346
          %3801 = vmatprep.subr.bf16.mxu0 %v1351
          %3802 = vmatpush1.bf16.msra.mxu0 %v1350
          %3803 = vmatprep.subr.bf16.mxu0 %v1355
          %3804 = vmatpush1.bf16.msra.mxu0 %v1354
          %3805 = vmatprep.subr.bf16.mxu0 %v1359
          %3806 = vmatpush1.bf16.msra.mxu0 %v1358
          %3807 = vmatprep.subr.bf16.mxu0 %v1363
          %3808 = vmatpush1.bf16.msra.mxu0 %v1362
          %3809 = vmatprep.subr.bf16.mxu0 0
          %3810 = vmatpush1.bf16.msra.mxu0 0
          %3811 = vmatprep.subr.bf16.mxu0 0
          %3812 = vmatpush1.bf16.msra.mxu0 0
          %3813 = vmatprep.subr.bf16.mxu0 0
          %3814 = vmatpush1.bf16.msra.mxu0 0
          %3815 = vmatprep.subr.bf16.mxu0 0
          %3816 = vmatpush1.bf16.msra.mxu0 0
          %3817 = vmatprep.subr.bf16.mxu0 0
          %3818 = vmatpush1.bf16.msra.mxu0 0
          %3819 = vmatprep.subr.bf16.mxu0 0
          %3820 = vmatpush1.bf16.msra.mxu0 0
          %3821 = vmatprep.subr.bf16.mxu0 0
          %3822 = vmatpush1.bf16.msra.mxu0 0
          %3823 = vmatprep.subr.bf16.mxu0 0
          %3824 = vmatpush1.bf16.msra.mxu0 0
          %3825 = vmatprep.mubr.bf16.mxu0 0
          %3826 = vmatmul.mubr.bf16.gmra.mrb[0].mxu0 %v3792
          %v3827 = vpop.f32.mrb[0].mxu0
          %v3828 = vadd.f32 0.0, %v3827
          %v3829 = vpop.f32.mrb[0].mxu0
          %v3830 = vadd.f32 0.0, %v3829
          %v3831 = vpop.f32.mrb[0].mxu0
          %v3832 = vadd.f32 0.0, %v3831
          %v3833 = vpop.f32.mrb[0].mxu0
          %v3834 = vadd.f32 0.0, %v3833
          %3835 = vdwg.mxu0
          %3836 = vmatprep.subr.bf16.mxu0 %v1337
          %3837 = vmatpush1.bf16.msra.mxu0 %v1336
          %3838 = vmatprep.subr.bf16.mxu0 %v1341
          %3839 = vmatpush1.bf16.msra.mxu0 %v1340
          %3840 = vmatprep.subr.bf16.mxu0 %v1345
          %3841 = vmatpush1.bf16.msra.mxu0 %v1344
          %3842 = vmatprep.subr.bf16.mxu0 %v1349
          %3843 = vmatpush1.bf16.msra.mxu0 %v1348
          %3844 = vmatprep.subr.bf16.mxu0 %v1353
          %3845 = vmatpush1.bf16.msra.mxu0 %v1352
          %3846 = vmatprep.subr.bf16.mxu0 %v1357
          %3847 = vmatpush1.bf16.msra.mxu0 %v1356
          %3848 = vmatprep.subr.bf16.mxu0 %v1361
          %3849 = vmatpush1.bf16.msra.mxu0 %v1360
          %3850 = vmatprep.subr.bf16.mxu0 %v1365
          %3851 = vmatpush1.bf16.msra.mxu0 %v1364
          %3852 = vmatprep.subr.bf16.mxu0 0
          %3853 = vmatpush1.bf16.msra.mxu0 0
          %3854 = vmatprep.subr.bf16.mxu0 0
          %3855 = vmatpush1.bf16.msra.mxu0 0
          %3856 = vmatprep.subr.bf16.mxu0 0
          %3857 = vmatpush1.bf16.msra.mxu0 0
          %3858 = vmatprep.subr.bf16.mxu0 0
          %3859 = vmatpush1.bf16.msra.mxu0 0
          %3860 = vmatprep.subr.bf16.mxu0 0
          %3861 = vmatpush1.bf16.msra.mxu0 0
          %3862 = vmatprep.subr.bf16.mxu0 0
          %3863 = vmatpush1.bf16.msra.mxu0 0
          %3864 = vmatprep.subr.bf16.mxu0 0
          %3865 = vmatpush1.bf16.msra.mxu0 0
          %3866 = vmatprep.subr.bf16.mxu0 0
          %3867 = vmatpush1.bf16.msra.mxu0 0
          %3868 = vmatprep.mubr.bf16.mxu0 0
          %3869 = vmatmul.mubr.bf16.gmra.mrb[0].mxu0 %v3792
          %v3870 = vpop.f32.mrb[0].mxu0
          %v3871 = vadd.f32 0.0, %v3870
          %v3872 = vpop.f32.mrb[0].mxu0
          %v3873 = vadd.f32 0.0, %v3872
          %v3874 = vpop.f32.mrb[0].mxu0
          %v3875 = vadd.f32 0.0, %v3874
          %v3876 = vpop.f32.mrb[0].mxu0
          %v3877 = vadd.f32 0.0, %v3876
          %3878 = vdwg.mxu0
          %3879 = vmatprep.subr.bf16.mxu0 %v1581
          %3880 = vmatpush1.bf16.msra.mxu0 %v1580
          %3881 = vmatprep.subr.bf16.mxu0 %v1585
          %3882 = vmatpush1.bf16.msra.mxu0 %v1584
          %3883 = vmatprep.subr.bf16.mxu0 %v1589
          %3884 = vmatpush1.bf16.msra.mxu0 %v1588
          %3885 = vmatprep.subr.bf16.mxu0 %v1593
          %3886 = vmatpush1.bf16.msra.mxu0 %v1592
          %3887 = vmatprep.subr.bf16.mxu0 %v1597
          %3888 = vmatpush1.bf16.msra.mxu0 %v1596
          %3889 = vmatprep.subr.bf16.mxu0 %v1601
          %3890 = vmatpush1.bf16.msra.mxu0 %v1600
          %3891 = vmatprep.subr.bf16.mxu0 %v1605
          %3892 = vmatpush1.bf16.msra.mxu0 %v1604
          %3893 = vmatprep.subr.bf16.mxu0 %v1609
          %3894 = vmatpush1.bf16.msra.mxu0 %v1608
          %3895 = vmatprep.subr.bf16.mxu0 0
          %3896 = vmatpush1.bf16.msra.mxu0 0
          %3897 = vmatprep.subr.bf16.mxu0 0
          %3898 = vmatpush1.bf16.msra.mxu0 0
          %3899 = vmatprep.subr.bf16.mxu0 0
          %3900 = vmatpush1.bf16.msra.mxu0 0
          %3901 = vmatprep.subr.bf16.mxu0 0
          %3902 = vmatpush1.bf16.msra.mxu0 0
          %3903 = vmatprep.subr.bf16.mxu0 0
          %3904 = vmatpush1.bf16.msra.mxu0 0
          %3905 = vmatprep.subr.bf16.mxu0 0
          %3906 = vmatpush1.bf16.msra.mxu0 0
          %3907 = vmatprep.subr.bf16.mxu0 0
          %3908 = vmatpush1.bf16.msra.mxu0 0
          %3909 = vmatprep.subr.bf16.mxu0 0
          %3910 = vmatpush1.bf16.msra.mxu0 0
          %3911 = vmatprep.mubr.bf16.mxu0 0
          %3912 = vmatmul.mubr.bf16.gmra.mrb[0].mxu0 %v3791
          %v3913 = vpop.f32.mrb[0].mxu0
          %v3914 = vadd.f32 %v3828, %v3913
          %v3915 = vpop.f32.mrb[0].mxu0
          %v3916 = vadd.f32 %v3830, %v3915
          %v3917 = vpop.f32.mrb[0].mxu0
          %v3918 = vadd.f32 %v3832, %v3917
          %v3919 = vpop.f32.mrb[0].mxu0
          %v3920 = vadd.f32 %v3834, %v3919
          %3921 = vdwg.mxu0
          %3922 = vmatprep.subr.bf16.mxu0 %v1583
          %3923 = vmatpush1.bf16.msra.mxu0 %v1582
          %3924 = vmatprep.subr.bf16.mxu0 %v1587
          %3925 = vmatpush1.bf16.msra.mxu0 %v1586
          %3926 = vmatprep.subr.bf16.mxu0 %v1591
          %3927 = vmatpush1.bf16.msra.mxu0 %v1590
          %3928 = vmatprep.subr.bf16.mxu0 %v1595
          %3929 = vmatpush1.bf16.msra.mxu0 %v1594
          %3930 = vmatprep.subr.bf16.mxu0 %v1599
          %3931 = vmatpush1.bf16.msra.mxu0 %v1598
          %3932 = vmatprep.subr.bf16.mxu0 %v1603
          %3933 = vmatpush1.bf16.msra.mxu0 %v1602
          %3934 = vmatprep.subr.bf16.mxu0 %v1607
          %3935 = vmatpush1.bf16.msra.mxu0 %v1606
          %3936 = vmatprep.subr.bf16.mxu0 %v1611
          %3937 = vmatpush1.bf16.msra.mxu0 %v1610
          %3938 = vmatprep.subr.bf16.mxu0 0
          %3939 = vmatpush1.bf16.msra.mxu0 0
          %3940 = vmatprep.subr.bf16.mxu0 0
          %3941 = vmatpush1.bf16.msra.mxu0 0
          %3942 = vmatprep.subr.bf16.mxu0 0
          %3943 = vmatpush1.bf16.msra.mxu0 0
          %3944 = vmatprep.subr.bf16.mxu0 0
          %3945 = vmatpush1.bf16.msra.mxu0 0
          %3946 = vmatprep.subr.bf16.mxu0 0
          %3947 = vmatpush1.bf16.msra.mxu0 0
          %3948 = vmatprep.subr.bf16.mxu0 0
          %3949 = vmatpush1.bf16.msra.mxu0 0
          %3950 = vmatprep.subr.bf16.mxu0 0
          %3951 = vmatpush1.bf16.msra.mxu0 0
          %3952 = vmatprep.subr.bf16.mxu0 0
          %3953 = vmatpush1.bf16.msra.mxu0 0
          %3954 = vmatprep.mubr.bf16.mxu0 0
          %3955 = vmatmul.mubr.bf16.gmra.mrb[0].mxu0 %v3791
          %v3956 = vpop.f32.mrb[0].mxu0
          %v3957 = vadd.f32 %v3871, %v3956
          %v3958 = vpop.f32.mrb[0].mxu0
          %v3959 = vadd.f32 %v3873, %v3958
          %v3960 = vpop.f32.mrb[0].mxu0
          %v3961 = vadd.f32 %v3875, %v3960
          %v3962 = vpop.f32.mrb[0].mxu0
          %v3963 = vadd.f32 %v3877, %v3962
          %3964 = vdwg.mxu0
          %v3965 = vadd.f32 %v3914, %v759
          %v3966 = vadd.f32 %v3916, %v763
          %v3967 = vadd.f32 %v3957, %v767
          %v3968 = vadd.f32 %v3959, %v771
          %v3969 = vadd.f32 %v3918, %v759
          %v3970 = vadd.f32 %v3920, %v763
          %v3971 = vadd.f32 %v3961, %v767
          %v3972 = vadd.f32 %v3963, %v771
          %v3973 = vxor.u32 %v3965, 2147483648
          %v3974 = vxor.u32 %v3966, 2147483648
          %v3975 = vxor.u32 %v3967, 2147483648
          %v3976 = vxor.u32 %v3969, 2147483648
          %v3977 = vxor.u32 %v3970, 2147483648
          %v3978 = vxor.u32 %v3971, 2147483648
          %v3979 = vmul.f32 %v3973, 1.442695
          %v3980 = vpow.pop %v3979
          %v3981 = vmul.f32 %v3974, 1.442695
          %v3982 = vpow.pop %v3981
          %v3983 = vmul.f32 %v3975, 1.442695
          %v3984 = vpow.pop %v3983
          %v3985 = vmul.f32 %v3976, 1.442695
          %v3986 = vpow.pop %v3985
          %v3987 = vmul.f32 %v3977, 1.442695
          %v3988 = vpow.pop %v3987
          %v3989 = vmul.f32 %v3978, 1.442695
          %v3990 = vpow.pop %v3989
          %v3991 = vadd.f32 %v3980, 1.0
          %v3992 = vadd.f32 %v3982, 1.0
          %v3993 = vadd.f32 %v3984, 1.0
          %v3994 = vadd.f32 %v3986, 1.0
          %v3995 = vadd.f32 %v3988, 1.0
          %v3996 = vadd.f32 %v3990, 1.0
          %v3997 = vrcp.pop %v3991
          %v3998 = vmul.f32 1.0, %v3997
          %v3999 = vrcp.pop %v3992
          %v4000 = vmul.f32 1.0, %v3999
          %v4001 = vrcp.pop %v3993
          %v4002 = vmul.f32 1.0, %v4001
          %v4003 = vrcp.pop %v3994
          %v4004 = vmul.f32 1.0, %v4003
          %v4005 = vrcp.pop %v3995
          %v4006 = vmul.f32 1.0, %v4005
          %v4007 = vrcp.pop %v3996
          %v4008 = vmul.f32 1.0, %v4007
          %v4009 = vtanh.pop %v3968
          %v4010 = vtanh.pop %v3972
          %v4011 = vmul.f32 %v4000, %v3568
          %v4012 = vmul.f32 %v4006, %v3569
          %v4013 = vmul.f32 %v3998, %v4009
          %v4014 = vmul.f32 %v4004, %v4010
          %v4015 = vadd.f32 %v4011, %v4013
          %v4016 = vadd.f32 %v4012, %v4014
          %v4017 = vtanh.pop %v4015
          %v4018 = vtanh.pop %v4016
          %v4019 = vmul.f32 %v4002, %v4017
          %v4020 = vmul.f32 %v4008, %v4018
          %s4021 = scalar_lea.vmem [#allocation2], 96
          %v4022 = vld [vmem:[%s4021] sm:$0xff]
          %v4023 = vld [vmem:[%s4021 + $0x8] sm:$0xff]
          %v4024 = vpack.c.bf16 %v4023, %v4022
          %v4026 = vsel %vm799, %v4024, 0
          %4028 = vmatprep.subr.bf16.mxu0 %v794
          %4029 = vmatpush1.bf16.msra.mxu0 %v793
          %4030 = vmatprep.subr.bf16.mxu0 0
          %4031 = vmatpush1.bf16.msra.mxu0 0
          %4032 = vmatprep.subr.bf16.mxu0 0
          %4033 = vmatpush1.bf16.msra.mxu0 0
          %4034 = vmatprep.subr.bf16.mxu0 0
          %4035 = vmatpush1.bf16.msra.mxu0 0
          %4036 = vmatprep.subr.bf16.mxu0 0
          %4037 = vmatpush1.bf16.msra.mxu0 0
          %4038 = vmatprep.subr.bf16.mxu0 0
          %4039 = vmatpush1.bf16.msra.mxu0 0
          %4040 = vmatprep.subr.bf16.mxu0 0
          %4041 = vmatpush1.bf16.msra.mxu0 0
          %4042 = vmatprep.subr.bf16.mxu0 0
          %4043 = vmatpush1.bf16.msra.mxu0 0
          %4044 = vmatprep.subr.bf16.mxu0 0
          %4045 = vmatpush1.bf16.msra.mxu0 0
          %4046 = vmatprep.subr.bf16.mxu0 0
          %4047 = vmatpush1.bf16.msra.mxu0 0
          %4048 = vmatprep.subr.bf16.mxu0 0
          %4049 = vmatpush1.bf16.msra.mxu0 0
          %4050 = vmatprep.subr.bf16.mxu0 0
          %4051 = vmatpush1.bf16.msra.mxu0 0
          %4052 = vmatprep.subr.bf16.mxu0 0
          %4053 = vmatpush1.bf16.msra.mxu0 0
          %4054 = vmatprep.subr.bf16.mxu0 0
          %4055 = vmatpush1.bf16.msra.mxu0 0
          %4056 = vmatprep.subr.bf16.mxu0 0
          %4057 = vmatpush1.bf16.msra.mxu0 0
          %4058 = vmatprep.subr.bf16.mxu0 0
          %4059 = vmatpush1.bf16.msra.mxu0 0
          %4060 = vmatprep.mubr.bf16.mxu0 0
          %4061 = vmatmul.mubr.bf16.gmra.mrb[0].mxu0 %v4026
          %v4062 = vpop.f32.mrb[0].mxu0
          %v4063 = vadd.f32 %v725, %v4062
          %v4064 = vpop.f32.mrb[0].mxu0
          %v4065 = vadd.f32 %v729, %v4064
          %v4066 = vpop.f32.mrb[0].mxu0
          %v4067 = vadd.f32 %v725, %v4066
          %v4068 = vpop.f32.mrb[0].mxu0
          %v4069 = vadd.f32 %v729, %v4068
          %4070 = vdwg.mxu0
          %4071 = vmatprep.subr.bf16.mxu0 0
          %4072 = vmatpush1.bf16.msra.mxu0 %v795
          %4073 = vmatprep.subr.bf16.mxu0 0
          %4074 = vmatpush1.bf16.msra.mxu0 0
          %4075 = vmatprep.subr.bf16.mxu0 0
          %4076 = vmatpush1.bf16.msra.mxu0 0
          %4077 = vmatprep.subr.bf16.mxu0 0
          %4078 = vmatpush1.bf16.msra.mxu0 0
          %4079 = vmatprep.subr.bf16.mxu0 0
          %4080 = vmatpush1.bf16.msra.mxu0 0
          %4081 = vmatprep.subr.bf16.mxu0 0
          %4082 = vmatpush1.bf16.msra.mxu0 0
          %4083 = vmatprep.subr.bf16.mxu0 0
          %4084 = vmatpush1.bf16.msra.mxu0 0
          %4085 = vmatprep.subr.bf16.mxu0 0
          %4086 = vmatpush1.bf16.msra.mxu0 0
          %4087 = vmatprep.subr.bf16.mxu0 0
          %4088 = vmatpush1.bf16.msra.mxu0 0
          %4089 = vmatprep.subr.bf16.mxu0 0
          %4090 = vmatpush1.bf16.msra.mxu0 0
          %4091 = vmatprep.subr.bf16.mxu0 0
          %4092 = vmatpush1.bf16.msra.mxu0 0
          %4093 = vmatprep.subr.bf16.mxu0 0
          %4094 = vmatpush1.bf16.msra.mxu0 0
          %4095 = vmatprep.subr.bf16.mxu0 0
          %4096 = vmatpush1.bf16.msra.mxu0 0
          %4097 = vmatprep.subr.bf16.mxu0 0
          %4098 = vmatpush1.bf16.msra.mxu0 0
          %4099 = vmatprep.subr.bf16.mxu0 0
          %4100 = vmatpush1.bf16.msra.mxu0 0
          %4101 = vmatprep.subr.bf16.mxu0 0
          %4102 = vmatpush1.bf16.msra.mxu0 0
          %4103 = vmatprep.mubr.bf16.mxu0 0
          %4104 = vmatmul.mubr.bf16.gmra.mrb[0].mxu0 %v4026
          %v4105 = vpop.f32.mrb[0].mxu0
          %v4106 = vadd.f32 %v733, %v4105
          %v4107 = vpop.f32.mrb[0].mxu0
          %v4108 = vpop.f32.mrb[0].mxu0
          %v4109 = vadd.f32 %v733, %v4108
          %v4110 = vpop.f32.mrb[0].mxu0
          %4111 = vdwg.mxu0
          %4112 = vmatprep.subr.bf16.mxu0 %v1000
          %4113 = vmatpush1.bf16.msra.mxu0 %v999
          %4114 = vmatprep.subr.bf16.mxu0 %v1003
          %4115 = vmatpush1.bf16.msra.mxu0 %v1002
          %4116 = vmatprep.subr.bf16.mxu0 %v1006
          %4117 = vmatpush1.bf16.msra.mxu0 %v1005
          %4118 = vmatprep.subr.bf16.mxu0 %v1009
          %4119 = vmatpush1.bf16.msra.mxu0 %v1008
          %4120 = vmatprep.subr.bf16.mxu0 %v1012
          %4121 = vmatpush1.bf16.msra.mxu0 %v1011
          %4122 = vmatprep.subr.bf16.mxu0 %v1015
          %4123 = vmatpush1.bf16.msra.mxu0 %v1014
          %4124 = vmatprep.subr.bf16.mxu0 %v1018
          %4125 = vmatpush1.bf16.msra.mxu0 %v1017
          %4126 = vmatprep.subr.bf16.mxu0 %v1021
          %4127 = vmatpush1.bf16.msra.mxu0 %v1020
          %4128 = vmatprep.subr.bf16.mxu0 0
          %4129 = vmatpush1.bf16.msra.mxu0 0
          %4130 = vmatprep.subr.bf16.mxu0 0
          %4131 = vmatpush1.bf16.msra.mxu0 0
          %4132 = vmatprep.subr.bf16.mxu0 0
          %4133 = vmatpush1.bf16.msra.mxu0 0
          %4134 = vmatprep.subr.bf16.mxu0 0
          %4135 = vmatpush1.bf16.msra.mxu0 0
          %4136 = vmatprep.subr.bf16.mxu0 0
          %4137 = vmatpush1.bf16.msra.mxu0 0
          %4138 = vmatprep.subr.bf16.mxu0 0
          %4139 = vmatpush1.bf16.msra.mxu0 0
          %4140 = vmatprep.subr.bf16.mxu0 0
          %4141 = vmatpush1.bf16.msra.mxu0 0
          %4142 = vmatprep.subr.bf16.mxu0 0
          %4143 = vmatpush1.bf16.msra.mxu0 0
          %4144 = vmatprep.mubr.bf16.mxu0 0
          %4145 = vmatmul.mubr.bf16.gmra.mrb[0].mxu0 %v3792
          %v4146 = vpop.f32.mrb[0].mxu0
          %v4147 = vadd.f32 %v742, %v4146
          %v4148 = vpop.f32.mrb[0].mxu0
          %v4149 = vadd.f32 %v746, %v4148
          %v4150 = vpop.f32.mrb[0].mxu0
          %v4151 = vadd.f32 %v742, %v4150
          %v4152 = vpop.f32.mrb[0].mxu0
          %v4153 = vadd.f32 %v746, %v4152
          %4154 = vdwg.mxu0
          %4155 = vmatprep.subr.bf16.mxu0 0
          %4156 = vmatpush1.bf16.msra.mxu0 %v1001
          %4157 = vmatprep.subr.bf16.mxu0 0
          %4158 = vmatpush1.bf16.msra.mxu0 %v1004
          %4159 = vmatprep.subr.bf16.mxu0 0
          %4160 = vmatpush1.bf16.msra.mxu0 %v1007
          %4161 = vmatprep.subr.bf16.mxu0 0
          %4162 = vmatpush1.bf16.msra.mxu0 %v1010
          %4163 = vmatprep.subr.bf16.mxu0 0
          %4164 = vmatpush1.bf16.msra.mxu0 %v1013
          %4165 = vmatprep.subr.bf16.mxu0 0
          %4166 = vmatpush1.bf16.msra.mxu0 %v1016
          %4167 = vmatprep.subr.bf16.mxu0 0
          %4168 = vmatpush1.bf16.msra.mxu0 %v1019
          %4169 = vmatprep.subr.bf16.mxu0 0
          %4170 = vmatpush1.bf16.msra.mxu0 %v1022
          %4171 = vmatprep.subr.bf16.mxu0 0
          %4172 = vmatpush1.bf16.msra.mxu0 0
          %4173 = vmatprep.subr.bf16.mxu0 0
          %4174 = vmatpush1.bf16.msra.mxu0 0
          %4175 = vmatprep.subr.bf16.mxu0 0
          %4176 = vmatpush1.bf16.msra.mxu0 0
          %4177 = vmatprep.subr.bf16.mxu0 0
          %4178 = vmatpush1.bf16.msra.mxu0 0
          %4179 = vmatprep.subr.bf16.mxu0 0
          %4180 = vmatpush1.bf16.msra.mxu0 0
          %4181 = vmatprep.subr.bf16.mxu0 0
          %4182 = vmatpush1.bf16.msra.mxu0 0
          %4183 = vmatprep.subr.bf16.mxu0 0
          %4184 = vmatpush1.bf16.msra.mxu0 0
          %4185 = vmatprep.subr.bf16.mxu0 0
          %4186 = vmatpush1.bf16.msra.mxu0 0
          %4187 = vmatprep.mubr.bf16.mxu0 0
          %4188 = vmatmul.mubr.bf16.gmra.mrb[0].mxu0 %v3792
          %v4189 = vpop.f32.mrb[0].mxu0
          %v4190 = vadd.f32 %v750, %v4189
          %v4191 = vpop.f32.mrb[0].mxu0
          %v4192 = vpop.f32.mrb[0].mxu0
          %v4193 = vadd.f32 %v750, %v4192
          %v4194 = vpop.f32.mrb[0].mxu0
          %4195 = vdwg.mxu0
          %v4196 = vadd.f32 %v4063, %v4147
          %v4197 = vadd.f32 %v4065, %v4149
          %v4198 = vadd.f32 %v4067, %v4151
          %v4199 = vadd.f32 %v4069, %v4153
          %v4200 = vxor.u32 %v4196, 2147483648
          %v4201 = vxor.u32 %v4197, 2147483648
          %v4202 = vxor.u32 %v4198, 2147483648
          %v4203 = vxor.u32 %v4199, 2147483648
          %v4204 = vmul.f32 %v4200, 1.442695
          %v4205 = vpow.pop %v4204
          %v4206 = vmul.f32 %v4201, 1.442695
          %v4207 = vpow.pop %v4206
          %v4208 = vmul.f32 %v4202, 1.442695
          %v4209 = vpow.pop %v4208
          %v4210 = vmul.f32 %v4203, 1.442695
          %v4211 = vpow.pop %v4210
          %v4212 = vadd.f32 %v4205, 1.0
          %v4213 = vadd.f32 %v4207, 1.0
          %v4214 = vadd.f32 %v4209, 1.0
          %v4215 = vadd.f32 %v4211, 1.0
          %v4216 = vrcp.pop %v4212
          %v4217 = vmul.f32 1.0, %v4216
          %v4218 = vrcp.pop %v4213
          %v4219 = vmul.f32 1.0, %v4218
          %v4220 = vrcp.pop %v4214
          %v4221 = vmul.f32 1.0, %v4220
          %v4222 = vrcp.pop %v4215
          %v4223 = vmul.f32 1.0, %v4222
          %v4224 = vmul.f32 %v4217, %v4190
          %v4225 = vmul.f32 %v4221, %v4193
          %v4226 = vadd.f32 %v4106, %v4224
          %v4227 = vadd.f32 %v4109, %v4225
          %v4228 = vtanh.pop %v4226
          %v4229 = vtanh.pop %v4227
          %v4230 = vsub.f32 1.0, %v4219
          %v4231 = vsub.f32 1.0, %v4223
          %v4232 = vmul.f32 %v4230, %v4228
          %v4233 = vmul.f32 %v4231, %v4229
          %v4234 = vmul.f32 %v4219, %v3789
          %v4235 = vmul.f32 %v4223, %v3790
          %v4236 = vadd.f32 %v4232, %v4234
          %v4237 = vadd.f32 %v4233, %v4235
          %v4238 = vpack.c.bf16 %v4020, %v4019
          %v4239 = vpack.c.bf16 %v4237, %v4236
          %4240 = vmatprep.subr.bf16.mxu0 %v1335
          %4241 = vmatpush1.bf16.msra.mxu0 %v1334
          %4242 = vmatprep.subr.bf16.mxu0 %v1339
          %4243 = vmatpush1.bf16.msra.mxu0 %v1338
          %4244 = vmatprep.subr.bf16.mxu0 %v1343
          %4245 = vmatpush1.bf16.msra.mxu0 %v1342
          %4246 = vmatprep.subr.bf16.mxu0 %v1347
          %4247 = vmatpush1.bf16.msra.mxu0 %v1346
          %4248 = vmatprep.subr.bf16.mxu0 %v1351
          %4249 = vmatpush1.bf16.msra.mxu0 %v1350
          %4250 = vmatprep.subr.bf16.mxu0 %v1355
          %4251 = vmatpush1.bf16.msra.mxu0 %v1354
          %4252 = vmatprep.subr.bf16.mxu0 %v1359
          %4253 = vmatpush1.bf16.msra.mxu0 %v1358
          %4254 = vmatprep.subr.bf16.mxu0 %v1363
          %4255 = vmatpush1.bf16.msra.mxu0 %v1362
          %4256 = vmatprep.subr.bf16.mxu0 0
          %4257 = vmatpush1.bf16.msra.mxu0 0
          %4258 = vmatprep.subr.bf16.mxu0 0
          %4259 = vmatpush1.bf16.msra.mxu0 0
          %4260 = vmatprep.subr.bf16.mxu0 0
          %4261 = vmatpush1.bf16.msra.mxu0 0
          %4262 = vmatprep.subr.bf16.mxu0 0
          %4263 = vmatpush1.bf16.msra.mxu0 0
          %4264 = vmatprep.subr.bf16.mxu0 0
          %4265 = vmatpush1.bf16.msra.mxu0 0
          %4266 = vmatprep.subr.bf16.mxu0 0
          %4267 = vmatpush1.bf16.msra.mxu0 0
          %4268 = vmatprep.subr.bf16.mxu0 0
          %4269 = vmatpush1.bf16.msra.mxu0 0
          %4270 = vmatprep.subr.bf16.mxu0 0
          %4271 = vmatpush1.bf16.msra.mxu0 0
          %4272 = vmatprep.mubr.bf16.mxu0 0
          %4273 = vmatmul.mubr.bf16.gmra.mrb[0].mxu0 %v4239
          %v4274 = vpop.f32.mrb[0].mxu0
          %v4275 = vadd.f32 0.0, %v4274
          %v4276 = vpop.f32.mrb[0].mxu0
          %v4277 = vadd.f32 0.0, %v4276
          %v4278 = vpop.f32.mrb[0].mxu0
          %v4279 = vadd.f32 0.0, %v4278
          %v4280 = vpop.f32.mrb[0].mxu0
          %v4281 = vadd.f32 0.0, %v4280
          %4282 = vdwg.mxu0
          %4283 = vmatprep.subr.bf16.mxu0 %v1337
          %4284 = vmatpush1.bf16.msra.mxu0 %v1336
          %4285 = vmatprep.subr.bf16.mxu0 %v1341
          %4286 = vmatpush1.bf16.msra.mxu0 %v1340
          %4287 = vmatprep.subr.bf16.mxu0 %v1345
          %4288 = vmatpush1.bf16.msra.mxu0 %v1344
          %4289 = vmatprep.subr.bf16.mxu0 %v1349
          %4290 = vmatpush1.bf16.msra.mxu0 %v1348
          %4291 = vmatprep.subr.bf16.mxu0 %v1353
          %4292 = vmatpush1.bf16.msra.mxu0 %v1352
          %4293 = vmatprep.subr.bf16.mxu0 %v1357
          %4294 = vmatpush1.bf16.msra.mxu0 %v1356
          %4295 = vmatprep.subr.bf16.mxu0 %v1361
          %4296 = vmatpush1.bf16.msra.mxu0 %v1360
          %4297 = vmatprep.subr.bf16.mxu0 %v1365
          %4298 = vmatpush1.bf16.msra.mxu0 %v1364
          %4299 = vmatprep.subr.bf16.mxu0 0
          %4300 = vmatpush1.bf16.msra.mxu0 0
          %4301 = vmatprep.subr.bf16.mxu0 0
          %4302 = vmatpush1.bf16.msra.mxu0 0
          %4303 = vmatprep.subr.bf16.mxu0 0
          %4304 = vmatpush1.bf16.msra.mxu0 0
          %4305 = vmatprep.subr.bf16.mxu0 0
          %4306 = vmatpush1.bf16.msra.mxu0 0
          %4307 = vmatprep.subr.bf16.mxu0 0
          %4308 = vmatpush1.bf16.msra.mxu0 0
          %4309 = vmatprep.subr.bf16.mxu0 0
          %4310 = vmatpush1.bf16.msra.mxu0 0
          %4311 = vmatprep.subr.bf16.mxu0 0
          %4312 = vmatpush1.bf16.msra.mxu0 0
          %4313 = vmatprep.subr.bf16.mxu0 0
          %4314 = vmatpush1.bf16.msra.mxu0 0
          %4315 = vmatprep.mubr.bf16.mxu0 0
          %4316 = vmatmul.mubr.bf16.gmra.mrb[0].mxu0 %v4239
          %v4317 = vpop.f32.mrb[0].mxu0
          %v4318 = vadd.f32 0.0, %v4317
          %v4319 = vpop.f32.mrb[0].mxu0
          %v4320 = vadd.f32 0.0, %v4319
          %v4321 = vpop.f32.mrb[0].mxu0
          %v4322 = vadd.f32 0.0, %v4321
          %v4323 = vpop.f32.mrb[0].mxu0
          %v4324 = vadd.f32 0.0, %v4323
          %4325 = vdwg.mxu0
          %4326 = vmatprep.subr.bf16.mxu0 %v1581
          %4327 = vmatpush1.bf16.msra.mxu0 %v1580
          %4328 = vmatprep.subr.bf16.mxu0 %v1585
          %4329 = vmatpush1.bf16.msra.mxu0 %v1584
          %4330 = vmatprep.subr.bf16.mxu0 %v1589
          %4331 = vmatpush1.bf16.msra.mxu0 %v1588
          %4332 = vmatprep.subr.bf16.mxu0 %v1593
          %4333 = vmatpush1.bf16.msra.mxu0 %v1592
          %4334 = vmatprep.subr.bf16.mxu0 %v1597
          %4335 = vmatpush1.bf16.msra.mxu0 %v1596
          %4336 = vmatprep.subr.bf16.mxu0 %v1601
          %4337 = vmatpush1.bf16.msra.mxu0 %v1600
          %4338 = vmatprep.subr.bf16.mxu0 %v1605
          %4339 = vmatpush1.bf16.msra.mxu0 %v1604
          %4340 = vmatprep.subr.bf16.mxu0 %v1609
          %4341 = vmatpush1.bf16.msra.mxu0 %v1608
          %4342 = vmatprep.subr.bf16.mxu0 0
          %4343 = vmatpush1.bf16.msra.mxu0 0
          %4344 = vmatprep.subr.bf16.mxu0 0
          %4345 = vmatpush1.bf16.msra.mxu0 0
          %4346 = vmatprep.subr.bf16.mxu0 0
          %4347 = vmatpush1.bf16.msra.mxu0 0
          %4348 = vmatprep.subr.bf16.mxu0 0
          %4349 = vmatpush1.bf16.msra.mxu0 0
          %4350 = vmatprep.subr.bf16.mxu0 0
          %4351 = vmatpush1.bf16.msra.mxu0 0
          %4352 = vmatprep.subr.bf16.mxu0 0
          %4353 = vmatpush1.bf16.msra.mxu0 0
          %4354 = vmatprep.subr.bf16.mxu0 0
          %4355 = vmatpush1.bf16.msra.mxu0 0
          %4356 = vmatprep.subr.bf16.mxu0 0
          %4357 = vmatpush1.bf16.msra.mxu0 0
          %4358 = vmatprep.mubr.bf16.mxu0 0
          %4359 = vmatmul.mubr.bf16.gmra.mrb[0].mxu0 %v4238
          %v4360 = vpop.f32.mrb[0].mxu0
          %v4361 = vadd.f32 %v4275, %v4360
          %v4362 = vpop.f32.mrb[0].mxu0
          %v4363 = vadd.f32 %v4277, %v4362
          %v4364 = vpop.f32.mrb[0].mxu0
          %v4365 = vadd.f32 %v4279, %v4364
          %v4366 = vpop.f32.mrb[0].mxu0
          %v4367 = vadd.f32 %v4281, %v4366
          %4368 = vdwg.mxu0
          %4369 = vmatprep.subr.bf16.mxu0 %v1583
          %4370 = vmatpush1.bf16.msra.mxu0 %v1582
          %4371 = vmatprep.subr.bf16.mxu0 %v1587
          %4372 = vmatpush1.bf16.msra.mxu0 %v1586
          %4373 = vmatprep.subr.bf16.mxu0 %v1591
          %4374 = vmatpush1.bf16.msra.mxu0 %v1590
          %4375 = vmatprep.subr.bf16.mxu0 %v1595
          %4376 = vmatpush1.bf16.msra.mxu0 %v1594
          %4377 = vmatprep.subr.bf16.mxu0 %v1599
          %4378 = vmatpush1.bf16.msra.mxu0 %v1598
          %4379 = vmatprep.subr.bf16.mxu0 %v1603
          %4380 = vmatpush1.bf16.msra.mxu0 %v1602
          %4381 = vmatprep.subr.bf16.mxu0 %v1607
          %4382 = vmatpush1.bf16.msra.mxu0 %v1606
          %4383 = vmatprep.subr.bf16.mxu0 %v1611
          %4384 = vmatpush1.bf16.msra.mxu0 %v1610
          %4385 = vmatprep.subr.bf16.mxu0 0
          %4386 = vmatpush1.bf16.msra.mxu0 0
          %4387 = vmatprep.subr.bf16.mxu0 0
          %4388 = vmatpush1.bf16.msra.mxu0 0
          %4389 = vmatprep.subr.bf16.mxu0 0
          %4390 = vmatpush1.bf16.msra.mxu0 0
          %4391 = vmatprep.subr.bf16.mxu0 0
          %4392 = vmatpush1.bf16.msra.mxu0 0
          %4393 = vmatprep.subr.bf16.mxu0 0
          %4394 = vmatpush1.bf16.msra.mxu0 0
          %4395 = vmatprep.subr.bf16.mxu0 0
          %4396 = vmatpush1.bf16.msra.mxu0 0
          %4397 = vmatprep.subr.bf16.mxu0 0
          %4398 = vmatpush1.bf16.msra.mxu0 0
          %4399 = vmatprep.subr.bf16.mxu0 0
          %4400 = vmatpush1.bf16.msra.mxu0 0
          %4401 = vmatprep.mubr.bf16.mxu0 0
          %4402 = vmatmul.mubr.bf16.gmra.mrb[0].mxu0 %v4238
          %v4403 = vpop.f32.mrb[0].mxu0
          %v4404 = vadd.f32 %v4318, %v4403
          %v4405 = vpop.f32.mrb[0].mxu0
          %v4406 = vadd.f32 %v4320, %v4405
          %v4407 = vpop.f32.mrb[0].mxu0
          %v4408 = vadd.f32 %v4322, %v4407
          %v4409 = vpop.f32.mrb[0].mxu0
          %v4410 = vadd.f32 %v4324, %v4409
          %4411 = vdwg.mxu0
          %v4412 = vadd.f32 %v4361, %v759
          %v4413 = vadd.f32 %v4363, %v763
          %v4414 = vadd.f32 %v4404, %v767
          %v4415 = vadd.f32 %v4406, %v771
          %v4416 = vadd.f32 %v4365, %v759
          %v4417 = vadd.f32 %v4367, %v763
          %v4418 = vadd.f32 %v4408, %v767
          %v4419 = vadd.f32 %v4410, %v771
          %v4420 = vxor.u32 %v4412, 2147483648
          %v4421 = vxor.u32 %v4413, 2147483648
          %v4422 = vxor.u32 %v4414, 2147483648
          %v4423 = vxor.u32 %v4416, 2147483648
          %v4424 = vxor.u32 %v4417, 2147483648
          %v4425 = vxor.u32 %v4418, 2147483648
          %v4426 = vmul.f32 %v4420, 1.442695
          %v4427 = vpow.pop %v4426
          %v4428 = vmul.f32 %v4421, 1.442695
          %v4429 = vpow.pop %v4428
          %v4430 = vmul.f32 %v4422, 1.442695
          %v4431 = vpow.pop %v4430
          %v4432 = vmul.f32 %v4423, 1.442695
          %v4433 = vpow.pop %v4432
          %v4434 = vmul.f32 %v4424, 1.442695
          %v4435 = vpow.pop %v4434
          %v4436 = vmul.f32 %v4425, 1.442695
          %v4437 = vpow.pop %v4436
          %v4438 = vadd.f32 %v4427, 1.0
          %v4439 = vadd.f32 %v4429, 1.0
          %v4440 = vadd.f32 %v4431, 1.0
          %v4441 = vadd.f32 %v4433, 1.0
          %v4442 = vadd.f32 %v4435, 1.0
          %v4443 = vadd.f32 %v4437, 1.0
          %v4444 = vrcp.pop %v4438
          %v4445 = vmul.f32 1.0, %v4444
          %v4446 = vrcp.pop %v4439
          %v4447 = vmul.f32 1.0, %v4446
          %v4448 = vrcp.pop %v4440
          %v4449 = vmul.f32 1.0, %v4448
          %v4450 = vrcp.pop %v4441
          %v4451 = vmul.f32 1.0, %v4450
          %v4452 = vrcp.pop %v4442
          %v4453 = vmul.f32 1.0, %v4452
          %v4454 = vrcp.pop %v4443
          %v4455 = vmul.f32 1.0, %v4454
          %v4456 = vtanh.pop %v4415
          %v4457 = vtanh.pop %v4419
          %v4458 = vmul.f32 %v4447, %v4015
          %v4459 = vmul.f32 %v4453, %v4016
          %v4460 = vmul.f32 %v4445, %v4456
          %v4461 = vmul.f32 %v4451, %v4457
          %v4462 = vadd.f32 %v4458, %v4460
          %v4463 = vadd.f32 %v4459, %v4461
          %v4464 = vtanh.pop %v4462
          %v4465 = vtanh.pop %v4463
          %v4466 = vmul.f32 %v4449, %v4464
          %v4467 = vmul.f32 %v4455, %v4465
          %s4468 = scalar_lea.vmem [#allocation2], 112
          %v4469 = vld [vmem:[%s4468] sm:$0xff]
          %v4470 = vld [vmem:[%s4468 + $0x8] sm:$0xff]
          %v4471 = vpack.c.bf16 %v4470, %v4469
          %v4473 = vsel %vm799, %v4471, 0
          %4475 = vmatprep.subr.bf16.mxu0 %v794
          %4476 = vmatpush1.bf16.msra.mxu0 %v793
          %4477 = vmatprep.subr.bf16.mxu0 0
          %4478 = vmatpush1.bf16.msra.mxu0 0
          %4479 = vmatprep.subr.bf16.mxu0 0
          %4480 = vmatpush1.bf16.msra.mxu0 0
          %4481 = vmatprep.subr.bf16.mxu0 0
          %4482 = vmatpush1.bf16.msra.mxu0 0
          %4483 = vmatprep.subr.bf16.mxu0 0
          %4484 = vmatpush1.bf16.msra.mxu0 0
          %4485 = vmatprep.subr.bf16.mxu0 0
          %4486 = vmatpush1.bf16.msra.mxu0 0
          %4487 = vmatprep.subr.bf16.mxu0 0
          %4488 = vmatpush1.bf16.msra.mxu0 0
          %4489 = vmatprep.subr.bf16.mxu0 0
          %4490 = vmatpush1.bf16.msra.mxu0 0
          %4491 = vmatprep.subr.bf16.mxu0 0
          %4492 = vmatpush1.bf16.msra.mxu0 0
          %4493 = vmatprep.subr.bf16.mxu0 0
          %4494 = vmatpush1.bf16.msra.mxu0 0
          %4495 = vmatprep.subr.bf16.mxu0 0
          %4496 = vmatpush1.bf16.msra.mxu0 0
          %4497 = vmatprep.subr.bf16.mxu0 0
          %4498 = vmatpush1.bf16.msra.mxu0 0
          %4499 = vmatprep.subr.bf16.mxu0 0
          %4500 = vmatpush1.bf16.msra.mxu0 0
          %4501 = vmatprep.subr.bf16.mxu0 0
          %4502 = vmatpush1.bf16.msra.mxu0 0
          %4503 = vmatprep.subr.bf16.mxu0 0
          %4504 = vmatpush1.bf16.msra.mxu0 0
          %4505 = vmatprep.subr.bf16.mxu0 0
          %4506 = vmatpush1.bf16.msra.mxu0 0
          %4507 = vmatprep.mubr.bf16.mxu0 0
          %4508 = vmatmul.mubr.bf16.gmra.mrb[0].mxu0 %v4473
          %v4509 = vpop.f32.mrb[0].mxu0
          %v4510 = vadd.f32 %v725, %v4509
          %v4511 = vpop.f32.mrb[0].mxu0
          %v4512 = vadd.f32 %v729, %v4511
          %v4513 = vpop.f32.mrb[0].mxu0
          %v4514 = vadd.f32 %v725, %v4513
          %v4515 = vpop.f32.mrb[0].mxu0
          %v4516 = vadd.f32 %v729, %v4515
          %4517 = vdwg.mxu0
          %4518 = vmatprep.subr.bf16.mxu0 0
          %4519 = vmatpush1.bf16.msra.mxu0 %v795
          %4520 = vmatprep.subr.bf16.mxu0 0
          %4521 = vmatpush1.bf16.msra.mxu0 0
          %4522 = vmatprep.subr.bf16.mxu0 0
          %4523 = vmatpush1.bf16.msra.mxu0 0
          %4524 = vmatprep.subr.bf16.mxu0 0
          %4525 = vmatpush1.bf16.msra.mxu0 0
          %4526 = vmatprep.subr.bf16.mxu0 0
          %4527 = vmatpush1.bf16.msra.mxu0 0
          %4528 = vmatprep.subr.bf16.mxu0 0
          %4529 = vmatpush1.bf16.msra.mxu0 0
          %4530 = vmatprep.subr.bf16.mxu0 0
          %4531 = vmatpush1.bf16.msra.mxu0 0
          %4532 = vmatprep.subr.bf16.mxu0 0
          %4533 = vmatpush1.bf16.msra.mxu0 0
          %4534 = vmatprep.subr.bf16.mxu0 0
          %4535 = vmatpush1.bf16.msra.mxu0 0
          %4536 = vmatprep.subr.bf16.mxu0 0
          %4537 = vmatpush1.bf16.msra.mxu0 0
          %4538 = vmatprep.subr.bf16.mxu0 0
          %4539 = vmatpush1.bf16.msra.mxu0 0
          %4540 = vmatprep.subr.bf16.mxu0 0
          %4541 = vmatpush1.bf16.msra.mxu0 0
          %4542 = vmatprep.subr.bf16.mxu0 0
          %4543 = vmatpush1.bf16.msra.mxu0 0
          %4544 = vmatprep.subr.bf16.mxu0 0
          %4545 = vmatpush1.bf16.msra.mxu0 0
          %4546 = vmatprep.subr.bf16.mxu0 0
          %4547 = vmatpush1.bf16.msra.mxu0 0
          %4548 = vmatprep.subr.bf16.mxu0 0
          %4549 = vmatpush1.bf16.msra.mxu0 0
          %4550 = vmatprep.mubr.bf16.mxu0 0
          %4551 = vmatmul.mubr.bf16.gmra.mrb[0].mxu0 %v4473
          %v4552 = vpop.f32.mrb[0].mxu0
          %v4553 = vadd.f32 %v733, %v4552
          %v4554 = vpop.f32.mrb[0].mxu0
          %v4555 = vpop.f32.mrb[0].mxu0
          %v4556 = vadd.f32 %v733, %v4555
          %v4557 = vpop.f32.mrb[0].mxu0
          %4558 = vdwg.mxu0
          %4559 = vmatprep.subr.bf16.mxu0 %v1000
          %4560 = vmatpush1.bf16.msra.mxu0 %v999
          %4561 = vmatprep.subr.bf16.mxu0 %v1003
          %4562 = vmatpush1.bf16.msra.mxu0 %v1002
          %4563 = vmatprep.subr.bf16.mxu0 %v1006
          %4564 = vmatpush1.bf16.msra.mxu0 %v1005
          %4565 = vmatprep.subr.bf16.mxu0 %v1009
          %4566 = vmatpush1.bf16.msra.mxu0 %v1008
          %4567 = vmatprep.subr.bf16.mxu0 %v1012
          %4568 = vmatpush1.bf16.msra.mxu0 %v1011
          %4569 = vmatprep.subr.bf16.mxu0 %v1015
          %4570 = vmatpush1.bf16.msra.mxu0 %v1014
          %4571 = vmatprep.subr.bf16.mxu0 %v1018
          %4572 = vmatpush1.bf16.msra.mxu0 %v1017
          %4573 = vmatprep.subr.bf16.mxu0 %v1021
          %4574 = vmatpush1.bf16.msra.mxu0 %v1020
          %4575 = vmatprep.subr.bf16.mxu0 0
          %4576 = vmatpush1.bf16.msra.mxu0 0
          %4577 = vmatprep.subr.bf16.mxu0 0
          %4578 = vmatpush1.bf16.msra.mxu0 0
          %4579 = vmatprep.subr.bf16.mxu0 0
          %4580 = vmatpush1.bf16.msra.mxu0 0
          %4581 = vmatprep.subr.bf16.mxu0 0
          %4582 = vmatpush1.bf16.msra.mxu0 0
          %4583 = vmatprep.subr.bf16.mxu0 0
          %4584 = vmatpush1.bf16.msra.mxu0 0
          %4585 = vmatprep.subr.bf16.mxu0 0
          %4586 = vmatpush1.bf16.msra.mxu0 0
          %4587 = vmatprep.subr.bf16.mxu0 0
          %4588 = vmatpush1.bf16.msra.mxu0 0
          %4589 = vmatprep.subr.bf16.mxu0 0
          %4590 = vmatpush1.bf16.msra.mxu0 0
          %4591 = vmatprep.mubr.bf16.mxu0 0
          %4592 = vmatmul.mubr.bf16.gmra.mrb[0].mxu0 %v4239
          %v4593 = vpop.f32.mrb[0].mxu0
          %v4594 = vadd.f32 %v742, %v4593
          %v4595 = vpop.f32.mrb[0].mxu0
          %v4596 = vadd.f32 %v746, %v4595
          %v4597 = vpop.f32.mrb[0].mxu0
          %v4598 = vadd.f32 %v742, %v4597
          %v4599 = vpop.f32.mrb[0].mxu0
          %v4600 = vadd.f32 %v746, %v4599
          %4601 = vdwg.mxu0
          %4602 = vmatprep.subr.bf16.mxu0 0
          %4603 = vmatpush1.bf16.msra.mxu0 %v1001
          %4604 = vmatprep.subr.bf16.mxu0 0
          %4605 = vmatpush1.bf16.msra.mxu0 %v1004
          %4606 = vmatprep.subr.bf16.mxu0 0
          %4607 = vmatpush1.bf16.msra.mxu0 %v1007
          %4608 = vmatprep.subr.bf16.mxu0 0
          %4609 = vmatpush1.bf16.msra.mxu0 %v1010
          %4610 = vmatprep.subr.bf16.mxu0 0
          %4611 = vmatpush1.bf16.msra.mxu0 %v1013
          %4612 = vmatprep.subr.bf16.mxu0 0
          %4613 = vmatpush1.bf16.msra.mxu0 %v1016
          %4614 = vmatprep.subr.bf16.mxu0 0
          %4615 = vmatpush1.bf16.msra.mxu0 %v1019
          %4616 = vmatprep.subr.bf16.mxu0 0
          %4617 = vmatpush1.bf16.msra.mxu0 %v1022
          %4618 = vmatprep.subr.bf16.mxu0 0
          %4619 = vmatpush1.bf16.msra.mxu0 0
          %4620 = vmatprep.subr.bf16.mxu0 0
          %4621 = vmatpush1.bf16.msra.mxu0 0
          %4622 = vmatprep.subr.bf16.mxu0 0
          %4623 = vmatpush1.bf16.msra.mxu0 0
          %4624 = vmatprep.subr.bf16.mxu0 0
          %4625 = vmatpush1.bf16.msra.mxu0 0
          %4626 = vmatprep.subr.bf16.mxu0 0
          %4627 = vmatpush1.bf16.msra.mxu0 0
          %4628 = vmatprep.subr.bf16.mxu0 0
          %4629 = vmatpush1.bf16.msra.mxu0 0
          %4630 = vmatprep.subr.bf16.mxu0 0
          %4631 = vmatpush1.bf16.msra.mxu0 0
          %4632 = vmatprep.subr.bf16.mxu0 0
          %4633 = vmatpush1.bf16.msra.mxu0 0
          %4634 = vmatprep.mubr.bf16.mxu0 0
          %4635 = vmatmul.mubr.bf16.gmra.mrb[0].mxu0 %v4239
          %v4636 = vpop.f32.mrb[0].mxu0
          %v4637 = vadd.f32 %v750, %v4636
          %v4638 = vpop.f32.mrb[0].mxu0
          %v4639 = vpop.f32.mrb[0].mxu0
          %v4640 = vadd.f32 %v750, %v4639
          %v4641 = vpop.f32.mrb[0].mxu0
          %4642 = vdwg.mxu0
          %v4643 = vadd.f32 %v4510, %v4594
          %v4644 = vadd.f32 %v4512, %v4596
          %v4645 = vadd.f32 %v4514, %v4598
          %v4646 = vadd.f32 %v4516, %v4600
          %v4647 = vxor.u32 %v4643, 2147483648
          %v4648 = vxor.u32 %v4644, 2147483648
          %v4649 = vxor.u32 %v4645, 2147483648
          %v4650 = vxor.u32 %v4646, 2147483648
          %v4651 = vmul.f32 %v4647, 1.442695
          %v4652 = vpow.pop %v4651
          %v4653 = vmul.f32 %v4648, 1.442695
          %v4654 = vpow.pop %v4653
          %v4655 = vmul.f32 %v4649, 1.442695
          %v4656 = vpow.pop %v4655
          %v4657 = vmul.f32 %v4650, 1.442695
          %v4658 = vpow.pop %v4657
          %v4659 = vadd.f32 %v4652, 1.0
          %v4660 = vadd.f32 %v4654, 1.0
          %v4661 = vadd.f32 %v4656, 1.0
          %v4662 = vadd.f32 %v4658, 1.0
          %v4663 = vrcp.pop %v4659
          %v4664 = vmul.f32 1.0, %v4663
          %v4665 = vrcp.pop %v4660
          %v4666 = vmul.f32 1.0, %v4665
          %v4667 = vrcp.pop %v4661
          %v4668 = vmul.f32 1.0, %v4667
          %v4669 = vrcp.pop %v4662
          %v4670 = vmul.f32 1.0, %v4669
          %v4671 = vmul.f32 %v4664, %v4637
          %v4672 = vmul.f32 %v4668, %v4640
          %v4673 = vadd.f32 %v4553, %v4671
          %v4674 = vadd.f32 %v4556, %v4672
          %v4675 = vtanh.pop %v4673
          %v4676 = vtanh.pop %v4674
          %v4677 = vsub.f32 1.0, %v4666
          %v4678 = vsub.f32 1.0, %v4670
          %v4679 = vmul.f32 %v4677, %v4675
          %v4680 = vmul.f32 %v4678, %v4676
          %v4681 = vmul.f32 %v4666, %v4236
          %v4682 = vmul.f32 %v4670, %v4237
          %v4683 = vadd.f32 %v4679, %v4681
          %v4684 = vadd.f32 %v4680, %v4682
          %v4685 = vpack.c.bf16 %v4467, %v4466
          %v4686 = vpack.c.bf16 %v4684, %v4683
          %4687 = vmatprep.subr.bf16.mxu0 %v1335
          %4688 = vmatpush1.bf16.msra.mxu0 %v1334
          %4689 = vmatprep.subr.bf16.mxu0 %v1339
          %4690 = vmatpush1.bf16.msra.mxu0 %v1338
          %4691 = vmatprep.subr.bf16.mxu0 %v1343
          %4692 = vmatpush1.bf16.msra.mxu0 %v1342
          %4693 = vmatprep.subr.bf16.mxu0 %v1347
          %4694 = vmatpush1.bf16.msra.mxu0 %v1346
          %4695 = vmatprep.subr.bf16.mxu0 %v1351
          %4696 = vmatpush1.bf16.msra.mxu0 %v1350
          %4697 = vmatprep.subr.bf16.mxu0 %v1355
          %4698 = vmatpush1.bf16.msra.mxu0 %v1354
          %4699 = vmatprep.subr.bf16.mxu0 %v1359
          %4700 = vmatpush1.bf16.msra.mxu0 %v1358
          %4701 = vmatprep.subr.bf16.mxu0 %v1363
          %4702 = vmatpush1.bf16.msra.mxu0 %v1362
          %4703 = vmatprep.subr.bf16.mxu0 0
          %4704 = vmatpush1.bf16.msra.mxu0 0
          %4705 = vmatprep.subr.bf16.mxu0 0
          %4706 = vmatpush1.bf16.msra.mxu0 0
          %4707 = vmatprep.subr.bf16.mxu0 0
          %4708 = vmatpush1.bf16.msra.mxu0 0
          %4709 = vmatprep.subr.bf16.mxu0 0
          %4710 = vmatpush1.bf16.msra.mxu0 0
          %4711 = vmatprep.subr.bf16.mxu0 0
          %4712 = vmatpush1.bf16.msra.mxu0 0
          %4713 = vmatprep.subr.bf16.mxu0 0
          %4714 = vmatpush1.bf16.msra.mxu0 0
          %4715 = vmatprep.subr.bf16.mxu0 0
          %4716 = vmatpush1.bf16.msra.mxu0 0
          %4717 = vmatprep.subr.bf16.mxu0 0
          %4718 = vmatpush1.bf16.msra.mxu0 0
          %4719 = vmatprep.mubr.bf16.mxu0 0
          %4720 = vmatmul.mubr.bf16.gmra.mrb[0].mxu0 %v4686
          %v4721 = vpop.f32.mrb[0].mxu0
          %v4722 = vadd.f32 0.0, %v4721
          %v4723 = vpop.f32.mrb[0].mxu0
          %v4724 = vadd.f32 0.0, %v4723
          %v4725 = vpop.f32.mrb[0].mxu0
          %v4726 = vadd.f32 0.0, %v4725
          %v4727 = vpop.f32.mrb[0].mxu0
          %v4728 = vadd.f32 0.0, %v4727
          %4729 = vdwg.mxu0
          %4730 = vmatprep.subr.bf16.mxu0 %v1337
          %4731 = vmatpush1.bf16.msra.mxu0 %v1336
          %4732 = vmatprep.subr.bf16.mxu0 %v1341
          %4733 = vmatpush1.bf16.msra.mxu0 %v1340
          %4734 = vmatprep.subr.bf16.mxu0 %v1345
          %4735 = vmatpush1.bf16.msra.mxu0 %v1344
          %4736 = vmatprep.subr.bf16.mxu0 %v1349
          %4737 = vmatpush1.bf16.msra.mxu0 %v1348
          %4738 = vmatprep.subr.bf16.mxu0 %v1353
          %4739 = vmatpush1.bf16.msra.mxu0 %v1352
          %4740 = vmatprep.subr.bf16.mxu0 %v1357
          %4741 = vmatpush1.bf16.msra.mxu0 %v1356
          %4742 = vmatprep.subr.bf16.mxu0 %v1361
          %4743 = vmatpush1.bf16.msra.mxu0 %v1360
          %4744 = vmatprep.subr.bf16.mxu0 %v1365
          %4745 = vmatpush1.bf16.msra.mxu0 %v1364
          %4746 = vmatprep.subr.bf16.mxu0 0
          %4747 = vmatpush1.bf16.msra.mxu0 0
          %4748 = vmatprep.subr.bf16.mxu0 0
          %4749 = vmatpush1.bf16.msra.mxu0 0
          %4750 = vmatprep.subr.bf16.mxu0 0
          %4751 = vmatpush1.bf16.msra.mxu0 0
          %4752 = vmatprep.subr.bf16.mxu0 0
          %4753 = vmatpush1.bf16.msra.mxu0 0
          %4754 = vmatprep.subr.bf16.mxu0 0
          %4755 = vmatpush1.bf16.msra.mxu0 0
          %4756 = vmatprep.subr.bf16.mxu0 0
          %4757 = vmatpush1.bf16.msra.mxu0 0
          %4758 = vmatprep.subr.bf16.mxu0 0
          %4759 = vmatpush1.bf16.msra.mxu0 0
          %4760 = vmatprep.subr.bf16.mxu0 0
          %4761 = vmatpush1.bf16.msra.mxu0 0
          %4762 = vmatprep.mubr.bf16.mxu0 0
          %4763 = vmatmul.mubr.bf16.gmra.mrb[0].mxu0 %v4686
          %v4764 = vpop.f32.mrb[0].mxu0
          %v4765 = vadd.f32 0.0, %v4764
          %v4766 = vpop.f32.mrb[0].mxu0
          %v4767 = vadd.f32 0.0, %v4766
          %v4768 = vpop.f32.mrb[0].mxu0
          %v4769 = vadd.f32 0.0, %v4768
          %v4770 = vpop.f32.mrb[0].mxu0
          %v4771 = vadd.f32 0.0, %v4770
          %4772 = vdwg.mxu0
          %4773 = vmatprep.subr.bf16.mxu0 %v1581
          %4774 = vmatpush1.bf16.msra.mxu0 %v1580
          %4775 = vmatprep.subr.bf16.mxu0 %v1585
          %4776 = vmatpush1.bf16.msra.mxu0 %v1584
          %4777 = vmatprep.subr.bf16.mxu0 %v1589
          %4778 = vmatpush1.bf16.msra.mxu0 %v1588
          %4779 = vmatprep.subr.bf16.mxu0 %v1593
          %4780 = vmatpush1.bf16.msra.mxu0 %v1592
          %4781 = vmatprep.subr.bf16.mxu0 %v1597
          %4782 = vmatpush1.bf16.msra.mxu0 %v1596
          %4783 = vmatprep.subr.bf16.mxu0 %v1601
          %4784 = vmatpush1.bf16.msra.mxu0 %v1600
          %4785 = vmatprep.subr.bf16.mxu0 %v1605
          %4786 = vmatpush1.bf16.msra.mxu0 %v1604
          %4787 = vmatprep.subr.bf16.mxu0 %v1609
          %4788 = vmatpush1.bf16.msra.mxu0 %v1608
          %4789 = vmatprep.subr.bf16.mxu0 0
          %4790 = vmatpush1.bf16.msra.mxu0 0
          %4791 = vmatprep.subr.bf16.mxu0 0
          %4792 = vmatpush1.bf16.msra.mxu0 0
          %4793 = vmatprep.subr.bf16.mxu0 0
          %4794 = vmatpush1.bf16.msra.mxu0 0
          %4795 = vmatprep.subr.bf16.mxu0 0
          %4796 = vmatpush1.bf16.msra.mxu0 0
          %4797 = vmatprep.subr.bf16.mxu0 0
          %4798 = vmatpush1.bf16.msra.mxu0 0
          %4799 = vmatprep.subr.bf16.mxu0 0
          %4800 = vmatpush1.bf16.msra.mxu0 0
          %4801 = vmatprep.subr.bf16.mxu0 0
          %4802 = vmatpush1.bf16.msra.mxu0 0
          %4803 = vmatprep.subr.bf16.mxu0 0
          %4804 = vmatpush1.bf16.msra.mxu0 0
          %4805 = vmatprep.mubr.bf16.mxu0 0
          %4806 = vmatmul.mubr.bf16.gmra.mrb[0].mxu0 %v4685
          %v4807 = vpop.f32.mrb[0].mxu0
          %v4808 = vadd.f32 %v4722, %v4807
          %v4809 = vpop.f32.mrb[0].mxu0
          %v4810 = vadd.f32 %v4724, %v4809
          %v4811 = vpop.f32.mrb[0].mxu0
          %v4812 = vadd.f32 %v4726, %v4811
          %v4813 = vpop.f32.mrb[0].mxu0
          %v4814 = vadd.f32 %v4728, %v4813
          %4815 = vdwg.mxu0
          %4816 = vmatprep.subr.bf16.mxu0 %v1583
          %4817 = vmatpush1.bf16.msra.mxu0 %v1582
          %4818 = vmatprep.subr.bf16.mxu0 %v1587
          %4819 = vmatpush1.bf16.msra.mxu0 %v1586
          %4820 = vmatprep.subr.bf16.mxu0 %v1591
          %4821 = vmatpush1.bf16.msra.mxu0 %v1590
          %4822 = vmatprep.subr.bf16.mxu0 %v1595
          %4823 = vmatpush1.bf16.msra.mxu0 %v1594
          %4824 = vmatprep.subr.bf16.mxu0 %v1599
          %4825 = vmatpush1.bf16.msra.mxu0 %v1598
          %4826 = vmatprep.subr.bf16.mxu0 %v1603
          %4827 = vmatpush1.bf16.msra.mxu0 %v1602
          %4828 = vmatprep.subr.bf16.mxu0 %v1607
          %4829 = vmatpush1.bf16.msra.mxu0 %v1606
          %4830 = vmatprep.subr.bf16.mxu0 %v1611
          %4831 = vmatpush1.bf16.msra.mxu0 %v1610
          %4832 = vmatprep.subr.bf16.mxu0 0
          %4833 = vmatpush1.bf16.msra.mxu0 0
          %4834 = vmatprep.subr.bf16.mxu0 0
          %4835 = vmatpush1.bf16.msra.mxu0 0
          %4836 = vmatprep.subr.bf16.mxu0 0
          %4837 = vmatpush1.bf16.msra.mxu0 0
          %4838 = vmatprep.subr.bf16.mxu0 0
          %4839 = vmatpush1.bf16.msra.mxu0 0
          %4840 = vmatprep.subr.bf16.mxu0 0
          %4841 = vmatpush1.bf16.msra.mxu0 0
          %4842 = vmatprep.subr.bf16.mxu0 0
          %4843 = vmatpush1.bf16.msra.mxu0 0
          %4844 = vmatprep.subr.bf16.mxu0 0
          %4845 = vmatpush1.bf16.msra.mxu0 0
          %4846 = vmatprep.subr.bf16.mxu0 0
          %4847 = vmatpush1.bf16.msra.mxu0 0
          %4848 = vmatprep.mubr.bf16.mxu0 0
          %4849 = vmatmul.mubr.bf16.gmra.mrb[0].mxu0 %v4685
          %v4850 = vpop.f32.mrb[0].mxu0
          %v4851 = vadd.f32 %v4765, %v4850
          %v4852 = vpop.f32.mrb[0].mxu0
          %v4853 = vadd.f32 %v4767, %v4852
          %v4854 = vpop.f32.mrb[0].mxu0
          %v4855 = vadd.f32 %v4769, %v4854
          %v4856 = vpop.f32.mrb[0].mxu0
          %v4857 = vadd.f32 %v4771, %v4856
          %4858 = vdwg.mxu0
          %v4859 = vadd.f32 %v4808, %v759
          %v4860 = vadd.f32 %v4810, %v763
          %v4861 = vadd.f32 %v4851, %v767
          %v4862 = vadd.f32 %v4853, %v771
          %v4863 = vadd.f32 %v4812, %v759
          %v4864 = vadd.f32 %v4814, %v763
          %v4865 = vadd.f32 %v4855, %v767
          %v4866 = vadd.f32 %v4857, %v771
          %v4867 = vxor.u32 %v4859, 2147483648
          %v4868 = vxor.u32 %v4860, 2147483648
          %v4869 = vxor.u32 %v4861, 2147483648
          %v4870 = vxor.u32 %v4863, 2147483648
          %v4871 = vxor.u32 %v4864, 2147483648
          %v4872 = vxor.u32 %v4865, 2147483648
          %v4873 = vmul.f32 %v4867, 1.442695
          %v4874 = vpow.pop %v4873
          %v4875 = vmul.f32 %v4868, 1.442695
          %v4876 = vpow.pop %v4875
          %v4877 = vmul.f32 %v4869, 1.442695
          %v4878 = vpow.pop %v4877
          %v4879 = vmul.f32 %v4870, 1.442695
          %v4880 = vpow.pop %v4879
          %v4881 = vmul.f32 %v4871, 1.442695
          %v4882 = vpow.pop %v4881
          %v4883 = vmul.f32 %v4872, 1.442695
          %v4884 = vpow.pop %v4883
          %v4885 = vadd.f32 %v4874, 1.0
          %v4886 = vadd.f32 %v4876, 1.0
          %v4887 = vadd.f32 %v4878, 1.0
          %v4888 = vadd.f32 %v4880, 1.0
          %v4889 = vadd.f32 %v4882, 1.0
          %v4890 = vadd.f32 %v4884, 1.0
          %v4891 = vrcp.pop %v4885
          %v4892 = vmul.f32 1.0, %v4891
          %v4893 = vrcp.pop %v4886
          %v4894 = vmul.f32 1.0, %v4893
          %v4895 = vrcp.pop %v4887
          %v4896 = vmul.f32 1.0, %v4895
          %v4897 = vrcp.pop %v4888
          %v4898 = vmul.f32 1.0, %v4897
          %v4899 = vrcp.pop %v4889
          %v4900 = vmul.f32 1.0, %v4899
          %v4901 = vrcp.pop %v4890
          %v4902 = vmul.f32 1.0, %v4901
          %v4903 = vtanh.pop %v4862
          %v4904 = vtanh.pop %v4866
          %v4905 = vmul.f32 %v4894, %v4462
          %v4906 = vmul.f32 %v4900, %v4463
          %v4907 = vmul.f32 %v4892, %v4903
          %v4908 = vmul.f32 %v4898, %v4904
          %v4909 = vadd.f32 %v4905, %v4907
          %v4910 = vadd.f32 %v4906, %v4908
          %v4911 = vtanh.pop %v4909
          %v4912 = vtanh.pop %v4910
          %v4913 = vmul.f32 %v4896, %v4911
          %v4914 = vmul.f32 %v4902, %v4912
          %v4915 = vld [vmem:[#allocation16] sm:$0xff]
          %v4916 = vld [vmem:[#allocation16 + $0x8] sm:$0xff]
          %v4917 = vld [vmem:[#allocation16 + $0x10] sm:$0xff]
          %v4918 = vld [vmem:[#allocation16 + $0x18] sm:$0xff]
          %v4919 = vld [vmem:[#allocation16 + $0x20] sm:$0xff]
          %v4920 = vld [vmem:[#allocation16 + $0x28] sm:$0xff]
          %v4921 = vld [vmem:[#allocation16 + $0x30] sm:$0xff]
          %v4922 = vld [vmem:[#allocation16 + $0x38] sm:$0xff]
          %v4923 = vld [vmem:[#allocation16 + $0x40] sm:$0xff]
          %v4924 = vld [vmem:[#allocation16 + $0x48] sm:$0xff]
          %v4925 = vld [vmem:[#allocation16 + $0x50] sm:$0xff]
          %v4926 = vld [vmem:[#allocation16 + $0x58] sm:$0xff]
          %v4927 = vld [vmem:[#allocation16 + $0x60] sm:$0xff]
          %v4928 = vld [vmem:[#allocation16 + $0x68] sm:$0xff]
          %v4929 = vld [vmem:[#allocation16 + $0x70] sm:$0xff]
          %v4930 = vld [vmem:[#allocation16 + $0x78] sm:$0xff]
          %v4931 = vld [vmem:[#allocation16 + $0x80] sm:$0xff]
          %v4932 = vld [vmem:[#allocation16 + $0x88] sm:$0xff]
          %v4933 = vld [vmem:[#allocation16 + $0x90] sm:$0xff]
          %v4934 = vld [vmem:[#allocation16 + $0x98] sm:$0xff]
          %v4935 = vld [vmem:[#allocation16 + $0xa0] sm:$0xff]
          %v4936 = vld [vmem:[#allocation16 + $0xa8] sm:$0xff]
          %v4937 = vld [vmem:[#allocation16 + $0xb0] sm:$0xff]
          %v4938 = vld [vmem:[#allocation16 + $0xb8] sm:$0xff]
          %v4939 = vld [vmem:[#allocation16 + $0xc0] sm:$0xff]
          %v4940 = vld [vmem:[#allocation16 + $0xc8] sm:$0xff]
          %v4941 = vld [vmem:[#allocation16 + $0xd0] sm:$0xff]
          %v4942 = vld [vmem:[#allocation16 + $0xd8] sm:$0xff]
          %v4943 = vld [vmem:[#allocation16 + $0xe0] sm:$0xff]
          %v4944 = vld [vmem:[#allocation16 + $0xe8] sm:$0xff]
          %v4945 = vld [vmem:[#allocation16 + $0xf0] sm:$0xff]
          %v4946 = vld [vmem:[#allocation16 + $0xf8] sm:$0xff]
          %v4947 = vld [vmem:[#allocation17] sm:$0xf]
          %v4949 = vlaneseq
          %v4950 = vshrl.u32 %v4949, 7
          %v4951 = vsub.s32 0, %v4950
          %v4952 = vrot.slane %v4947, %v4951
          %v4953 = vlaneseq
          %v4954 = vshrl.u32 %v4953, 7
          %v4955 = vsub.s32 2, %v4954
          %v4956 = vrot.slane %v4947, %v4955
          %v4957 = vlaneseq
          %v4958 = vshrl.u32 %v4957, 7
          %v4959 = vsub.s32 3, %v4958
          %v4960 = vrot.slane %v4947, %v4959
          %v4996 = vunpack.c.l.b16 %v4915
          %v4997 = vunpack.c.h.b16 %v4915
          %v4998 = vunpack.c.l.b16 %v4916
          %v4999 = vunpack.c.h.b16 %v4916
          %v5000 = vunpack.c.l.b16 %v4917
          %v5001 = vunpack.c.h.b16 %v4917
          %v5002 = vunpack.c.l.b16 %v4918
          %v5003 = vunpack.c.h.b16 %v4918
          %v5004 = vunpack.c.l.b16 %v4919
          %v5005 = vunpack.c.h.b16 %v4919
          %v5006 = vunpack.c.l.b16 %v4920
          %v5007 = vunpack.c.h.b16 %v4920
          %v5008 = vunpack.c.l.b16 %v4921
          %v5009 = vunpack.c.h.b16 %v4921
          %v5010 = vunpack.c.l.b16 %v4922
          %v5011 = vunpack.c.h.b16 %v4922
          %v5012 = vunpack.c.l.b16 %v4923
          %v5013 = vunpack.c.h.b16 %v4923
          %v5014 = vunpack.c.l.b16 %v4924
          %v5015 = vunpack.c.h.b16 %v4924
          %v5016 = vunpack.c.l.b16 %v4925
          %v5017 = vunpack.c.h.b16 %v4925
          %v5018 = vunpack.c.l.b16 %v4926
          %v5019 = vunpack.c.h.b16 %v4926
          %v5020 = vunpack.c.l.b16 %v4927
          %v5021 = vunpack.c.h.b16 %v4927
          %v5022 = vunpack.c.l.b16 %v4928
          %v5023 = vunpack.c.h.b16 %v4928
          %v5024 = vunpack.c.l.b16 %v4929
          %v5025 = vunpack.c.h.b16 %v4929
          %v5026 = vunpack.c.l.b16 %v4930
          %v5027 = vunpack.c.h.b16 %v4930
          %v5028 = vunpack.c.l.b16 %v4931
          %v5029 = vunpack.c.h.b16 %v4931
          %v5030 = vunpack.c.l.b16 %v4932
          %v5031 = vunpack.c.h.b16 %v4932
          %v5032 = vunpack.c.l.b16 %v4933
          %v5033 = vunpack.c.h.b16 %v4933
          %v5034 = vunpack.c.l.b16 %v4934
          %v5035 = vunpack.c.h.b16 %v4934
          %v5036 = vunpack.c.l.b16 %v4935
          %v5037 = vunpack.c.h.b16 %v4935
          %v5038 = vunpack.c.l.b16 %v4936
          %v5039 = vunpack.c.h.b16 %v4936
          %v5040 = vunpack.c.l.b16 %v4937
          %v5041 = vunpack.c.h.b16 %v4937
          %v5042 = vunpack.c.l.b16 %v4938
          %v5043 = vunpack.c.h.b16 %v4938
          %v5044 = vunpack.c.l.b16 %v4939
          %v5045 = vunpack.c.h.b16 %v4939
          %v5046 = vunpack.c.l.b16 %v4940
          %v5047 = vunpack.c.h.b16 %v4940
          %v5048 = vunpack.c.l.b16 %v4941
          %v5049 = vunpack.c.h.b16 %v4941
          %v5050 = vunpack.c.l.b16 %v4942
          %v5051 = vunpack.c.h.b16 %v4942
          %v5052 = vunpack.c.l.b16 %v4943
          %v5053 = vunpack.c.h.b16 %v4943
          %v5054 = vunpack.c.l.b16 %v4944
          %v5055 = vunpack.c.h.b16 %v4944
          %v5056 = vunpack.c.l.b16 %v4945
          %v5057 = vunpack.c.h.b16 %v4945
          %v5058 = vunpack.c.l.b16 %v4946
          %v5059 = vunpack.c.h.b16 %v4946
          %v5060 = vpack.c.b16 %v5000, %v4996
          %v5061 = vpack.c.b16 %v5001, %v4997
          %v5062 = vpack.c.b16 %v5002, %v4998
          %v5063 = vpack.c.b16 %v5003, %v4999
          %v5064 = vpack.c.b16 %v5008, %v5004
          %v5065 = vpack.c.b16 %v5009, %v5005
          %v5066 = vpack.c.b16 %v5010, %v5006
          %v5067 = vpack.c.b16 %v5011, %v5007
          %v5068 = vpack.c.b16 %v5016, %v5012
          %v5069 = vpack.c.b16 %v5017, %v5013
          %v5070 = vpack.c.b16 %v5018, %v5014
          %v5071 = vpack.c.b16 %v5019, %v5015
          %v5072 = vpack.c.b16 %v5024, %v5020
          %v5073 = vpack.c.b16 %v5025, %v5021
          %v5074 = vpack.c.b16 %v5026, %v5022
          %v5075 = vpack.c.b16 %v5027, %v5023
          %v5076 = vpack.c.b16 %v5032, %v5028
          %v5077 = vpack.c.b16 %v5033, %v5029
          %v5078 = vpack.c.b16 %v5034, %v5030
          %v5079 = vpack.c.b16 %v5035, %v5031
          %v5080 = vpack.c.b16 %v5040, %v5036
          %v5081 = vpack.c.b16 %v5041, %v5037
          %v5082 = vpack.c.b16 %v5042, %v5038
          %v5083 = vpack.c.b16 %v5043, %v5039
          %v5084 = vpack.c.b16 %v5048, %v5044
          %v5085 = vpack.c.b16 %v5049, %v5045
          %v5086 = vpack.c.b16 %v5050, %v5046
          %v5087 = vpack.c.b16 %v5051, %v5047
          %v5088 = vpack.c.b16 %v5056, %v5052
          %v5089 = vpack.c.b16 %v5057, %v5053
          %v5090 = vpack.c.b16 %v5058, %v5054
          %v5091 = vpack.c.b16 %v5059, %v5055
          %5124 = vmatprep.subr.bf16.mxu0 %v5061
          %5125 = vmatpush1.bf16.msra.mxu0 %v5060
          %5126 = vmatprep.subr.bf16.mxu0 %v5065
          %5127 = vmatpush1.bf16.msra.mxu0 %v5064
          %5128 = vmatprep.subr.bf16.mxu0 %v5069
          %5129 = vmatpush1.bf16.msra.mxu0 %v5068
          %5130 = vmatprep.subr.bf16.mxu0 %v5073
          %5131 = vmatpush1.bf16.msra.mxu0 %v5072
          %5132 = vmatprep.subr.bf16.mxu0 %v5077
          %5133 = vmatpush1.bf16.msra.mxu0 %v5076
          %5134 = vmatprep.subr.bf16.mxu0 %v5081
          %5135 = vmatpush1.bf16.msra.mxu0 %v5080
          %5136 = vmatprep.subr.bf16.mxu0 %v5085
          %5137 = vmatpush1.bf16.msra.mxu0 %v5084
          %5138 = vmatprep.subr.bf16.mxu0 %v5089
          %5139 = vmatpush1.bf16.msra.mxu0 %v5088
          %5140 = vmatprep.subr.bf16.mxu0 0
          %5141 = vmatpush1.bf16.msra.mxu0 0
          %5142 = vmatprep.subr.bf16.mxu0 0
          %5143 = vmatpush1.bf16.msra.mxu0 0
          %5144 = vmatprep.subr.bf16.mxu0 0
          %5145 = vmatpush1.bf16.msra.mxu0 0
          %5146 = vmatprep.subr.bf16.mxu0 0
          %5147 = vmatpush1.bf16.msra.mxu0 0
          %5148 = vmatprep.subr.bf16.mxu0 0
          %5149 = vmatpush1.bf16.msra.mxu0 0
          %5150 = vmatprep.subr.bf16.mxu0 0
          %5151 = vmatpush1.bf16.msra.mxu0 0
          %5152 = vmatprep.subr.bf16.mxu0 0
          %5153 = vmatpush1.bf16.msra.mxu0 0
          %5154 = vmatprep.subr.bf16.mxu0 0
          %5155 = vmatpush1.bf16.msra.mxu0 0
          %5156 = vmatprep.mubr.bf16.mxu0 0
          %5157 = vmatmul.mubr.bf16.gmra.mrb[0].mxu0 %v4686
          %v5158 = vpop.f32.mrb[0].mxu0
          %v5159 = vadd.f32 %v4952, %v5158
          %v5160 = vpop.f32.mrb[0].mxu0
          %v5161 = vpop.f32.mrb[0].mxu0
          %v5162 = vadd.f32 %v4952, %v5161
          %v5163 = vpop.f32.mrb[0].mxu0
          %5164 = vdwg.mxu0
          %5165 = vmatprep.subr.bf16.mxu0 %v5063
          %5166 = vmatpush1.bf16.msra.mxu0 %v5062
          %5167 = vmatprep.subr.bf16.mxu0 %v5067
          %5168 = vmatpush1.bf16.msra.mxu0 %v5066
          %5169 = vmatprep.subr.bf16.mxu0 %v5071
          %5170 = vmatpush1.bf16.msra.mxu0 %v5070
          %5171 = vmatprep.subr.bf16.mxu0 %v5075
          %5172 = vmatpush1.bf16.msra.mxu0 %v5074
          %5173 = vmatprep.subr.bf16.mxu0 %v5079
          %5174 = vmatpush1.bf16.msra.mxu0 %v5078
          %5175 = vmatprep.subr.bf16.mxu0 %v5083
          %5176 = vmatpush1.bf16.msra.mxu0 %v5082
          %5177 = vmatprep.subr.bf16.mxu0 %v5087
          %5178 = vmatpush1.bf16.msra.mxu0 %v5086
          %5179 = vmatprep.subr.bf16.mxu0 %v5091
          %5180 = vmatpush1.bf16.msra.mxu0 %v5090
          %5181 = vmatprep.subr.bf16.mxu0 0
          %5182 = vmatpush1.bf16.msra.mxu0 0
          %5183 = vmatprep.subr.bf16.mxu0 0
          %5184 = vmatpush1.bf16.msra.mxu0 0
          %5185 = vmatprep.subr.bf16.mxu0 0
          %5186 = vmatpush1.bf16.msra.mxu0 0
          %5187 = vmatprep.subr.bf16.mxu0 0
          %5188 = vmatpush1.bf16.msra.mxu0 0
          %5189 = vmatprep.subr.bf16.mxu0 0
          %5190 = vmatpush1.bf16.msra.mxu0 0
          %5191 = vmatprep.subr.bf16.mxu0 0
          %5192 = vmatpush1.bf16.msra.mxu0 0
          %5193 = vmatprep.subr.bf16.mxu0 0
          %5194 = vmatpush1.bf16.msra.mxu0 0
          %5195 = vmatprep.subr.bf16.mxu0 0
          %5196 = vmatpush1.bf16.msra.mxu0 0
          %5197 = vmatprep.mubr.bf16.mxu0 0
          %5198 = vmatmul.mubr.bf16.gmra.mrb[0].mxu0 %v4686
          %v5199 = vpop.f32.mrb[0].mxu0
          %v5200 = vadd.f32 %v4956, %v5199
          %v5201 = vpop.f32.mrb[0].mxu0
          %v5202 = vadd.f32 %v4960, %v5201
          %v5203 = vpop.f32.mrb[0].mxu0
          %v5204 = vadd.f32 %v4956, %v5203
          %v5205 = vpop.f32.mrb[0].mxu0
          %v5206 = vadd.f32 %v4960, %v5205
          %5207 = vdwg.mxu0
          %v5208 = vxor.u32 %v5159, 2147483648
          %v5209 = vxor.u32 %v5200, 2147483648
          %v5210 = vxor.u32 %v5162, 2147483648
          %v5211 = vxor.u32 %v5204, 2147483648
          %v5212 = vmul.f32 %v5208, 1.442695
          %v5213 = vpow.pop %v5212
          %v5214 = vmul.f32 %v5209, 1.442695
          %v5215 = vpow.pop %v5214
          %v5216 = vmul.f32 %v5210, 1.442695
          %v5217 = vpow.pop %v5216
          %v5218 = vmul.f32 %v5211, 1.442695
          %v5219 = vpow.pop %v5218
          %v5220 = vadd.f32 %v5213, 1.0
          %v5221 = vadd.f32 %v5215, 1.0
          %v5222 = vadd.f32 %v5217, 1.0
          %v5223 = vadd.f32 %v5219, 1.0
          %v5224 = vrcp.pop %v5220
          %v5225 = vmul.f32 1.0, %v5224
          %v5226 = vrcp.pop %v5221
          %v5227 = vmul.f32 1.0, %v5226
          %v5228 = vrcp.pop %v5222
          %v5229 = vmul.f32 1.0, %v5228
          %v5230 = vrcp.pop %v5223
          %v5231 = vmul.f32 1.0, %v5230
          %v5232 = vtanh.pop %v5202
          %v5233 = vtanh.pop %v5206
          %v5234 = vmul.f32 %v5225, %v5232
          %v5235 = vmul.f32 %v5229, %v5233
          %v5236 = vtanh.pop %v5234
          %v5237 = vtanh.pop %v5235
          %v5238 = vmul.f32 %v5227, %v5236
          %v5239 = vmul.f32 %v5231, %v5237
          %5240 = vst [vmem:[%s710] sm:$0xff] %v4913
          %5241 = vst [vmem:[%s710 + $0x10] sm:$0xff] %v4914
          %5242 = vst [vmem:[%s710 + $0x8] sm:$0xff] %v5238
          %5243 = vst [vmem:[%s710 + $0x18] sm:$0xff] %v5239
        $region140: #{tpu_custom_call.1} parent=83 // pred_fallthru
          _
        %p5244 = scmp.eq.s32.totalorder %s42, 1
        // Predicated region
        $region141: #{tpu_custom_call.1} parent=83 // pred_check
          %p5245 = pneg %p5244
        $region142: #{tpu_custom_call.1} parent=83 // pred_check_branch
          %5247 = sbr.rel (%p5245) target = $region144
        $region143: #{tpu_custom_call.1} parent=83 // pred_region
          %v5248 = vld [vmem:[#allocation22] sm:$0xf]
          %v5250 = vlaneseq
          %v5251 = vshrl.u32 %v5250, 7
          %v5252 = vsub.s32 0, %v5251
          %v5253 = vrot.slane %v5248, %v5252
          %v5254 = vlaneseq
          %v5255 = vshrl.u32 %v5254, 7
          %v5256 = vsub.s32 1, %v5255
          %v5257 = vrot.slane %v5248, %v5256
          %v5258 = vlaneseq
          %v5259 = vshrl.u32 %v5258, 7
          %v5260 = vsub.s32 2, %v5259
          %v5261 = vrot.slane %v5248, %v5260
          %v5262 = vlaneseq
          %v5263 = vshrl.u32 %v5262, 7
          %v5264 = vsub.s32 3, %v5263
          %v5265 = vrot.slane %v5248, %v5264
          %v5270 = vld [vmem:[#allocation5] sm:$0xff]
          %v5271 = vld [vmem:[#allocation5 + $0x8] sm:$0xff]
          %v5272 = vpack.c.bf16 %v5271, %v5270
          %v5273 = vld [vmem:[#allocation19] sm:$0xff]
          %v5274 = vld [vmem:[#allocation19 + $0x8] sm:$0xff]
          %v5275 = vld [vmem:[#allocation19 + $0x10] sm:$0xff]
          %v5276 = vld [vmem:[#allocation19 + $0x18] sm:$0xff]
          %v5277 = vld [vmem:[#allocation19 + $0x20] sm:$0xff]
          %v5278 = vld [vmem:[#allocation19 + $0x28] sm:$0xff]
          %v5279 = vld [vmem:[#allocation20] sm:$0xff]
          %v5280 = vld [vmem:[#allocation20 + $0x8] sm:$0xff]
          %v5281 = vld [vmem:[#allocation20 + $0x10] sm:$0xff]
          %v5282 = vld [vmem:[#allocation20 + $0x18] sm:$0xff]
          %v5283 = vld [vmem:[#allocation20 + $0x20] sm:$0xff]
          %v5284 = vld [vmem:[#allocation20 + $0x28] sm:$0xff]
          %v5285 = vld [vmem:[#allocation20 + $0x30] sm:$0xff]
          %v5286 = vld [vmem:[#allocation20 + $0x38] sm:$0xff]
          %v5287 = vld [vmem:[#allocation20 + $0x40] sm:$0xff]
          %v5288 = vld [vmem:[#allocation20 + $0x48] sm:$0xff]
          %v5289 = vld [vmem:[#allocation20 + $0x50] sm:$0xff]
          %v5290 = vld [vmem:[#allocation20 + $0x58] sm:$0xff]
          %v5291 = vld [vmem:[#allocation20 + $0x60] sm:$0xff]
          %v5292 = vld [vmem:[#allocation20 + $0x68] sm:$0xff]
          %v5293 = vld [vmem:[#allocation20 + $0x70] sm:$0xff]
          %v5294 = vld [vmem:[#allocation20 + $0x78] sm:$0xff]
          %v5295 = vld [vmem:[#allocation20 + $0x80] sm:$0xff]
          %v5296 = vld [vmem:[#allocation20 + $0x88] sm:$0xff]
          %v5297 = vld [vmem:[#allocation20 + $0x90] sm:$0xff]
          %v5298 = vld [vmem:[#allocation20 + $0x98] sm:$0xff]
          %v5299 = vld [vmem:[#allocation20 + $0xa0] sm:$0xff]
          %v5300 = vld [vmem:[#allocation20 + $0xa8] sm:$0xff]
          %v5301 = vld [vmem:[#allocation20 + $0xb0] sm:$0xff]
          %v5302 = vld [vmem:[#allocation20 + $0xb8] sm:$0xff]
          %v5303 = vld [vmem:[#allocation20 + $0xc0] sm:$0xff]
          %v5304 = vld [vmem:[#allocation20 + $0xc8] sm:$0xff]
          %v5305 = vld [vmem:[#allocation20 + $0xd0] sm:$0xff]
          %v5306 = vld [vmem:[#allocation20 + $0xd8] sm:$0xff]
          %v5307 = vld [vmem:[#allocation20 + $0xe0] sm:$0xff]
          %v5308 = vld [vmem:[#allocation20 + $0xe8] sm:$0xff]
          %v5309 = vld [vmem:[#allocation20 + $0xf0] sm:$0xff]
          %v5310 = vld [vmem:[#allocation20 + $0xf8] sm:$0xff]
          %v5343 = vunpack.c.l.b16 %v5279
          %v5344 = vunpack.c.h.b16 %v5279
          %v5345 = vunpack.c.l.b16 %v5280
          %v5346 = vunpack.c.h.b16 %v5280
          %v5347 = vunpack.c.l.b16 %v5281
          %v5348 = vunpack.c.h.b16 %v5281
          %v5349 = vunpack.c.l.b16 %v5282
          %v5350 = vunpack.c.h.b16 %v5282
          %v5351 = vunpack.c.l.b16 %v5283
          %v5352 = vunpack.c.h.b16 %v5283
          %v5353 = vunpack.c.l.b16 %v5284
          %v5354 = vunpack.c.h.b16 %v5284
          %v5355 = vunpack.c.l.b16 %v5285
          %v5356 = vunpack.c.h.b16 %v5285
          %v5357 = vunpack.c.l.b16 %v5286
          %v5358 = vunpack.c.h.b16 %v5286
          %v5359 = vunpack.c.l.b16 %v5287
          %v5360 = vunpack.c.h.b16 %v5287
          %v5361 = vunpack.c.l.b16 %v5288
          %v5362 = vunpack.c.h.b16 %v5288
          %v5363 = vunpack.c.l.b16 %v5289
          %v5364 = vunpack.c.h.b16 %v5289
          %v5365 = vunpack.c.l.b16 %v5290
          %v5366 = vunpack.c.h.b16 %v5290
          %v5367 = vunpack.c.l.b16 %v5291
          %v5368 = vunpack.c.h.b16 %v5291
          %v5369 = vunpack.c.l.b16 %v5292
          %v5370 = vunpack.c.h.b16 %v5292
          %v5371 = vunpack.c.l.b16 %v5293
          %v5372 = vunpack.c.h.b16 %v5293
          %v5373 = vunpack.c.l.b16 %v5294
          %v5374 = vunpack.c.h.b16 %v5294
          %v5375 = vunpack.c.l.b16 %v5295
          %v5376 = vunpack.c.h.b16 %v5295
          %v5377 = vunpack.c.l.b16 %v5296
          %v5378 = vunpack.c.h.b16 %v5296
          %v5379 = vunpack.c.l.b16 %v5297
          %v5380 = vunpack.c.h.b16 %v5297
          %v5381 = vunpack.c.l.b16 %v5298
          %v5382 = vunpack.c.h.b16 %v5298
          %v5383 = vunpack.c.l.b16 %v5299
          %v5384 = vunpack.c.h.b16 %v5299
          %v5385 = vunpack.c.l.b16 %v5300
          %v5386 = vunpack.c.h.b16 %v5300
          %v5387 = vunpack.c.l.b16 %v5301
          %v5388 = vunpack.c.h.b16 %v5301
          %v5389 = vunpack.c.l.b16 %v5302
          %v5390 = vunpack.c.h.b16 %v5302
          %v5391 = vunpack.c.l.b16 %v5303
          %v5392 = vunpack.c.h.b16 %v5303
          %v5393 = vunpack.c.l.b16 %v5304
          %v5394 = vunpack.c.h.b16 %v5304
          %v5395 = vunpack.c.l.b16 %v5305
          %v5396 = vunpack.c.h.b16 %v5305
          %v5397 = vunpack.c.l.b16 %v5306
          %v5398 = vunpack.c.h.b16 %v5306
          %v5399 = vunpack.c.l.b16 %v5307
          %v5400 = vunpack.c.h.b16 %v5307
          %v5401 = vunpack.c.l.b16 %v5308
          %v5402 = vunpack.c.h.b16 %v5308
          %v5403 = vunpack.c.l.b16 %v5309
          %v5404 = vunpack.c.h.b16 %v5309
          %v5405 = vunpack.c.l.b16 %v5310
          %v5406 = vunpack.c.h.b16 %v5310
          %v5407 = vpack.c.b16 %v5347, %v5343
          %v5408 = vpack.c.b16 %v5348, %v5344
          %v5409 = vpack.c.b16 %v5349, %v5345
          %v5410 = vpack.c.b16 %v5350, %v5346
          %v5411 = vpack.c.b16 %v5355, %v5351
          %v5412 = vpack.c.b16 %v5356, %v5352
          %v5413 = vpack.c.b16 %v5357, %v5353
          %v5414 = vpack.c.b16 %v5358, %v5354
          %v5415 = vpack.c.b16 %v5363, %v5359
          %v5416 = vpack.c.b16 %v5364, %v5360
          %v5417 = vpack.c.b16 %v5365, %v5361
          %v5418 = vpack.c.b16 %v5366, %v5362
          %v5419 = vpack.c.b16 %v5371, %v5367
          %v5420 = vpack.c.b16 %v5372, %v5368
          %v5421 = vpack.c.b16 %v5373, %v5369
          %v5422 = vpack.c.b16 %v5374, %v5370
          %v5423 = vpack.c.b16 %v5379, %v5375
          %v5424 = vpack.c.b16 %v5380, %v5376
          %v5425 = vpack.c.b16 %v5381, %v5377
          %v5426 = vpack.c.b16 %v5382, %v5378
          %v5427 = vpack.c.b16 %v5387, %v5383
          %v5428 = vpack.c.b16 %v5388, %v5384
          %v5429 = vpack.c.b16 %v5389, %v5385
          %v5430 = vpack.c.b16 %v5390, %v5386
          %v5431 = vpack.c.b16 %v5395, %v5391
          %v5432 = vpack.c.b16 %v5396, %v5392
          %v5433 = vpack.c.b16 %v5397, %v5393
          %v5434 = vpack.c.b16 %v5398, %v5394
          %v5435 = vpack.c.b16 %v5403, %v5399
          %v5436 = vpack.c.b16 %v5404, %v5400
          %v5437 = vpack.c.b16 %v5405, %v5401
          %v5438 = vpack.c.b16 %v5406, %v5402
          %5471 = vmatprep.subr.bf16.mxu0 %v5408
          %5472 = vmatpush1.bf16.msra.mxu0 %v5407
          %5473 = vmatprep.subr.bf16.mxu0 %v5412
          %5474 = vmatpush1.bf16.msra.mxu0 %v5411
          %5475 = vmatprep.subr.bf16.mxu0 %v5416
          %5476 = vmatpush1.bf16.msra.mxu0 %v5415
          %5477 = vmatprep.subr.bf16.mxu0 %v5420
          %5478 = vmatpush1.bf16.msra.mxu0 %v5419
          %5479 = vmatprep.subr.bf16.mxu0 %v5424
          %5480 = vmatpush1.bf16.msra.mxu0 %v5423
          %5481 = vmatprep.subr.bf16.mxu0 %v5428
          %5482 = vmatpush1.bf16.msra.mxu0 %v5427
          %5483 = vmatprep.subr.bf16.mxu0 %v5432
          %5484 = vmatpush1.bf16.msra.mxu0 %v5431
          %5485 = vmatprep.subr.bf16.mxu0 %v5436
          %5486 = vmatpush1.bf16.msra.mxu0 %v5435
          %5487 = vmatprep.subr.bf16.mxu0 0
          %5488 = vmatpush1.bf16.msra.mxu0 0
          %5489 = vmatprep.subr.bf16.mxu0 0
          %5490 = vmatpush1.bf16.msra.mxu0 0
          %5491 = vmatprep.subr.bf16.mxu0 0
          %5492 = vmatpush1.bf16.msra.mxu0 0
          %5493 = vmatprep.subr.bf16.mxu0 0
          %5494 = vmatpush1.bf16.msra.mxu0 0
          %5495 = vmatprep.subr.bf16.mxu0 0
          %5496 = vmatpush1.bf16.msra.mxu0 0
          %5497 = vmatprep.subr.bf16.mxu0 0
          %5498 = vmatpush1.bf16.msra.mxu0 0
          %5499 = vmatprep.subr.bf16.mxu0 0
          %5500 = vmatpush1.bf16.msra.mxu0 0
          %5501 = vmatprep.subr.bf16.mxu0 0
          %5502 = vmatpush1.bf16.msra.mxu0 0
          %5503 = vmatprep.mubr.bf16.mxu0 0
          %5504 = vmatmul.mubr.bf16.gmra.mrb[0].mxu0 0
          %v5505 = vpop.f32.mrb[0].mxu0
          %v5506 = vadd.f32 0.0, %v5505
          %v5507 = vpop.f32.mrb[0].mxu0
          %v5508 = vadd.f32 0.0, %v5507
          %v5509 = vpop.f32.mrb[0].mxu0
          %v5510 = vadd.f32 0.0, %v5509
          %v5511 = vpop.f32.mrb[0].mxu0
          %v5512 = vadd.f32 0.0, %v5511
          %5513 = vdwg.mxu0
          %5514 = vmatprep.subr.bf16.mxu0 %v5410
          %5515 = vmatpush1.bf16.msra.mxu0 %v5409
          %5516 = vmatprep.subr.bf16.mxu0 %v5414
          %5517 = vmatpush1.bf16.msra.mxu0 %v5413
          %5518 = vmatprep.subr.bf16.mxu0 %v5418
          %5519 = vmatpush1.bf16.msra.mxu0 %v5417
          %5520 = vmatprep.subr.bf16.mxu0 %v5422
          %5521 = vmatpush1.bf16.msra.mxu0 %v5421
          %5522 = vmatprep.subr.bf16.mxu0 %v5426
          %5523 = vmatpush1.bf16.msra.mxu0 %v5425
          %5524 = vmatprep.subr.bf16.mxu0 %v5430
          %5525 = vmatpush1.bf16.msra.mxu0 %v5429
          %5526 = vmatprep.subr.bf16.mxu0 %v5434
          %5527 = vmatpush1.bf16.msra.mxu0 %v5433
          %5528 = vmatprep.subr.bf16.mxu0 %v5438
          %5529 = vmatpush1.bf16.msra.mxu0 %v5437
          %5530 = vmatprep.subr.bf16.mxu0 0
          %5531 = vmatpush1.bf16.msra.mxu0 0
          %5532 = vmatprep.subr.bf16.mxu0 0
          %5533 = vmatpush1.bf16.msra.mxu0 0
          %5534 = vmatprep.subr.bf16.mxu0 0
          %5535 = vmatpush1.bf16.msra.mxu0 0
          %5536 = vmatprep.subr.bf16.mxu0 0
          %5537 = vmatpush1.bf16.msra.mxu0 0
          %5538 = vmatprep.subr.bf16.mxu0 0
          %5539 = vmatpush1.bf16.msra.mxu0 0
          %5540 = vmatprep.subr.bf16.mxu0 0
          %5541 = vmatpush1.bf16.msra.mxu0 0
          %5542 = vmatprep.subr.bf16.mxu0 0
          %5543 = vmatpush1.bf16.msra.mxu0 0
          %5544 = vmatprep.subr.bf16.mxu0 0
          %5545 = vmatpush1.bf16.msra.mxu0 0
          %5546 = vmatprep.mubr.bf16.mxu0 0
          %5547 = vmatmul.mubr.bf16.gmra.mrb[0].mxu0 0
          %v5548 = vpop.f32.mrb[0].mxu0
          %v5549 = vadd.f32 0.0, %v5548
          %v5550 = vpop.f32.mrb[0].mxu0
          %v5551 = vadd.f32 0.0, %v5550
          %v5552 = vpop.f32.mrb[0].mxu0
          %v5553 = vadd.f32 0.0, %v5552
          %v5554 = vpop.f32.mrb[0].mxu0
          %v5555 = vadd.f32 0.0, %v5554
          %5556 = vdwg.mxu0
          %v5563 = vunpack.c.l.b16 %v5273
          %v5564 = vunpack.c.h.b16 %v5273
          %v5565 = vunpack.c.l.b16 %v5274
          %v5566 = vunpack.c.h.b16 %v5274
          %v5567 = vunpack.c.l.b16 %v5275
          %v5568 = vunpack.c.h.b16 %v5275
          %v5569 = vunpack.c.l.b16 %v5276
          %v5570 = vunpack.c.h.b16 %v5276
          %v5571 = vunpack.c.l.b16 %v5277
          %v5572 = vunpack.c.h.b16 %v5277
          %v5573 = vunpack.c.l.b16 %v5278
          %v5574 = vunpack.c.h.b16 %v5278
          %v5575 = vpack.c.b16 %v5567, %v5563
          %v5576 = vpack.c.b16 %v5568, %v5564
          %v5577 = vpack.c.b16 %v5569, %v5565
          %v5578 = vpack.c.b16 %v5570, %v5566
          %v5579 = vpack.c.b16 %v5571, %v5571
          %v5580 = vpack.c.b16 %v5572, %v5572
          %v5581 = vpack.c.b16 %v5573, %v5573
          %v5582 = vpack.c.b16 %v5574, %v5574
          %vm5587 = vcmask 195584
          %v5589 = vsel %vm5587, %v5272, 0
          %vm5591 = vcmask 1043456
          %v5593 = vsel %vm5591, %v5579, 0
          %v5596 = vsel %vm5591, %v5580, 0
          %v5599 = vsel %vm5591, %v5581, 0
          %v5602 = vsel %vm5591, %v5582, 0
          %5604 = vmatprep.subr.bf16.mxu0 %v5576
          %5605 = vmatpush1.bf16.msra.mxu0 %v5575
          %5606 = vmatprep.subr.bf16.mxu0 %v5596
          %5607 = vmatpush1.bf16.msra.mxu0 %v5593
          %5608 = vmatprep.subr.bf16.mxu0 0
          %5609 = vmatpush1.bf16.msra.mxu0 0
          %5610 = vmatprep.subr.bf16.mxu0 0
          %5611 = vmatpush1.bf16.msra.mxu0 0
          %5612 = vmatprep.subr.bf16.mxu0 0
          %5613 = vmatpush1.bf16.msra.mxu0 0
          %5614 = vmatprep.subr.bf16.mxu0 0
          %5615 = vmatpush1.bf16.msra.mxu0 0
          %5616 = vmatprep.subr.bf16.mxu0 0
          %5617 = vmatpush1.bf16.msra.mxu0 0
          %5618 = vmatprep.subr.bf16.mxu0 0
          %5619 = vmatpush1.bf16.msra.mxu0 0
          %5620 = vmatprep.subr.bf16.mxu0 0
          %5621 = vmatpush1.bf16.msra.mxu0 0
          %5622 = vmatprep.subr.bf16.mxu0 0
          %5623 = vmatpush1.bf16.msra.mxu0 0
          %5624 = vmatprep.subr.bf16.mxu0 0
          %5625 = vmatpush1.bf16.msra.mxu0 0
          %5626 = vmatprep.subr.bf16.mxu0 0
          %5627 = vmatpush1.bf16.msra.mxu0 0
          %5628 = vmatprep.subr.bf16.mxu0 0
          %5629 = vmatpush1.bf16.msra.mxu0 0
          %5630 = vmatprep.subr.bf16.mxu0 0
          %5631 = vmatpush1.bf16.msra.mxu0 0
          %5632 = vmatprep.subr.bf16.mxu0 0
          %5633 = vmatpush1.bf16.msra.mxu0 0
          %5634 = vmatprep.subr.bf16.mxu0 0
          %5635 = vmatpush1.bf16.msra.mxu0 0
          %5636 = vmatprep.mubr.bf16.mxu0 0
          %5637 = vmatmul.mubr.bf16.gmra.mrb[0].mxu0 %v5589
          %v5638 = vpop.f32.mrb[0].mxu0
          %v5639 = vadd.f32 %v5506, %v5638
          %v5640 = vpop.f32.mrb[0].mxu0
          %v5641 = vadd.f32 %v5508, %v5640
          %v5642 = vpop.f32.mrb[0].mxu0
          %v5643 = vadd.f32 %v5510, %v5642
          %v5644 = vpop.f32.mrb[0].mxu0
          %v5645 = vadd.f32 %v5512, %v5644
          %5646 = vdwg.mxu0
          %5647 = vmatprep.subr.bf16.mxu0 %v5578
          %5648 = vmatpush1.bf16.msra.mxu0 %v5577
          %5649 = vmatprep.subr.bf16.mxu0 %v5602
          %5650 = vmatpush1.bf16.msra.mxu0 %v5599
          %5651 = vmatprep.subr.bf16.mxu0 0
          %5652 = vmatpush1.bf16.msra.mxu0 0
          %5653 = vmatprep.subr.bf16.mxu0 0
          %5654 = vmatpush1.bf16.msra.mxu0 0
          %5655 = vmatprep.subr.bf16.mxu0 0
          %5656 = vmatpush1.bf16.msra.mxu0 0
          %5657 = vmatprep.subr.bf16.mxu0 0
          %5658 = vmatpush1.bf16.msra.mxu0 0
          %5659 = vmatprep.subr.bf16.mxu0 0
          %5660 = vmatpush1.bf16.msra.mxu0 0
          %5661 = vmatprep.subr.bf16.mxu0 0
          %5662 = vmatpush1.bf16.msra.mxu0 0
          %5663 = vmatprep.subr.bf16.mxu0 0
          %5664 = vmatpush1.bf16.msra.mxu0 0
          %5665 = vmatprep.subr.bf16.mxu0 0
          %5666 = vmatpush1.bf16.msra.mxu0 0
          %5667 = vmatprep.subr.bf16.mxu0 0
          %5668 = vmatpush1.bf16.msra.mxu0 0
          %5669 = vmatprep.subr.bf16.mxu0 0
          %5670 = vmatpush1.bf16.msra.mxu0 0
          %5671 = vmatprep.subr.bf16.mxu0 0
          %5672 = vmatpush1.bf16.msra.mxu0 0
          %5673 = vmatprep.subr.bf16.mxu0 0
          %5674 = vmatpush1.bf16.msra.mxu0 0
          %5675 = vmatprep.subr.bf16.mxu0 0
          %5676 = vmatpush1.bf16.msra.mxu0 0
          %5677 = vmatprep.subr.bf16.mxu0 0
          %5678 = vmatpush1.bf16.msra.mxu0 0
          %5679 = vmatprep.mubr.bf16.mxu0 0
          %5680 = vmatmul.mubr.bf16.gmra.mrb[0].mxu0 %v5589
          %v5681 = vpop.f32.mrb[0].mxu0
          %v5682 = vadd.f32 %v5549, %v5681
          %v5683 = vpop.f32.mrb[0].mxu0
          %v5684 = vadd.f32 %v5551, %v5683
          %v5685 = vpop.f32.mrb[0].mxu0
          %v5686 = vadd.f32 %v5553, %v5685
          %v5687 = vpop.f32.mrb[0].mxu0
          %v5688 = vadd.f32 %v5555, %v5687
          %5689 = vdwg.mxu0
          %v5690 = vadd.f32 %v5639, %v5253
          %v5691 = vadd.f32 %v5641, %v5257
          %v5692 = vadd.f32 %v5682, %v5261
          %v5693 = vadd.f32 %v5684, %v5265
          %v5694 = vadd.f32 %v5643, %v5253
          %v5695 = vadd.f32 %v5645, %v5257
          %v5696 = vadd.f32 %v5686, %v5261
          %v5697 = vadd.f32 %v5688, %v5265
          %v5698 = vxor.u32 %v5690, 2147483648
          %v5699 = vxor.u32 %v5691, 2147483648
          %v5700 = vxor.u32 %v5692, 2147483648
          %v5701 = vxor.u32 %v5694, 2147483648
          %v5702 = vxor.u32 %v5695, 2147483648
          %v5703 = vxor.u32 %v5696, 2147483648
          %v5704 = vmul.f32 %v5698, 1.442695
          %v5705 = vpow.pop %v5704
          %v5706 = vmul.f32 %v5699, 1.442695
          %v5707 = vpow.pop %v5706
          %v5708 = vmul.f32 %v5700, 1.442695
          %v5709 = vpow.pop %v5708
          %v5710 = vmul.f32 %v5701, 1.442695
          %v5711 = vpow.pop %v5710
          %v5712 = vmul.f32 %v5702, 1.442695
          %v5713 = vpow.pop %v5712
          %v5714 = vmul.f32 %v5703, 1.442695
          %v5715 = vpow.pop %v5714
          %v5716 = vadd.f32 %v5705, 1.0
          %v5717 = vadd.f32 %v5707, 1.0
          %v5718 = vadd.f32 %v5709, 1.0
          %v5719 = vadd.f32 %v5711, 1.0
          %v5720 = vadd.f32 %v5713, 1.0
          %v5721 = vadd.f32 %v5715, 1.0
          %v5722 = vrcp.pop %v5716
          %v5723 = vmul.f32 1.0, %v5722
          %v5724 = vrcp.pop %v5717
          %v5725 = vmul.f32 1.0, %v5724
          %v5726 = vrcp.pop %v5718
          %v5727 = vmul.f32 1.0, %v5726
          %v5728 = vrcp.pop %v5719
          %v5729 = vmul.f32 1.0, %v5728
          %v5730 = vrcp.pop %v5720
          %v5731 = vmul.f32 1.0, %v5730
          %v5732 = vrcp.pop %v5721
          %v5733 = vmul.f32 1.0, %v5732
          %v5734 = vtanh.pop %v5693
          %v5735 = vtanh.pop %v5697
          %v5736 = vmul.f32 %v5725, 0.0
          %v5737 = vmul.f32 %v5731, 0.0
          %v5738 = vmul.f32 %v5723, %v5734
          %v5739 = vmul.f32 %v5729, %v5735
          %v5740 = vadd.f32 %v5736, %v5738
          %v5741 = vadd.f32 %v5737, %v5739
          %v5742 = vtanh.pop %v5740
          %v5743 = vtanh.pop %v5741
          %v5744 = vmul.f32 %v5727, %v5742
          %v5745 = vmul.f32 %v5733, %v5743
          %s5746 = scalar_lea.vmem [#allocation5], 16
          %v5747 = vld [vmem:[%s5746] sm:$0xff]
          %v5748 = vld [vmem:[%s5746 + $0x8] sm:$0xff]
          %v5749 = vpack.c.bf16 %v5748, %v5747
          %v5750 = vpack.c.bf16 %v5745, %v5744
          %5751 = vmatprep.subr.bf16.mxu0 %v5408
          %5752 = vmatpush1.bf16.msra.mxu0 %v5407
          %5753 = vmatprep.subr.bf16.mxu0 %v5412
          %5754 = vmatpush1.bf16.msra.mxu0 %v5411
          %5755 = vmatprep.subr.bf16.mxu0 %v5416
          %5756 = vmatpush1.bf16.msra.mxu0 %v5415
          %5757 = vmatprep.subr.bf16.mxu0 %v5420
          %5758 = vmatpush1.bf16.msra.mxu0 %v5419
          %5759 = vmatprep.subr.bf16.mxu0 %v5424
          %5760 = vmatpush1.bf16.msra.mxu0 %v5423
          %5761 = vmatprep.subr.bf16.mxu0 %v5428
          %5762 = vmatpush1.bf16.msra.mxu0 %v5427
          %5763 = vmatprep.subr.bf16.mxu0 %v5432
          %5764 = vmatpush1.bf16.msra.mxu0 %v5431
          %5765 = vmatprep.subr.bf16.mxu0 %v5436
          %5766 = vmatpush1.bf16.msra.mxu0 %v5435
          %5767 = vmatprep.subr.bf16.mxu0 0
          %5768 = vmatpush1.bf16.msra.mxu0 0
          %5769 = vmatprep.subr.bf16.mxu0 0
          %5770 = vmatpush1.bf16.msra.mxu0 0
          %5771 = vmatprep.subr.bf16.mxu0 0
          %5772 = vmatpush1.bf16.msra.mxu0 0
          %5773 = vmatprep.subr.bf16.mxu0 0
          %5774 = vmatpush1.bf16.msra.mxu0 0
          %5775 = vmatprep.subr.bf16.mxu0 0
          %5776 = vmatpush1.bf16.msra.mxu0 0
          %5777 = vmatprep.subr.bf16.mxu0 0
          %5778 = vmatpush1.bf16.msra.mxu0 0
          %5779 = vmatprep.subr.bf16.mxu0 0
          %5780 = vmatpush1.bf16.msra.mxu0 0
          %5781 = vmatprep.subr.bf16.mxu0 0
          %5782 = vmatpush1.bf16.msra.mxu0 0
          %5783 = vmatprep.mubr.bf16.mxu0 0
          %5784 = vmatmul.mubr.bf16.gmra.mrb[0].mxu0 %v5750
          %v5785 = vpop.f32.mrb[0].mxu0
          %v5786 = vadd.f32 0.0, %v5785
          %v5787 = vpop.f32.mrb[0].mxu0
          %v5788 = vadd.f32 0.0, %v5787
          %v5789 = vpop.f32.mrb[0].mxu0
          %v5790 = vadd.f32 0.0, %v5789
          %v5791 = vpop.f32.mrb[0].mxu0
          %v5792 = vadd.f32 0.0, %v5791
          %5793 = vdwg.mxu0
          %5794 = vmatprep.subr.bf16.mxu0 %v5410
          %5795 = vmatpush1.bf16.msra.mxu0 %v5409
          %5796 = vmatprep.subr.bf16.mxu0 %v5414
          %5797 = vmatpush1.bf16.msra.mxu0 %v5413
          %5798 = vmatprep.subr.bf16.mxu0 %v5418
          %5799 = vmatpush1.bf16.msra.mxu0 %v5417
          %5800 = vmatprep.subr.bf16.mxu0 %v5422
          %5801 = vmatpush1.bf16.msra.mxu0 %v5421
          %5802 = vmatprep.subr.bf16.mxu0 %v5426
          %5803 = vmatpush1.bf16.msra.mxu0 %v5425
          %5804 = vmatprep.subr.bf16.mxu0 %v5430
          %5805 = vmatpush1.bf16.msra.mxu0 %v5429
          %5806 = vmatprep.subr.bf16.mxu0 %v5434
          %5807 = vmatpush1.bf16.msra.mxu0 %v5433
          %5808 = vmatprep.subr.bf16.mxu0 %v5438
          %5809 = vmatpush1.bf16.msra.mxu0 %v5437
          %5810 = vmatprep.subr.bf16.mxu0 0
          %5811 = vmatpush1.bf16.msra.mxu0 0
          %5812 = vmatprep.subr.bf16.mxu0 0
          %5813 = vmatpush1.bf16.msra.mxu0 0
          %5814 = vmatprep.subr.bf16.mxu0 0
          %5815 = vmatpush1.bf16.msra.mxu0 0
          %5816 = vmatprep.subr.bf16.mxu0 0
          %5817 = vmatpush1.bf16.msra.mxu0 0
          %5818 = vmatprep.subr.bf16.mxu0 0
          %5819 = vmatpush1.bf16.msra.mxu0 0
          %5820 = vmatprep.subr.bf16.mxu0 0
          %5821 = vmatpush1.bf16.msra.mxu0 0
          %5822 = vmatprep.subr.bf16.mxu0 0
          %5823 = vmatpush1.bf16.msra.mxu0 0
          %5824 = vmatprep.subr.bf16.mxu0 0
          %5825 = vmatpush1.bf16.msra.mxu0 0
          %5826 = vmatprep.mubr.bf16.mxu0 0
          %5827 = vmatmul.mubr.bf16.gmra.mrb[0].mxu0 %v5750
          %v5828 = vpop.f32.mrb[0].mxu0
          %v5829 = vadd.f32 0.0, %v5828
          %v5830 = vpop.f32.mrb[0].mxu0
          %v5831 = vadd.f32 0.0, %v5830
          %v5832 = vpop.f32.mrb[0].mxu0
          %v5833 = vadd.f32 0.0, %v5832
          %v5834 = vpop.f32.mrb[0].mxu0
          %v5835 = vadd.f32 0.0, %v5834
          %5836 = vdwg.mxu0
          %v5838 = vsel %vm5587, %v5749, 0
          %5840 = vmatprep.subr.bf16.mxu0 %v5576
          %5841 = vmatpush1.bf16.msra.mxu0 %v5575
          %5842 = vmatprep.subr.bf16.mxu0 %v5596
          %5843 = vmatpush1.bf16.msra.mxu0 %v5593
          %5844 = vmatprep.subr.bf16.mxu0 0
          %5845 = vmatpush1.bf16.msra.mxu0 0
          %5846 = vmatprep.subr.bf16.mxu0 0
          %5847 = vmatpush1.bf16.msra.mxu0 0
          %5848 = vmatprep.subr.bf16.mxu0 0
          %5849 = vmatpush1.bf16.msra.mxu0 0
          %5850 = vmatprep.subr.bf16.mxu0 0
          %5851 = vmatpush1.bf16.msra.mxu0 0
          %5852 = vmatprep.subr.bf16.mxu0 0
          %5853 = vmatpush1.bf16.msra.mxu0 0
          %5854 = vmatprep.subr.bf16.mxu0 0
          %5855 = vmatpush1.bf16.msra.mxu0 0
          %5856 = vmatprep.subr.bf16.mxu0 0
          %5857 = vmatpush1.bf16.msra.mxu0 0
          %5858 = vmatprep.subr.bf16.mxu0 0
          %5859 = vmatpush1.bf16.msra.mxu0 0
          %5860 = vmatprep.subr.bf16.mxu0 0
          %5861 = vmatpush1.bf16.msra.mxu0 0
          %5862 = vmatprep.subr.bf16.mxu0 0
          %5863 = vmatpush1.bf16.msra.mxu0 0
          %5864 = vmatprep.subr.bf16.mxu0 0
          %5865 = vmatpush1.bf16.msra.mxu0 0
          %5866 = vmatprep.subr.bf16.mxu0 0
          %5867 = vmatpush1.bf16.msra.mxu0 0
          %5868 = vmatprep.subr.bf16.mxu0 0
          %5869 = vmatpush1.bf16.msra.mxu0 0
          %5870 = vmatprep.subr.bf16.mxu0 0
          %5871 = vmatpush1.bf16.msra.mxu0 0
          %5872 = vmatprep.mubr.bf16.mxu0 0
          %5873 = vmatmul.mubr.bf16.gmra.mrb[0].mxu0 %v5838
          %v5874 = vpop.f32.mrb[0].mxu0
          %v5875 = vadd.f32 %v5786, %v5874
          %v5876 = vpop.f32.mrb[0].mxu0
          %v5877 = vadd.f32 %v5788, %v5876
          %v5878 = vpop.f32.mrb[0].mxu0
          %v5879 = vadd.f32 %v5790, %v5878
          %v5880 = vpop.f32.mrb[0].mxu0
          %v5881 = vadd.f32 %v5792, %v5880
          %5882 = vdwg.mxu0
          %5883 = vmatprep.subr.bf16.mxu0 %v5578
          %5884 = vmatpush1.bf16.msra.mxu0 %v5577
          %5885 = vmatprep.subr.bf16.mxu0 %v5602
          %5886 = vmatpush1.bf16.msra.mxu0 %v5599
          %5887 = vmatprep.subr.bf16.mxu0 0
          %5888 = vmatpush1.bf16.msra.mxu0 0
          %5889 = vmatprep.subr.bf16.mxu0 0
          %5890 = vmatpush1.bf16.msra.mxu0 0
          %5891 = vmatprep.subr.bf16.mxu0 0
          %5892 = vmatpush1.bf16.msra.mxu0 0
          %5893 = vmatprep.subr.bf16.mxu0 0
          %5894 = vmatpush1.bf16.msra.mxu0 0
          %5895 = vmatprep.subr.bf16.mxu0 0
          %5896 = vmatpush1.bf16.msra.mxu0 0
          %5897 = vmatprep.subr.bf16.mxu0 0
          %5898 = vmatpush1.bf16.msra.mxu0 0
          %5899 = vmatprep.subr.bf16.mxu0 0
          %5900 = vmatpush1.bf16.msra.mxu0 0
          %5901 = vmatprep.subr.bf16.mxu0 0
          %5902 = vmatpush1.bf16.msra.mxu0 0
          %5903 = vmatprep.subr.bf16.mxu0 0
          %5904 = vmatpush1.bf16.msra.mxu0 0
          %5905 = vmatprep.subr.bf16.mxu0 0
          %5906 = vmatpush1.bf16.msra.mxu0 0
          %5907 = vmatprep.subr.bf16.mxu0 0
          %5908 = vmatpush1.bf16.msra.mxu0 0
          %5909 = vmatprep.subr.bf16.mxu0 0
          %5910 = vmatpush1.bf16.msra.mxu0 0
          %5911 = vmatprep.subr.bf16.mxu0 0
          %5912 = vmatpush1.bf16.msra.mxu0 0
          %5913 = vmatprep.subr.bf16.mxu0 0
          %5914 = vmatpush1.bf16.msra.mxu0 0
          %5915 = vmatprep.mubr.bf16.mxu0 0
          %5916 = vmatmul.mubr.bf16.gmra.mrb[0].mxu0 %v5838
          %v5917 = vpop.f32.mrb[0].mxu0
          %v5918 = vadd.f32 %v5829, %v5917
          %v5919 = vpop.f32.mrb[0].mxu0
          %v5920 = vadd.f32 %v5831, %v5919
          %v5921 = vpop.f32.mrb[0].mxu0
          %v5922 = vadd.f32 %v5833, %v5921
          %v5923 = vpop.f32.mrb[0].mxu0
          %v5924 = vadd.f32 %v5835, %v5923
          %5925 = vdwg.mxu0
          %v5926 = vadd.f32 %v5875, %v5253
          %v5927 = vadd.f32 %v5877, %v5257
          %v5928 = vadd.f32 %v5918, %v5261
          %v5929 = vadd.f32 %v5920, %v5265
          %v5930 = vadd.f32 %v5879, %v5253
          %v5931 = vadd.f32 %v5881, %v5257
          %v5932 = vadd.f32 %v5922, %v5261
          %v5933 = vadd.f32 %v5924, %v5265
          %v5934 = vxor.u32 %v5926, 2147483648
          %v5935 = vxor.u32 %v5927, 2147483648
          %v5936 = vxor.u32 %v5928, 2147483648
          %v5937 = vxor.u32 %v5930, 2147483648
          %v5938 = vxor.u32 %v5931, 2147483648
          %v5939 = vxor.u32 %v5932, 2147483648
          %v5940 = vmul.f32 %v5934, 1.442695
          %v5941 = vpow.pop %v5940
          %v5942 = vmul.f32 %v5935, 1.442695
          %v5943 = vpow.pop %v5942
          %v5944 = vmul.f32 %v5936, 1.442695
          %v5945 = vpow.pop %v5944
          %v5946 = vmul.f32 %v5937, 1.442695
          %v5947 = vpow.pop %v5946
          %v5948 = vmul.f32 %v5938, 1.442695
          %v5949 = vpow.pop %v5948
          %v5950 = vmul.f32 %v5939, 1.442695
          %v5951 = vpow.pop %v5950
          %v5952 = vadd.f32 %v5941, 1.0
          %v5953 = vadd.f32 %v5943, 1.0
          %v5954 = vadd.f32 %v5945, 1.0
          %v5955 = vadd.f32 %v5947, 1.0
          %v5956 = vadd.f32 %v5949, 1.0
          %v5957 = vadd.f32 %v5951, 1.0
          %v5958 = vrcp.pop %v5952
          %v5959 = vmul.f32 1.0, %v5958
          %v5960 = vrcp.pop %v5953
          %v5961 = vmul.f32 1.0, %v5960
          %v5962 = vrcp.pop %v5954
          %v5963 = vmul.f32 1.0, %v5962
          %v5964 = vrcp.pop %v5955
          %v5965 = vmul.f32 1.0, %v5964
          %v5966 = vrcp.pop %v5956
          %v5967 = vmul.f32 1.0, %v5966
          %v5968 = vrcp.pop %v5957
          %v5969 = vmul.f32 1.0, %v5968
          %v5970 = vtanh.pop %v5929
          %v5971 = vtanh.pop %v5933
          %v5972 = vmul.f32 %v5961, %v5740
          %v5973 = vmul.f32 %v5967, %v5741
          %v5974 = vmul.f32 %v5959, %v5970
          %v5975 = vmul.f32 %v5965, %v5971
          %v5976 = vadd.f32 %v5972, %v5974
          %v5977 = vadd.f32 %v5973, %v5975
          %v5978 = vtanh.pop %v5976
          %v5979 = vtanh.pop %v5977
          %v5980 = vmul.f32 %v5963, %v5978
          %v5981 = vmul.f32 %v5969, %v5979
          %s5982 = scalar_lea.vmem [#allocation5], 32
          %v5983 = vld [vmem:[%s5982] sm:$0xff]
          %v5984 = vld [vmem:[%s5982 + $0x8] sm:$0xff]
          %v5985 = vpack.c.bf16 %v5984, %v5983
          %v5986 = vpack.c.bf16 %v5981, %v5980
          %5987 = vmatprep.subr.bf16.mxu0 %v5408
          %5988 = vmatpush1.bf16.msra.mxu0 %v5407
          %5989 = vmatprep.subr.bf16.mxu0 %v5412
          %5990 = vmatpush1.bf16.msra.mxu0 %v5411
          %5991 = vmatprep.subr.bf16.mxu0 %v5416
          %5992 = vmatpush1.bf16.msra.mxu0 %v5415
          %5993 = vmatprep.subr.bf16.mxu0 %v5420
          %5994 = vmatpush1.bf16.msra.mxu0 %v5419
          %5995 = vmatprep.subr.bf16.mxu0 %v5424
          %5996 = vmatpush1.bf16.msra.mxu0 %v5423
          %5997 = vmatprep.subr.bf16.mxu0 %v5428
          %5998 = vmatpush1.bf16.msra.mxu0 %v5427
          %5999 = vmatprep.subr.bf16.mxu0 %v5432
          %6000 = vmatpush1.bf16.msra.mxu0 %v5431
          %6001 = vmatprep.subr.bf16.mxu0 %v5436
          %6002 = vmatpush1.bf16.msra.mxu0 %v5435
          %6003 = vmatprep.subr.bf16.mxu0 0
          %6004 = vmatpush1.bf16.msra.mxu0 0
          %6005 = vmatprep.subr.bf16.mxu0 0
          %6006 = vmatpush1.bf16.msra.mxu0 0
          %6007 = vmatprep.subr.bf16.mxu0 0
          %6008 = vmatpush1.bf16.msra.mxu0 0
          %6009 = vmatprep.subr.bf16.mxu0 0
          %6010 = vmatpush1.bf16.msra.mxu0 0
          %6011 = vmatprep.subr.bf16.mxu0 0
          %6012 = vmatpush1.bf16.msra.mxu0 0
          %6013 = vmatprep.subr.bf16.mxu0 0
          %6014 = vmatpush1.bf16.msra.mxu0 0
          %6015 = vmatprep.subr.bf16.mxu0 0
          %6016 = vmatpush1.bf16.msra.mxu0 0
          %6017 = vmatprep.subr.bf16.mxu0 0
          %6018 = vmatpush1.bf16.msra.mxu0 0
          %6019 = vmatprep.mubr.bf16.mxu0 0
          %6020 = vmatmul.mubr.bf16.gmra.mrb[0].mxu0 %v5986
          %v6021 = vpop.f32.mrb[0].mxu0
          %v6022 = vadd.f32 0.0, %v6021
          %v6023 = vpop.f32.mrb[0].mxu0
          %v6024 = vadd.f32 0.0, %v6023
          %v6025 = vpop.f32.mrb[0].mxu0
          %v6026 = vadd.f32 0.0, %v6025
          %v6027 = vpop.f32.mrb[0].mxu0
          %v6028 = vadd.f32 0.0, %v6027
          %6029 = vdwg.mxu0
          %6030 = vmatprep.subr.bf16.mxu0 %v5410
          %6031 = vmatpush1.bf16.msra.mxu0 %v5409
          %6032 = vmatprep.subr.bf16.mxu0 %v5414
          %6033 = vmatpush1.bf16.msra.mxu0 %v5413
          %6034 = vmatprep.subr.bf16.mxu0 %v5418
          %6035 = vmatpush1.bf16.msra.mxu0 %v5417
          %6036 = vmatprep.subr.bf16.mxu0 %v5422
          %6037 = vmatpush1.bf16.msra.mxu0 %v5421
          %6038 = vmatprep.subr.bf16.mxu0 %v5426
          %6039 = vmatpush1.bf16.msra.mxu0 %v5425
          %6040 = vmatprep.subr.bf16.mxu0 %v5430
          %6041 = vmatpush1.bf16.msra.mxu0 %v5429
          %6042 = vmatprep.subr.bf16.mxu0 %v5434
          %6043 = vmatpush1.bf16.msra.mxu0 %v5433
          %6044 = vmatprep.subr.bf16.mxu0 %v5438
          %6045 = vmatpush1.bf16.msra.mxu0 %v5437
          %6046 = vmatprep.subr.bf16.mxu0 0
          %6047 = vmatpush1.bf16.msra.mxu0 0
          %6048 = vmatprep.subr.bf16.mxu0 0
          %6049 = vmatpush1.bf16.msra.mxu0 0
          %6050 = vmatprep.subr.bf16.mxu0 0
          %6051 = vmatpush1.bf16.msra.mxu0 0
          %6052 = vmatprep.subr.bf16.mxu0 0
          %6053 = vmatpush1.bf16.msra.mxu0 0
          %6054 = vmatprep.subr.bf16.mxu0 0
          %6055 = vmatpush1.bf16.msra.mxu0 0
          %6056 = vmatprep.subr.bf16.mxu0 0
          %6057 = vmatpush1.bf16.msra.mxu0 0
          %6058 = vmatprep.subr.bf16.mxu0 0
          %6059 = vmatpush1.bf16.msra.mxu0 0
          %6060 = vmatprep.subr.bf16.mxu0 0
          %6061 = vmatpush1.bf16.msra.mxu0 0
          %6062 = vmatprep.mubr.bf16.mxu0 0
          %6063 = vmatmul.mubr.bf16.gmra.mrb[0].mxu0 %v5986
          %v6064 = vpop.f32.mrb[0].mxu0
          %v6065 = vadd.f32 0.0, %v6064
          %v6066 = vpop.f32.mrb[0].mxu0
          %v6067 = vadd.f32 0.0, %v6066
          %v6068 = vpop.f32.mrb[0].mxu0
          %v6069 = vadd.f32 0.0, %v6068
          %v6070 = vpop.f32.mrb[0].mxu0
          %v6071 = vadd.f32 0.0, %v6070
          %6072 = vdwg.mxu0
          %v6074 = vsel %vm5587, %v5985, 0
          %6076 = vmatprep.subr.bf16.mxu0 %v5576
          %6077 = vmatpush1.bf16.msra.mxu0 %v5575
          %6078 = vmatprep.subr.bf16.mxu0 %v5596
          %6079 = vmatpush1.bf16.msra.mxu0 %v5593
          %6080 = vmatprep.subr.bf16.mxu0 0
          %6081 = vmatpush1.bf16.msra.mxu0 0
          %6082 = vmatprep.subr.bf16.mxu0 0
          %6083 = vmatpush1.bf16.msra.mxu0 0
          %6084 = vmatprep.subr.bf16.mxu0 0
          %6085 = vmatpush1.bf16.msra.mxu0 0
          %6086 = vmatprep.subr.bf16.mxu0 0
          %6087 = vmatpush1.bf16.msra.mxu0 0
          %6088 = vmatprep.subr.bf16.mxu0 0
          %6089 = vmatpush1.bf16.msra.mxu0 0
          %6090 = vmatprep.subr.bf16.mxu0 0
          %6091 = vmatpush1.bf16.msra.mxu0 0
          %6092 = vmatprep.subr.bf16.mxu0 0
          %6093 = vmatpush1.bf16.msra.mxu0 0
          %6094 = vmatprep.subr.bf16.mxu0 0
          %6095 = vmatpush1.bf16.msra.mxu0 0
          %6096 = vmatprep.subr.bf16.mxu0 0
          %6097 = vmatpush1.bf16.msra.mxu0 0
          %6098 = vmatprep.subr.bf16.mxu0 0
          %6099 = vmatpush1.bf16.msra.mxu0 0
          %6100 = vmatprep.subr.bf16.mxu0 0
          %6101 = vmatpush1.bf16.msra.mxu0 0
          %6102 = vmatprep.subr.bf16.mxu0 0
          %6103 = vmatpush1.bf16.msra.mxu0 0
          %6104 = vmatprep.subr.bf16.mxu0 0
          %6105 = vmatpush1.bf16.msra.mxu0 0
          %6106 = vmatprep.subr.bf16.mxu0 0
          %6107 = vmatpush1.bf16.msra.mxu0 0
          %6108 = vmatprep.mubr.bf16.mxu0 0
          %6109 = vmatmul.mubr.bf16.gmra.mrb[0].mxu0 %v6074
          %v6110 = vpop.f32.mrb[0].mxu0
          %v6111 = vadd.f32 %v6022, %v6110
          %v6112 = vpop.f32.mrb[0].mxu0
          %v6113 = vadd.f32 %v6024, %v6112
          %v6114 = vpop.f32.mrb[0].mxu0
          %v6115 = vadd.f32 %v6026, %v6114
          %v6116 = vpop.f32.mrb[0].mxu0
          %v6117 = vadd.f32 %v6028, %v6116
          %6118 = vdwg.mxu0
          %6119 = vmatprep.subr.bf16.mxu0 %v5578
          %6120 = vmatpush1.bf16.msra.mxu0 %v5577
          %6121 = vmatprep.subr.bf16.mxu0 %v5602
          %6122 = vmatpush1.bf16.msra.mxu0 %v5599
          %6123 = vmatprep.subr.bf16.mxu0 0
          %6124 = vmatpush1.bf16.msra.mxu0 0
          %6125 = vmatprep.subr.bf16.mxu0 0
          %6126 = vmatpush1.bf16.msra.mxu0 0
          %6127 = vmatprep.subr.bf16.mxu0 0
          %6128 = vmatpush1.bf16.msra.mxu0 0
          %6129 = vmatprep.subr.bf16.mxu0 0
          %6130 = vmatpush1.bf16.msra.mxu0 0
          %6131 = vmatprep.subr.bf16.mxu0 0
          %6132 = vmatpush1.bf16.msra.mxu0 0
          %6133 = vmatprep.subr.bf16.mxu0 0
          %6134 = vmatpush1.bf16.msra.mxu0 0
          %6135 = vmatprep.subr.bf16.mxu0 0
          %6136 = vmatpush1.bf16.msra.mxu0 0
          %6137 = vmatprep.subr.bf16.mxu0 0
          %6138 = vmatpush1.bf16.msra.mxu0 0
          %6139 = vmatprep.subr.bf16.mxu0 0
          %6140 = vmatpush1.bf16.msra.mxu0 0
          %6141 = vmatprep.subr.bf16.mxu0 0
          %6142 = vmatpush1.bf16.msra.mxu0 0
          %6143 = vmatprep.subr.bf16.mxu0 0
          %6144 = vmatpush1.bf16.msra.mxu0 0
          %6145 = vmatprep.subr.bf16.mxu0 0
          %6146 = vmatpush1.bf16.msra.mxu0 0
          %6147 = vmatprep.subr.bf16.mxu0 0
          %6148 = vmatpush1.bf16.msra.mxu0 0
          %6149 = vmatprep.subr.bf16.mxu0 0
          %6150 = vmatpush1.bf16.msra.mxu0 0
          %6151 = vmatprep.mubr.bf16.mxu0 0
          %6152 = vmatmul.mubr.bf16.gmra.mrb[0].mxu0 %v6074
          %v6153 = vpop.f32.mrb[0].mxu0
          %v6154 = vadd.f32 %v6065, %v6153
          %v6155 = vpop.f32.mrb[0].mxu0
          %v6156 = vadd.f32 %v6067, %v6155
          %v6157 = vpop.f32.mrb[0].mxu0
          %v6158 = vadd.f32 %v6069, %v6157
          %v6159 = vpop.f32.mrb[0].mxu0
          %v6160 = vadd.f32 %v6071, %v6159
          %6161 = vdwg.mxu0
          %v6162 = vadd.f32 %v6111, %v5253
          %v6163 = vadd.f32 %v6113, %v5257
          %v6164 = vadd.f32 %v6154, %v5261
          %v6165 = vadd.f32 %v6156, %v5265
          %v6166 = vadd.f32 %v6115, %v5253
          %v6167 = vadd.f32 %v6117, %v5257
          %v6168 = vadd.f32 %v6158, %v5261
          %v6169 = vadd.f32 %v6160, %v5265
          %v6170 = vxor.u32 %v6162, 2147483648
          %v6171 = vxor.u32 %v6163, 2147483648
          %v6172 = vxor.u32 %v6164, 2147483648
          %v6173 = vxor.u32 %v6166, 2147483648
          %v6174 = vxor.u32 %v6167, 2147483648
          %v6175 = vxor.u32 %v6168, 2147483648
          %v6176 = vmul.f32 %v6170, 1.442695
          %v6177 = vpow.pop %v6176
          %v6178 = vmul.f32 %v6171, 1.442695
          %v6179 = vpow.pop %v6178
          %v6180 = vmul.f32 %v6172, 1.442695
          %v6181 = vpow.pop %v6180
          %v6182 = vmul.f32 %v6173, 1.442695
          %v6183 = vpow.pop %v6182
          %v6184 = vmul.f32 %v6174, 1.442695
          %v6185 = vpow.pop %v6184
          %v6186 = vmul.f32 %v6175, 1.442695
          %v6187 = vpow.pop %v6186
          %v6188 = vadd.f32 %v6177, 1.0
          %v6189 = vadd.f32 %v6179, 1.0
          %v6190 = vadd.f32 %v6181, 1.0
          %v6191 = vadd.f32 %v6183, 1.0
          %v6192 = vadd.f32 %v6185, 1.0
          %v6193 = vadd.f32 %v6187, 1.0
          %v6194 = vrcp.pop %v6188
          %v6195 = vmul.f32 1.0, %v6194
          %v6196 = vrcp.pop %v6189
          %v6197 = vmul.f32 1.0, %v6196
          %v6198 = vrcp.pop %v6190
          %v6199 = vmul.f32 1.0, %v6198
          %v6200 = vrcp.pop %v6191
          %v6201 = vmul.f32 1.0, %v6200
          %v6202 = vrcp.pop %v6192
          %v6203 = vmul.f32 1.0, %v6202
          %v6204 = vrcp.pop %v6193
          %v6205 = vmul.f32 1.0, %v6204
          %v6206 = vtanh.pop %v6165
          %v6207 = vtanh.pop %v6169
          %v6208 = vmul.f32 %v6197, %v5976
          %v6209 = vmul.f32 %v6203, %v5977
          %v6210 = vmul.f32 %v6195, %v6206
          %v6211 = vmul.f32 %v6201, %v6207
          %v6212 = vadd.f32 %v6208, %v6210
          %v6213 = vadd.f32 %v6209, %v6211
          %v6214 = vtanh.pop %v6212
          %v6215 = vtanh.pop %v6213
          %v6216 = vmul.f32 %v6199, %v6214
          %v6217 = vmul.f32 %v6205, %v6215
          %s6218 = scalar_lea.vmem [#allocation5], 48
          %v6219 = vld [vmem:[%s6218] sm:$0xff]
          %v6220 = vld [vmem:[%s6218 + $0x8] sm:$0xff]
          %v6221 = vpack.c.bf16 %v6220, %v6219
          %v6222 = vpack.c.bf16 %v6217, %v6216
          %6223 = vmatprep.subr.bf16.mxu0 %v5408
          %6224 = vmatpush1.bf16.msra.mxu0 %v5407
          %6225 = vmatprep.subr.bf16.mxu0 %v5412
          %6226 = vmatpush1.bf16.msra.mxu0 %v5411
          %6227 = vmatprep.subr.bf16.mxu0 %v5416
          %6228 = vmatpush1.bf16.msra.mxu0 %v5415
          %6229 = vmatprep.subr.bf16.mxu0 %v5420
          %6230 = vmatpush1.bf16.msra.mxu0 %v5419
          %6231 = vmatprep.subr.bf16.mxu0 %v5424
          %6232 = vmatpush1.bf16.msra.mxu0 %v5423
          %6233 = vmatprep.subr.bf16.mxu0 %v5428
          %6234 = vmatpush1.bf16.msra.mxu0 %v5427
          %6235 = vmatprep.subr.bf16.mxu0 %v5432
          %6236 = vmatpush1.bf16.msra.mxu0 %v5431
          %6237 = vmatprep.subr.bf16.mxu0 %v5436
          %6238 = vmatpush1.bf16.msra.mxu0 %v5435
          %6239 = vmatprep.subr.bf16.mxu0 0
          %6240 = vmatpush1.bf16.msra.mxu0 0
          %6241 = vmatprep.subr.bf16.mxu0 0
          %6242 = vmatpush1.bf16.msra.mxu0 0
          %6243 = vmatprep.subr.bf16.mxu0 0
          %6244 = vmatpush1.bf16.msra.mxu0 0
          %6245 = vmatprep.subr.bf16.mxu0 0
          %6246 = vmatpush1.bf16.msra.mxu0 0
          %6247 = vmatprep.subr.bf16.mxu0 0
          %6248 = vmatpush1.bf16.msra.mxu0 0
          %6249 = vmatprep.subr.bf16.mxu0 0
          %6250 = vmatpush1.bf16.msra.mxu0 0
          %6251 = vmatprep.subr.bf16.mxu0 0
          %6252 = vmatpush1.bf16.msra.mxu0 0
          %6253 = vmatprep.subr.bf16.mxu0 0
          %6254 = vmatpush1.bf16.msra.mxu0 0
          %6255 = vmatprep.mubr.bf16.mxu0 0
          %6256 = vmatmul.mubr.bf16.gmra.mrb[0].mxu0 %v6222
          %v6257 = vpop.f32.mrb[0].mxu0
          %v6258 = vadd.f32 0.0, %v6257
          %v6259 = vpop.f32.mrb[0].mxu0
          %v6260 = vadd.f32 0.0, %v6259
          %v6261 = vpop.f32.mrb[0].mxu0
          %v6262 = vadd.f32 0.0, %v6261
          %v6263 = vpop.f32.mrb[0].mxu0
          %v6264 = vadd.f32 0.0, %v6263
          %6265 = vdwg.mxu0
          %6266 = vmatprep.subr.bf16.mxu0 %v5410
          %6267 = vmatpush1.bf16.msra.mxu0 %v5409
          %6268 = vmatprep.subr.bf16.mxu0 %v5414
          %6269 = vmatpush1.bf16.msra.mxu0 %v5413
          %6270 = vmatprep.subr.bf16.mxu0 %v5418
          %6271 = vmatpush1.bf16.msra.mxu0 %v5417
          %6272 = vmatprep.subr.bf16.mxu0 %v5422
          %6273 = vmatpush1.bf16.msra.mxu0 %v5421
          %6274 = vmatprep.subr.bf16.mxu0 %v5426
          %6275 = vmatpush1.bf16.msra.mxu0 %v5425
          %6276 = vmatprep.subr.bf16.mxu0 %v5430
          %6277 = vmatpush1.bf16.msra.mxu0 %v5429
          %6278 = vmatprep.subr.bf16.mxu0 %v5434
          %6279 = vmatpush1.bf16.msra.mxu0 %v5433
          %6280 = vmatprep.subr.bf16.mxu0 %v5438
          %6281 = vmatpush1.bf16.msra.mxu0 %v5437
          %6282 = vmatprep.subr.bf16.mxu0 0
          %6283 = vmatpush1.bf16.msra.mxu0 0
          %6284 = vmatprep.subr.bf16.mxu0 0
          %6285 = vmatpush1.bf16.msra.mxu0 0
          %6286 = vmatprep.subr.bf16.mxu0 0
          %6287 = vmatpush1.bf16.msra.mxu0 0
          %6288 = vmatprep.subr.bf16.mxu0 0
          %6289 = vmatpush1.bf16.msra.mxu0 0
          %6290 = vmatprep.subr.bf16.mxu0 0
          %6291 = vmatpush1.bf16.msra.mxu0 0
          %6292 = vmatprep.subr.bf16.mxu0 0
          %6293 = vmatpush1.bf16.msra.mxu0 0
          %6294 = vmatprep.subr.bf16.mxu0 0
          %6295 = vmatpush1.bf16.msra.mxu0 0
          %6296 = vmatprep.subr.bf16.mxu0 0
          %6297 = vmatpush1.bf16.msra.mxu0 0
          %6298 = vmatprep.mubr.bf16.mxu0 0
          %6299 = vmatmul.mubr.bf16.gmra.mrb[0].mxu0 %v6222
          %v6300 = vpop.f32.mrb[0].mxu0
          %v6301 = vadd.f32 0.0, %v6300
          %v6302 = vpop.f32.mrb[0].mxu0
          %v6303 = vadd.f32 0.0, %v6302
          %v6304 = vpop.f32.mrb[0].mxu0
          %v6305 = vadd.f32 0.0, %v6304
          %v6306 = vpop.f32.mrb[0].mxu0
          %v6307 = vadd.f32 0.0, %v6306
          %6308 = vdwg.mxu0
          %v6310 = vsel %vm5587, %v6221, 0
          %6312 = vmatprep.subr.bf16.mxu0 %v5576
          %6313 = vmatpush1.bf16.msra.mxu0 %v5575
          %6314 = vmatprep.subr.bf16.mxu0 %v5596
          %6315 = vmatpush1.bf16.msra.mxu0 %v5593
          %6316 = vmatprep.subr.bf16.mxu0 0
          %6317 = vmatpush1.bf16.msra.mxu0 0
          %6318 = vmatprep.subr.bf16.mxu0 0
          %6319 = vmatpush1.bf16.msra.mxu0 0
          %6320 = vmatprep.subr.bf16.mxu0 0
          %6321 = vmatpush1.bf16.msra.mxu0 0
          %6322 = vmatprep.subr.bf16.mxu0 0
          %6323 = vmatpush1.bf16.msra.mxu0 0
          %6324 = vmatprep.subr.bf16.mxu0 0
          %6325 = vmatpush1.bf16.msra.mxu0 0
          %6326 = vmatprep.subr.bf16.mxu0 0
          %6327 = vmatpush1.bf16.msra.mxu0 0
          %6328 = vmatprep.subr.bf16.mxu0 0
          %6329 = vmatpush1.bf16.msra.mxu0 0
          %6330 = vmatprep.subr.bf16.mxu0 0
          %6331 = vmatpush1.bf16.msra.mxu0 0
          %6332 = vmatprep.subr.bf16.mxu0 0
          %6333 = vmatpush1.bf16.msra.mxu0 0
          %6334 = vmatprep.subr.bf16.mxu0 0
          %6335 = vmatpush1.bf16.msra.mxu0 0
          %6336 = vmatprep.subr.bf16.mxu0 0
          %6337 = vmatpush1.bf16.msra.mxu0 0
          %6338 = vmatprep.subr.bf16.mxu0 0
          %6339 = vmatpush1.bf16.msra.mxu0 0
          %6340 = vmatprep.subr.bf16.mxu0 0
          %6341 = vmatpush1.bf16.msra.mxu0 0
          %6342 = vmatprep.subr.bf16.mxu0 0
          %6343 = vmatpush1.bf16.msra.mxu0 0
          %6344 = vmatprep.mubr.bf16.mxu0 0
          %6345 = vmatmul.mubr.bf16.gmra.mrb[0].mxu0 %v6310
          %v6346 = vpop.f32.mrb[0].mxu0
          %v6347 = vadd.f32 %v6258, %v6346
          %v6348 = vpop.f32.mrb[0].mxu0
          %v6349 = vadd.f32 %v6260, %v6348
          %v6350 = vpop.f32.mrb[0].mxu0
          %v6351 = vadd.f32 %v6262, %v6350
          %v6352 = vpop.f32.mrb[0].mxu0
          %v6353 = vadd.f32 %v6264, %v6352
          %6354 = vdwg.mxu0
          %6355 = vmatprep.subr.bf16.mxu0 %v5578
          %6356 = vmatpush1.bf16.msra.mxu0 %v5577
          %6357 = vmatprep.subr.bf16.mxu0 %v5602
          %6358 = vmatpush1.bf16.msra.mxu0 %v5599
          %6359 = vmatprep.subr.bf16.mxu0 0
          %6360 = vmatpush1.bf16.msra.mxu0 0
          %6361 = vmatprep.subr.bf16.mxu0 0
          %6362 = vmatpush1.bf16.msra.mxu0 0
          %6363 = vmatprep.subr.bf16.mxu0 0
          %6364 = vmatpush1.bf16.msra.mxu0 0
          %6365 = vmatprep.subr.bf16.mxu0 0
          %6366 = vmatpush1.bf16.msra.mxu0 0
          %6367 = vmatprep.subr.bf16.mxu0 0
          %6368 = vmatpush1.bf16.msra.mxu0 0
          %6369 = vmatprep.subr.bf16.mxu0 0
          %6370 = vmatpush1.bf16.msra.mxu0 0
          %6371 = vmatprep.subr.bf16.mxu0 0
          %6372 = vmatpush1.bf16.msra.mxu0 0
          %6373 = vmatprep.subr.bf16.mxu0 0
          %6374 = vmatpush1.bf16.msra.mxu0 0
          %6375 = vmatprep.subr.bf16.mxu0 0
          %6376 = vmatpush1.bf16.msra.mxu0 0
          %6377 = vmatprep.subr.bf16.mxu0 0
          %6378 = vmatpush1.bf16.msra.mxu0 0
          %6379 = vmatprep.subr.bf16.mxu0 0
          %6380 = vmatpush1.bf16.msra.mxu0 0
          %6381 = vmatprep.subr.bf16.mxu0 0
          %6382 = vmatpush1.bf16.msra.mxu0 0
          %6383 = vmatprep.subr.bf16.mxu0 0
          %6384 = vmatpush1.bf16.msra.mxu0 0
          %6385 = vmatprep.subr.bf16.mxu0 0
          %6386 = vmatpush1.bf16.msra.mxu0 0
          %6387 = vmatprep.mubr.bf16.mxu0 0
          %6388 = vmatmul.mubr.bf16.gmra.mrb[0].mxu0 %v6310
          %v6389 = vpop.f32.mrb[0].mxu0
          %v6390 = vadd.f32 %v6301, %v6389
          %v6391 = vpop.f32.mrb[0].mxu0
          %v6392 = vadd.f32 %v6303, %v6391
          %v6393 = vpop.f32.mrb[0].mxu0
          %v6394 = vadd.f32 %v6305, %v6393
          %v6395 = vpop.f32.mrb[0].mxu0
          %v6396 = vadd.f32 %v6307, %v6395
          %6397 = vdwg.mxu0
          %v6398 = vadd.f32 %v6347, %v5253
          %v6399 = vadd.f32 %v6349, %v5257
          %v6400 = vadd.f32 %v6390, %v5261
          %v6401 = vadd.f32 %v6392, %v5265
          %v6402 = vadd.f32 %v6351, %v5253
          %v6403 = vadd.f32 %v6353, %v5257
          %v6404 = vadd.f32 %v6394, %v5261
          %v6405 = vadd.f32 %v6396, %v5265
          %v6406 = vxor.u32 %v6398, 2147483648
          %v6407 = vxor.u32 %v6399, 2147483648
          %v6408 = vxor.u32 %v6400, 2147483648
          %v6409 = vxor.u32 %v6402, 2147483648
          %v6410 = vxor.u32 %v6403, 2147483648
          %v6411 = vxor.u32 %v6404, 2147483648
          %v6412 = vmul.f32 %v6406, 1.442695
          %v6413 = vpow.pop %v6412
          %v6414 = vmul.f32 %v6407, 1.442695
          %v6415 = vpow.pop %v6414
          %v6416 = vmul.f32 %v6408, 1.442695
          %v6417 = vpow.pop %v6416
          %v6418 = vmul.f32 %v6409, 1.442695
          %v6419 = vpow.pop %v6418
          %v6420 = vmul.f32 %v6410, 1.442695
          %v6421 = vpow.pop %v6420
          %v6422 = vmul.f32 %v6411, 1.442695
          %v6423 = vpow.pop %v6422
          %v6424 = vadd.f32 %v6413, 1.0
          %v6425 = vadd.f32 %v6415, 1.0
          %v6426 = vadd.f32 %v6417, 1.0
          %v6427 = vadd.f32 %v6419, 1.0
          %v6428 = vadd.f32 %v6421, 1.0
          %v6429 = vadd.f32 %v6423, 1.0
          %v6430 = vrcp.pop %v6424
          %v6431 = vmul.f32 1.0, %v6430
          %v6432 = vrcp.pop %v6425
          %v6433 = vmul.f32 1.0, %v6432
          %v6434 = vrcp.pop %v6426
          %v6435 = vmul.f32 1.0, %v6434
          %v6436 = vrcp.pop %v6427
          %v6437 = vmul.f32 1.0, %v6436
          %v6438 = vrcp.pop %v6428
          %v6439 = vmul.f32 1.0, %v6438
          %v6440 = vrcp.pop %v6429
          %v6441 = vmul.f32 1.0, %v6440
          %v6442 = vtanh.pop %v6401
          %v6443 = vtanh.pop %v6405
          %v6444 = vmul.f32 %v6433, %v6212
          %v6445 = vmul.f32 %v6439, %v6213
          %v6446 = vmul.f32 %v6431, %v6442
          %v6447 = vmul.f32 %v6437, %v6443
          %v6448 = vadd.f32 %v6444, %v6446
          %v6449 = vadd.f32 %v6445, %v6447
          %v6450 = vtanh.pop %v6448
          %v6451 = vtanh.pop %v6449
          %v6452 = vmul.f32 %v6435, %v6450
          %v6453 = vmul.f32 %v6441, %v6451
          %s6454 = scalar_lea.vmem [#allocation5], 64
          %v6455 = vld [vmem:[%s6454] sm:$0xff]
          %v6456 = vld [vmem:[%s6454 + $0x8] sm:$0xff]
          %v6457 = vpack.c.bf16 %v6456, %v6455
          %v6458 = vpack.c.bf16 %v6453, %v6452
          %6459 = vmatprep.subr.bf16.mxu0 %v5408
          %6460 = vmatpush1.bf16.msra.mxu0 %v5407
          %6461 = vmatprep.subr.bf16.mxu0 %v5412
          %6462 = vmatpush1.bf16.msra.mxu0 %v5411
          %6463 = vmatprep.subr.bf16.mxu0 %v5416
          %6464 = vmatpush1.bf16.msra.mxu0 %v5415
          %6465 = vmatprep.subr.bf16.mxu0 %v5420
          %6466 = vmatpush1.bf16.msra.mxu0 %v5419
          %6467 = vmatprep.subr.bf16.mxu0 %v5424
          %6468 = vmatpush1.bf16.msra.mxu0 %v5423
          %6469 = vmatprep.subr.bf16.mxu0 %v5428
          %6470 = vmatpush1.bf16.msra.mxu0 %v5427
          %6471 = vmatprep.subr.bf16.mxu0 %v5432
          %6472 = vmatpush1.bf16.msra.mxu0 %v5431
          %6473 = vmatprep.subr.bf16.mxu0 %v5436
          %6474 = vmatpush1.bf16.msra.mxu0 %v5435
          %6475 = vmatprep.subr.bf16.mxu0 0
          %6476 = vmatpush1.bf16.msra.mxu0 0
          %6477 = vmatprep.subr.bf16.mxu0 0
          %6478 = vmatpush1.bf16.msra.mxu0 0
          %6479 = vmatprep.subr.bf16.mxu0 0
          %6480 = vmatpush1.bf16.msra.mxu0 0
          %6481 = vmatprep.subr.bf16.mxu0 0
          %6482 = vmatpush1.bf16.msra.mxu0 0
          %6483 = vmatprep.subr.bf16.mxu0 0
          %6484 = vmatpush1.bf16.msra.mxu0 0
          %6485 = vmatprep.subr.bf16.mxu0 0
          %6486 = vmatpush1.bf16.msra.mxu0 0
          %6487 = vmatprep.subr.bf16.mxu0 0
          %6488 = vmatpush1.bf16.msra.mxu0 0
          %6489 = vmatprep.subr.bf16.mxu0 0
          %6490 = vmatpush1.bf16.msra.mxu0 0
          %6491 = vmatprep.mubr.bf16.mxu0 0
          %6492 = vmatmul.mubr.bf16.gmra.mrb[0].mxu0 %v6458
          %v6493 = vpop.f32.mrb[0].mxu0
          %v6494 = vadd.f32 0.0, %v6493
          %v6495 = vpop.f32.mrb[0].mxu0
          %v6496 = vadd.f32 0.0, %v6495
          %v6497 = vpop.f32.mrb[0].mxu0
          %v6498 = vadd.f32 0.0, %v6497
          %v6499 = vpop.f32.mrb[0].mxu0
          %v6500 = vadd.f32 0.0, %v6499
          %6501 = vdwg.mxu0
          %6502 = vmatprep.subr.bf16.mxu0 %v5410
          %6503 = vmatpush1.bf16.msra.mxu0 %v5409
          %6504 = vmatprep.subr.bf16.mxu0 %v5414
          %6505 = vmatpush1.bf16.msra.mxu0 %v5413
          %6506 = vmatprep.subr.bf16.mxu0 %v5418
          %6507 = vmatpush1.bf16.msra.mxu0 %v5417
          %6508 = vmatprep.subr.bf16.mxu0 %v5422
          %6509 = vmatpush1.bf16.msra.mxu0 %v5421
          %6510 = vmatprep.subr.bf16.mxu0 %v5426
          %6511 = vmatpush1.bf16.msra.mxu0 %v5425
          %6512 = vmatprep.subr.bf16.mxu0 %v5430
          %6513 = vmatpush1.bf16.msra.mxu0 %v5429
          %6514 = vmatprep.subr.bf16.mxu0 %v5434
          %6515 = vmatpush1.bf16.msra.mxu0 %v5433
          %6516 = vmatprep.subr.bf16.mxu0 %v5438
          %6517 = vmatpush1.bf16.msra.mxu0 %v5437
          %6518 = vmatprep.subr.bf16.mxu0 0
          %6519 = vmatpush1.bf16.msra.mxu0 0
          %6520 = vmatprep.subr.bf16.mxu0 0
          %6521 = vmatpush1.bf16.msra.mxu0 0
          %6522 = vmatprep.subr.bf16.mxu0 0
          %6523 = vmatpush1.bf16.msra.mxu0 0
          %6524 = vmatprep.subr.bf16.mxu0 0
          %6525 = vmatpush1.bf16.msra.mxu0 0
          %6526 = vmatprep.subr.bf16.mxu0 0
          %6527 = vmatpush1.bf16.msra.mxu0 0
          %6528 = vmatprep.subr.bf16.mxu0 0
          %6529 = vmatpush1.bf16.msra.mxu0 0
          %6530 = vmatprep.subr.bf16.mxu0 0
          %6531 = vmatpush1.bf16.msra.mxu0 0
          %6532 = vmatprep.subr.bf16.mxu0 0
          %6533 = vmatpush1.bf16.msra.mxu0 0
          %6534 = vmatprep.mubr.bf16.mxu0 0
          %6535 = vmatmul.mubr.bf16.gmra.mrb[0].mxu0 %v6458
          %v6536 = vpop.f32.mrb[0].mxu0
          %v6537 = vadd.f32 0.0, %v6536
          %v6538 = vpop.f32.mrb[0].mxu0
          %v6539 = vadd.f32 0.0, %v6538
          %v6540 = vpop.f32.mrb[0].mxu0
          %v6541 = vadd.f32 0.0, %v6540
          %v6542 = vpop.f32.mrb[0].mxu0
          %v6543 = vadd.f32 0.0, %v6542
          %6544 = vdwg.mxu0
          %v6546 = vsel %vm5587, %v6457, 0
          %6548 = vmatprep.subr.bf16.mxu0 %v5576
          %6549 = vmatpush1.bf16.msra.mxu0 %v5575
          %6550 = vmatprep.subr.bf16.mxu0 %v5596
          %6551 = vmatpush1.bf16.msra.mxu0 %v5593
          %6552 = vmatprep.subr.bf16.mxu0 0
          %6553 = vmatpush1.bf16.msra.mxu0 0
          %6554 = vmatprep.subr.bf16.mxu0 0
          %6555 = vmatpush1.bf16.msra.mxu0 0
          %6556 = vmatprep.subr.bf16.mxu0 0
          %6557 = vmatpush1.bf16.msra.mxu0 0
          %6558 = vmatprep.subr.bf16.mxu0 0
          %6559 = vmatpush1.bf16.msra.mxu0 0
          %6560 = vmatprep.subr.bf16.mxu0 0
          %6561 = vmatpush1.bf16.msra.mxu0 0
          %6562 = vmatprep.subr.bf16.mxu0 0
          %6563 = vmatpush1.bf16.msra.mxu0 0
          %6564 = vmatprep.subr.bf16.mxu0 0
          %6565 = vmatpush1.bf16.msra.mxu0 0
          %6566 = vmatprep.subr.bf16.mxu0 0
          %6567 = vmatpush1.bf16.msra.mxu0 0
          %6568 = vmatprep.subr.bf16.mxu0 0
          %6569 = vmatpush1.bf16.msra.mxu0 0
          %6570 = vmatprep.subr.bf16.mxu0 0
          %6571 = vmatpush1.bf16.msra.mxu0 0
          %6572 = vmatprep.subr.bf16.mxu0 0
          %6573 = vmatpush1.bf16.msra.mxu0 0
          %6574 = vmatprep.subr.bf16.mxu0 0
          %6575 = vmatpush1.bf16.msra.mxu0 0
          %6576 = vmatprep.subr.bf16.mxu0 0
          %6577 = vmatpush1.bf16.msra.mxu0 0
          %6578 = vmatprep.subr.bf16.mxu0 0
          %6579 = vmatpush1.bf16.msra.mxu0 0
          %6580 = vmatprep.mubr.bf16.mxu0 0
          %6581 = vmatmul.mubr.bf16.gmra.mrb[0].mxu0 %v6546
          %v6582 = vpop.f32.mrb[0].mxu0
          %v6583 = vadd.f32 %v6494, %v6582
          %v6584 = vpop.f32.mrb[0].mxu0
          %v6585 = vadd.f32 %v6496, %v6584
          %v6586 = vpop.f32.mrb[0].mxu0
          %v6587 = vadd.f32 %v6498, %v6586
          %v6588 = vpop.f32.mrb[0].mxu0
          %v6589 = vadd.f32 %v6500, %v6588
          %6590 = vdwg.mxu0
          %6591 = vmatprep.subr.bf16.mxu0 %v5578
          %6592 = vmatpush1.bf16.msra.mxu0 %v5577
          %6593 = vmatprep.subr.bf16.mxu0 %v5602
          %6594 = vmatpush1.bf16.msra.mxu0 %v5599
          %6595 = vmatprep.subr.bf16.mxu0 0
          %6596 = vmatpush1.bf16.msra.mxu0 0
          %6597 = vmatprep.subr.bf16.mxu0 0
          %6598 = vmatpush1.bf16.msra.mxu0 0
          %6599 = vmatprep.subr.bf16.mxu0 0
          %6600 = vmatpush1.bf16.msra.mxu0 0
          %6601 = vmatprep.subr.bf16.mxu0 0
          %6602 = vmatpush1.bf16.msra.mxu0 0
          %6603 = vmatprep.subr.bf16.mxu0 0
          %6604 = vmatpush1.bf16.msra.mxu0 0
          %6605 = vmatprep.subr.bf16.mxu0 0
          %6606 = vmatpush1.bf16.msra.mxu0 0
          %6607 = vmatprep.subr.bf16.mxu0 0
          %6608 = vmatpush1.bf16.msra.mxu0 0
          %6609 = vmatprep.subr.bf16.mxu0 0
          %6610 = vmatpush1.bf16.msra.mxu0 0
          %6611 = vmatprep.subr.bf16.mxu0 0
          %6612 = vmatpush1.bf16.msra.mxu0 0
          %6613 = vmatprep.subr.bf16.mxu0 0
          %6614 = vmatpush1.bf16.msra.mxu0 0
          %6615 = vmatprep.subr.bf16.mxu0 0
          %6616 = vmatpush1.bf16.msra.mxu0 0
          %6617 = vmatprep.subr.bf16.mxu0 0
          %6618 = vmatpush1.bf16.msra.mxu0 0
          %6619 = vmatprep.subr.bf16.mxu0 0
          %6620 = vmatpush1.bf16.msra.mxu0 0
          %6621 = vmatprep.subr.bf16.mxu0 0
          %6622 = vmatpush1.bf16.msra.mxu0 0
          %6623 = vmatprep.mubr.bf16.mxu0 0
          %6624 = vmatmul.mubr.bf16.gmra.mrb[0].mxu0 %v6546
          %v6625 = vpop.f32.mrb[0].mxu0
          %v6626 = vadd.f32 %v6537, %v6625
          %v6627 = vpop.f32.mrb[0].mxu0
          %v6628 = vadd.f32 %v6539, %v6627
          %v6629 = vpop.f32.mrb[0].mxu0
          %v6630 = vadd.f32 %v6541, %v6629
          %v6631 = vpop.f32.mrb[0].mxu0
          %v6632 = vadd.f32 %v6543, %v6631
          %6633 = vdwg.mxu0
          %v6634 = vadd.f32 %v6583, %v5253
          %v6635 = vadd.f32 %v6585, %v5257
          %v6636 = vadd.f32 %v6626, %v5261
          %v6637 = vadd.f32 %v6628, %v5265
          %v6638 = vadd.f32 %v6587, %v5253
          %v6639 = vadd.f32 %v6589, %v5257
          %v6640 = vadd.f32 %v6630, %v5261
          %v6641 = vadd.f32 %v6632, %v5265
          %v6642 = vxor.u32 %v6634, 2147483648
          %v6643 = vxor.u32 %v6635, 2147483648
          %v6644 = vxor.u32 %v6636, 2147483648
          %v6645 = vxor.u32 %v6638, 2147483648
          %v6646 = vxor.u32 %v6639, 2147483648
          %v6647 = vxor.u32 %v6640, 2147483648
          %v6648 = vmul.f32 %v6642, 1.442695
          %v6649 = vpow.pop %v6648
          %v6650 = vmul.f32 %v6643, 1.442695
          %v6651 = vpow.pop %v6650
          %v6652 = vmul.f32 %v6644, 1.442695
          %v6653 = vpow.pop %v6652
          %v6654 = vmul.f32 %v6645, 1.442695
          %v6655 = vpow.pop %v6654
          %v6656 = vmul.f32 %v6646, 1.442695
          %v6657 = vpow.pop %v6656
          %v6658 = vmul.f32 %v6647, 1.442695
          %v6659 = vpow.pop %v6658
          %v6660 = vadd.f32 %v6649, 1.0
          %v6661 = vadd.f32 %v6651, 1.0
          %v6662 = vadd.f32 %v6653, 1.0
          %v6663 = vadd.f32 %v6655, 1.0
          %v6664 = vadd.f32 %v6657, 1.0
          %v6665 = vadd.f32 %v6659, 1.0
          %v6666 = vrcp.pop %v6660
          %v6667 = vmul.f32 1.0, %v6666
          %v6668 = vrcp.pop %v6661
          %v6669 = vmul.f32 1.0, %v6668
          %v6670 = vrcp.pop %v6662
          %v6671 = vmul.f32 1.0, %v6670
          %v6672 = vrcp.pop %v6663
          %v6673 = vmul.f32 1.0, %v6672
          %v6674 = vrcp.pop %v6664
          %v6675 = vmul.f32 1.0, %v6674
          %v6676 = vrcp.pop %v6665
          %v6677 = vmul.f32 1.0, %v6676
          %v6678 = vtanh.pop %v6637
          %v6679 = vtanh.pop %v6641
          %v6680 = vmul.f32 %v6669, %v6448
          %v6681 = vmul.f32 %v6675, %v6449
          %v6682 = vmul.f32 %v6667, %v6678
          %v6683 = vmul.f32 %v6673, %v6679
          %v6684 = vadd.f32 %v6680, %v6682
          %v6685 = vadd.f32 %v6681, %v6683
          %v6686 = vtanh.pop %v6684
          %v6687 = vtanh.pop %v6685
          %v6688 = vmul.f32 %v6671, %v6686
          %v6689 = vmul.f32 %v6677, %v6687
          %s6690 = scalar_lea.vmem [#allocation5], 80
          %v6691 = vld [vmem:[%s6690] sm:$0xff]
          %v6692 = vld [vmem:[%s6690 + $0x8] sm:$0xff]
          %v6693 = vpack.c.bf16 %v6692, %v6691
          %v6694 = vpack.c.bf16 %v6689, %v6688
          %6695 = vmatprep.subr.bf16.mxu0 %v5408
          %6696 = vmatpush1.bf16.msra.mxu0 %v5407
          %6697 = vmatprep.subr.bf16.mxu0 %v5412
          %6698 = vmatpush1.bf16.msra.mxu0 %v5411
          %6699 = vmatprep.subr.bf16.mxu0 %v5416
          %6700 = vmatpush1.bf16.msra.mxu0 %v5415
          %6701 = vmatprep.subr.bf16.mxu0 %v5420
          %6702 = vmatpush1.bf16.msra.mxu0 %v5419
          %6703 = vmatprep.subr.bf16.mxu0 %v5424
          %6704 = vmatpush1.bf16.msra.mxu0 %v5423
          %6705 = vmatprep.subr.bf16.mxu0 %v5428
          %6706 = vmatpush1.bf16.msra.mxu0 %v5427
          %6707 = vmatprep.subr.bf16.mxu0 %v5432
          %6708 = vmatpush1.bf16.msra.mxu0 %v5431
          %6709 = vmatprep.subr.bf16.mxu0 %v5436
          %6710 = vmatpush1.bf16.msra.mxu0 %v5435
          %6711 = vmatprep.subr.bf16.mxu0 0
          %6712 = vmatpush1.bf16.msra.mxu0 0
          %6713 = vmatprep.subr.bf16.mxu0 0
          %6714 = vmatpush1.bf16.msra.mxu0 0
          %6715 = vmatprep.subr.bf16.mxu0 0
          %6716 = vmatpush1.bf16.msra.mxu0 0
          %6717 = vmatprep.subr.bf16.mxu0 0
          %6718 = vmatpush1.bf16.msra.mxu0 0
          %6719 = vmatprep.subr.bf16.mxu0 0
          %6720 = vmatpush1.bf16.msra.mxu0 0
          %6721 = vmatprep.subr.bf16.mxu0 0
          %6722 = vmatpush1.bf16.msra.mxu0 0
          %6723 = vmatprep.subr.bf16.mxu0 0
          %6724 = vmatpush1.bf16.msra.mxu0 0
          %6725 = vmatprep.subr.bf16.mxu0 0
          %6726 = vmatpush1.bf16.msra.mxu0 0
          %6727 = vmatprep.mubr.bf16.mxu0 0
          %6728 = vmatmul.mubr.bf16.gmra.mrb[0].mxu0 %v6694
          %v6729 = vpop.f32.mrb[0].mxu0
          %v6730 = vadd.f32 0.0, %v6729
          %v6731 = vpop.f32.mrb[0].mxu0
          %v6732 = vadd.f32 0.0, %v6731
          %v6733 = vpop.f32.mrb[0].mxu0
          %v6734 = vadd.f32 0.0, %v6733
          %v6735 = vpop.f32.mrb[0].mxu0
          %v6736 = vadd.f32 0.0, %v6735
          %6737 = vdwg.mxu0
          %6738 = vmatprep.subr.bf16.mxu0 %v5410
          %6739 = vmatpush1.bf16.msra.mxu0 %v5409
          %6740 = vmatprep.subr.bf16.mxu0 %v5414
          %6741 = vmatpush1.bf16.msra.mxu0 %v5413
          %6742 = vmatprep.subr.bf16.mxu0 %v5418
          %6743 = vmatpush1.bf16.msra.mxu0 %v5417
          %6744 = vmatprep.subr.bf16.mxu0 %v5422
          %6745 = vmatpush1.bf16.msra.mxu0 %v5421
          %6746 = vmatprep.subr.bf16.mxu0 %v5426
          %6747 = vmatpush1.bf16.msra.mxu0 %v5425
          %6748 = vmatprep.subr.bf16.mxu0 %v5430
          %6749 = vmatpush1.bf16.msra.mxu0 %v5429
          %6750 = vmatprep.subr.bf16.mxu0 %v5434
          %6751 = vmatpush1.bf16.msra.mxu0 %v5433
          %6752 = vmatprep.subr.bf16.mxu0 %v5438
          %6753 = vmatpush1.bf16.msra.mxu0 %v5437
          %6754 = vmatprep.subr.bf16.mxu0 0
          %6755 = vmatpush1.bf16.msra.mxu0 0
          %6756 = vmatprep.subr.bf16.mxu0 0
          %6757 = vmatpush1.bf16.msra.mxu0 0
          %6758 = vmatprep.subr.bf16.mxu0 0
          %6759 = vmatpush1.bf16.msra.mxu0 0
          %6760 = vmatprep.subr.bf16.mxu0 0
          %6761 = vmatpush1.bf16.msra.mxu0 0
          %6762 = vmatprep.subr.bf16.mxu0 0
          %6763 = vmatpush1.bf16.msra.mxu0 0
          %6764 = vmatprep.subr.bf16.mxu0 0
          %6765 = vmatpush1.bf16.msra.mxu0 0
          %6766 = vmatprep.subr.bf16.mxu0 0
          %6767 = vmatpush1.bf16.msra.mxu0 0
          %6768 = vmatprep.subr.bf16.mxu0 0
          %6769 = vmatpush1.bf16.msra.mxu0 0
          %6770 = vmatprep.mubr.bf16.mxu0 0
          %6771 = vmatmul.mubr.bf16.gmra.mrb[0].mxu0 %v6694
          %v6772 = vpop.f32.mrb[0].mxu0
          %v6773 = vadd.f32 0.0, %v6772
          %v6774 = vpop.f32.mrb[0].mxu0
          %v6775 = vadd.f32 0.0, %v6774
          %v6776 = vpop.f32.mrb[0].mxu0
          %v6777 = vadd.f32 0.0, %v6776
          %v6778 = vpop.f32.mrb[0].mxu0
          %v6779 = vadd.f32 0.0, %v6778
          %6780 = vdwg.mxu0
          %v6782 = vsel %vm5587, %v6693, 0
          %6784 = vmatprep.subr.bf16.mxu0 %v5576
          %6785 = vmatpush1.bf16.msra.mxu0 %v5575
          %6786 = vmatprep.subr.bf16.mxu0 %v5596
          %6787 = vmatpush1.bf16.msra.mxu0 %v5593
          %6788 = vmatprep.subr.bf16.mxu0 0
          %6789 = vmatpush1.bf16.msra.mxu0 0
          %6790 = vmatprep.subr.bf16.mxu0 0
          %6791 = vmatpush1.bf16.msra.mxu0 0
          %6792 = vmatprep.subr.bf16.mxu0 0
          %6793 = vmatpush1.bf16.msra.mxu0 0
          %6794 = vmatprep.subr.bf16.mxu0 0
          %6795 = vmatpush1.bf16.msra.mxu0 0
          %6796 = vmatprep.subr.bf16.mxu0 0
          %6797 = vmatpush1.bf16.msra.mxu0 0
          %6798 = vmatprep.subr.bf16.mxu0 0
          %6799 = vmatpush1.bf16.msra.mxu0 0
          %6800 = vmatprep.subr.bf16.mxu0 0
          %6801 = vmatpush1.bf16.msra.mxu0 0
          %6802 = vmatprep.subr.bf16.mxu0 0
          %6803 = vmatpush1.bf16.msra.mxu0 0
          %6804 = vmatprep.subr.bf16.mxu0 0
          %6805 = vmatpush1.bf16.msra.mxu0 0
          %6806 = vmatprep.subr.bf16.mxu0 0
          %6807 = vmatpush1.bf16.msra.mxu0 0
          %6808 = vmatprep.subr.bf16.mxu0 0
          %6809 = vmatpush1.bf16.msra.mxu0 0
          %6810 = vmatprep.subr.bf16.mxu0 0
          %6811 = vmatpush1.bf16.msra.mxu0 0
          %6812 = vmatprep.subr.bf16.mxu0 0
          %6813 = vmatpush1.bf16.msra.mxu0 0
          %6814 = vmatprep.subr.bf16.mxu0 0
          %6815 = vmatpush1.bf16.msra.mxu0 0
          %6816 = vmatprep.mubr.bf16.mxu0 0
          %6817 = vmatmul.mubr.bf16.gmra.mrb[0].mxu0 %v6782
          %v6818 = vpop.f32.mrb[0].mxu0
          %v6819 = vadd.f32 %v6730, %v6818
          %v6820 = vpop.f32.mrb[0].mxu0
          %v6821 = vadd.f32 %v6732, %v6820
          %v6822 = vpop.f32.mrb[0].mxu0
          %v6823 = vadd.f32 %v6734, %v6822
          %v6824 = vpop.f32.mrb[0].mxu0
          %v6825 = vadd.f32 %v6736, %v6824
          %6826 = vdwg.mxu0
          %6827 = vmatprep.subr.bf16.mxu0 %v5578
          %6828 = vmatpush1.bf16.msra.mxu0 %v5577
          %6829 = vmatprep.subr.bf16.mxu0 %v5602
          %6830 = vmatpush1.bf16.msra.mxu0 %v5599
          %6831 = vmatprep.subr.bf16.mxu0 0
          %6832 = vmatpush1.bf16.msra.mxu0 0
          %6833 = vmatprep.subr.bf16.mxu0 0
          %6834 = vmatpush1.bf16.msra.mxu0 0
          %6835 = vmatprep.subr.bf16.mxu0 0
          %6836 = vmatpush1.bf16.msra.mxu0 0
          %6837 = vmatprep.subr.bf16.mxu0 0
          %6838 = vmatpush1.bf16.msra.mxu0 0
          %6839 = vmatprep.subr.bf16.mxu0 0
          %6840 = vmatpush1.bf16.msra.mxu0 0
          %6841 = vmatprep.subr.bf16.mxu0 0
          %6842 = vmatpush1.bf16.msra.mxu0 0
          %6843 = vmatprep.subr.bf16.mxu0 0
          %6844 = vmatpush1.bf16.msra.mxu0 0
          %6845 = vmatprep.subr.bf16.mxu0 0
          %6846 = vmatpush1.bf16.msra.mxu0 0
          %6847 = vmatprep.subr.bf16.mxu0 0
          %6848 = vmatpush1.bf16.msra.mxu0 0
          %6849 = vmatprep.subr.bf16.mxu0 0
          %6850 = vmatpush1.bf16.msra.mxu0 0
          %6851 = vmatprep.subr.bf16.mxu0 0
          %6852 = vmatpush1.bf16.msra.mxu0 0
          %6853 = vmatprep.subr.bf16.mxu0 0
          %6854 = vmatpush1.bf16.msra.mxu0 0
          %6855 = vmatprep.subr.bf16.mxu0 0
          %6856 = vmatpush1.bf16.msra.mxu0 0
          %6857 = vmatprep.subr.bf16.mxu0 0
          %6858 = vmatpush1.bf16.msra.mxu0 0
          %6859 = vmatprep.mubr.bf16.mxu0 0
          %6860 = vmatmul.mubr.bf16.gmra.mrb[0].mxu0 %v6782
          %v6861 = vpop.f32.mrb[0].mxu0
          %v6862 = vadd.f32 %v6773, %v6861
          %v6863 = vpop.f32.mrb[0].mxu0
          %v6864 = vadd.f32 %v6775, %v6863
          %v6865 = vpop.f32.mrb[0].mxu0
          %v6866 = vadd.f32 %v6777, %v6865
          %v6867 = vpop.f32.mrb[0].mxu0
          %v6868 = vadd.f32 %v6779, %v6867
          %6869 = vdwg.mxu0
          %v6870 = vadd.f32 %v6819, %v5253
          %v6871 = vadd.f32 %v6821, %v5257
          %v6872 = vadd.f32 %v6862, %v5261
          %v6873 = vadd.f32 %v6864, %v5265
          %v6874 = vadd.f32 %v6823, %v5253
          %v6875 = vadd.f32 %v6825, %v5257
          %v6876 = vadd.f32 %v6866, %v5261
          %v6877 = vadd.f32 %v6868, %v5265
          %v6878 = vxor.u32 %v6870, 2147483648
          %v6879 = vxor.u32 %v6871, 2147483648
          %v6880 = vxor.u32 %v6872, 2147483648
          %v6881 = vxor.u32 %v6874, 2147483648
          %v6882 = vxor.u32 %v6875, 2147483648
          %v6883 = vxor.u32 %v6876, 2147483648
          %v6884 = vmul.f32 %v6878, 1.442695
          %v6885 = vpow.pop %v6884
          %v6886 = vmul.f32 %v6879, 1.442695
          %v6887 = vpow.pop %v6886
          %v6888 = vmul.f32 %v6880, 1.442695
          %v6889 = vpow.pop %v6888
          %v6890 = vmul.f32 %v6881, 1.442695
          %v6891 = vpow.pop %v6890
          %v6892 = vmul.f32 %v6882, 1.442695
          %v6893 = vpow.pop %v6892
          %v6894 = vmul.f32 %v6883, 1.442695
          %v6895 = vpow.pop %v6894
          %v6896 = vadd.f32 %v6885, 1.0
          %v6897 = vadd.f32 %v6887, 1.0
          %v6898 = vadd.f32 %v6889, 1.0
          %v6899 = vadd.f32 %v6891, 1.0
          %v6900 = vadd.f32 %v6893, 1.0
          %v6901 = vadd.f32 %v6895, 1.0
          %v6902 = vrcp.pop %v6896
          %v6903 = vmul.f32 1.0, %v6902
          %v6904 = vrcp.pop %v6897
          %v6905 = vmul.f32 1.0, %v6904
          %v6906 = vrcp.pop %v6898
          %v6907 = vmul.f32 1.0, %v6906
          %v6908 = vrcp.pop %v6899
          %v6909 = vmul.f32 1.0, %v6908
          %v6910 = vrcp.pop %v6900
          %v6911 = vmul.f32 1.0, %v6910
          %v6912 = vrcp.pop %v6901
          %v6913 = vmul.f32 1.0, %v6912
          %v6914 = vtanh.pop %v6873
          %v6915 = vtanh.pop %v6877
          %v6916 = vmul.f32 %v6905, %v6684
          %v6917 = vmul.f32 %v6911, %v6685
          %v6918 = vmul.f32 %v6903, %v6914
          %v6919 = vmul.f32 %v6909, %v6915
          %v6920 = vadd.f32 %v6916, %v6918
          %v6921 = vadd.f32 %v6917, %v6919
          %v6922 = vtanh.pop %v6920
          %v6923 = vtanh.pop %v6921
          %v6924 = vmul.f32 %v6907, %v6922
          %v6925 = vmul.f32 %v6913, %v6923
          %s6926 = scalar_lea.vmem [#allocation5], 96
          %v6927 = vld [vmem:[%s6926] sm:$0xff]
          %v6928 = vld [vmem:[%s6926 + $0x8] sm:$0xff]
          %v6929 = vpack.c.bf16 %v6928, %v6927
          %v6930 = vpack.c.bf16 %v6925, %v6924
          %6931 = vmatprep.subr.bf16.mxu0 %v5408
          %6932 = vmatpush1.bf16.msra.mxu0 %v5407
          %6933 = vmatprep.subr.bf16.mxu0 %v5412
          %6934 = vmatpush1.bf16.msra.mxu0 %v5411
          %6935 = vmatprep.subr.bf16.mxu0 %v5416
          %6936 = vmatpush1.bf16.msra.mxu0 %v5415
          %6937 = vmatprep.subr.bf16.mxu0 %v5420
          %6938 = vmatpush1.bf16.msra.mxu0 %v5419
          %6939 = vmatprep.subr.bf16.mxu0 %v5424
          %6940 = vmatpush1.bf16.msra.mxu0 %v5423
          %6941 = vmatprep.subr.bf16.mxu0 %v5428
          %6942 = vmatpush1.bf16.msra.mxu0 %v5427
          %6943 = vmatprep.subr.bf16.mxu0 %v5432
          %6944 = vmatpush1.bf16.msra.mxu0 %v5431
          %6945 = vmatprep.subr.bf16.mxu0 %v5436
          %6946 = vmatpush1.bf16.msra.mxu0 %v5435
          %6947 = vmatprep.subr.bf16.mxu0 0
          %6948 = vmatpush1.bf16.msra.mxu0 0
          %6949 = vmatprep.subr.bf16.mxu0 0
          %6950 = vmatpush1.bf16.msra.mxu0 0
          %6951 = vmatprep.subr.bf16.mxu0 0
          %6952 = vmatpush1.bf16.msra.mxu0 0
          %6953 = vmatprep.subr.bf16.mxu0 0
          %6954 = vmatpush1.bf16.msra.mxu0 0
          %6955 = vmatprep.subr.bf16.mxu0 0
          %6956 = vmatpush1.bf16.msra.mxu0 0
          %6957 = vmatprep.subr.bf16.mxu0 0
          %6958 = vmatpush1.bf16.msra.mxu0 0
          %6959 = vmatprep.subr.bf16.mxu0 0
          %6960 = vmatpush1.bf16.msra.mxu0 0
          %6961 = vmatprep.subr.bf16.mxu0 0
          %6962 = vmatpush1.bf16.msra.mxu0 0
          %6963 = vmatprep.mubr.bf16.mxu0 0
          %6964 = vmatmul.mubr.bf16.gmra.mrb[0].mxu0 %v6930
          %v6965 = vpop.f32.mrb[0].mxu0
          %v6966 = vadd.f32 0.0, %v6965
          %v6967 = vpop.f32.mrb[0].mxu0
          %v6968 = vadd.f32 0.0, %v6967
          %v6969 = vpop.f32.mrb[0].mxu0
          %v6970 = vadd.f32 0.0, %v6969
          %v6971 = vpop.f32.mrb[0].mxu0
          %v6972 = vadd.f32 0.0, %v6971
          %6973 = vdwg.mxu0
          %6974 = vmatprep.subr.bf16.mxu0 %v5410
          %6975 = vmatpush1.bf16.msra.mxu0 %v5409
          %6976 = vmatprep.subr.bf16.mxu0 %v5414
          %6977 = vmatpush1.bf16.msra.mxu0 %v5413
          %6978 = vmatprep.subr.bf16.mxu0 %v5418
          %6979 = vmatpush1.bf16.msra.mxu0 %v5417
          %6980 = vmatprep.subr.bf16.mxu0 %v5422
          %6981 = vmatpush1.bf16.msra.mxu0 %v5421
          %6982 = vmatprep.subr.bf16.mxu0 %v5426
          %6983 = vmatpush1.bf16.msra.mxu0 %v5425
          %6984 = vmatprep.subr.bf16.mxu0 %v5430
          %6985 = vmatpush1.bf16.msra.mxu0 %v5429
          %6986 = vmatprep.subr.bf16.mxu0 %v5434
          %6987 = vmatpush1.bf16.msra.mxu0 %v5433
          %6988 = vmatprep.subr.bf16.mxu0 %v5438
          %6989 = vmatpush1.bf16.msra.mxu0 %v5437
          %6990 = vmatprep.subr.bf16.mxu0 0
          %6991 = vmatpush1.bf16.msra.mxu0 0
          %6992 = vmatprep.subr.bf16.mxu0 0
          %6993 = vmatpush1.bf16.msra.mxu0 0
          %6994 = vmatprep.subr.bf16.mxu0 0
          %6995 = vmatpush1.bf16.msra.mxu0 0
          %6996 = vmatprep.subr.bf16.mxu0 0
          %6997 = vmatpush1.bf16.msra.mxu0 0
          %6998 = vmatprep.subr.bf16.mxu0 0
          %6999 = vmatpush1.bf16.msra.mxu0 0
          %7000 = vmatprep.subr.bf16.mxu0 0
          %7001 = vmatpush1.bf16.msra.mxu0 0
          %7002 = vmatprep.subr.bf16.mxu0 0
          %7003 = vmatpush1.bf16.msra.mxu0 0
          %7004 = vmatprep.subr.bf16.mxu0 0
          %7005 = vmatpush1.bf16.msra.mxu0 0
          %7006 = vmatprep.mubr.bf16.mxu0 0
          %7007 = vmatmul.mubr.bf16.gmra.mrb[0].mxu0 %v6930
          %v7008 = vpop.f32.mrb[0].mxu0
          %v7009 = vadd.f32 0.0, %v7008
          %v7010 = vpop.f32.mrb[0].mxu0
          %v7011 = vadd.f32 0.0, %v7010
          %v7012 = vpop.f32.mrb[0].mxu0
          %v7013 = vadd.f32 0.0, %v7012
          %v7014 = vpop.f32.mrb[0].mxu0
          %v7015 = vadd.f32 0.0, %v7014
          %7016 = vdwg.mxu0
          %v7018 = vsel %vm5587, %v6929, 0
          %7020 = vmatprep.subr.bf16.mxu0 %v5576
          %7021 = vmatpush1.bf16.msra.mxu0 %v5575
          %7022 = vmatprep.subr.bf16.mxu0 %v5596
          %7023 = vmatpush1.bf16.msra.mxu0 %v5593
          %7024 = vmatprep.subr.bf16.mxu0 0
          %7025 = vmatpush1.bf16.msra.mxu0 0
          %7026 = vmatprep.subr.bf16.mxu0 0
          %7027 = vmatpush1.bf16.msra.mxu0 0
          %7028 = vmatprep.subr.bf16.mxu0 0
          %7029 = vmatpush1.bf16.msra.mxu0 0
          %7030 = vmatprep.subr.bf16.mxu0 0
          %7031 = vmatpush1.bf16.msra.mxu0 0
          %7032 = vmatprep.subr.bf16.mxu0 0
          %7033 = vmatpush1.bf16.msra.mxu0 0
          %7034 = vmatprep.subr.bf16.mxu0 0
          %7035 = vmatpush1.bf16.msra.mxu0 0
          %7036 = vmatprep.subr.bf16.mxu0 0
          %7037 = vmatpush1.bf16.msra.mxu0 0
          %7038 = vmatprep.subr.bf16.mxu0 0
          %7039 = vmatpush1.bf16.msra.mxu0 0
          %7040 = vmatprep.subr.bf16.mxu0 0
          %7041 = vmatpush1.bf16.msra.mxu0 0
          %7042 = vmatprep.subr.bf16.mxu0 0
          %7043 = vmatpush1.bf16.msra.mxu0 0
          %7044 = vmatprep.subr.bf16.mxu0 0
          %7045 = vmatpush1.bf16.msra.mxu0 0
          %7046 = vmatprep.subr.bf16.mxu0 0
          %7047 = vmatpush1.bf16.msra.mxu0 0
          %7048 = vmatprep.subr.bf16.mxu0 0
          %7049 = vmatpush1.bf16.msra.mxu0 0
          %7050 = vmatprep.subr.bf16.mxu0 0
          %7051 = vmatpush1.bf16.msra.mxu0 0
          %7052 = vmatprep.mubr.bf16.mxu0 0
          %7053 = vmatmul.mubr.bf16.gmra.mrb[0].mxu0 %v7018
          %v7054 = vpop.f32.mrb[0].mxu0
          %v7055 = vadd.f32 %v6966, %v7054
          %v7056 = vpop.f32.mrb[0].mxu0
          %v7057 = vadd.f32 %v6968, %v7056
          %v7058 = vpop.f32.mrb[0].mxu0
          %v7059 = vadd.f32 %v6970, %v7058
          %v7060 = vpop.f32.mrb[0].mxu0
          %v7061 = vadd.f32 %v6972, %v7060
          %7062 = vdwg.mxu0
          %7063 = vmatprep.subr.bf16.mxu0 %v5578
          %7064 = vmatpush1.bf16.msra.mxu0 %v5577
          %7065 = vmatprep.subr.bf16.mxu0 %v5602
          %7066 = vmatpush1.bf16.msra.mxu0 %v5599
          %7067 = vmatprep.subr.bf16.mxu0 0
          %7068 = vmatpush1.bf16.msra.mxu0 0
          %7069 = vmatprep.subr.bf16.mxu0 0
          %7070 = vmatpush1.bf16.msra.mxu0 0
          %7071 = vmatprep.subr.bf16.mxu0 0
          %7072 = vmatpush1.bf16.msra.mxu0 0
          %7073 = vmatprep.subr.bf16.mxu0 0
          %7074 = vmatpush1.bf16.msra.mxu0 0
          %7075 = vmatprep.subr.bf16.mxu0 0
          %7076 = vmatpush1.bf16.msra.mxu0 0
          %7077 = vmatprep.subr.bf16.mxu0 0
          %7078 = vmatpush1.bf16.msra.mxu0 0
          %7079 = vmatprep.subr.bf16.mxu0 0
          %7080 = vmatpush1.bf16.msra.mxu0 0
          %7081 = vmatprep.subr.bf16.mxu0 0
          %7082 = vmatpush1.bf16.msra.mxu0 0
          %7083 = vmatprep.subr.bf16.mxu0 0
          %7084 = vmatpush1.bf16.msra.mxu0 0
          %7085 = vmatprep.subr.bf16.mxu0 0
          %7086 = vmatpush1.bf16.msra.mxu0 0
          %7087 = vmatprep.subr.bf16.mxu0 0
          %7088 = vmatpush1.bf16.msra.mxu0 0
          %7089 = vmatprep.subr.bf16.mxu0 0
          %7090 = vmatpush1.bf16.msra.mxu0 0
          %7091 = vmatprep.subr.bf16.mxu0 0
          %7092 = vmatpush1.bf16.msra.mxu0 0
          %7093 = vmatprep.subr.bf16.mxu0 0
          %7094 = vmatpush1.bf16.msra.mxu0 0
          %7095 = vmatprep.mubr.bf16.mxu0 0
          %7096 = vmatmul.mubr.bf16.gmra.mrb[0].mxu0 %v7018
          %v7097 = vpop.f32.mrb[0].mxu0
          %v7098 = vadd.f32 %v7009, %v7097
          %v7099 = vpop.f32.mrb[0].mxu0
          %v7100 = vadd.f32 %v7011, %v7099
          %v7101 = vpop.f32.mrb[0].mxu0
          %v7102 = vadd.f32 %v7013, %v7101
          %v7103 = vpop.f32.mrb[0].mxu0
          %v7104 = vadd.f32 %v7015, %v7103
          %7105 = vdwg.mxu0
          %v7106 = vadd.f32 %v7055, %v5253
          %v7107 = vadd.f32 %v7057, %v5257
          %v7108 = vadd.f32 %v7098, %v5261
          %v7109 = vadd.f32 %v7100, %v5265
          %v7110 = vadd.f32 %v7059, %v5253
          %v7111 = vadd.f32 %v7061, %v5257
          %v7112 = vadd.f32 %v7102, %v5261
          %v7113 = vadd.f32 %v7104, %v5265
          %v7114 = vxor.u32 %v7106, 2147483648
          %v7115 = vxor.u32 %v7107, 2147483648
          %v7116 = vxor.u32 %v7108, 2147483648
          %v7117 = vxor.u32 %v7110, 2147483648
          %v7118 = vxor.u32 %v7111, 2147483648
          %v7119 = vxor.u32 %v7112, 2147483648
          %v7120 = vmul.f32 %v7114, 1.442695
          %v7121 = vpow.pop %v7120
          %v7122 = vmul.f32 %v7115, 1.442695
          %v7123 = vpow.pop %v7122
          %v7124 = vmul.f32 %v7116, 1.442695
          %v7125 = vpow.pop %v7124
          %v7126 = vmul.f32 %v7117, 1.442695
          %v7127 = vpow.pop %v7126
          %v7128 = vmul.f32 %v7118, 1.442695
          %v7129 = vpow.pop %v7128
          %v7130 = vmul.f32 %v7119, 1.442695
          %v7131 = vpow.pop %v7130
          %v7132 = vadd.f32 %v7121, 1.0
          %v7133 = vadd.f32 %v7123, 1.0
          %v7134 = vadd.f32 %v7125, 1.0
          %v7135 = vadd.f32 %v7127, 1.0
          %v7136 = vadd.f32 %v7129, 1.0
          %v7137 = vadd.f32 %v7131, 1.0
          %v7138 = vrcp.pop %v7132
          %v7139 = vmul.f32 1.0, %v7138
          %v7140 = vrcp.pop %v7133
          %v7141 = vmul.f32 1.0, %v7140
          %v7142 = vrcp.pop %v7134
          %v7143 = vmul.f32 1.0, %v7142
          %v7144 = vrcp.pop %v7135
          %v7145 = vmul.f32 1.0, %v7144
          %v7146 = vrcp.pop %v7136
          %v7147 = vmul.f32 1.0, %v7146
          %v7148 = vrcp.pop %v7137
          %v7149 = vmul.f32 1.0, %v7148
          %v7150 = vtanh.pop %v7109
          %v7151 = vtanh.pop %v7113
          %v7152 = vmul.f32 %v7141, %v6920
          %v7153 = vmul.f32 %v7147, %v6921
          %v7154 = vmul.f32 %v7139, %v7150
          %v7155 = vmul.f32 %v7145, %v7151
          %v7156 = vadd.f32 %v7152, %v7154
          %v7157 = vadd.f32 %v7153, %v7155
          %v7158 = vtanh.pop %v7156
          %v7159 = vtanh.pop %v7157
          %v7160 = vmul.f32 %v7143, %v7158
          %v7161 = vmul.f32 %v7149, %v7159
          %s7162 = scalar_lea.vmem [#allocation5], 112
          %v7163 = vld [vmem:[%s7162] sm:$0xff]
          %v7164 = vld [vmem:[%s7162 + $0x8] sm:$0xff]
          %v7165 = vpack.c.bf16 %v7164, %v7163
          %v7166 = vpack.c.bf16 %v7161, %v7160
          %7167 = vmatprep.subr.bf16.mxu0 %v5408
          %7168 = vmatpush1.bf16.msra.mxu0 %v5407
          %7169 = vmatprep.subr.bf16.mxu0 %v5412
          %7170 = vmatpush1.bf16.msra.mxu0 %v5411
          %7171 = vmatprep.subr.bf16.mxu0 %v5416
          %7172 = vmatpush1.bf16.msra.mxu0 %v5415
          %7173 = vmatprep.subr.bf16.mxu0 %v5420
          %7174 = vmatpush1.bf16.msra.mxu0 %v5419
          %7175 = vmatprep.subr.bf16.mxu0 %v5424
          %7176 = vmatpush1.bf16.msra.mxu0 %v5423
          %7177 = vmatprep.subr.bf16.mxu0 %v5428
          %7178 = vmatpush1.bf16.msra.mxu0 %v5427
          %7179 = vmatprep.subr.bf16.mxu0 %v5432
          %7180 = vmatpush1.bf16.msra.mxu0 %v5431
          %7181 = vmatprep.subr.bf16.mxu0 %v5436
          %7182 = vmatpush1.bf16.msra.mxu0 %v5435
          %7183 = vmatprep.subr.bf16.mxu0 0
          %7184 = vmatpush1.bf16.msra.mxu0 0
          %7185 = vmatprep.subr.bf16.mxu0 0
          %7186 = vmatpush1.bf16.msra.mxu0 0
          %7187 = vmatprep.subr.bf16.mxu0 0
          %7188 = vmatpush1.bf16.msra.mxu0 0
          %7189 = vmatprep.subr.bf16.mxu0 0
          %7190 = vmatpush1.bf16.msra.mxu0 0
          %7191 = vmatprep.subr.bf16.mxu0 0
          %7192 = vmatpush1.bf16.msra.mxu0 0
          %7193 = vmatprep.subr.bf16.mxu0 0
          %7194 = vmatpush1.bf16.msra.mxu0 0
          %7195 = vmatprep.subr.bf16.mxu0 0
          %7196 = vmatpush1.bf16.msra.mxu0 0
          %7197 = vmatprep.subr.bf16.mxu0 0
          %7198 = vmatpush1.bf16.msra.mxu0 0
          %7199 = vmatprep.mubr.bf16.mxu0 0
          %7200 = vmatmul.mubr.bf16.gmra.mrb[0].mxu0 %v7166
          %v7201 = vpop.f32.mrb[0].mxu0
          %v7202 = vadd.f32 0.0, %v7201
          %v7203 = vpop.f32.mrb[0].mxu0
          %v7204 = vadd.f32 0.0, %v7203
          %v7205 = vpop.f32.mrb[0].mxu0
          %v7206 = vadd.f32 0.0, %v7205
          %v7207 = vpop.f32.mrb[0].mxu0
          %v7208 = vadd.f32 0.0, %v7207
          %7209 = vdwg.mxu0
          %7210 = vmatprep.subr.bf16.mxu0 %v5410
          %7211 = vmatpush1.bf16.msra.mxu0 %v5409
          %7212 = vmatprep.subr.bf16.mxu0 %v5414
          %7213 = vmatpush1.bf16.msra.mxu0 %v5413
          %7214 = vmatprep.subr.bf16.mxu0 %v5418
          %7215 = vmatpush1.bf16.msra.mxu0 %v5417
          %7216 = vmatprep.subr.bf16.mxu0 %v5422
          %7217 = vmatpush1.bf16.msra.mxu0 %v5421
          %7218 = vmatprep.subr.bf16.mxu0 %v5426
          %7219 = vmatpush1.bf16.msra.mxu0 %v5425
          %7220 = vmatprep.subr.bf16.mxu0 %v5430
          %7221 = vmatpush1.bf16.msra.mxu0 %v5429
          %7222 = vmatprep.subr.bf16.mxu0 %v5434
          %7223 = vmatpush1.bf16.msra.mxu0 %v5433
          %7224 = vmatprep.subr.bf16.mxu0 %v5438
          %7225 = vmatpush1.bf16.msra.mxu0 %v5437
          %7226 = vmatprep.subr.bf16.mxu0 0
          %7227 = vmatpush1.bf16.msra.mxu0 0
          %7228 = vmatprep.subr.bf16.mxu0 0
          %7229 = vmatpush1.bf16.msra.mxu0 0
          %7230 = vmatprep.subr.bf16.mxu0 0
          %7231 = vmatpush1.bf16.msra.mxu0 0
          %7232 = vmatprep.subr.bf16.mxu0 0
          %7233 = vmatpush1.bf16.msra.mxu0 0
          %7234 = vmatprep.subr.bf16.mxu0 0
          %7235 = vmatpush1.bf16.msra.mxu0 0
          %7236 = vmatprep.subr.bf16.mxu0 0
          %7237 = vmatpush1.bf16.msra.mxu0 0
          %7238 = vmatprep.subr.bf16.mxu0 0
          %7239 = vmatpush1.bf16.msra.mxu0 0
          %7240 = vmatprep.subr.bf16.mxu0 0
          %7241 = vmatpush1.bf16.msra.mxu0 0
          %7242 = vmatprep.mubr.bf16.mxu0 0
          %7243 = vmatmul.mubr.bf16.gmra.mrb[0].mxu0 %v7166
          %v7244 = vpop.f32.mrb[0].mxu0
          %v7245 = vadd.f32 0.0, %v7244
          %v7246 = vpop.f32.mrb[0].mxu0
          %v7247 = vadd.f32 0.0, %v7246
          %v7248 = vpop.f32.mrb[0].mxu0
          %v7249 = vadd.f32 0.0, %v7248
          %v7250 = vpop.f32.mrb[0].mxu0
          %v7251 = vadd.f32 0.0, %v7250
          %7252 = vdwg.mxu0
          %v7254 = vsel %vm5587, %v7165, 0
          %7256 = vmatprep.subr.bf16.mxu0 %v5576
          %7257 = vmatpush1.bf16.msra.mxu0 %v5575
          %7258 = vmatprep.subr.bf16.mxu0 %v5596
          %7259 = vmatpush1.bf16.msra.mxu0 %v5593
          %7260 = vmatprep.subr.bf16.mxu0 0
          %7261 = vmatpush1.bf16.msra.mxu0 0
          %7262 = vmatprep.subr.bf16.mxu0 0
          %7263 = vmatpush1.bf16.msra.mxu0 0
          %7264 = vmatprep.subr.bf16.mxu0 0
          %7265 = vmatpush1.bf16.msra.mxu0 0
          %7266 = vmatprep.subr.bf16.mxu0 0
          %7267 = vmatpush1.bf16.msra.mxu0 0
          %7268 = vmatprep.subr.bf16.mxu0 0
          %7269 = vmatpush1.bf16.msra.mxu0 0
          %7270 = vmatprep.subr.bf16.mxu0 0
          %7271 = vmatpush1.bf16.msra.mxu0 0
          %7272 = vmatprep.subr.bf16.mxu0 0
          %7273 = vmatpush1.bf16.msra.mxu0 0
          %7274 = vmatprep.subr.bf16.mxu0 0
          %7275 = vmatpush1.bf16.msra.mxu0 0
          %7276 = vmatprep.subr.bf16.mxu0 0
          %7277 = vmatpush1.bf16.msra.mxu0 0
          %7278 = vmatprep.subr.bf16.mxu0 0
          %7279 = vmatpush1.bf16.msra.mxu0 0
          %7280 = vmatprep.subr.bf16.mxu0 0
          %7281 = vmatpush1.bf16.msra.mxu0 0
          %7282 = vmatprep.subr.bf16.mxu0 0
          %7283 = vmatpush1.bf16.msra.mxu0 0
          %7284 = vmatprep.subr.bf16.mxu0 0
          %7285 = vmatpush1.bf16.msra.mxu0 0
          %7286 = vmatprep.subr.bf16.mxu0 0
          %7287 = vmatpush1.bf16.msra.mxu0 0
          %7288 = vmatprep.mubr.bf16.mxu0 0
          %7289 = vmatmul.mubr.bf16.gmra.mrb[0].mxu0 %v7254
          %v7290 = vpop.f32.mrb[0].mxu0
          %v7291 = vadd.f32 %v7202, %v7290
          %v7292 = vpop.f32.mrb[0].mxu0
          %v7293 = vadd.f32 %v7204, %v7292
          %v7294 = vpop.f32.mrb[0].mxu0
          %v7295 = vadd.f32 %v7206, %v7294
          %v7296 = vpop.f32.mrb[0].mxu0
          %v7297 = vadd.f32 %v7208, %v7296
          %7298 = vdwg.mxu0
          %7299 = vmatprep.subr.bf16.mxu0 %v5578
          %7300 = vmatpush1.bf16.msra.mxu0 %v5577
          %7301 = vmatprep.subr.bf16.mxu0 %v5602
          %7302 = vmatpush1.bf16.msra.mxu0 %v5599
          %7303 = vmatprep.subr.bf16.mxu0 0
          %7304 = vmatpush1.bf16.msra.mxu0 0
          %7305 = vmatprep.subr.bf16.mxu0 0
          %7306 = vmatpush1.bf16.msra.mxu0 0
          %7307 = vmatprep.subr.bf16.mxu0 0
          %7308 = vmatpush1.bf16.msra.mxu0 0
          %7309 = vmatprep.subr.bf16.mxu0 0
          %7310 = vmatpush1.bf16.msra.mxu0 0
          %7311 = vmatprep.subr.bf16.mxu0 0
          %7312 = vmatpush1.bf16.msra.mxu0 0
          %7313 = vmatprep.subr.bf16.mxu0 0
          %7314 = vmatpush1.bf16.msra.mxu0 0
          %7315 = vmatprep.subr.bf16.mxu0 0
          %7316 = vmatpush1.bf16.msra.mxu0 0
          %7317 = vmatprep.subr.bf16.mxu0 0
          %7318 = vmatpush1.bf16.msra.mxu0 0
          %7319 = vmatprep.subr.bf16.mxu0 0
          %7320 = vmatpush1.bf16.msra.mxu0 0
          %7321 = vmatprep.subr.bf16.mxu0 0
          %7322 = vmatpush1.bf16.msra.mxu0 0
          %7323 = vmatprep.subr.bf16.mxu0 0
          %7324 = vmatpush1.bf16.msra.mxu0 0
          %7325 = vmatprep.subr.bf16.mxu0 0
          %7326 = vmatpush1.bf16.msra.mxu0 0
          %7327 = vmatprep.subr.bf16.mxu0 0
          %7328 = vmatpush1.bf16.msra.mxu0 0
          %7329 = vmatprep.subr.bf16.mxu0 0
          %7330 = vmatpush1.bf16.msra.mxu0 0
          %7331 = vmatprep.mubr.bf16.mxu0 0
          %7332 = vmatmul.mubr.bf16.gmra.mrb[0].mxu0 %v7254
          %v7333 = vpop.f32.mrb[0].mxu0
          %v7334 = vadd.f32 %v7245, %v7333
          %v7335 = vpop.f32.mrb[0].mxu0
          %v7336 = vadd.f32 %v7247, %v7335
          %v7337 = vpop.f32.mrb[0].mxu0
          %v7338 = vadd.f32 %v7249, %v7337
          %v7339 = vpop.f32.mrb[0].mxu0
          %v7340 = vadd.f32 %v7251, %v7339
          %7341 = vdwg.mxu0
          %v7342 = vadd.f32 %v7291, %v5253
          %v7343 = vadd.f32 %v7293, %v5257
          %v7344 = vadd.f32 %v7334, %v5261
          %v7345 = vadd.f32 %v7336, %v5265
          %v7346 = vadd.f32 %v7295, %v5253
          %v7347 = vadd.f32 %v7297, %v5257
          %v7348 = vadd.f32 %v7338, %v5261
          %v7349 = vadd.f32 %v7340, %v5265
          %v7350 = vxor.u32 %v7342, 2147483648
          %v7351 = vxor.u32 %v7343, 2147483648
          %v7352 = vxor.u32 %v7344, 2147483648
          %v7353 = vxor.u32 %v7346, 2147483648
          %v7354 = vxor.u32 %v7347, 2147483648
          %v7355 = vxor.u32 %v7348, 2147483648
          %v7356 = vmul.f32 %v7350, 1.442695
          %v7357 = vpow.pop %v7356
          %v7358 = vmul.f32 %v7351, 1.442695
          %v7359 = vpow.pop %v7358
          %v7360 = vmul.f32 %v7352, 1.442695
          %v7361 = vpow.pop %v7360
          %v7362 = vmul.f32 %v7353, 1.442695
          %v7363 = vpow.pop %v7362
          %v7364 = vmul.f32 %v7354, 1.442695
          %v7365 = vpow.pop %v7364
          %v7366 = vmul.f32 %v7355, 1.442695
          %v7367 = vpow.pop %v7366
          %v7368 = vadd.f32 %v7357, 1.0
          %v7369 = vadd.f32 %v7359, 1.0
          %v7370 = vadd.f32 %v7361, 1.0
          %v7371 = vadd.f32 %v7363, 1.0
          %v7372 = vadd.f32 %v7365, 1.0
          %v7373 = vadd.f32 %v7367, 1.0
          %v7374 = vrcp.pop %v7368
          %v7375 = vmul.f32 1.0, %v7374
          %v7376 = vrcp.pop %v7369
          %v7377 = vmul.f32 1.0, %v7376
          %v7378 = vrcp.pop %v7370
          %v7379 = vmul.f32 1.0, %v7378
          %v7380 = vrcp.pop %v7371
          %v7381 = vmul.f32 1.0, %v7380
          %v7382 = vrcp.pop %v7372
          %v7383 = vmul.f32 1.0, %v7382
          %v7384 = vrcp.pop %v7373
          %v7385 = vmul.f32 1.0, %v7384
          %v7386 = vtanh.pop %v7345
          %v7387 = vtanh.pop %v7349
          %v7388 = vmul.f32 %v7377, %v7156
          %v7389 = vmul.f32 %v7383, %v7157
          %v7390 = vmul.f32 %v7375, %v7386
          %v7391 = vmul.f32 %v7381, %v7387
          %v7392 = vadd.f32 %v7388, %v7390
          %v7393 = vadd.f32 %v7389, %v7391
          %v7394 = vtanh.pop %v7392
          %v7395 = vtanh.pop %v7393
          %v7396 = vmul.f32 %v7379, %v7394
          %v7397 = vmul.f32 %v7385, %v7395
          %v7398 = vld [vmem:[%s14] sm:$0xff]
          %v7399 = vld [vmem:[%s14 + $0x8] sm:$0xff]
          %v7400 = vld [vmem:[%s14 + $0x10] sm:$0xff]
          %v7401 = vld [vmem:[%s14 + $0x18] sm:$0xff]
          %v7402 = vld [vmem:[%s14 + $0x20] sm:$0xff]
          %v7403 = vld [vmem:[%s14 + $0x28] sm:$0xff]
          %v7404 = vld [vmem:[%s15] sm:$0xf]
          %v7406 = vlaneseq
          %v7407 = vshrl.u32 %v7406, 7
          %v7408 = vsub.s32 0, %v7407
          %v7409 = vrot.slane %v7404, %v7408
          %v7410 = vlaneseq
          %v7411 = vshrl.u32 %v7410, 7
          %v7412 = vsub.s32 2, %v7411
          %v7413 = vrot.slane %v7404, %v7412
          %v7414 = vlaneseq
          %v7415 = vshrl.u32 %v7414, 7
          %v7416 = vsub.s32 3, %v7415
          %v7417 = vrot.slane %v7404, %v7416
          %v7427 = vunpack.c.l.b16 %v7398
          %v7428 = vunpack.c.h.b16 %v7398
          %v7429 = vunpack.c.l.b16 %v7399
          %v7430 = vunpack.c.h.b16 %v7399
          %v7431 = vunpack.c.l.b16 %v7400
          %v7432 = vunpack.c.h.b16 %v7400
          %v7433 = vunpack.c.l.b16 %v7401
          %v7434 = vunpack.c.h.b16 %v7401
          %v7435 = vunpack.c.l.b16 %v7402
          %v7436 = vunpack.c.h.b16 %v7402
          %v7437 = vunpack.c.l.b16 %v7403
          %v7438 = vunpack.c.h.b16 %v7403
          %v7439 = vpack.c.b16 %v7431, %v7427
          %v7440 = vpack.c.b16 %v7432, %v7428
          %v7441 = vpack.c.b16 %v7433, %v7429
          %v7442 = vpack.c.b16 %v7434, %v7430
          %v7443 = vpack.c.b16 %v7435, %v7435
          %v7444 = vpack.c.b16 %v7436, %v7436
          %v7445 = vpack.c.b16 %v7437, %v7437
          %v7446 = vpack.c.b16 %v7438, %v7438
          %v7452 = vsel %vm5591, %v7443, 0
          %v7455 = vsel %vm5591, %v7444, 0
          %v7458 = vsel %vm5591, %v7445, 0
          %v7461 = vsel %vm5591, %v7446, 0
          %7463 = vmatprep.subr.bf16.mxu0 %v7440
          %7464 = vmatpush1.bf16.msra.mxu0 %v7439
          %7465 = vmatprep.subr.bf16.mxu0 %v7455
          %7466 = vmatpush1.bf16.msra.mxu0 %v7452
          %7467 = vmatprep.subr.bf16.mxu0 0
          %7468 = vmatpush1.bf16.msra.mxu0 0
          %7469 = vmatprep.subr.bf16.mxu0 0
          %7470 = vmatpush1.bf16.msra.mxu0 0
          %7471 = vmatprep.subr.bf16.mxu0 0
          %7472 = vmatpush1.bf16.msra.mxu0 0
          %7473 = vmatprep.subr.bf16.mxu0 0
          %7474 = vmatpush1.bf16.msra.mxu0 0
          %7475 = vmatprep.subr.bf16.mxu0 0
          %7476 = vmatpush1.bf16.msra.mxu0 0
          %7477 = vmatprep.subr.bf16.mxu0 0
          %7478 = vmatpush1.bf16.msra.mxu0 0
          %7479 = vmatprep.subr.bf16.mxu0 0
          %7480 = vmatpush1.bf16.msra.mxu0 0
          %7481 = vmatprep.subr.bf16.mxu0 0
          %7482 = vmatpush1.bf16.msra.mxu0 0
          %7483 = vmatprep.subr.bf16.mxu0 0
          %7484 = vmatpush1.bf16.msra.mxu0 0
          %7485 = vmatprep.subr.bf16.mxu0 0
          %7486 = vmatpush1.bf16.msra.mxu0 0
          %7487 = vmatprep.subr.bf16.mxu0 0
          %7488 = vmatpush1.bf16.msra.mxu0 0
          %7489 = vmatprep.subr.bf16.mxu0 0
          %7490 = vmatpush1.bf16.msra.mxu0 0
          %7491 = vmatprep.subr.bf16.mxu0 0
          %7492 = vmatpush1.bf16.msra.mxu0 0
          %7493 = vmatprep.subr.bf16.mxu0 0
          %7494 = vmatpush1.bf16.msra.mxu0 0
          %7495 = vmatprep.mubr.bf16.mxu0 0
          %7496 = vmatmul.mubr.bf16.gmra.mrb[0].mxu0 %v7254
          %v7497 = vpop.f32.mrb[0].mxu0
          %v7498 = vadd.f32 %v7409, %v7497
          %v7499 = vpop.f32.mrb[0].mxu0
          %v7500 = vpop.f32.mrb[0].mxu0
          %v7501 = vadd.f32 %v7409, %v7500
          %v7502 = vpop.f32.mrb[0].mxu0
          %7503 = vdwg.mxu0
          %7504 = vmatprep.subr.bf16.mxu0 %v7442
          %7505 = vmatpush1.bf16.msra.mxu0 %v7441
          %7506 = vmatprep.subr.bf16.mxu0 %v7461
          %7507 = vmatpush1.bf16.msra.mxu0 %v7458
          %7508 = vmatprep.subr.bf16.mxu0 0
          %7509 = vmatpush1.bf16.msra.mxu0 0
          %7510 = vmatprep.subr.bf16.mxu0 0
          %7511 = vmatpush1.bf16.msra.mxu0 0
          %7512 = vmatprep.subr.bf16.mxu0 0
          %7513 = vmatpush1.bf16.msra.mxu0 0
          %7514 = vmatprep.subr.bf16.mxu0 0
          %7515 = vmatpush1.bf16.msra.mxu0 0
          %7516 = vmatprep.subr.bf16.mxu0 0
          %7517 = vmatpush1.bf16.msra.mxu0 0
          %7518 = vmatprep.subr.bf16.mxu0 0
          %7519 = vmatpush1.bf16.msra.mxu0 0
          %7520 = vmatprep.subr.bf16.mxu0 0
          %7521 = vmatpush1.bf16.msra.mxu0 0
          %7522 = vmatprep.subr.bf16.mxu0 0
          %7523 = vmatpush1.bf16.msra.mxu0 0
          %7524 = vmatprep.subr.bf16.mxu0 0
          %7525 = vmatpush1.bf16.msra.mxu0 0
          %7526 = vmatprep.subr.bf16.mxu0 0
          %7527 = vmatpush1.bf16.msra.mxu0 0
          %7528 = vmatprep.subr.bf16.mxu0 0
          %7529 = vmatpush1.bf16.msra.mxu0 0
          %7530 = vmatprep.subr.bf16.mxu0 0
          %7531 = vmatpush1.bf16.msra.mxu0 0
          %7532 = vmatprep.subr.bf16.mxu0 0
          %7533 = vmatpush1.bf16.msra.mxu0 0
          %7534 = vmatprep.subr.bf16.mxu0 0
          %7535 = vmatpush1.bf16.msra.mxu0 0
          %7536 = vmatprep.mubr.bf16.mxu0 0
          %7537 = vmatmul.mubr.bf16.gmra.mrb[0].mxu0 %v7254
          %v7538 = vpop.f32.mrb[0].mxu0
          %v7539 = vadd.f32 %v7413, %v7538
          %v7540 = vpop.f32.mrb[0].mxu0
          %v7541 = vadd.f32 %v7417, %v7540
          %v7542 = vpop.f32.mrb[0].mxu0
          %v7543 = vadd.f32 %v7413, %v7542
          %v7544 = vpop.f32.mrb[0].mxu0
          %v7545 = vadd.f32 %v7417, %v7544
          %7546 = vdwg.mxu0
          %v7547 = vxor.u32 %v7498, 2147483648
          %v7548 = vxor.u32 %v7539, 2147483648
          %v7549 = vxor.u32 %v7501, 2147483648
          %v7550 = vxor.u32 %v7543, 2147483648
          %v7551 = vmul.f32 %v7547, 1.442695
          %v7552 = vpow.pop %v7551
          %v7553 = vmul.f32 %v7548, 1.442695
          %v7554 = vpow.pop %v7553
          %v7555 = vmul.f32 %v7549, 1.442695
          %v7556 = vpow.pop %v7555
          %v7557 = vmul.f32 %v7550, 1.442695
          %v7558 = vpow.pop %v7557
          %v7559 = vadd.f32 %v7552, 1.0
          %v7560 = vadd.f32 %v7554, 1.0
          %v7561 = vadd.f32 %v7556, 1.0
          %v7562 = vadd.f32 %v7558, 1.0
          %v7563 = vrcp.pop %v7559
          %v7564 = vmul.f32 1.0, %v7563
          %v7565 = vrcp.pop %v7560
          %v7566 = vmul.f32 1.0, %v7565
          %v7567 = vrcp.pop %v7561
          %v7568 = vmul.f32 1.0, %v7567
          %v7569 = vrcp.pop %v7562
          %v7570 = vmul.f32 1.0, %v7569
          %v7571 = vtanh.pop %v7541
          %v7572 = vtanh.pop %v7545
          %v7573 = vmul.f32 %v7564, %v7571
          %v7574 = vmul.f32 %v7568, %v7572
          %v7575 = vtanh.pop %v7573
          %v7576 = vtanh.pop %v7574
          %v7577 = vmul.f32 %v7566, %v7575
          %v7578 = vmul.f32 %v7570, %v7576
          %7579 = vst [vmem:[%s710] sm:$0xff] %v7396
          %7580 = vst [vmem:[%s710 + $0x10] sm:$0xff] %v7397
          %7581 = vst [vmem:[%s710 + $0x8] sm:$0xff] %v7577
          %7582 = vst [vmem:[%s710 + $0x18] sm:$0xff] %v7578
        $region144: #{tpu_custom_call.1} parent=83 // pred_fallthru
          _
        %s7583 = sand.u32 %s405, 1
        %s7584 = scalar_lea.sflag [#allocation4], %s7583
        %s7585 = sand.u32 %s405, 1
        %s7586 = smul.addr %s7585, 32
        %s7587 = scalar_lea.vmem [#allocation23], %s7586
        // Predicated region
        $region145: #{tpu_custom_call.1} parent=83 // pred_check
          %p7588 = pneg %p415
        $region146: #{tpu_custom_call.1} parent=83 // pred_check_branch
          %7590 = sbr.rel (%p7588) target = $region148
        $region147: #{tpu_custom_call.1} parent=83 // pred_region
          %s7591 = smul.u32 2, %s41
          %s7592 = smul.u32 2, %s42
          %s7594 = ssub.s32 512, 512
          %7595 = vsyncadd %s7584, %s7594
          %s7596 = smul.addr %s7591, 4
          %s7597 = sadd.s32 %s7592, %s7596
          %s7598 = smul.addr %s7597, 128
          %s7599 = scalar_lea.hbm %s16, %s7598
          %s7600 = sshll.u32 %s7587, 4
          %s7601 = int_to_ptr.vmem [resolvable:$true] %s7600
          %7606 = dma.vmem_to_hbm [thread:$0]  %s7601, 512, %s7599, %s7584, 256, 512, 16
        $region148: #{tpu_custom_call.1} parent=83 // pred_fallthru
          _
      $region84: #{tpu_custom_call.1} parent=5 // pred_fallthru
        _
      %p7607 = scmp.le.s32.totalorder 2, %s32
      // Predicated region
      $region149: #{tpu_custom_call.1} parent=5 // pred_check
        %p7608 = pneg %p7607
      $region150: #{tpu_custom_call.1} parent=5 // pred_check_branch
        %7610 = sbr.rel (%p7608) target = $region152
      $region151: #{tpu_custom_call.1} parent=5 // pred_region
        %s7611 = ssub.s32 %s32, 2
        // Predicated region
        $region153: #{tpu_custom_call.1} parent=151 // pred_check
          %p7612 = pneg %p421
        $region154: #{tpu_custom_call.1} parent=151 // pred_check_branch
          %7614 = sbr.rel (%p7612) target = $region156
        $region155: #{tpu_custom_call.1} parent=151 // pred_region
          %s7615 = sand.u32 %s406, 1
          %s7616 = scalar_lea.sflag [#allocation4], %s7615
          %s7617 = sand.u32 %s406, 1
          %s7618 = smul.addr %s7617, 32
          %s7619 = scalar_lea.vmem [#allocation23], %s7618
          %7620 = dma.done %s7616, 512
        $region156: #{tpu_custom_call.1} parent=151 // pred_fallthru
          _
      $region152: #{tpu_custom_call.1} parent=5 // pred_fallthru
        _
    $region6: #{tpu_custom_call.1} parent=1 // loop_footer
      %s36 = sadd.s32 1, %s32
    $region7: #{tpu_custom_call.1} parent=1 // loop_footer_branch
      %31 = sbr.rel target = $region3
    $region8: #{tpu_custom_call.1} parent=1 // loop_exit
      _
    %7621 = vsyncpa [#allocation3], 1
    %s7622 = scalar_lea.sflag [#allocation3], 1
    %7623 = vsyncpa %s7622, 1
    %7624 = vsyncpa [#allocation6], 1
    %7625 = vsyncpa [#allocation9], 1
    %7626 = vsyncpa [#allocation12], 1
    %7627 = vsyncpa [#allocation15], 1
    %7628 = vsyncpa [#allocation18], 1
    %7629 = vsyncpa [#allocation21], 1
    %7630 = vsyncpa [#allocation4], 1
    %s7631 = scalar_lea.sflag [#allocation4], 1
    %7632 = vsyncpa %s7631, 1

</llo_original>
